<compile_context>
chip_gen: v7x
topology: tpu7x:2x2x1
jax: 0.10.0
libtpu: 0.0.40
codegen_flags: <defaults>
</compile_context>

<pallas_src>
import functools

import numpy as np
import jax
import jax.numpy as jnp
from jax import lax
from jax.experimental import pallas as pl
from jax.experimental.pallas import tpu as pltpu

# ------------------------- small, module-consistent configuration -------------------------
IMG_SIZE = 32          # must be divisible by 16 (4*2*2)
IN_CHANS = 3
TOKEN_DIM = 16
EMBED_DIM = 64
DEPTH = 2
NUM_HEADS = 4
MLP_RATIO = 4.0
NUM_CLASSES = 10
FINAL_K = 1


# ===================================== in-kernel helpers ==================================
def _gelu(y):
    # TODO(synk): exact erf GELU replaced by tanh approximation for robust EUP lowering.
    c = jnp.float32(0.7978845608028654)
    return 0.5 * y * (1.0 + jnp.tanh(c * (y + jnp.float32(0.044715) * y * y * y)))


def _layernorm(x, w, b, eps=1e-5):
    """Row-wise LayerNorm (eps=1e-5, biased variance). x:(T,D) f32; w,b:(1,D)."""
    mu = jnp.mean(x, axis=-1, keepdims=True)
    xc = x - mu
    var = jnp.mean(xc * xc, axis=-1, keepdims=True)
    return xc * lax.rsqrt(var + jnp.float32(eps)) * w + b


# ======================================= Pallas kernels ===================================
def _token_performer_kernel(x_ref, n1w, n1b, kqvw, kqvb, wT_ref, projw, projb,
                            n2w, n2b, fc1w, fc1b, fc2w, fc2b, o_ref):
    """Fused Token_performer for one batch element.  x:(1,T,dim) -> o:(1,T,E)."""
    f32 = jnp.float32
    bf16 = jnp.bfloat16
    m = wT_ref.shape[1]

    x = x_ref[0]                                                    # (T, dim) f32
    xn = _layernorm(x, n1w[...], n1b[...]).astype(bf16)

    # kqv linear via per-split weight slabs (no lane slicing of the activation).
    k = jnp.dot(xn, kqvw[0], preferred_element_type=f32) + kqvb[0]  # (T, E)
    q = jnp.dot(xn, kqvw[1], preferred_element_type=f32) + kqvb[1]
    v = jnp.dot(xn, kqvw[2], preferred_element_type=f32) + kqvb[2]

    # performer random-feature attention (prm_exp) kept in f32 (reference uses .float()).
    wT = wT_ref[...]                                                # (E, m) f32
    inv_sqrt_m = f32(1.0 / np.sqrt(m))
    kd = 0.5 * jnp.sum(k * k, axis=-1, keepdims=True)
    qd = 0.5 * jnp.sum(q * q, axis=-1, keepdims=True)
    kp = jnp.exp(jnp.dot(k, wT, preferred_element_type=f32) - kd) * inv_sqrt_m   # (T, m)
    qp = jnp.exp(jnp.dot(q, wT, preferred_element_type=f32) - qd) * inv_sqrt_m   # (T, m)
    kp_sum = jnp.sum(kp, axis=0, keepdims=True)                                   # (1, m)
    denom = jnp.sum(qp * kp_sum, axis=-1, keepdims=True)                          # (T, 1)
    # kptv[e, m'] = sum_t v[t, e] * kp[t, m']
    kptv = lax.dot_general(v, kp, (((0,), (0,)), ((), ())),
                           preferred_element_type=f32)                            # (E, m)
    # y[t, e] = sum_m qp[t, m] * kptv[e, m]
    y = lax.dot_general(qp, kptv, (((1,), (1,)), ((), ())),
                        preferred_element_type=f32)                               # (T, E)
    attn = y * pl.reciprocal(denom + f32(1e-8), approx=True)

    # residual uses v (reference single_attn), then MLP residual.
    y = v + jnp.dot(attn.astype(bf16), projw[...], preferred_element_type=f32) + projb[...]
    yn = _layernorm(y, n2w[...], n2b[...]).astype(bf16)
    h = _gelu(jnp.dot(yn, fc1w[...], preferred_element_type=f32) + fc1b[...])
    h = jnp.dot(h.astype(bf16), fc2w[...], preferred_element_type=f32) + fc2b[...]
    o_ref[0] = y + h


def _vit_block_kernel(*refs, num_heads, with_embed, with_head):
    """Fused ViT Block for one batch element.

    Optional prologue (with_embed): T2T 'project' linear + (cls/pos/project-bias) add.
    Optional epilogue (with_head): final LayerNorm of the cls row + classifier head.
    """
    it = iter(refs)
    if with_embed:
        pat_ref, projw_e, bias_ref = next(it), next(it), next(it)
    else:
        x_ref = next(it)
    n1w, n1b = next(it), next(it)
    qkvw, aprojw, aprojb = next(it), next(it), next(it)
    n2w, n2b = next(it), next(it)
    fc1w, fc1b, fc2w, fc2b = next(it), next(it), next(it), next(it)
    if with_head:
        fnw, fnb, hw, hb = next(it), next(it), next(it), next(it)
    o_ref = next(it)
    if with_head:
        logits_ref = next(it)

    f32 = jnp.float32
    bf16 = jnp.bfloat16

    if with_embed:
        # bias_ref already folds cls_token + sinusoid pos_embed + project bias per row;
        # row 0 of the (zero-padded) patches contributes exactly 0 to the matmul.
        x = jnp.dot(pat_ref[0].astype(bf16), projw_e[...],
                    preferred_element_type=f32) + bias_ref[0]
    else:
        x = x_ref[0]

    T, D = x.shape
    dh = D // num_heads
    scale = f32(dh ** -0.5)

    # ---- MHSA: all heads in this kernel; per-head weight slabs avoid lane slicing ----
    xn = _layernorm(x, n1w[...], n1b[...]).astype(bf16)
    attn = jnp.zeros((T, D), f32)
    for h in range(num_heads):                                      # static unroll
        q = jnp.dot(xn, qkvw[h], preferred_element_type=f32)        # (T, dh), qkv_bias=False
        k = jnp.dot(xn, qkvw[num_heads + h], preferred_element_type=f32)
        v = jnp.dot(xn, qkvw[2 * num_heads + h], preferred_element_type=f32)
        s = lax.dot_general(q, k, (((1,), (1,)), ((), ())),
                            preferred_element_type=f32) * scale      # (T, T)
        s = s - jnp.max(s, axis=-1, keepdims=True)
        e = jnp.exp(s)
        p = e * pl.reciprocal(jnp.sum(e, axis=-1, keepdims=True), approx=True)
        oh = jnp.dot(p.astype(bf16), v.astype(bf16), preferred_element_type=f32)
        # proj(concat_h(oh)) == sum_h oh @ proj_w[h]  -> no lane concat needed
        attn = attn + jnp.dot(oh.astype(bf16), aprojw[h], preferred_element_type=f32)
    x = x + attn + aprojb[...]

    # ---- MLP ----
    xn2 = _layernorm(x, n2w[...], n2b[...]).astype(bf16)
    hdn = _gelu(jnp.dot(xn2, fc1w[...], preferred_element_type=f32) + fc1b[...])
    x = x + jnp.dot(hdn.astype(bf16), fc2w[...], preferred_element_type=f32) + fc2b[...]
    o_ref[0] = x

    if with_head:
        # final LayerNorm computed once, only on the cls row, + classifier (mix stream).
        cls = _layernorm(x[0:1, :], fnw[...], fnb[...]).astype(bf16)    # (1, D)
        logits_ref[0] = jnp.dot(cls, hw[...], preferred_element_type=f32) + hb[...]


# ======================================= Pallas wrappers ==================================
def _const_spec(a):
    zero = (0,) * a.ndim
    return pl.BlockSpec(tuple(a.shape), lambda i: zero)


def _batched_spec(a):
    tail = (0,) * (a.ndim - 1)
    return pl.BlockSpec((1,) + tuple(a.shape[1:]), lambda i: (i,) + tail)


_PERF_KEYS = ("norm1_w", "norm1_b", "kqv_w", "kqv_b", "wT", "proj_w", "proj_b",
              "norm2_w", "norm2_b", "fc1_w", "fc1_b", "fc2_w", "fc2_b")
_BLOCK_KEYS = ("norm1_w", "norm1_b", "qkv_w", "proj_w", "proj_b",
               "norm2_w", "norm2_b", "fc1_w", "fc1_b", "fc2_w", "fc2_b")


def token_performer_call(p, x):
    """Fused Token_performer: x (B, T, dim) -> (B, T, E).  Grid over batch."""
    B, T, _ = x.shape
    E = p["proj_w"].shape[0]
    in_specs = [_batched_spec(x)] + [_const_spec(p[k]) for k in _PERF_KEYS]
    return pl.pallas_call(
        _token_performer_kernel,
        grid=(B,),
        in_specs=in_specs,
        out_specs=pl.BlockSpec((1, T, E), lambda i: (i, 0, 0)),
        out_shape=jax.ShapeDtypeStruct((B, T, E), jnp.float32),
        compiler_params=pltpu.CompilerParams(dimension_semantics=("parallel",)),
    )(x, *[p[k] for k in _PERF_KEYS])


def vit_block_call(p, x=None, *, embed=None, head=None):
    """One fused ViT Block.  embed=(padded_patches, project_w, bias_rows) fuses the T2T
    projection + cls/pos add; head=(norm_w, norm_b, fc_w, fc_b) fuses final LN + classifier."""
    if embed is not None:
        patches, proj_w_e, bias_rows = embed
        B, T, _ = patches.shape
        D = proj_w_e.shape[1]
    else:
        B, T, D = x.shape

    operands, in_specs = [], []

    def add(a, batched=False):
        operands.append(a)
        in_specs.append(_batched_spec(a) if batched else _const_spec(a))

    if embed is not None:
        add(patches, batched=True)
        add(proj_w_e)
        add(bias_rows)
    else:
        add(x, batched=True)
    for key in _BLOCK_KEYS:
        add(p[key])
    if head is not None:
        for a in head:
            add(a)

    x_shape = jax.ShapeDtypeStruct((B, T, D), jnp.float32)
    x_spec = pl.BlockSpec((1, T, D), lambda i: (i, 0, 0))
    if head is not None:
        C = head[2].shape[1]
        out_shape = (x_shape, jax.ShapeDtypeStruct((B, 1, C), jnp.float32))
        out_specs = (x_spec, pl.BlockSpec((1, 1, C), lambda i: (i, 0, 0)))
    else:
        out_shape = x_shape
        out_specs = x_spec

    kernel = functools.partial(_vit_block_kernel, num_heads=NUM_HEADS,
                               with_embed=embed is not None,
                               with_head=head is not None)
    res = pl.pallas_call(
        kernel,
        grid=(B,),
        in_specs=in_specs,
        out_specs=out_specs,
        out_shape=out_shape,
        compiler_params=pltpu.CompilerParams(dimension_semantics=("parallel",)),
    )(*operands)

    if head is not None:
        x_out, logits = res
        return x_out, logits[:, 0, :]
    return res, None


# ======================================= model glue =======================================
def unfold_nchw(x, k, s, p):
    """PyTorch nn.Unfold(kernel_size=k, stride=s, padding=p): (B,C,H,W) -> (B, C*k*k, L)."""
    pat = lax.conv_general_dilated_patches(
        x, filter_shape=(k, k), window_strides=(s, s),
        padding=((p, p), (p, p)),
        dimension_numbers=("NCHW", "OIHW", "NCHW"))
    B = x.shape[0]
    return pat.reshape(B, pat.shape[1], -1)


def get_sinusoid_encoding(n_position, d_hid):
    pos = np.arange(n_position, dtype=np.float64)[:, None]
    idx = np.arange(d_hid, dtype=np.float64)[None, :]
    angle = pos / np.power(10000.0, 2.0 * (idx // 2) / d_hid)
    table = np.zeros((n_position, d_hid), dtype=np.float64)
    table[:, 0::2] = np.sin(angle[:, 0::2])
    table[:, 1::2] = np.cos(angle[:, 1::2])
    return jnp.asarray(table[None], dtype=jnp.float32)       # (1, n_position, d_hid)


def t2t_vit_feature_forward(params, x):
    B = x.shape[0]

    # ---- T2T module (performer path): Unfold -> Token_performer x2 -> (project fused) ----
    t = jnp.transpose(unfold_nchw(x, 7, 4, 2), (0, 2, 1))           # (B, 64, 147)
    t = token_performer_call(params["t2t_attn1"], t)                # (B, 64, 16)
    s = int(np.sqrt(t.shape[1]))
    t = jnp.transpose(t, (0, 2, 1)).reshape(B, t.shape[2], s, s)
    t = jnp.transpose(unfold_nchw(t, 3, 2, 1), (0, 2, 1))           # (B, 16, 144)
    t = token_performer_call(params["t2t_attn2"], t)                # (B, 16, 16)
    s = int(np.sqrt(t.shape[1]))
    t = jnp.transpose(t, (0, 2, 1)).reshape(B, t.shape[2], s, s)
    patches = jnp.transpose(unfold_nchw(t, 3, 2, 1), (0, 2, 1))     # (B, num_patches, 144)

    # Zero leading row stands in for the cls token so the fused 'project' matmul covers all
    # T rows; cls_token + pos_embed + project bias are folded into one additive (1,T,D) term.
    patches = jnp.pad(patches, ((0, 0), (1, 0), (0, 0)))            # (B, T, 144)
    bias_rows = jnp.concatenate(
        [params["cls_token"] + params["pos_embed"][:, :1],
         params["pos_embed"][:, 1:] + params["project_b"][None]], axis=1)   # (1, T, D)

    # ---- transformer blocks (depth-1 standard Blocks, final Block_ours approximation) ----
    t_tok, logits = None, None
    for i in range(DEPTH):
        embed = (patches, params["project_w"], bias_rows) if i == 0 else None
        head = ((params["norm_w"], params["norm_b"], params["fc_w"], params["fc_b"])
                if i == DEPTH - 1 else None)
        # TODO(synk): Block_ours disentangling not provided; last block approximated by a
        # standard Block feeding identical causal/spurious/mix streams (only mix is used).
        t_tok, logits = vit_block_call(params["blocks"][i], t_tok, embed=embed, head=head)
    return logits


# ======================================= parameter init ===================================
def _orth_features(key, emb, m):
    """Performer random-feature matrix: orthogonal (m, emb) * sqrt(m); stored transposed."""
    a = np.asarray(jax.random.normal(key, (emb, m), jnp.float32), dtype=np.float64)
    qmat, _ = np.linalg.qr(a)                      # (emb, m) with orthonormal columns
    return jnp.asarray(qmat * np.sqrt(m), jnp.float32)


def init_params(key):
    kit = iter(jax.random.split(key, 64))

    def tn(shape, std=0.02, dtype=jnp.bfloat16):
        return (std * jax.random.truncated_normal(next(kit), -2.0, 2.0, shape)).astype(dtype)

    def zeros(*shape):
        return jnp.zeros(shape, jnp.float32)

    def ones(*shape):
        return jnp.ones(shape, jnp.float32)

    def perf(dim, emb):
        m = int(emb * 0.5)
        return {
            "norm1_w": ones(1, dim), "norm1_b": zeros(1, dim),
            "kqv_w": tn((3, dim, emb)), "kqv_b": zeros(3, 1, emb),
            "wT": _orth_features(next(kit), emb, m),
            "proj_w": tn((emb, emb)), "proj_b": zeros(1, emb),
            "norm2_w": ones(1, emb), "norm2_b": zeros(1, emb),
            "fc1_w": tn((emb, emb)), "fc1_b": zeros(1, emb),
            "fc2_w": tn((emb, emb)), "fc2_b": zeros(1, emb),
        }

    def block(dim, ratio, heads):
        hid = int(dim * ratio)
        dh = dim // heads
        return {
            "norm1_w": ones(1, dim), "norm1_b": zeros(1, dim),
            "qkv_w": tn((3 * heads, dim, dh)),                 # qkv_bias=False -> no bias
            "proj_w": tn((heads, dh, dim)), "proj_b": zeros(1, dim),
            "norm2_w": ones(1, dim), "norm2_b": zeros(1, dim),
            "fc1_w": tn((dim, hid)), "fc1_b": zeros(1, hid),
            "fc2_w": tn((hid, dim)), "fc2_b": zeros(1, dim),
        }

    num_patches = (IMG_SIZE // 16) ** 2
    return {
        "t2t_attn1": perf(IN_CHANS * 7 * 7, TOKEN_DIM),
        "t2t_attn2": perf(TOKEN_DIM * 3 * 3, TOKEN_DIM),
        "project_w": tn((TOKEN_DIM * 3 * 3, EMBED_DIM)),
        "project_b": zeros(1, EMBED_DIM),
        "cls_token": tn((1, 1, EMBED_DIM), dtype=jnp.float32),
        "pos_embed": get_sinusoid_encoding(num_patches + 1, EMBED_DIM),
        "blocks": [block(EMBED_DIM, MLP_RATIO, NUM_HEADS) for _ in range(DEPTH)],
        "norm_w": ones(1, EMBED_DIM), "norm_b": zeros(1, EMBED_DIM),
        "fc_w": tn((EMBED_DIM, NUM_CLASSES)),
        "fc_b": zeros(1, NUM_CLASSES),
    }


# ============================================ main =========================================
if __name__ == "__main__":
    key = jax.random.PRNGKey(0)
    pkey, xkey = jax.random.split(key)
    params = init_params(pkey)
    x = jax.random.normal(xkey, (2, IN_CHANS, IMG_SIZE, IMG_SIZE), jnp.float32)  # NCHW

    fwd = jax.jit(t2t_vit_feature_forward)
    logits = fwd(params, x)
    jax.block_until_ready(logits)
    assert logits.shape == (2, NUM_CLASSES), logits.shape
    assert bool(jnp.all(jnp.isfinite(logits)))
    print("KERNEL_OK")
</pallas_src>

<mosaic_0001>
module attributes {stable_mosaic.version = 11 : i64} {
  func.func @_token_performer_kernel(%arg0: i32, %arg1: memref<1x64x147xf32, #tpu.memory_space<vmem>>, %arg2: memref<1x147xf32, #tpu.memory_space<vmem>>, %arg3: memref<1x147xf32, #tpu.memory_space<vmem>>, %arg4: memref<3x147x16xbf16, #tpu.memory_space<vmem>>, %arg5: memref<3x1x16xf32, #tpu.memory_space<vmem>>, %arg6: memref<16x8xf32, #tpu.memory_space<vmem>>, %arg7: memref<16x16xbf16, #tpu.memory_space<vmem>>, %arg8: memref<1x16xf32, #tpu.memory_space<vmem>>, %arg9: memref<1x16xf32, #tpu.memory_space<vmem>>, %arg10: memref<1x16xf32, #tpu.memory_space<vmem>>, %arg11: memref<16x16xbf16, #tpu.memory_space<vmem>>, %arg12: memref<1x16xf32, #tpu.memory_space<vmem>>, %arg13: memref<16x16xbf16, #tpu.memory_space<vmem>>, %arg14: memref<1x16xf32, #tpu.memory_space<vmem>>, %arg15: memref<1x64x16xf32, #tpu.memory_space<vmem>>) attributes {dimension_semantics = [#tpu.dimension_semantics<parallel>], iteration_bounds = array<i64: 2>, scalar_prefetch = 0 : i64, scratch_operands = 0 : i64, tpu.core_type = #tpu.core_type<tc>, window_params = [{transform_indices = @transform_0, window_bounds = array<i64: 1, 64, 147>}, {pipeline_mode = #tpu.pipeline_mode<synchronous>, transform_indices = @transform_1, window_bounds = array<i64: 1, 147>}, {pipeline_mode = #tpu.pipeline_mode<synchronous>, transform_indices = @transform_2, window_bounds = array<i64: 1, 147>}, {pipeline_mode = #tpu.pipeline_mode<synchronous>, transform_indices = @transform_3, window_bounds = array<i64: 3, 147, 16>}, {pipeline_mode = #tpu.pipeline_mode<synchronous>, transform_indices = @transform_4, window_bounds = array<i64: 3, 1, 16>}, {pipeline_mode = #tpu.pipeline_mode<synchronous>, transform_indices = @transform_5, window_bounds = array<i64: 16, 8>}, {pipeline_mode = #tpu.pipeline_mode<synchronous>, transform_indices = @transform_6, window_bounds = array<i64: 16, 16>}, {pipeline_mode = #tpu.pipeline_mode<synchronous>, transform_indices = @transform_7, window_bounds = array<i64: 1, 16>}, {pipeline_mode = #tpu.pipeline_mode<synchronous>, transform_indices = @transform_8, window_bounds = array<i64: 1, 16>}, {pipeline_mode = #tpu.pipeline_mode<synchronous>, transform_indices = @transform_9, window_bounds = array<i64: 1, 16>}, {pipeline_mode = #tpu.pipeline_mode<synchronous>, transform_indices = @transform_10, window_bounds = array<i64: 16, 16>}, {pipeline_mode = #tpu.pipeline_mode<synchronous>, transform_indices = @transform_11, window_bounds = array<i64: 1, 16>}, {pipeline_mode = #tpu.pipeline_mode<synchronous>, transform_indices = @transform_12, window_bounds = array<i64: 16, 16>}, {pipeline_mode = #tpu.pipeline_mode<synchronous>, transform_indices = @transform_13, window_bounds = array<i64: 1, 16>}, {transform_indices = @transform_14, window_bounds = array<i64: 1, 64, 16>}]} {
    %c0 = arith.constant 0 : index
    %c0_0 = arith.constant 0 : index
    %c0_1 = arith.constant 0 : index
    %0 = vector.load %arg1[%c0, %c0_0, %c0_1] : memref<1x64x147xf32, #tpu.memory_space<vmem>>, vector<1x64x147xf32>
    %1 = vector.shape_cast %0 : vector<1x64x147xf32> to vector<64x147xf32>
    %c0_2 = arith.constant 0 : index
    %c0_3 = arith.constant 0 : index
    %2 = vector.load %arg2[%c0_2, %c0_3] : memref<1x147xf32, #tpu.memory_space<vmem>>, vector<1x147xf32>
    %c0_4 = arith.constant 0 : index
    %c0_5 = arith.constant 0 : index
    %3 = vector.load %arg3[%c0_4, %c0_5] : memref<1x147xf32, #tpu.memory_space<vmem>>, vector<1x147xf32>
    %cst = arith.constant dense<0.000000e+00> : vector<64xf32>
    %4 = vector.multi_reduction <add>, %1, %cst [1] : vector<64x147xf32> to vector<64xf32>
    %5 = vector.shape_cast %4 : vector<64xf32> to vector<64x1xf32>
    %cst_6 = arith.constant 1.470000e+02 : f32
    %6 = vector.broadcast %cst_6 : f32 to vector<64x1xf32>
    %7 = arith.divf %5, %6 : vector<64x1xf32>
    %8 = vector.broadcast %7 : vector<64x1xf32> to vector<64x147xf32>
    %9 = arith.subf %1, %8 : vector<64x147xf32>
    %10 = arith.mulf %9, %9 : vector<64x147xf32>
    %cst_7 = arith.constant dense<0.000000e+00> : vector<64xf32>
    %11 = vector.multi_reduction <add>, %10, %cst_7 [1] : vector<64x147xf32> to vector<64xf32>
    %12 = vector.shape_cast %11 : vector<64xf32> to vector<64x1xf32>
    %cst_8 = arith.constant 1.470000e+02 : f32
    %13 = vector.broadcast %cst_8 : f32 to vector<64x1xf32>
    %14 = arith.divf %12, %13 : vector<64x1xf32>
    %cst_9 = arith.constant 9.99999974E-6 : f32
    %15 = vector.broadcast %cst_9 : f32 to vector<64x1xf32>
    %16 = arith.addf %14, %15 : vector<64x1xf32>
    %17 = math.rsqrt %16 : vector<64x1xf32>
    %18 = vector.broadcast %17 : vector<64x1xf32> to vector<64x147xf32>
    %19 = arith.mulf %9, %18 : vector<64x147xf32>
    %20 = vector.broadcast %2 : vector<1x147xf32> to vector<64x147xf32>
    %21 = arith.mulf %19, %20 : vector<64x147xf32>
    %22 = vector.broadcast %3 : vector<1x147xf32> to vector<64x147xf32>
    %23 = arith.addf %21, %22 : vector<64x147xf32>
    %24 = arith.truncf %23 : vector<64x147xf32> to vector<64x147xbf16>
    %c0_10 = arith.constant 0 : index
    %c0_11 = arith.constant 0 : index
    %c0_12 = arith.constant 0 : index
    %25 = vector.load %arg4[%c0_10, %c0_11, %c0_12] : memref<3x147x16xbf16, #tpu.memory_space<vmem>>, vector<1x147x16xbf16>
    %26 = vector.shape_cast %25 : vector<1x147x16xbf16> to vector<147x16xbf16>
    %cst_13 = arith.constant dense<0.000000e+00> : vector<64x16xf32>
    %27 = tpu.matmul %24, %26, %cst_13 {dimension_numbers = #tpu.dot_dimension_numbers<[1], [0], [0], [1], [0, 0, 1, 1], [], []>} : vector<64x147xbf16>, vector<147x16xbf16>, vector<64x16xf32> -> vector<64x16xf32>
    %c0_14 = arith.constant 0 : index
    %c0_15 = arith.constant 0 : index
    %c0_16 = arith.constant 0 : index
    %28 = vector.load %arg5[%c0_14, %c0_15, %c0_16] : memref<3x1x16xf32, #tpu.memory_space<vmem>>, vector<1x1x16xf32>
    %29 = vector.shape_cast %28 : vector<1x1x16xf32> to vector<1x16xf32>
    %30 = vector.broadcast %29 : vector<1x16xf32> to vector<64x16xf32>
    %31 = arith.addf %27, %30 : vector<64x16xf32>
    %c1 = arith.constant 1 : index
    %c0_17 = arith.constant 0 : index
    %c0_18 = arith.constant 0 : index
    %32 = vector.load %arg4[%c1, %c0_17, %c0_18] : memref<3x147x16xbf16, #tpu.memory_space<vmem>>, vector<1x147x16xbf16>
    %33 = vector.shape_cast %32 : vector<1x147x16xbf16> to vector<147x16xbf16>
    %cst_19 = arith.constant dense<0.000000e+00> : vector<64x16xf32>
    %34 = tpu.matmul %24, %33, %cst_19 {dimension_numbers = #tpu.dot_dimension_numbers<[1], [0], [0], [1], [0, 0, 1, 1], [], []>} : vector<64x147xbf16>, vector<147x16xbf16>, vector<64x16xf32> -> vector<64x16xf32>
    %c1_20 = arith.constant 1 : index
    %c0_21 = arith.constant 0 : index
    %c0_22 = arith.constant 0 : index
    %35 = vector.load %arg5[%c1_20, %c0_21, %c0_22] : memref<3x1x16xf32, #tpu.memory_space<vmem>>, vector<1x1x16xf32>
    %36 = vector.shape_cast %35 : vector<1x1x16xf32> to vector<1x16xf32>
    %37 = vector.broadcast %36 : vector<1x16xf32> to vector<64x16xf32>
    %38 = arith.addf %34, %37 : vector<64x16xf32>
    %c2 = arith.constant 2 : index
    %c0_23 = arith.constant 0 : index
    %c0_24 = arith.constant 0 : index
    %39 = vector.load %arg4[%c2, %c0_23, %c0_24] : memref<3x147x16xbf16, #tpu.memory_space<vmem>>, vector<1x147x16xbf16>
    %40 = vector.shape_cast %39 : vector<1x147x16xbf16> to vector<147x16xbf16>
    %cst_25 = arith.constant dense<0.000000e+00> : vector<64x16xf32>
    %41 = tpu.matmul %24, %40, %cst_25 {dimension_numbers = #tpu.dot_dimension_numbers<[1], [0], [0], [1], [0, 0, 1, 1], [], []>} : vector<64x147xbf16>, vector<147x16xbf16>, vector<64x16xf32> -> vector<64x16xf32>
    %c2_26 = arith.constant 2 : index
    %c0_27 = arith.constant 0 : index
    %c0_28 = arith.constant 0 : index
    %42 = vector.load %arg5[%c2_26, %c0_27, %c0_28] : memref<3x1x16xf32, #tpu.memory_space<vmem>>, vector<1x1x16xf32>
    %43 = vector.shape_cast %42 : vector<1x1x16xf32> to vector<1x16xf32>
    %44 = vector.broadcast %43 : vector<1x16xf32> to vector<64x16xf32>
    %45 = arith.addf %41, %44 : vector<64x16xf32>
    %c0_29 = arith.constant 0 : index
    %c0_30 = arith.constant 0 : index
    %46 = vector.load %arg6[%c0_29, %c0_30] : memref<16x8xf32, #tpu.memory_space<vmem>>, vector<16x8xf32>
    %47 = arith.mulf %31, %31 : vector<64x16xf32>
    %cst_31 = arith.constant dense<0.000000e+00> : vector<64xf32>
    %48 = vector.multi_reduction <add>, %47, %cst_31 [1] : vector<64x16xf32> to vector<64xf32>
    %49 = vector.shape_cast %48 : vector<64xf32> to vector<64x1xf32>
    %cst_32 = arith.constant 5.000000e-01 : f32
    %50 = vector.broadcast %cst_32 : f32 to vector<64x1xf32>
    %51 = arith.mulf %50, %49 : vector<64x1xf32>
    %52 = arith.mulf %38, %38 : vector<64x16xf32>
    %cst_33 = arith.constant dense<0.000000e+00> : vector<64xf32>
    %53 = vector.multi_reduction <add>, %52, %cst_33 [1] : vector<64x16xf32> to vector<64xf32>
    %54 = vector.shape_cast %53 : vector<64xf32> to vector<64x1xf32>
    %cst_34 = arith.constant 5.000000e-01 : f32
    %55 = vector.broadcast %cst_34 : f32 to vector<64x1xf32>
    %56 = arith.mulf %55, %54 : vector<64x1xf32>
    %cst_35 = arith.constant dense<0.000000e+00> : vector<64x8xf32>
    %57 = tpu.matmul %31, %46, %cst_35 {dimension_numbers = #tpu.dot_dimension_numbers<[1], [0], [0], [1], [0, 0, 1, 1], [], []>} : vector<64x16xf32>, vector<16x8xf32>, vector<64x8xf32> -> vector<64x8xf32>
    %58 = vector.broadcast %51 : vector<64x1xf32> to vector<64x8xf32>
    %59 = arith.subf %57, %58 : vector<64x8xf32>
    %60 = math.exp %59 : vector<64x8xf32>
    %cst_36 = arith.constant 0.353553385 : f32
    %61 = vector.broadcast %cst_36 : f32 to vector<64x8xf32>
    %62 = arith.mulf %60, %61 : vector<64x8xf32>
    %cst_37 = arith.constant dense<0.000000e+00> : vector<64x8xf32>
    %63 = tpu.matmul %38, %46, %cst_37 {dimension_numbers = #tpu.dot_dimension_numbers<[1], [0], [0], [1], [0, 0, 1, 1], [], []>} : vector<64x16xf32>, vector<16x8xf32>, vector<64x8xf32> -> vector<64x8xf32>
    %64 = vector.broadcast %56 : vector<64x1xf32> to vector<64x8xf32>
    %65 = arith.subf %63, %64 : vector<64x8xf32>
    %66 = math.exp %65 : vector<64x8xf32>
    %cst_38 = arith.constant 0.353553385 : f32
    %67 = vector.broadcast %cst_38 : f32 to vector<64x8xf32>
    %68 = arith.mulf %66, %67 : vector<64x8xf32>
    %cst_39 = arith.constant dense<0.000000e+00> : vector<8xf32>
    %69 = vector.multi_reduction <add>, %62, %cst_39 [0] : vector<64x8xf32> to vector<8xf32>
    %70 = vector.shape_cast %69 : vector<8xf32> to vector<1x8xf32>
    %71 = vector.broadcast %70 : vector<1x8xf32> to vector<64x8xf32>
    %72 = arith.mulf %68, %71 : vector<64x8xf32>
    %cst_40 = arith.constant dense<0.000000e+00> : vector<64xf32>
    %73 = vector.multi_reduction <add>, %72, %cst_40 [1] : vector<64x8xf32> to vector<64xf32>
    %74 = vector.shape_cast %73 : vector<64xf32> to vector<64x1xf32>
    %cst_41 = arith.constant dense<0.000000e+00> : vector<16x8xf32>
    %75 = tpu.matmul %45, %62, %cst_41 {dimension_numbers = #tpu.dot_dimension_numbers<[0], [0], [1], [1], [0, 1, 1, 1], [], []>} : vector<64x16xf32>, vector<64x8xf32>, vector<16x8xf32> -> vector<16x8xf32>
    %cst_42 = arith.constant dense<0.000000e+00> : vector<64x16xf32>
    %76 = tpu.matmul %68, %75, %cst_42 {dimension_numbers = #tpu.dot_dimension_numbers<[1], [1], [0], [0], [0, 0, 1, 0], [], []>} : vector<64x8xf32>, vector<16x8xf32>, vector<64x16xf32> -> vector<64x16xf32>
    %cst_43 = arith.constant 9.99999993E-9 : f32
    %77 = vector.broadcast %cst_43 : f32 to vector<64x1xf32>
    %78 = arith.addf %74, %77 : vector<64x1xf32>
    %79 = tpu.reciprocal %78 {approx = true} : vector<64x1xf32> -> vector<64x1xf32>
    %80 = vector.broadcast %79 : vector<64x1xf32> to vector<64x16xf32>
    %81 = arith.mulf %76, %80 : vector<64x16xf32>
    %82 = arith.truncf %81 : vector<64x16xf32> to vector<64x16xbf16>
    %c0_44 = arith.constant 0 : index
    %c0_45 = arith.constant 0 : index
    %83 = vector.load %arg7[%c0_44, %c0_45] : memref<16x16xbf16, #tpu.memory_space<vmem>>, vector<16x16xbf16>
    %cst_46 = arith.constant dense<0.000000e+00> : vector<64x16xf32>
    %84 = tpu.matmul %82, %83, %cst_46 {dimension_numbers = #tpu.dot_dimension_numbers<[1], [0], [0], [1], [0, 0, 1, 1], [], []>} : vector<64x16xbf16>, vector<16x16xbf16>, vector<64x16xf32> -> vector<64x16xf32>
    %85 = arith.addf %45, %84 : vector<64x16xf32>
    %c0_47 = arith.constant 0 : index
    %c0_48 = arith.constant 0 : index
    %86 = vector.load %arg8[%c0_47, %c0_48] : memref<1x16xf32, #tpu.memory_space<vmem>>, vector<1x16xf32>
    %87 = vector.broadcast %86 : vector<1x16xf32> to vector<64x16xf32>
    %88 = arith.addf %85, %87 : vector<64x16xf32>
    %c0_49 = arith.constant 0 : index
    %c0_50 = arith.constant 0 : index
    %89 = vector.load %arg9[%c0_49, %c0_50] : memref<1x16xf32, #tpu.memory_space<vmem>>, vector<1x16xf32>
    %c0_51 = arith.constant 0 : index
    %c0_52 = arith.constant 0 : index
    %90 = vector.load %arg10[%c0_51, %c0_52] : memref<1x16xf32, #tpu.memory_space<vmem>>, vector<1x16xf32>
    %cst_53 = arith.constant dense<0.000000e+00> : vector<64xf32>
    %91 = vector.multi_reduction <add>, %88, %cst_53 [1] : vector<64x16xf32> to vector<64xf32>
    %92 = vector.shape_cast %91 : vector<64xf32> to vector<64x1xf32>
    %cst_54 = arith.constant 1.600000e+01 : f32
    %93 = vector.broadcast %cst_54 : f32 to vector<64x1xf32>
    %94 = arith.divf %92, %93 : vector<64x1xf32>
    %95 = vector.broadcast %94 : vector<64x1xf32> to vector<64x16xf32>
    %96 = arith.subf %88, %95 : vector<64x16xf32>
    %97 = arith.mulf %96, %96 : vector<64x16xf32>
    %cst_55 = arith.constant dense<0.000000e+00> : vector<64xf32>
    %98 = vector.multi_reduction <add>, %97, %cst_55 [1] : vector<64x16xf32> to vector<64xf32>
    %99 = vector.shape_cast %98 : vector<64xf32> to vector<64x1xf32>
    %cst_56 = arith.constant 1.600000e+01 : f32
    %100 = vector.broadcast %cst_56 : f32 to vector<64x1xf32>
    %101 = arith.divf %99, %100 : vector<64x1xf32>
    %cst_57 = arith.constant 9.99999974E-6 : f32
    %102 = vector.broadcast %cst_57 : f32 to vector<64x1xf32>
    %103 = arith.addf %101, %102 : vector<64x1xf32>
    %104 = math.rsqrt %103 : vector<64x1xf32>
    %105 = vector.broadcast %104 : vector<64x1xf32> to vector<64x16xf32>
    %106 = arith.mulf %96, %105 : vector<64x16xf32>
    %107 = vector.broadcast %89 : vector<1x16xf32> to vector<64x16xf32>
    %108 = arith.mulf %106, %107 : vector<64x16xf32>
    %109 = vector.broadcast %90 : vector<1x16xf32> to vector<64x16xf32>
    %110 = arith.addf %108, %109 : vector<64x16xf32>
    %111 = arith.truncf %110 : vector<64x16xf32> to vector<64x16xbf16>
    %c0_58 = arith.constant 0 : index
    %c0_59 = arith.constant 0 : index
    %112 = vector.load %arg11[%c0_58, %c0_59] : memref<16x16xbf16, #tpu.memory_space<vmem>>, vector<16x16xbf16>
    %cst_60 = arith.constant dense<0.000000e+00> : vector<64x16xf32>
    %113 = tpu.matmul %111, %112, %cst_60 {dimension_numbers = #tpu.dot_dimension_numbers<[1], [0], [0], [1], [0, 0, 1, 1], [], []>} : vector<64x16xbf16>, vector<16x16xbf16>, vector<64x16xf32> -> vector<64x16xf32>
    %c0_61 = arith.constant 0 : index
    %c0_62 = arith.constant 0 : index
    %114 = vector.load %arg12[%c0_61, %c0_62] : memref<1x16xf32, #tpu.memory_space<vmem>>, vector<1x16xf32>
    %115 = vector.broadcast %114 : vector<1x16xf32> to vector<64x16xf32>
    %116 = arith.addf %113, %115 : vector<64x16xf32>
    %cst_63 = arith.constant 5.000000e-01 : f32
    %117 = vector.broadcast %cst_63 : f32 to vector<64x16xf32>
    %118 = arith.mulf %117, %116 : vector<64x16xf32>
    %cst_64 = arith.constant 4.471500e-02 : f32
    %119 = vector.broadcast %cst_64 : f32 to vector<64x16xf32>
    %120 = arith.mulf %119, %116 : vector<64x16xf32>
    %121 = arith.mulf %120, %116 : vector<64x16xf32>
    %122 = arith.mulf %121, %116 : vector<64x16xf32>
    %123 = arith.addf %116, %122 : vector<64x16xf32>
    %cst_65 = arith.constant 0.797884583 : f32
    %124 = vector.broadcast %cst_65 : f32 to vector<64x16xf32>
    %125 = arith.mulf %124, %123 : vector<64x16xf32>
    %126 = math.tanh %125 : vector<64x16xf32>
    %cst_66 = arith.constant 1.000000e+00 : f32
    %127 = vector.broadcast %cst_66 : f32 to vector<64x16xf32>
    %128 = arith.addf %127, %126 : vector<64x16xf32>
    %129 = arith.mulf %118, %128 : vector<64x16xf32>
    %130 = arith.truncf %129 : vector<64x16xf32> to vector<64x16xbf16>
    %c0_67 = arith.constant 0 : index
    %c0_68 = arith.constant 0 : index
    %131 = vector.load %arg13[%c0_67, %c0_68] : memref<16x16xbf16, #tpu.memory_space<vmem>>, vector<16x16xbf16>
    %cst_69 = arith.constant dense<0.000000e+00> : vector<64x16xf32>
    %132 = tpu.matmul %130, %131, %cst_69 {dimension_numbers = #tpu.dot_dimension_numbers<[1], [0], [0], [1], [0, 0, 1, 1], [], []>} : vector<64x16xbf16>, vector<16x16xbf16>, vector<64x16xf32> -> vector<64x16xf32>
    %c0_70 = arith.constant 0 : index
    %c0_71 = arith.constant 0 : index
    %133 = vector.load %arg14[%c0_70, %c0_71] : memref<1x16xf32, #tpu.memory_space<vmem>>, vector<1x16xf32>
    %134 = vector.broadcast %133 : vector<1x16xf32> to vector<64x16xf32>
    %135 = arith.addf %132, %134 : vector<64x16xf32>
    %136 = arith.addf %88, %135 : vector<64x16xf32>
    %c0_72 = arith.constant 0 : index
    %c0_73 = arith.constant 0 : index
    %c0_74 = arith.constant 0 : index
    %137 = vector.load %arg15[%c0_72, %c0_73, %c0_74] : memref<1x64x16xf32, #tpu.memory_space<vmem>>, vector<1x64x16xf32>
    %138 = vector.shape_cast %137 : vector<1x64x16xf32> to vector<64x16xf32>
    %139 = vector.shape_cast %136 : vector<64x16xf32> to vector<1x64x16xf32>
    tpu.vector_store %arg15[%c0_72, %c0_73, %c0_74], %139 {strides = array<i32>} : memref<1x64x16xf32, #tpu.memory_space<vmem>>, vector<1x64x16xf32>,
    return
  }
  func.func @transform_0(%arg0: i32) -> (i32, i32, i32) {
    %c0_i32 = arith.constant 0 : i32
    %c0_i32_0 = arith.constant 0 : i32
    %c0_i32_1 = arith.constant 0 : i32
    return %arg0, %c0_i32, %c0_i32_0 : i32, i32, i32
  }
  func.func @transform_1(%arg0: i32) -> (i32, i32) {
    %c0_i32 = arith.constant 0 : i32
    %c0_i32_0 = arith.constant 0 : i32
    %c0_i32_1 = arith.constant 0 : i32
    return %c0_i32, %c0_i32_0 : i32, i32
  }
  func.func @transform_2(%arg0: i32) -> (i32, i32) {
    %c0_i32 = arith.constant 0 : i32
    %c0_i32_0 = arith.constant 0 : i32
    %c0_i32_1 = arith.constant 0 : i32
    return %c0_i32, %c0_i32_0 : i32, i32
  }
  func.func @transform_3(%arg0: i32) -> (i32, i32, i32) {
    %c0_i32 = arith.constant 0 : i32
    %c0_i32_0 = arith.constant 0 : i32
    %c0_i32_1 = arith.constant 0 : i32
    %c0_i32_2 = arith.constant 0 : i32
    return %c0_i32, %c0_i32_0, %c0_i32_1 : i32, i32, i32
  }
  func.func @transform_4(%arg0: i32) -> (i32, i32, i32) {
    %c0_i32 = arith.constant 0 : i32
    %c0_i32_0 = arith.constant 0 : i32
    %c0_i32_1 = arith.constant 0 : i32
    %c0_i32_2 = arith.constant 0 : i32
    return %c0_i32, %c0_i32_0, %c0_i32_1 : i32, i32, i32
  }
  func.func @transform_5(%arg0: i32) -> (i32, i32) {
    %c0_i32 = arith.constant 0 : i32
    %c0_i32_0 = arith.constant 0 : i32
    %c0_i32_1 = arith.constant 0 : i32
    return %c0_i32, %c0_i32_0 : i32, i32
  }
  func.func @transform_6(%arg0: i32) -> (i32, i32) {
    %c0_i32 = arith.constant 0 : i32
    %c0_i32_0 = arith.constant 0 : i32
    %c0_i32_1 = arith.constant 0 : i32
    return %c0_i32, %c0_i32_0 : i32, i32
  }
  func.func @transform_7(%arg0: i32) -> (i32, i32) {
    %c0_i32 = arith.constant 0 : i32
    %c0_i32_0 = arith.constant 0 : i32
    %c0_i32_1 = arith.constant 0 : i32
    return %c0_i32, %c0_i32_0 : i32, i32
  }
  func.func @transform_8(%arg0: i32) -> (i32, i32) {
    %c0_i32 = arith.constant 0 : i32
    %c0_i32_0 = arith.constant 0 : i32
    %c0_i32_1 = arith.constant 0 : i32
    return %c0_i32, %c0_i32_0 : i32, i32
  }
  func.func @transform_9(%arg0: i32) -> (i32, i32) {
    %c0_i32 = arith.constant 0 : i32
    %c0_i32_0 = arith.constant 0 : i32
    %c0_i32_1 = arith.constant 0 : i32
    return %c0_i32, %c0_i32_0 : i32, i32
  }
  func.func @transform_10(%arg0: i32) -> (i32, i32) {
    %c0_i32 = arith.constant 0 : i32
    %c0_i32_0 = arith.constant 0 : i32
    %c0_i32_1 = arith.constant 0 : i32
    return %c0_i32, %c0_i32_0 : i32, i32
  }
  func.func @transform_11(%arg0: i32) -> (i32, i32) {
    %c0_i32 = arith.constant 0 : i32
    %c0_i32_0 = arith.constant 0 : i32
    %c0_i32_1 = arith.constant 0 : i32
    return %c0_i32, %c0_i32_0 : i32, i32
  }
  func.func @transform_12(%arg0: i32) -> (i32, i32) {
    %c0_i32 = arith.constant 0 : i32
    %c0_i32_0 = arith.constant 0 : i32
    %c0_i32_1 = arith.constant 0 : i32
    return %c0_i32, %c0_i32_0 : i32, i32
  }
  func.func @transform_13(%arg0: i32) -> (i32, i32) {
    %c0_i32 = arith.constant 0 : i32
    %c0_i32_0 = arith.constant 0 : i32
    %c0_i32_1 = arith.constant 0 : i32
    return %c0_i32, %c0_i32_0 : i32, i32
  }
  func.func @transform_14(%arg0: i32) -> (i32, i32, i32) {
    %c0_i32 = arith.constant 0 : i32
    %c0_i32_0 = arith.constant 0 : i32
    %c0_i32_1 = arith.constant 0 : i32
    return %arg0, %c0_i32, %c0_i32_0 : i32, i32, i32
  }
}

module attributes {stable_mosaic.version = 11 : i64} {
  func.func @_token_performer_kernel(%arg0: i32, %arg1: memref<1x16x144xf32, #tpu.memory_space<vmem>>, %arg2: memref<1x144xf32, #tpu.memory_space<vmem>>, %arg3: memref<1x144xf32, #tpu.memory_space<vmem>>, %arg4: memref<3x144x16xbf16, #tpu.memory_space<vmem>>, %arg5: memref<3x1x16xf32, #tpu.memory_space<vmem>>, %arg6: memref<16x8xf32, #tpu.memory_space<vmem>>, %arg7: memref<16x16xbf16, #tpu.memory_space<vmem>>, %arg8: memref<1x16xf32, #tpu.memory_space<vmem>>, %arg9: memref<1x16xf32, #tpu.memory_space<vmem>>, %arg10: memref<1x16xf32, #tpu.memory_space<vmem>>, %arg11: memref<16x16xbf16, #tpu.memory_space<vmem>>, %arg12: memref<1x16xf32, #tpu.memory_space<vmem>>, %arg13: memref<16x16xbf16, #tpu.memory_space<vmem>>, %arg14: memref<1x16xf32, #tpu.memory_space<vmem>>, %arg15: memref<1x16x16xf32, #tpu.memory_space<vmem>>) attributes {dimension_semantics = [#tpu.dimension_semantics<parallel>], iteration_bounds = array<i64: 2>, scalar_prefetch = 0 : i64, scratch_operands = 0 : i64, tpu.core_type = #tpu.core_type<tc>, window_params = [{transform_indices = @transform_0, window_bounds = array<i64: 1, 16, 144>}, {pipeline_mode = #tpu.pipeline_mode<synchronous>, transform_indices = @transform_1, window_bounds = array<i64: 1, 144>}, {pipeline_mode = #tpu.pipeline_mode<synchronous>, transform_indices = @transform_2, window_bounds = array<i64: 1, 144>}, {pipeline_mode = #tpu.pipeline_mode<synchronous>, transform_indices = @transform_3, window_bounds = array<i64: 3, 144, 16>}, {pipeline_mode = #tpu.pipeline_mode<synchronous>, transform_indices = @transform_4, window_bounds = array<i64: 3, 1, 16>}, {pipeline_mode = #tpu.pipeline_mode<synchronous>, transform_indices = @transform_5, window_bounds = array<i64: 16, 8>}, {pipeline_mode = #tpu.pipeline_mode<synchronous>, transform_indices = @transform_6, window_bounds = array<i64: 16, 16>}, {pipeline_mode = #tpu.pipeline_mode<synchronous>, transform_indices = @transform_7, window_bounds = array<i64: 1, 16>}, {pipeline_mode = #tpu.pipeline_mode<synchronous>, transform_indices = @transform_8, window_bounds = array<i64: 1, 16>}, {pipeline_mode = #tpu.pipeline_mode<synchronous>, transform_indices = @transform_9, window_bounds = array<i64: 1, 16>}, {pipeline_mode = #tpu.pipeline_mode<synchronous>, transform_indices = @transform_10, window_bounds = array<i64: 16, 16>}, {pipeline_mode = #tpu.pipeline_mode<synchronous>, transform_indices = @transform_11, window_bounds = array<i64: 1, 16>}, {pipeline_mode = #tpu.pipeline_mode<synchronous>, transform_indices = @transform_12, window_bounds = array<i64: 16, 16>}, {pipeline_mode = #tpu.pipeline_mode<synchronous>, transform_indices = @transform_13, window_bounds = array<i64: 1, 16>}, {transform_indices = @transform_14, window_bounds = array<i64: 1, 16, 16>}]} {
    %c0 = arith.constant 0 : index
    %c0_0 = arith.constant 0 : index
    %c0_1 = arith.constant 0 : index
    %0 = vector.load %arg1[%c0, %c0_0, %c0_1] : memref<1x16x144xf32, #tpu.memory_space<vmem>>, vector<1x16x144xf32>
    %1 = vector.shape_cast %0 : vector<1x16x144xf32> to vector<16x144xf32>
    %c0_2 = arith.constant 0 : index
    %c0_3 = arith.constant 0 : index
    %2 = vector.load %arg2[%c0_2, %c0_3] : memref<1x144xf32, #tpu.memory_space<vmem>>, vector<1x144xf32>
    %c0_4 = arith.constant 0 : index
    %c0_5 = arith.constant 0 : index
    %3 = vector.load %arg3[%c0_4, %c0_5] : memref<1x144xf32, #tpu.memory_space<vmem>>, vector<1x144xf32>
    %cst = arith.constant dense<0.000000e+00> : vector<16xf32>
    %4 = vector.multi_reduction <add>, %1, %cst [1] : vector<16x144xf32> to vector<16xf32>
    %5 = vector.shape_cast %4 : vector<16xf32> to vector<16x1xf32>
    %cst_6 = arith.constant 1.440000e+02 : f32
    %6 = vector.broadcast %cst_6 : f32 to vector<16x1xf32>
    %7 = arith.divf %5, %6 : vector<16x1xf32>
    %8 = vector.broadcast %7 : vector<16x1xf32> to vector<16x144xf32>
    %9 = arith.subf %1, %8 : vector<16x144xf32>
    %10 = arith.mulf %9, %9 : vector<16x144xf32>
    %cst_7 = arith.constant dense<0.000000e+00> : vector<16xf32>
    %11 = vector.multi_reduction <add>, %10, %cst_7 [1] : vector<16x144xf32> to vector<16xf32>
    %12 = vector.shape_cast %11 : vector<16xf32> to vector<16x1xf32>
    %cst_8 = arith.constant 1.440000e+02 : f32
    %13 = vector.broadcast %cst_8 : f32 to vector<16x1xf32>
    %14 = arith.divf %12, %13 : vector<16x1xf32>
    %cst_9 = arith.constant 9.99999974E-6 : f32
    %15 = vector.broadcast %cst_9 : f32 to vector<16x1xf32>
    %16 = arith.addf %14, %15 : vector<16x1xf32>
    %17 = math.rsqrt %16 : vector<16x1xf32>
    %18 = vector.broadcast %17 : vector<16x1xf32> to vector<16x144xf32>
    %19 = arith.mulf %9, %18 : vector<16x144xf32>
    %20 = vector.broadcast %2 : vector<1x144xf32> to vector<16x144xf32>
    %21 = arith.mulf %19, %20 : vector<16x144xf32>
    %22 = vector.broadcast %3 : vector<1x144xf32> to vector<16x144xf32>
    %23 = arith.addf %21, %22 : vector<16x144xf32>
    %24 = arith.truncf %23 : vector<16x144xf32> to vector<16x144xbf16>
    %c0_10 = arith.constant 0 : index
    %c0_11 = arith.constant 0 : index
    %c0_12 = arith.constant 0 : index
    %25 = vector.load %arg4[%c0_10, %c0_11, %c0_12] : memref<3x144x16xbf16, #tpu.memory_space<vmem>>, vector<1x144x16xbf16>
    %26 = vector.shape_cast %25 : vector<1x144x16xbf16> to vector<144x16xbf16>
    %cst_13 = arith.constant dense<0.000000e+00> : vector<16x16xf32>
    %27 = tpu.matmul %24, %26, %cst_13 {dimension_numbers = #tpu.dot_dimension_numbers<[1], [0], [0], [1], [0, 0, 1, 1], [], []>} : vector<16x144xbf16>, vector<144x16xbf16>, vector<16x16xf32> -> vector<16x16xf32>
    %c0_14 = arith.constant 0 : index
    %c0_15 = arith.constant 0 : index
    %c0_16 = arith.constant 0 : index
    %28 = vector.load %arg5[%c0_14, %c0_15, %c0_16] : memref<3x1x16xf32, #tpu.memory_space<vmem>>, vector<1x1x16xf32>
    %29 = vector.shape_cast %28 : vector<1x1x16xf32> to vector<1x16xf32>
    %30 = vector.broadcast %29 : vector<1x16xf32> to vector<16x16xf32>
    %31 = arith.addf %27, %30 : vector<16x16xf32>
    %c1 = arith.constant 1 : index
    %c0_17 = arith.constant 0 : index
    %c0_18 = arith.constant 0 : index
    %32 = vector.load %arg4[%c1, %c0_17, %c0_18] : memref<3x144x16xbf16, #tpu.memory_space<vmem>>, vector<1x144x16xbf16>
    %33 = vector.shape_cast %32 : vector<1x144x16xbf16> to vector<144x16xbf16>
    %cst_19 = arith.constant dense<0.000000e+00> : vector<16x16xf32>
    %34 = tpu.matmul %24, %33, %cst_19 {dimension_numbers = #tpu.dot_dimension_numbers<[1], [0], [0], [1], [0, 0, 1, 1], [], []>} : vector<16x144xbf16>, vector<144x16xbf16>, vector<16x16xf32> -> vector<16x16xf32>
    %c1_20 = arith.constant 1 : index
    %c0_21 = arith.constant 0 : index
    %c0_22 = arith.constant 0 : index
    %35 = vector.load %arg5[%c1_20, %c0_21, %c0_22] : memref<3x1x16xf32, #tpu.memory_space<vmem>>, vector<1x1x16xf32>
    %36 = vector.shape_cast %35 : vector<1x1x16xf32> to vector<1x16xf32>
    %37 = vector.broadcast %36 : vector<1x16xf32> to vector<16x16xf32>
    %38 = arith.addf %34, %37 : vector<16x16xf32>
    %c2 = arith.constant 2 : index
    %c0_23 = arith.constant 0 : index
    %c0_24 = arith.constant 0 : index
    %39 = vector.load %arg4[%c2, %c0_23, %c0_24] : memref<3x144x16xbf16, #tpu.memory_space<vmem>>, vector<1x144x16xbf16>
    %40 = vector.shape_cast %39 : vector<1x144x16xbf16> to vector<144x16xbf16>
    %cst_25 = arith.constant dense<0.000000e+00> : vector<16x16xf32>
    %41 = tpu.matmul %24, %40, %cst_25 {dimension_numbers = #tpu.dot_dimension_numbers<[1], [0], [0], [1], [0, 0, 1, 1], [], []>} : vector<16x144xbf16>, vector<144x16xbf16>, vector<16x16xf32> -> vector<16x16xf32>
    %c2_26 = arith.constant 2 : index
    %c0_27 = arith.constant 0 : index
    %c0_28 = arith.constant 0 : index
    %42 = vector.load %arg5[%c2_26, %c0_27, %c0_28] : memref<3x1x16xf32, #tpu.memory_space<vmem>>, vector<1x1x16xf32>
    %43 = vector.shape_cast %42 : vector<1x1x16xf32> to vector<1x16xf32>
    %44 = vector.broadcast %43 : vector<1x16xf32> to vector<16x16xf32>
    %45 = arith.addf %41, %44 : vector<16x16xf32>
    %c0_29 = arith.constant 0 : index
    %c0_30 = arith.constant 0 : index
    %46 = vector.load %arg6[%c0_29, %c0_30] : memref<16x8xf32, #tpu.memory_space<vmem>>, vector<16x8xf32>
    %47 = arith.mulf %31, %31 : vector<16x16xf32>
    %cst_31 = arith.constant dense<0.000000e+00> : vector<16xf32>
    %48 = vector.multi_reduction <add>, %47, %cst_31 [1] : vector<16x16xf32> to vector<16xf32>
    %49 = vector.shape_cast %48 : vector<16xf32> to vector<16x1xf32>
    %cst_32 = arith.constant 5.000000e-01 : f32
    %50 = vector.broadcast %cst_32 : f32 to vector<16x1xf32>
    %51 = arith.mulf %50, %49 : vector<16x1xf32>
    %52 = arith.mulf %38, %38 : vector<16x16xf32>
    %cst_33 = arith.constant dense<0.000000e+00> : vector<16xf32>
    %53 = vector.multi_reduction <add>, %52, %cst_33 [1] : vector<16x16xf32> to vector<16xf32>
    %54 = vector.shape_cast %53 : vector<16xf32> to vector<16x1xf32>
    %cst_34 = arith.constant 5.000000e-01 : f32
    %55 = vector.broadcast %cst_34 : f32 to vector<16x1xf32>
    %56 = arith.mulf %55, %54 : vector<16x1xf32>
    %cst_35 = arith.constant dense<0.000000e+00> : vector<16x8xf32>
    %57 = tpu.matmul %31, %46, %cst_35 {dimension_numbers = #tpu.dot_dimension_numbers<[1], [0], [0], [1], [0, 0, 1, 1], [], []>} : vector<16x16xf32>, vector<16x8xf32>, vector<16x8xf32> -> vector<16x8xf32>
    %58 = vector.broadcast %51 : vector<16x1xf32> to vector<16x8xf32>
    %59 = arith.subf %57, %58 : vector<16x8xf32>
    %60 = math.exp %59 : vector<16x8xf32>
    %cst_36 = arith.constant 0.353553385 : f32
    %61 = vector.broadcast %cst_36 : f32 to vector<16x8xf32>
    %62 = arith.mulf %60, %61 : vector<16x8xf32>
    %cst_37 = arith.constant dense<0.000000e+00> : vector<16x8xf32>
    %63 = tpu.matmul %38, %46, %cst_37 {dimension_numbers = #tpu.dot_dimension_numbers<[1], [0], [0], [1], [0, 0, 1, 1], [], []>} : vector<16x16xf32>, vector<16x8xf32>, vector<16x8xf32> -> vector<16x8xf32>
    %64 = vector.broadcast %56 : vector<16x1xf32> to vector<16x8xf32>
    %65 = arith.subf %63, %64 : vector<16x8xf32>
    %66 = math.exp %65 : vector<16x8xf32>
    %cst_38 = arith.constant 0.353553385 : f32
    %67 = vector.broadcast %cst_38 : f32 to vector<16x8xf32>
    %68 = arith.mulf %66, %67 : vector<16x8xf32>
    %cst_39 = arith.constant dense<0.000000e+00> : vector<8xf32>
    %69 = vector.multi_reduction <add>, %62, %cst_39 [0] : vector<16x8xf32> to vector<8xf32>
    %70 = vector.shape_cast %69 : vector<8xf32> to vector<1x8xf32>
    %71 = vector.broadcast %70 : vector<1x8xf32> to vector<16x8xf32>
    %72 = arith.mulf %68, %71 : vector<16x8xf32>
    %cst_40 = arith.constant dense<0.000000e+00> : vector<16xf32>
    %73 = vector.multi_reduction <add>, %72, %cst_40 [1] : vector<16x8xf32> to vector<16xf32>
    %74 = vector.shape_cast %73 : vector<16xf32> to vector<16x1xf32>
    %cst_41 = arith.constant dense<0.000000e+00> : vector<16x8xf32>
    %75 = tpu.matmul %45, %62, %cst_41 {dimension_numbers = #tpu.dot_dimension_numbers<[0], [0], [1], [1], [0, 1, 1, 1], [], []>} : vector<16x16xf32>, vector<16x8xf32>, vector<16x8xf32> -> vector<16x8xf32>
    %cst_42 = arith.constant dense<0.000000e+00> : vector<16x16xf32>
    %76 = tpu.matmul %68, %75, %cst_42 {dimension_numbers = #tpu.dot_dimension_numbers<[1], [1], [0], [0], [0, 0, 1, 0], [], []>} : vector<16x8xf32>, vector<16x8xf32>, vector<16x16xf32> -> vector<16x16xf32>
    %cst_43 = arith.constant 9.99999993E-9 : f32
    %77 = vector.broadcast %cst_43 : f32 to vector<16x1xf32>
    %78 = arith.addf %74, %77 : vector<16x1xf32>
    %79 = tpu.reciprocal %78 {approx = true} : vector<16x1xf32> -> vector<16x1xf32>
    %80 = vector.broadcast %79 : vector<16x1xf32> to vector<16x16xf32>
    %81 = arith.mulf %76, %80 : vector<16x16xf32>
    %82 = arith.truncf %81 : vector<16x16xf32> to vector<16x16xbf16>
    %c0_44 = arith.constant 0 : index
    %c0_45 = arith.constant 0 : index
    %83 = vector.load %arg7[%c0_44, %c0_45] : memref<16x16xbf16, #tpu.memory_space<vmem>>, vector<16x16xbf16>
    %cst_46 = arith.constant dense<0.000000e+00> : vector<16x16xf32>
    %84 = tpu.matmul %82, %83, %cst_46 {dimension_numbers = #tpu.dot_dimension_numbers<[1], [0], [0], [1], [0, 0, 1, 1], [], []>} : vector<16x16xbf16>, vector<16x16xbf16>, vector<16x16xf32> -> vector<16x16xf32>
    %85 = arith.addf %45, %84 : vector<16x16xf32>
    %c0_47 = arith.constant 0 : index
    %c0_48 = arith.constant 0 : index
    %86 = vector.load %arg8[%c0_47, %c0_48] : memref<1x16xf32, #tpu.memory_space<vmem>>, vector<1x16xf32>
    %87 = vector.broadcast %86 : vector<1x16xf32> to vector<16x16xf32>
    %88 = arith.addf %85, %87 : vector<16x16xf32>
    %c0_49 = arith.constant 0 : index
    %c0_50 = arith.constant 0 : index
    %89 = vector.load %arg9[%c0_49, %c0_50] : memref<1x16xf32, #tpu.memory_space<vmem>>, vector<1x16xf32>
    %c0_51 = arith.constant 0 : index
    %c0_52 = arith.constant 0 : index
    %90 = vector.load %arg10[%c0_51, %c0_52] : memref<1x16xf32, #tpu.memory_space<vmem>>, vector<1x16xf32>
    %cst_53 = arith.constant dense<0.000000e+00> : vector<16xf32>
    %91 = vector.multi_reduction <add>, %88, %cst_53 [1] : vector<16x16xf32> to vector<16xf32>
    %92 = vector.shape_cast %91 : vector<16xf32> to vector<16x1xf32>
    %cst_54 = arith.constant 1.600000e+01 : f32
    %93 = vector.broadcast %cst_54 : f32 to vector<16x1xf32>
    %94 = arith.divf %92, %93 : vector<16x1xf32>
    %95 = vector.broadcast %94 : vector<16x1xf32> to vector<16x16xf32>
    %96 = arith.subf %88, %95 : vector<16x16xf32>
    %97 = arith.mulf %96, %96 : vector<16x16xf32>
    %cst_55 = arith.constant dense<0.000000e+00> : vector<16xf32>
    %98 = vector.multi_reduction <add>, %97, %cst_55 [1] : vector<16x16xf32> to vector<16xf32>
    %99 = vector.shape_cast %98 : vector<16xf32> to vector<16x1xf32>
    %cst_56 = arith.constant 1.600000e+01 : f32
    %100 = vector.broadcast %cst_56 : f32 to vector<16x1xf32>
    %101 = arith.divf %99, %100 : vector<16x1xf32>
    %cst_57 = arith.constant 9.99999974E-6 : f32
    %102 = vector.broadcast %cst_57 : f32 to vector<16x1xf32>
    %103 = arith.addf %101, %102 : vector<16x1xf32>
    %104 = math.rsqrt %103 : vector<16x1xf32>
    %105 = vector.broadcast %104 : vector<16x1xf32> to vector<16x16xf32>
    %106 = arith.mulf %96, %105 : vector<16x16xf32>
    %107 = vector.broadcast %89 : vector<1x16xf32> to vector<16x16xf32>
    %108 = arith.mulf %106, %107 : vector<16x16xf32>
    %109 = vector.broadcast %90 : vector<1x16xf32> to vector<16x16xf32>
    %110 = arith.addf %108, %109 : vector<16x16xf32>
    %111 = arith.truncf %110 : vector<16x16xf32> to vector<16x16xbf16>
    %c0_58 = arith.constant 0 : index
    %c0_59 = arith.constant 0 : index
    %112 = vector.load %arg11[%c0_58, %c0_59] : memref<16x16xbf16, #tpu.memory_space<vmem>>, vector<16x16xbf16>
    %cst_60 = arith.constant dense<0.000000e+00> : vector<16x16xf32>
    %113 = tpu.matmul %111, %112, %cst_60 {dimension_numbers = #tpu.dot_dimension_numbers<[1], [0], [0], [1], [0, 0, 1, 1], [], []>} : vector<16x16xbf16>, vector<16x16xbf16>, vector<16x16xf32> -> vector<16x16xf32>
    %c0_61 = arith.constant 0 : index
    %c0_62 = arith.constant 0 : index
    %114 = vector.load %arg12[%c0_61, %c0_62] : memref<1x16xf32, #tpu.memory_space<vmem>>, vector<1x16xf32>
    %115 = vector.broadcast %114 : vector<1x16xf32> to vector<16x16xf32>
    %116 = arith.addf %113, %115 : vector<16x16xf32>
    %cst_63 = arith.constant 5.000000e-01 : f32
    %117 = vector.broadcast %cst_63 : f32 to vector<16x16xf32>
    %118 = arith.mulf %117, %116 : vector<16x16xf32>
    %cst_64 = arith.constant 4.471500e-02 : f32
    %119 = vector.broadcast %cst_64 : f32 to vector<16x16xf32>
    %120 = arith.mulf %119, %116 : vector<16x16xf32>
    %121 = arith.mulf %120, %116 : vector<16x16xf32>
    %122 = arith.mulf %121, %116 : vector<16x16xf32>
    %123 = arith.addf %116, %122 : vector<16x16xf32>
    %cst_65 = arith.constant 0.797884583 : f32
    %124 = vector.broadcast %cst_65 : f32 to vector<16x16xf32>
    %125 = arith.mulf %124, %123 : vector<16x16xf32>
    %126 = math.tanh %125 : vector<16x16xf32>
    %cst_66 = arith.constant 1.000000e+00 : f32
    %127 = vector.broadcast %cst_66 : f32 to vector<16x16xf32>
    %128 = arith.addf %127, %126 : vector<16x16xf32>
    %129 = arith.mulf %118, %128 : vector<16x16xf32>
    %130 = arith.truncf %129 : vector<16x16xf32> to vector<16x16xbf16>
    %c0_67 = arith.constant 0 : index
    %c0_68 = arith.constant 0 : index
    %131 = vector.load %arg13[%c0_67, %c0_68] : memref<16x16xbf16, #tpu.memory_space<vmem>>, vector<16x16xbf16>
    %cst_69 = arith.constant dense<0.000000e+00> : vector<16x16xf32>
    %132 = tpu.matmul %130, %131, %cst_69 {dimension_numbers = #tpu.dot_dimension_numbers<[1], [0], [0], [1], [0, 0, 1, 1], [], []>} : vector<16x16xbf16>, vector<16x16xbf16>, vector<16x16xf32> -> vector<16x16xf32>
    %c0_70 = arith.constant 0 : index
    %c0_71 = arith.constant 0 : index
    %133 = vector.load %arg14[%c0_70, %c0_71] : memref<1x16xf32, #tpu.memory_space<vmem>>, vector<1x16xf32>
    %134 = vector.broadcast %133 : vector<1x16xf32> to vector<16x16xf32>
    %135 = arith.addf %132, %134 : vector<16x16xf32>
    %136 = arith.addf %88, %135 : vector<16x16xf32>
    %c0_72 = arith.constant 0 : index
    %c0_73 = arith.constant 0 : index
    %c0_74 = arith.constant 0 : index
    %137 = vector.load %arg15[%c0_72, %c0_73, %c0_74] : memref<1x16x16xf32, #tpu.memory_space<vmem>>, vector<1x16x16xf32>
    %138 = vector.shape_cast %137 : vector<1x16x16xf32> to vector<16x16xf32>
    %139 = vector.shape_cast %136 : vector<16x16xf32> to vector<1x16x16xf32>
    tpu.vector_store %arg15[%c0_72, %c0_73, %c0_74], %139 {strides = array<i32>} : memref<1x16x16xf32, #tpu.memory_space<vmem>>, vector<1x16x16xf32>,
    return
  }
  func.func @transform_0(%arg0: i32) -> (i32, i32, i32) {
    %c0_i32 = arith.constant 0 : i32
    %c0_i32_0 = arith.constant 0 : i32
    %c0_i32_1 = arith.constant 0 : i32
    return %arg0, %c0_i32, %c0_i32_0 : i32, i32, i32
  }
  func.func @transform_1(%arg0: i32) -> (i32, i32) {
    %c0_i32 = arith.constant 0 : i32
    %c0_i32_0 = arith.constant 0 : i32
    %c0_i32_1 = arith.constant 0 : i32
    return %c0_i32, %c0_i32_0 : i32, i32
  }
  func.func @transform_2(%arg0: i32) -> (i32, i32) {
    %c0_i32 = arith.constant 0 : i32
    %c0_i32_0 = arith.constant 0 : i32
    %c0_i32_1 = arith.constant 0 : i32
    return %c0_i32, %c0_i32_0 : i32, i32
  }
  func.func @transform_3(%arg0: i32) -> (i32, i32, i32) {
    %c0_i32 = arith.constant 0 : i32
    %c0_i32_0 = arith.constant 0 : i32
    %c0_i32_1 = arith.constant 0 : i32
    %c0_i32_2 = arith.constant 0 : i32
    return %c0_i32, %c0_i32_0, %c0_i32_1 : i32, i32, i32
  }
  func.func @transform_4(%arg0: i32) -> (i32, i32, i32) {
    %c0_i32 = arith.constant 0 : i32
    %c0_i32_0 = arith.constant 0 : i32
    %c0_i32_1 = arith.constant 0 : i32
    %c0_i32_2 = arith.constant 0 : i32
    return %c0_i32, %c0_i32_0, %c0_i32_1 : i32, i32, i32
  }
  func.func @transform_5(%arg0: i32) -> (i32, i32) {
    %c0_i32 = arith.constant 0 : i32
    %c0_i32_0 = arith.constant 0 : i32
    %c0_i32_1 = arith.constant 0 : i32
    return %c0_i32, %c0_i32_0 : i32, i32
  }
  func.func @transform_6(%arg0: i32) -> (i32, i32) {
    %c0_i32 = arith.constant 0 : i32
    %c0_i32_0 = arith.constant 0 : i32
    %c0_i32_1 = arith.constant 0 : i32
    return %c0_i32, %c0_i32_0 : i32, i32
  }
  func.func @transform_7(%arg0: i32) -> (i32, i32) {
    %c0_i32 = arith.constant 0 : i32
    %c0_i32_0 = arith.constant 0 : i32
    %c0_i32_1 = arith.constant 0 : i32
    return %c0_i32, %c0_i32_0 : i32, i32
  }
  func.func @transform_8(%arg0: i32) -> (i32, i32) {
    %c0_i32 = arith.constant 0 : i32
    %c0_i32_0 = arith.constant 0 : i32
    %c0_i32_1 = arith.constant 0 : i32
    return %c0_i32, %c0_i32_0 : i32, i32
  }
  func.func @transform_9(%arg0: i32) -> (i32, i32) {
    %c0_i32 = arith.constant 0 : i32
    %c0_i32_0 = arith.constant 0 : i32
    %c0_i32_1 = arith.constant 0 : i32
    return %c0_i32, %c0_i32_0 : i32, i32
  }
  func.func @transform_10(%arg0: i32) -> (i32, i32) {
    %c0_i32 = arith.constant 0 : i32
    %c0_i32_0 = arith.constant 0 : i32
    %c0_i32_1 = arith.constant 0 : i32
    return %c0_i32, %c0_i32_0 : i32, i32
  }
  func.func @transform_11(%arg0: i32) -> (i32, i32) {
    %c0_i32 = arith.constant 0 : i32
    %c0_i32_0 = arith.constant 0 : i32
    %c0_i32_1 = arith.constant 0 : i32
    return %c0_i32, %c0_i32_0 : i32, i32
  }
  func.func @transform_12(%arg0: i32) -> (i32, i32) {
    %c0_i32 = arith.constant 0 : i32
    %c0_i32_0 = arith.constant 0 : i32
    %c0_i32_1 = arith.constant 0 : i32
    return %c0_i32, %c0_i32_0 : i32, i32
  }
  func.func @transform_13(%arg0: i32) -> (i32, i32) {
    %c0_i32 = arith.constant 0 : i32
    %c0_i32_0 = arith.constant 0 : i32
    %c0_i32_1 = arith.constant 0 : i32
    return %c0_i32, %c0_i32_0 : i32, i32
  }
  func.func @transform_14(%arg0: i32) -> (i32, i32, i32) {
    %c0_i32 = arith.constant 0 : i32
    %c0_i32_0 = arith.constant 0 : i32
    %c0_i32_1 = arith.constant 0 : i32
    return %arg0, %c0_i32, %c0_i32_0 : i32, i32, i32
  }
}

module attributes {stable_mosaic.version = 11 : i64} {
  func.func @_vit_block_kernel(%arg0: i32, %arg1: memref<1x5x64xf32, #tpu.memory_space<vmem>>, %arg2: memref<1x64xf32, #tpu.memory_space<vmem>>, %arg3: memref<1x64xf32, #tpu.memory_space<vmem>>, %arg4: memref<12x64x16xbf16, #tpu.memory_space<vmem>>, %arg5: memref<4x16x64xbf16, #tpu.memory_space<vmem>>, %arg6: memref<1x64xf32, #tpu.memory_space<vmem>>, %arg7: memref<1x64xf32, #tpu.memory_space<vmem>>, %arg8: memref<1x64xf32, #tpu.memory_space<vmem>>, %arg9: memref<64x256xbf16, #tpu.memory_space<vmem>>, %arg10: memref<1x256xf32, #tpu.memory_space<vmem>>, %arg11: memref<256x64xbf16, #tpu.memory_space<vmem>>, %arg12: memref<1x64xf32, #tpu.memory_space<vmem>>, %arg13: memref<1x64xf32, #tpu.memory_space<vmem>>, %arg14: memref<1x64xf32, #tpu.memory_space<vmem>>, %arg15: memref<64x10xbf16, #tpu.memory_space<vmem>>, %arg16: memref<1x10xf32, #tpu.memory_space<vmem>>, %arg17: memref<1x5x64xf32, #tpu.memory_space<vmem>>, %arg18: memref<1x1x10xf32, #tpu.memory_space<vmem>>) attributes {dimension_semantics = [#tpu.dimension_semantics<parallel>], iteration_bounds = array<i64: 2>, scalar_prefetch = 0 : i64, scratch_operands = 0 : i64, tpu.core_type = #tpu.core_type<tc>, window_params = [{transform_indices = @transform_0, window_bounds = array<i64: 1, 5, 64>}, {pipeline_mode = #tpu.pipeline_mode<synchronous>, transform_indices = @transform_1, window_bounds = array<i64: 1, 64>}, {pipeline_mode = #tpu.pipeline_mode<synchronous>, transform_indices = @transform_2, window_bounds = array<i64: 1, 64>}, {pipeline_mode = #tpu.pipeline_mode<synchronous>, transform_indices = @transform_3, window_bounds = array<i64: 12, 64, 16>}, {pipeline_mode = #tpu.pipeline_mode<synchronous>, transform_indices = @transform_4, window_bounds = array<i64: 4, 16, 64>}, {pipeline_mode = #tpu.pipeline_mode<synchronous>, transform_indices = @transform_5, window_bounds = array<i64: 1, 64>}, {pipeline_mode = #tpu.pipeline_mode<synchronous>, transform_indices = @transform_6, window_bounds = array<i64: 1, 64>}, {pipeline_mode = #tpu.pipeline_mode<synchronous>, transform_indices = @transform_7, window_bounds = array<i64: 1, 64>}, {pipeline_mode = #tpu.pipeline_mode<synchronous>, transform_indices = @transform_8, window_bounds = array<i64: 64, 256>}, {pipeline_mode = #tpu.pipeline_mode<synchronous>, transform_indices = @transform_9, window_bounds = array<i64: 1, 256>}, {pipeline_mode = #tpu.pipeline_mode<synchronous>, transform_indices = @transform_10, window_bounds = array<i64: 256, 64>}, {pipeline_mode = #tpu.pipeline_mode<synchronous>, transform_indices = @transform_11, window_bounds = array<i64: 1, 64>}, {pipeline_mode = #tpu.pipeline_mode<synchronous>, transform_indices = @transform_12, window_bounds = array<i64: 1, 64>}, {pipeline_mode = #tpu.pipeline_mode<synchronous>, transform_indices = @transform_13, window_bounds = array<i64: 1, 64>}, {pipeline_mode = #tpu.pipeline_mode<synchronous>, transform_indices = @transform_14, window_bounds = array<i64: 64, 10>}, {pipeline_mode = #tpu.pipeline_mode<synchronous>, transform_indices = @transform_15, window_bounds = array<i64: 1, 10>}, {transform_indices = @transform_16, window_bounds = array<i64: 1, 5, 64>}, {transform_indices = @transform_17, window_bounds = array<i64: 1, 1, 10>}]} {
    %c0 = arith.constant 0 : index
    %c0_0 = arith.constant 0 : index
    %c0_1 = arith.constant 0 : index
    %0 = vector.load %arg1[%c0, %c0_0, %c0_1] : memref<1x5x64xf32, #tpu.memory_space<vmem>>, vector<1x5x64xf32>
    %1 = vector.shape_cast %0 : vector<1x5x64xf32> to vector<5x64xf32>
    %c0_2 = arith.constant 0 : index
    %c0_3 = arith.constant 0 : index
    %2 = vector.load %arg2[%c0_2, %c0_3] : memref<1x64xf32, #tpu.memory_space<vmem>>, vector<1x64xf32>
    %c0_4 = arith.constant 0 : index
    %c0_5 = arith.constant 0 : index
    %3 = vector.load %arg3[%c0_4, %c0_5] : memref<1x64xf32, #tpu.memory_space<vmem>>, vector<1x64xf32>
    %cst = arith.constant dense<0.000000e+00> : vector<5xf32>
    %4 = vector.multi_reduction <add>, %1, %cst [1] : vector<5x64xf32> to vector<5xf32>
    %5 = vector.shape_cast %4 : vector<5xf32> to vector<5x1xf32>
    %cst_6 = arith.constant 6.400000e+01 : f32
    %6 = vector.broadcast %cst_6 : f32 to vector<5x1xf32>
    %7 = arith.divf %5, %6 : vector<5x1xf32>
    %8 = vector.broadcast %7 : vector<5x1xf32> to vector<5x64xf32>
    %9 = arith.subf %1, %8 : vector<5x64xf32>
    %10 = arith.mulf %9, %9 : vector<5x64xf32>
    %cst_7 = arith.constant dense<0.000000e+00> : vector<5xf32>
    %11 = vector.multi_reduction <add>, %10, %cst_7 [1] : vector<5x64xf32> to vector<5xf32>
    %12 = vector.shape_cast %11 : vector<5xf32> to vector<5x1xf32>
    %cst_8 = arith.constant 6.400000e+01 : f32
    %13 = vector.broadcast %cst_8 : f32 to vector<5x1xf32>
    %14 = arith.divf %12, %13 : vector<5x1xf32>
    %cst_9 = arith.constant 9.99999974E-6 : f32
    %15 = vector.broadcast %cst_9 : f32 to vector<5x1xf32>
    %16 = arith.addf %14, %15 : vector<5x1xf32>
    %17 = math.rsqrt %16 : vector<5x1xf32>
    %18 = vector.broadcast %17 : vector<5x1xf32> to vector<5x64xf32>
    %19 = arith.mulf %9, %18 : vector<5x64xf32>
    %20 = vector.broadcast %2 : vector<1x64xf32> to vector<5x64xf32>
    %21 = arith.mulf %19, %20 : vector<5x64xf32>
    %22 = vector.broadcast %3 : vector<1x64xf32> to vector<5x64xf32>
    %23 = arith.addf %21, %22 : vector<5x64xf32>
    %24 = arith.truncf %23 : vector<5x64xf32> to vector<5x64xbf16>
    %cst_10 = arith.constant 0.000000e+00 : f32
    %25 = vector.broadcast %cst_10 : f32 to vector<5x64xf32>
    %c0_11 = arith.constant 0 : index
    %c0_12 = arith.constant 0 : index
    %c0_13 = arith.constant 0 : index
    %26 = vector.load %arg4[%c0_11, %c0_12, %c0_13] : memref<12x64x16xbf16, #tpu.memory_space<vmem>>, vector<1x64x16xbf16>
    %27 = vector.shape_cast %26 : vector<1x64x16xbf16> to vector<64x16xbf16>
    %cst_14 = arith.constant dense<0.000000e+00> : vector<5x16xf32>
    %28 = tpu.matmul %24, %27, %cst_14 {dimension_numbers = #tpu.dot_dimension_numbers<[1], [0], [0], [1], [0, 0, 1, 1], [], []>} : vector<5x64xbf16>, vector<64x16xbf16>, vector<5x16xf32> -> vector<5x16xf32>
    %c4 = arith.constant 4 : index
    %c0_15 = arith.constant 0 : index
    %c0_16 = arith.constant 0 : index
    %29 = vector.load %arg4[%c4, %c0_15, %c0_16] : memref<12x64x16xbf16, #tpu.memory_space<vmem>>, vector<1x64x16xbf16>
    %30 = vector.shape_cast %29 : vector<1x64x16xbf16> to vector<64x16xbf16>
    %cst_17 = arith.constant dense<0.000000e+00> : vector<5x16xf32>
    %31 = tpu.matmul %24, %30, %cst_17 {dimension_numbers = #tpu.dot_dimension_numbers<[1], [0], [0], [1], [0, 0, 1, 1], [], []>} : vector<5x64xbf16>, vector<64x16xbf16>, vector<5x16xf32> -> vector<5x16xf32>
    %c8 = arith.constant 8 : index
    %c0_18 = arith.constant 0 : index
    %c0_19 = arith.constant 0 : index
    %32 = vector.load %arg4[%c8, %c0_18, %c0_19] : memref<12x64x16xbf16, #tpu.memory_space<vmem>>, vector<1x64x16xbf16>
    %33 = vector.shape_cast %32 : vector<1x64x16xbf16> to vector<64x16xbf16>
    %cst_20 = arith.constant dense<0.000000e+00> : vector<5x16xf32>
    %34 = tpu.matmul %24, %33, %cst_20 {dimension_numbers = #tpu.dot_dimension_numbers<[1], [0], [0], [1], [0, 0, 1, 1], [], []>} : vector<5x64xbf16>, vector<64x16xbf16>, vector<5x16xf32> -> vector<5x16xf32>
    %cst_21 = arith.constant dense<0.000000e+00> : vector<5x5xf32>
    %35 = tpu.matmul %28, %31, %cst_21 {dimension_numbers = #tpu.dot_dimension_numbers<[1], [1], [0], [0], [0, 0, 1, 0], [], []>} : vector<5x16xf32>, vector<5x16xf32>, vector<5x5xf32> -> vector<5x5xf32>
    %cst_22 = arith.constant 2.500000e-01 : f32
    %36 = vector.broadcast %cst_22 : f32 to vector<5x5xf32>
    %37 = arith.mulf %35, %36 : vector<5x5xf32>
    %cst_23 = arith.constant dense<0xFF800000> : vector<5xf32>
    %38 = vector.multi_reduction <maximumf>, %37, %cst_23 [1] : vector<5x5xf32> to vector<5xf32>
    %39 = vector.shape_cast %38 : vector<5xf32> to vector<5x1xf32>
    %40 = vector.broadcast %39 : vector<5x1xf32> to vector<5x5xf32>
    %41 = arith.subf %37, %40 : vector<5x5xf32>
    %42 = math.exp %41 : vector<5x5xf32>
    %cst_24 = arith.constant dense<0.000000e+00> : vector<5xf32>
    %43 = vector.multi_reduction <add>, %42, %cst_24 [1] : vector<5x5xf32> to vector<5xf32>
    %44 = vector.shape_cast %43 : vector<5xf32> to vector<5x1xf32>
    %45 = tpu.reciprocal %44 {approx = true} : vector<5x1xf32> -> vector<5x1xf32>
    %46 = vector.broadcast %45 : vector<5x1xf32> to vector<5x5xf32>
    %47 = arith.mulf %42, %46 : vector<5x5xf32>
    %48 = arith.truncf %47 : vector<5x5xf32> to vector<5x5xbf16>
    %49 = arith.truncf %34 : vector<5x16xf32> to vector<5x16xbf16>
    %cst_25 = arith.constant dense<0.000000e+00> : vector<5x16xf32>
    %50 = tpu.matmul %48, %49, %cst_25 {dimension_numbers = #tpu.dot_dimension_numbers<[1], [0], [0], [1], [0, 0, 1, 1], [], []>} : vector<5x5xbf16>, vector<5x16xbf16>, vector<5x16xf32> -> vector<5x16xf32>
    %51 = arith.truncf %50 : vector<5x16xf32> to vector<5x16xbf16>
    %c0_26 = arith.constant 0 : index
    %c0_27 = arith.constant 0 : index
    %c0_28 = arith.constant 0 : index
    %52 = vector.load %arg5[%c0_26, %c0_27, %c0_28] : memref<4x16x64xbf16, #tpu.memory_space<vmem>>, vector<1x16x64xbf16>
    %53 = vector.shape_cast %52 : vector<1x16x64xbf16> to vector<16x64xbf16>
    %cst_29 = arith.constant dense<0.000000e+00> : vector<5x64xf32>
    %54 = tpu.matmul %51, %53, %cst_29 {dimension_numbers = #tpu.dot_dimension_numbers<[1], [0], [0], [1], [0, 0, 1, 1], [], []>} : vector<5x16xbf16>, vector<16x64xbf16>, vector<5x64xf32> -> vector<5x64xf32>
    %55 = arith.addf %25, %54 : vector<5x64xf32>
    %c1 = arith.constant 1 : index
    %c0_30 = arith.constant 0 : index
    %c0_31 = arith.constant 0 : index
    %56 = vector.load %arg4[%c1, %c0_30, %c0_31] : memref<12x64x16xbf16, #tpu.memory_space<vmem>>, vector<1x64x16xbf16>
    %57 = vector.shape_cast %56 : vector<1x64x16xbf16> to vector<64x16xbf16>
    %cst_32 = arith.constant dense<0.000000e+00> : vector<5x16xf32>
    %58 = tpu.matmul %24, %57, %cst_32 {dimension_numbers = #tpu.dot_dimension_numbers<[1], [0], [0], [1], [0, 0, 1, 1], [], []>} : vector<5x64xbf16>, vector<64x16xbf16>, vector<5x16xf32> -> vector<5x16xf32>
    %c5 = arith.constant 5 : index
    %c0_33 = arith.constant 0 : index
    %c0_34 = arith.constant 0 : index
    %59 = vector.load %arg4[%c5, %c0_33, %c0_34] : memref<12x64x16xbf16, #tpu.memory_space<vmem>>, vector<1x64x16xbf16>
    %60 = vector.shape_cast %59 : vector<1x64x16xbf16> to vector<64x16xbf16>
    %cst_35 = arith.constant dense<0.000000e+00> : vector<5x16xf32>
    %61 = tpu.matmul %24, %60, %cst_35 {dimension_numbers = #tpu.dot_dimension_numbers<[1], [0], [0], [1], [0, 0, 1, 1], [], []>} : vector<5x64xbf16>, vector<64x16xbf16>, vector<5x16xf32> -> vector<5x16xf32>
    %c9 = arith.constant 9 : index
    %c0_36 = arith.constant 0 : index
    %c0_37 = arith.constant 0 : index
    %62 = vector.load %arg4[%c9, %c0_36, %c0_37] : memref<12x64x16xbf16, #tpu.memory_space<vmem>>, vector<1x64x16xbf16>
    %63 = vector.shape_cast %62 : vector<1x64x16xbf16> to vector<64x16xbf16>
    %cst_38 = arith.constant dense<0.000000e+00> : vector<5x16xf32>
    %64 = tpu.matmul %24, %63, %cst_38 {dimension_numbers = #tpu.dot_dimension_numbers<[1], [0], [0], [1], [0, 0, 1, 1], [], []>} : vector<5x64xbf16>, vector<64x16xbf16>, vector<5x16xf32> -> vector<5x16xf32>
    %cst_39 = arith.constant dense<0.000000e+00> : vector<5x5xf32>
    %65 = tpu.matmul %58, %61, %cst_39 {dimension_numbers = #tpu.dot_dimension_numbers<[1], [1], [0], [0], [0, 0, 1, 0], [], []>} : vector<5x16xf32>, vector<5x16xf32>, vector<5x5xf32> -> vector<5x5xf32>
    %cst_40 = arith.constant 2.500000e-01 : f32
    %66 = vector.broadcast %cst_40 : f32 to vector<5x5xf32>
    %67 = arith.mulf %65, %66 : vector<5x5xf32>
    %cst_41 = arith.constant dense<0xFF800000> : vector<5xf32>
    %68 = vector.multi_reduction <maximumf>, %67, %cst_41 [1] : vector<5x5xf32> to vector<5xf32>
    %69 = vector.shape_cast %68 : vector<5xf32> to vector<5x1xf32>
    %70 = vector.broadcast %69 : vector<5x1xf32> to vector<5x5xf32>
    %71 = arith.subf %67, %70 : vector<5x5xf32>
    %72 = math.exp %71 : vector<5x5xf32>
    %cst_42 = arith.constant dense<0.000000e+00> : vector<5xf32>
    %73 = vector.multi_reduction <add>, %72, %cst_42 [1] : vector<5x5xf32> to vector<5xf32>
    %74 = vector.shape_cast %73 : vector<5xf32> to vector<5x1xf32>
    %75 = tpu.reciprocal %74 {approx = true} : vector<5x1xf32> -> vector<5x1xf32>
    %76 = vector.broadcast %75 : vector<5x1xf32> to vector<5x5xf32>
    %77 = arith.mulf %72, %76 : vector<5x5xf32>
    %78 = arith.truncf %77 : vector<5x5xf32> to vector<5x5xbf16>
    %79 = arith.truncf %64 : vector<5x16xf32> to vector<5x16xbf16>
    %cst_43 = arith.constant dense<0.000000e+00> : vector<5x16xf32>
    %80 = tpu.matmul %78, %79, %cst_43 {dimension_numbers = #tpu.dot_dimension_numbers<[1], [0], [0], [1], [0, 0, 1, 1], [], []>} : vector<5x5xbf16>, vector<5x16xbf16>, vector<5x16xf32> -> vector<5x16xf32>
    %81 = arith.truncf %80 : vector<5x16xf32> to vector<5x16xbf16>
    %c1_44 = arith.constant 1 : index
    %c0_45 = arith.constant 0 : index
    %c0_46 = arith.constant 0 : index
    %82 = vector.load %arg5[%c1_44, %c0_45, %c0_46] : memref<4x16x64xbf16, #tpu.memory_space<vmem>>, vector<1x16x64xbf16>
    %83 = vector.shape_cast %82 : vector<1x16x64xbf16> to vector<16x64xbf16>
    %cst_47 = arith.constant dense<0.000000e+00> : vector<5x64xf32>
    %84 = tpu.matmul %81, %83, %cst_47 {dimension_numbers = #tpu.dot_dimension_numbers<[1], [0], [0], [1], [0, 0, 1, 1], [], []>} : vector<5x16xbf16>, vector<16x64xbf16>, vector<5x64xf32> -> vector<5x64xf32>
    %85 = arith.addf %55, %84 : vector<5x64xf32>
    %c2 = arith.constant 2 : index
    %c0_48 = arith.constant 0 : index
    %c0_49 = arith.constant 0 : index
    %86 = vector.load %arg4[%c2, %c0_48, %c0_49] : memref<12x64x16xbf16, #tpu.memory_space<vmem>>, vector<1x64x16xbf16>
    %87 = vector.shape_cast %86 : vector<1x64x16xbf16> to vector<64x16xbf16>
    %cst_50 = arith.constant dense<0.000000e+00> : vector<5x16xf32>
    %88 = tpu.matmul %24, %87, %cst_50 {dimension_numbers = #tpu.dot_dimension_numbers<[1], [0], [0], [1], [0, 0, 1, 1], [], []>} : vector<5x64xbf16>, vector<64x16xbf16>, vector<5x16xf32> -> vector<5x16xf32>
    %c6 = arith.constant 6 : index
    %c0_51 = arith.constant 0 : index
    %c0_52 = arith.constant 0 : index
    %89 = vector.load %arg4[%c6, %c0_51, %c0_52] : memref<12x64x16xbf16, #tpu.memory_space<vmem>>, vector<1x64x16xbf16>
    %90 = vector.shape_cast %89 : vector<1x64x16xbf16> to vector<64x16xbf16>
    %cst_53 = arith.constant dense<0.000000e+00> : vector<5x16xf32>
    %91 = tpu.matmul %24, %90, %cst_53 {dimension_numbers = #tpu.dot_dimension_numbers<[1], [0], [0], [1], [0, 0, 1, 1], [], []>} : vector<5x64xbf16>, vector<64x16xbf16>, vector<5x16xf32> -> vector<5x16xf32>
    %c10 = arith.constant 10 : index
    %c0_54 = arith.constant 0 : index
    %c0_55 = arith.constant 0 : index
    %92 = vector.load %arg4[%c10, %c0_54, %c0_55] : memref<12x64x16xbf16, #tpu.memory_space<vmem>>, vector<1x64x16xbf16>
    %93 = vector.shape_cast %92 : vector<1x64x16xbf16> to vector<64x16xbf16>
    %cst_56 = arith.constant dense<0.000000e+00> : vector<5x16xf32>
    %94 = tpu.matmul %24, %93, %cst_56 {dimension_numbers = #tpu.dot_dimension_numbers<[1], [0], [0], [1], [0, 0, 1, 1], [], []>} : vector<5x64xbf16>, vector<64x16xbf16>, vector<5x16xf32> -> vector<5x16xf32>
    %cst_57 = arith.constant dense<0.000000e+00> : vector<5x5xf32>
    %95 = tpu.matmul %88, %91, %cst_57 {dimension_numbers = #tpu.dot_dimension_numbers<[1], [1], [0], [0], [0, 0, 1, 0], [], []>} : vector<5x16xf32>, vector<5x16xf32>, vector<5x5xf32> -> vector<5x5xf32>
    %cst_58 = arith.constant 2.500000e-01 : f32
    %96 = vector.broadcast %cst_58 : f32 to vector<5x5xf32>
    %97 = arith.mulf %95, %96 : vector<5x5xf32>
    %cst_59 = arith.constant dense<0xFF800000> : vector<5xf32>
    %98 = vector.multi_reduction <maximumf>, %97, %cst_59 [1] : vector<5x5xf32> to vector<5xf32>
    %99 = vector.shape_cast %98 : vector<5xf32> to vector<5x1xf32>
    %100 = vector.broadcast %99 : vector<5x1xf32> to vector<5x5xf32>
    %101 = arith.subf %97, %100 : vector<5x5xf32>
    %102 = math.exp %101 : vector<5x5xf32>
    %cst_60 = arith.constant dense<0.000000e+00> : vector<5xf32>
    %103 = vector.multi_reduction <add>, %102, %cst_60 [1] : vector<5x5xf32> to vector<5xf32>
    %104 = vector.shape_cast %103 : vector<5xf32> to vector<5x1xf32>
    %105 = tpu.reciprocal %104 {approx = true} : vector<5x1xf32> -> vector<5x1xf32>
    %106 = vector.broadcast %105 : vector<5x1xf32> to vector<5x5xf32>
    %107 = arith.mulf %102, %106 : vector<5x5xf32>
    %108 = arith.truncf %107 : vector<5x5xf32> to vector<5x5xbf16>
    %109 = arith.truncf %94 : vector<5x16xf32> to vector<5x16xbf16>
    %cst_61 = arith.constant dense<0.000000e+00> : vector<5x16xf32>
    %110 = tpu.matmul %108, %109, %cst_61 {dimension_numbers = #tpu.dot_dimension_numbers<[1], [0], [0], [1], [0, 0, 1, 1], [], []>} : vector<5x5xbf16>, vector<5x16xbf16>, vector<5x16xf32> -> vector<5x16xf32>
    %111 = arith.truncf %110 : vector<5x16xf32> to vector<5x16xbf16>
    %c2_62 = arith.constant 2 : index
    %c0_63 = arith.constant 0 : index
    %c0_64 = arith.constant 0 : index
    %112 = vector.load %arg5[%c2_62, %c0_63, %c0_64] : memref<4x16x64xbf16, #tpu.memory_space<vmem>>, vector<1x16x64xbf16>
    %113 = vector.shape_cast %112 : vector<1x16x64xbf16> to vector<16x64xbf16>
    %cst_65 = arith.constant dense<0.000000e+00> : vector<5x64xf32>
    %114 = tpu.matmul %111, %113, %cst_65 {dimension_numbers = #tpu.dot_dimension_numbers<[1], [0], [0], [1], [0, 0, 1, 1], [], []>} : vector<5x16xbf16>, vector<16x64xbf16>, vector<5x64xf32> -> vector<5x64xf32>
    %115 = arith.addf %85, %114 : vector<5x64xf32>
    %c3 = arith.constant 3 : index
    %c0_66 = arith.constant 0 : index
    %c0_67 = arith.constant 0 : index
    %116 = vector.load %arg4[%c3, %c0_66, %c0_67] : memref<12x64x16xbf16, #tpu.memory_space<vmem>>, vector<1x64x16xbf16>
    %117 = vector.shape_cast %116 : vector<1x64x16xbf16> to vector<64x16xbf16>
    %cst_68 = arith.constant dense<0.000000e+00> : vector<5x16xf32>
    %118 = tpu.matmul %24, %117, %cst_68 {dimension_numbers = #tpu.dot_dimension_numbers<[1], [0], [0], [1], [0, 0, 1, 1], [], []>} : vector<5x64xbf16>, vector<64x16xbf16>, vector<5x16xf32> -> vector<5x16xf32>
    %c7 = arith.constant 7 : index
    %c0_69 = arith.constant 0 : index
    %c0_70 = arith.constant 0 : index
    %119 = vector.load %arg4[%c7, %c0_69, %c0_70] : memref<12x64x16xbf16, #tpu.memory_space<vmem>>, vector<1x64x16xbf16>
    %120 = vector.shape_cast %119 : vector<1x64x16xbf16> to vector<64x16xbf16>
    %cst_71 = arith.constant dense<0.000000e+00> : vector<5x16xf32>
    %121 = tpu.matmul %24, %120, %cst_71 {dimension_numbers = #tpu.dot_dimension_numbers<[1], [0], [0], [1], [0, 0, 1, 1], [], []>} : vector<5x64xbf16>, vector<64x16xbf16>, vector<5x16xf32> -> vector<5x16xf32>
    %c11 = arith.constant 11 : index
    %c0_72 = arith.constant 0 : index
    %c0_73 = arith.constant 0 : index
    %122 = vector.load %arg4[%c11, %c0_72, %c0_73] : memref<12x64x16xbf16, #tpu.memory_space<vmem>>, vector<1x64x16xbf16>
    %123 = vector.shape_cast %122 : vector<1x64x16xbf16> to vector<64x16xbf16>
    %cst_74 = arith.constant dense<0.000000e+00> : vector<5x16xf32>
    %124 = tpu.matmul %24, %123, %cst_74 {dimension_numbers = #tpu.dot_dimension_numbers<[1], [0], [0], [1], [0, 0, 1, 1], [], []>} : vector<5x64xbf16>, vector<64x16xbf16>, vector<5x16xf32> -> vector<5x16xf32>
    %cst_75 = arith.constant dense<0.000000e+00> : vector<5x5xf32>
    %125 = tpu.matmul %118, %121, %cst_75 {dimension_numbers = #tpu.dot_dimension_numbers<[1], [1], [0], [0], [0, 0, 1, 0], [], []>} : vector<5x16xf32>, vector<5x16xf32>, vector<5x5xf32> -> vector<5x5xf32>
    %cst_76 = arith.constant 2.500000e-01 : f32
    %126 = vector.broadcast %cst_76 : f32 to vector<5x5xf32>
    %127 = arith.mulf %125, %126 : vector<5x5xf32>
    %cst_77 = arith.constant dense<0xFF800000> : vector<5xf32>
    %128 = vector.multi_reduction <maximumf>, %127, %cst_77 [1] : vector<5x5xf32> to vector<5xf32>
    %129 = vector.shape_cast %128 : vector<5xf32> to vector<5x1xf32>
    %130 = vector.broadcast %129 : vector<5x1xf32> to vector<5x5xf32>
    %131 = arith.subf %127, %130 : vector<5x5xf32>
    %132 = math.exp %131 : vector<5x5xf32>
    %cst_78 = arith.constant dense<0.000000e+00> : vector<5xf32>
    %133 = vector.multi_reduction <add>, %132, %cst_78 [1] : vector<5x5xf32> to vector<5xf32>
    %134 = vector.shape_cast %133 : vector<5xf32> to vector<5x1xf32>
    %135 = tpu.reciprocal %134 {approx = true} : vector<5x1xf32> -> vector<5x1xf32>
    %136 = vector.broadcast %135 : vector<5x1xf32> to vector<5x5xf32>
    %137 = arith.mulf %132, %136 : vector<5x5xf32>
    %138 = arith.truncf %137 : vector<5x5xf32> to vector<5x5xbf16>
    %139 = arith.truncf %124 : vector<5x16xf32> to vector<5x16xbf16>
    %cst_79 = arith.constant dense<0.000000e+00> : vector<5x16xf32>
    %140 = tpu.matmul %138, %139, %cst_79 {dimension_numbers = #tpu.dot_dimension_numbers<[1], [0], [0], [1], [0, 0, 1, 1], [], []>} : vector<5x5xbf16>, vector<5x16xbf16>, vector<5x16xf32> -> vector<5x16xf32>
    %141 = arith.truncf %140 : vector<5x16xf32> to vector<5x16xbf16>
    %c3_80 = arith.constant 3 : index
    %c0_81 = arith.constant 0 : index
    %c0_82 = arith.constant 0 : index
    %142 = vector.load %arg5[%c3_80, %c0_81, %c0_82] : memref<4x16x64xbf16, #tpu.memory_space<vmem>>, vector<1x16x64xbf16>
    %143 = vector.shape_cast %142 : vector<1x16x64xbf16> to vector<16x64xbf16>
    %cst_83 = arith.constant dense<0.000000e+00> : vector<5x64xf32>
    %144 = tpu.matmul %141, %143, %cst_83 {dimension_numbers = #tpu.dot_dimension_numbers<[1], [0], [0], [1], [0, 0, 1, 1], [], []>} : vector<5x16xbf16>, vector<16x64xbf16>, vector<5x64xf32> -> vector<5x64xf32>
    %145 = arith.addf %115, %144 : vector<5x64xf32>
    %146 = arith.addf %1, %145 : vector<5x64xf32>
    %c0_84 = arith.constant 0 : index
    %c0_85 = arith.constant 0 : index
    %147 = vector.load %arg6[%c0_84, %c0_85] : memref<1x64xf32, #tpu.memory_space<vmem>>, vector<1x64xf32>
    %148 = vector.broadcast %147 : vector<1x64xf32> to vector<5x64xf32>
    %149 = arith.addf %146, %148 : vector<5x64xf32>
    %c0_86 = arith.constant 0 : index
    %c0_87 = arith.constant 0 : index
    %150 = vector.load %arg7[%c0_86, %c0_87] : memref<1x64xf32, #tpu.memory_space<vmem>>, vector<1x64xf32>
    %c0_88 = arith.constant 0 : index
    %c0_89 = arith.constant 0 : index
    %151 = vector.load %arg8[%c0_88, %c0_89] : memref<1x64xf32, #tpu.memory_space<vmem>>, vector<1x64xf32>
    %cst_90 = arith.constant dense<0.000000e+00> : vector<5xf32>
    %152 = vector.multi_reduction <add>, %149, %cst_90 [1] : vector<5x64xf32> to vector<5xf32>
    %153 = vector.shape_cast %152 : vector<5xf32> to vector<5x1xf32>
    %cst_91 = arith.constant 6.400000e+01 : f32
    %154 = vector.broadcast %cst_91 : f32 to vector<5x1xf32>
    %155 = arith.divf %153, %154 : vector<5x1xf32>
    %156 = vector.broadcast %155 : vector<5x1xf32> to vector<5x64xf32>
    %157 = arith.subf %149, %156 : vector<5x64xf32>
    %158 = arith.mulf %157, %157 : vector<5x64xf32>
    %cst_92 = arith.constant dense<0.000000e+00> : vector<5xf32>
    %159 = vector.multi_reduction <add>, %158, %cst_92 [1] : vector<5x64xf32> to vector<5xf32>
    %160 = vector.shape_cast %159 : vector<5xf32> to vector<5x1xf32>
    %cst_93 = arith.constant 6.400000e+01 : f32
    %161 = vector.broadcast %cst_93 : f32 to vector<5x1xf32>
    %162 = arith.divf %160, %161 : vector<5x1xf32>
    %cst_94 = arith.constant 9.99999974E-6 : f32
    %163 = vector.broadcast %cst_94 : f32 to vector<5x1xf32>
    %164 = arith.addf %162, %163 : vector<5x1xf32>
    %165 = math.rsqrt %164 : vector<5x1xf32>
    %166 = vector.broadcast %165 : vector<5x1xf32> to vector<5x64xf32>
    %167 = arith.mulf %157, %166 : vector<5x64xf32>
    %168 = vector.broadcast %150 : vector<1x64xf32> to vector<5x64xf32>
    %169 = arith.mulf %167, %168 : vector<5x64xf32>
    %170 = vector.broadcast %151 : vector<1x64xf32> to vector<5x64xf32>
    %171 = arith.addf %169, %170 : vector<5x64xf32>
    %172 = arith.truncf %171 : vector<5x64xf32> to vector<5x64xbf16>
    %c0_95 = arith.constant 0 : index
    %c0_96 = arith.constant 0 : index
    %173 = vector.load %arg9[%c0_95, %c0_96] : memref<64x256xbf16, #tpu.memory_space<vmem>>, vector<64x256xbf16>
    %cst_97 = arith.constant dense<0.000000e+00> : vector<5x256xf32>
    %174 = tpu.matmul %172, %173, %cst_97 {dimension_numbers = #tpu.dot_dimension_numbers<[1], [0], [0], [1], [0, 0, 1, 1], [], []>} : vector<5x64xbf16>, vector<64x256xbf16>, vector<5x256xf32> -> vector<5x256xf32>
    %c0_98 = arith.constant 0 : index
    %c0_99 = arith.constant 0 : index
    %175 = vector.load %arg10[%c0_98, %c0_99] : memref<1x256xf32, #tpu.memory_space<vmem>>, vector<1x256xf32>
    %176 = vector.broadcast %175 : vector<1x256xf32> to vector<5x256xf32>
    %177 = arith.addf %174, %176 : vector<5x256xf32>
    %cst_100 = arith.constant 5.000000e-01 : f32
    %178 = vector.broadcast %cst_100 : f32 to vector<5x256xf32>
    %179 = arith.mulf %178, %177 : vector<5x256xf32>
    %cst_101 = arith.constant 4.471500e-02 : f32
    %180 = vector.broadcast %cst_101 : f32 to vector<5x256xf32>
    %181 = arith.mulf %180, %177 : vector<5x256xf32>
    %182 = arith.mulf %181, %177 : vector<5x256xf32>
    %183 = arith.mulf %182, %177 : vector<5x256xf32>
    %184 = arith.addf %177, %183 : vector<5x256xf32>
    %cst_102 = arith.constant 0.797884583 : f32
    %185 = vector.broadcast %cst_102 : f32 to vector<5x256xf32>
    %186 = arith.mulf %185, %184 : vector<5x256xf32>
    %187 = math.tanh %186 : vector<5x256xf32>
    %cst_103 = arith.constant 1.000000e+00 : f32
    %188 = vector.broadcast %cst_103 : f32 to vector<5x256xf32>
    %189 = arith.addf %188, %187 : vector<5x256xf32>
    %190 = arith.mulf %179, %189 : vector<5x256xf32>
    %191 = arith.truncf %190 : vector<5x256xf32> to vector<5x256xbf16>
    %c0_104 = arith.constant 0 : index
    %c0_105 = arith.constant 0 : index
    %192 = vector.load %arg11[%c0_104, %c0_105] : memref<256x64xbf16, #tpu.memory_space<vmem>>, vector<256x64xbf16>
    %cst_106 = arith.constant dense<0.000000e+00> : vector<5x64xf32>
    %193 = tpu.matmul %191, %192, %cst_106 {dimension_numbers = #tpu.dot_dimension_numbers<[1], [0], [0], [1], [0, 0, 1, 1], [], []>} : vector<5x256xbf16>, vector<256x64xbf16>, vector<5x64xf32> -> vector<5x64xf32>
    %194 = arith.addf %149, %193 : vector<5x64xf32>
    %c0_107 = arith.constant 0 : index
    %c0_108 = arith.constant 0 : index
    %195 = vector.load %arg12[%c0_107, %c0_108] : memref<1x64xf32, #tpu.memory_space<vmem>>, vector<1x64xf32>
    %196 = vector.broadcast %195 : vector<1x64xf32> to vector<5x64xf32>
    %197 = arith.addf %194, %196 : vector<5x64xf32>
    %c0_109 = arith.constant 0 : index
    %c0_110 = arith.constant 0 : index
    %c0_111 = arith.constant 0 : index
    %198 = vector.load %arg17[%c0_109, %c0_110, %c0_111] : memref<1x5x64xf32, #tpu.memory_space<vmem>>, vector<1x5x64xf32>
    %199 = vector.shape_cast %198 : vector<1x5x64xf32> to vector<5x64xf32>
    %200 = vector.shape_cast %197 : vector<5x64xf32> to vector<1x5x64xf32>
    tpu.vector_store %arg17[%c0_109, %c0_110, %c0_111], %200 {strides = array<i32>} : memref<1x5x64xf32, #tpu.memory_space<vmem>>, vector<1x5x64xf32>,
    %201 = vector.extract_strided_slice %197 {offsets = [0, 0], sizes = [1, 64], strides = [1, 1]} : vector<5x64xf32> to vector<1x64xf32>
    %c0_112 = arith.constant 0 : index
    %c0_113 = arith.constant 0 : index
    %202 = vector.load %arg13[%c0_112, %c0_113] : memref<1x64xf32, #tpu.memory_space<vmem>>, vector<1x64xf32>
    %c0_114 = arith.constant 0 : index
    %c0_115 = arith.constant 0 : index
    %203 = vector.load %arg14[%c0_114, %c0_115] : memref<1x64xf32, #tpu.memory_space<vmem>>, vector<1x64xf32>
    %cst_116 = arith.constant dense<0.000000e+00> : vector<1xf32>
    %204 = vector.multi_reduction <add>, %201, %cst_116 [1] : vector<1x64xf32> to vector<1xf32>
    %205 = vector.shape_cast %204 : vector<1xf32> to vector<1x1xf32>
    %cst_117 = arith.constant 6.400000e+01 : f32
    %206 = vector.broadcast %cst_117 : f32 to vector<1x1xf32>
    %207 = arith.divf %205, %206 : vector<1x1xf32>
    %208 = vector.broadcast %207 : vector<1x1xf32> to vector<1x64xf32>
    %209 = arith.subf %201, %208 : vector<1x64xf32>
    %210 = arith.mulf %209, %209 : vector<1x64xf32>
    %cst_118 = arith.constant dense<0.000000e+00> : vector<1xf32>
    %211 = vector.multi_reduction <add>, %210, %cst_118 [1] : vector<1x64xf32> to vector<1xf32>
    %212 = vector.shape_cast %211 : vector<1xf32> to vector<1x1xf32>
    %cst_119 = arith.constant 6.400000e+01 : f32
    %213 = vector.broadcast %cst_119 : f32 to vector<1x1xf32>
    %214 = arith.divf %212, %213 : vector<1x1xf32>
    %cst_120 = arith.constant 9.99999974E-6 : f32
    %215 = vector.broadcast %cst_120 : f32 to vector<1x1xf32>
    %216 = arith.addf %214, %215 : vector<1x1xf32>
    %217 = math.rsqrt %216 : vector<1x1xf32>
    %218 = vector.broadcast %217 : vector<1x1xf32> to vector<1x64xf32>
    %219 = arith.mulf %209, %218 : vector<1x64xf32>
    %220 = arith.mulf %219, %202 : vector<1x64xf32>
    %221 = arith.addf %220, %203 : vector<1x64xf32>
    %222 = arith.truncf %221 : vector<1x64xf32> to vector<1x64xbf16>
    %c0_121 = arith.constant 0 : index
    %c0_122 = arith.constant 0 : index
    %223 = vector.load %arg15[%c0_121, %c0_122] : memref<64x10xbf16, #tpu.memory_space<vmem>>, vector<64x10xbf16>
    %cst_123 = arith.constant dense<0.000000e+00> : vector<1x10xf32>
    %224 = tpu.matmul %222, %223, %cst_123 {dimension_numbers = #tpu.dot_dimension_numbers<[1], [0], [0], [1], [0, 0, 1, 1], [], []>} : vector<1x64xbf16>, vector<64x10xbf16>, vector<1x10xf32> -> vector<1x10xf32>
    %c0_124 = arith.constant 0 : index
    %c0_125 = arith.constant 0 : index
    %225 = vector.load %arg16[%c0_124, %c0_125] : memref<1x10xf32, #tpu.memory_space<vmem>>, vector<1x10xf32>
    %226 = arith.addf %224, %225 : vector<1x10xf32>
    %c0_126 = arith.constant 0 : index
    %c0_127 = arith.constant 0 : index
    %c0_128 = arith.constant 0 : index
    %227 = vector.load %arg18[%c0_126, %c0_127, %c0_128] : memref<1x1x10xf32, #tpu.memory_space<vmem>>, vector<1x1x10xf32>
    %228 = vector.shape_cast %227 : vector<1x1x10xf32> to vector<1x10xf32>
    %229 = vector.shape_cast %226 : vector<1x10xf32> to vector<1x1x10xf32>
    tpu.vector_store %arg18[%c0_126, %c0_127, %c0_128], %229 {strides = array<i32>} : memref<1x1x10xf32, #tpu.memory_space<vmem>>, vector<1x1x10xf32>,
    return
  }
  func.func @transform_0(%arg0: i32) -> (i32, i32, i32) {
    %c0_i32 = arith.constant 0 : i32
    %c0_i32_0 = arith.constant 0 : i32
    %c0_i32_1 = arith.constant 0 : i32
    return %arg0, %c0_i32, %c0_i32_0 : i32, i32, i32
  }
  func.func @transform_1(%arg0: i32) -> (i32, i32) {
    %c0_i32 = arith.constant 0 : i32
    %c0_i32_0 = arith.constant 0 : i32
    %c0_i32_1 = arith.constant 0 : i32
    return %c0_i32, %c0_i32_0 : i32, i32
  }
  func.func @transform_2(%arg0: i32) -> (i32, i32) {
    %c0_i32 = arith.constant 0 : i32
    %c0_i32_0 = arith.constant 0 : i32
    %c0_i32_1 = arith.constant 0 : i32
    return %c0_i32, %c0_i32_0 : i32, i32
  }
  func.func @transform_3(%arg0: i32) -> (i32, i32, i32) {
    %c0_i32 = arith.constant 0 : i32
    %c0_i32_0 = arith.constant 0 : i32
    %c0_i32_1 = arith.constant 0 : i32
    %c0_i32_2 = arith.constant 0 : i32
    return %c0_i32, %c0_i32_0, %c0_i32_1 : i32, i32, i32
  }
  func.func @transform_4(%arg0: i32) -> (i32, i32, i32) {
    %c0_i32 = arith.constant 0 : i32
    %c0_i32_0 = arith.constant 0 : i32
    %c0_i32_1 = arith.constant 0 : i32
    %c0_i32_2 = arith.constant 0 : i32
    return %c0_i32, %c0_i32_0, %c0_i32_1 : i32, i32, i32
  }
  func.func @transform_5(%arg0: i32) -> (i32, i32) {
    %c0_i32 = arith.constant 0 : i32
    %c0_i32_0 = arith.constant 0 : i32
    %c0_i32_1 = arith.constant 0 : i32
    return %c0_i32, %c0_i32_0 : i32, i32
  }
  func.func @transform_6(%arg0: i32) -> (i32, i32) {
    %c0_i32 = arith.constant 0 : i32
    %c0_i32_0 = arith.constant 0 : i32
    %c0_i32_1 = arith.constant 0 : i32
    return %c0_i32, %c0_i32_0 : i32, i32
  }
  func.func @transform_7(%arg0: i32) -> (i32, i32) {
    %c0_i32 = arith.constant 0 : i32
    %c0_i32_0 = arith.constant 0 : i32
    %c0_i32_1 = arith.constant 0 : i32
    return %c0_i32, %c0_i32_0 : i32, i32
  }
  func.func @transform_8(%arg0: i32) -> (i32, i32) {
    %c0_i32 = arith.constant 0 : i32
    %c0_i32_0 = arith.constant 0 : i32
    %c0_i32_1 = arith.constant 0 : i32
    return %c0_i32, %c0_i32_0 : i32, i32
  }
  func.func @transform_9(%arg0: i32) -> (i32, i32) {
    %c0_i32 = arith.constant 0 : i32
    %c0_i32_0 = arith.constant 0 : i32
    %c0_i32_1 = arith.constant 0 : i32
    return %c0_i32, %c0_i32_0 : i32, i32
  }
  func.func @transform_10(%arg0: i32) -> (i32, i32) {
    %c0_i32 = arith.constant 0 : i32
    %c0_i32_0 = arith.constant 0 : i32
    %c0_i32_1 = arith.constant 0 : i32
    return %c0_i32, %c0_i32_0 : i32, i32
  }
  func.func @transform_11(%arg0: i32) -> (i32, i32) {
    %c0_i32 = arith.constant 0 : i32
    %c0_i32_0 = arith.constant 0 : i32
    %c0_i32_1 = arith.constant 0 : i32
    return %c0_i32, %c0_i32_0 : i32, i32
  }
  func.func @transform_12(%arg0: i32) -> (i32, i32) {
    %c0_i32 = arith.constant 0 : i32
    %c0_i32_0 = arith.constant 0 : i32
    %c0_i32_1 = arith.constant 0 : i32
    return %c0_i32, %c0_i32_0 : i32, i32
  }
  func.func @transform_13(%arg0: i32) -> (i32, i32) {
    %c0_i32 = arith.constant 0 : i32
    %c0_i32_0 = arith.constant 0 : i32
    %c0_i32_1 = arith.constant 0 : i32
    return %c0_i32, %c0_i32_0 : i32, i32
  }
  func.func @transform_14(%arg0: i32) -> (i32, i32) {
    %c0_i32 = arith.constant 0 : i32
    %c0_i32_0 = arith.constant 0 : i32
    %c0_i32_1 = arith.constant 0 : i32
    return %c0_i32, %c0_i32_0 : i32, i32
  }
  func.func @transform_15(%arg0: i32) -> (i32, i32) {
    %c0_i32 = arith.constant 0 : i32
    %c0_i32_0 = arith.constant 0 : i32
    %c0_i32_1 = arith.constant 0 : i32
    return %c0_i32, %c0_i32_0 : i32, i32
  }
  func.func @transform_16(%arg0: i32) -> (i32, i32, i32) {
    %c0_i32 = arith.constant 0 : i32
    %c0_i32_0 = arith.constant 0 : i32
    %c0_i32_1 = arith.constant 0 : i32
    return %arg0, %c0_i32, %c0_i32_0 : i32, i32, i32
  }
  func.func @transform_17(%arg0: i32) -> (i32, i32, i32) {
    %c0_i32 = arith.constant 0 : i32
    %c0_i32_0 = arith.constant 0 : i32
    %c0_i32_1 = arith.constant 0 : i32
    return %arg0, %c0_i32, %c0_i32_0 : i32, i32, i32
  }
}

module attributes {stable_mosaic.version = 11 : i64} {
  func.func @_vit_block_kernel(%arg0: i32, %arg1: memref<1x5x144xf32, #tpu.memory_space<vmem>>, %arg2: memref<144x64xbf16, #tpu.memory_space<vmem>>, %arg3: memref<1x5x64xf32, #tpu.memory_space<vmem>>, %arg4: memref<1x64xf32, #tpu.memory_space<vmem>>, %arg5: memref<1x64xf32, #tpu.memory_space<vmem>>, %arg6: memref<12x64x16xbf16, #tpu.memory_space<vmem>>, %arg7: memref<4x16x64xbf16, #tpu.memory_space<vmem>>, %arg8: memref<1x64xf32, #tpu.memory_space<vmem>>, %arg9: memref<1x64xf32, #tpu.memory_space<vmem>>, %arg10: memref<1x64xf32, #tpu.memory_space<vmem>>, %arg11: memref<64x256xbf16, #tpu.memory_space<vmem>>, %arg12: memref<1x256xf32, #tpu.memory_space<vmem>>, %arg13: memref<256x64xbf16, #tpu.memory_space<vmem>>, %arg14: memref<1x64xf32, #tpu.memory_space<vmem>>, %arg15: memref<1x5x64xf32, #tpu.memory_space<vmem>>) attributes {dimension_semantics = [#tpu.dimension_semantics<parallel>], iteration_bounds = array<i64: 2>, scalar_prefetch = 0 : i64, scratch_operands = 0 : i64, tpu.core_type = #tpu.core_type<tc>, window_params = [{transform_indices = @transform_0, window_bounds = array<i64: 1, 5, 144>}, {pipeline_mode = #tpu.pipeline_mode<synchronous>, transform_indices = @transform_1, window_bounds = array<i64: 144, 64>}, {pipeline_mode = #tpu.pipeline_mode<synchronous>, transform_indices = @transform_2, window_bounds = array<i64: 1, 5, 64>}, {pipeline_mode = #tpu.pipeline_mode<synchronous>, transform_indices = @transform_3, window_bounds = array<i64: 1, 64>}, {pipeline_mode = #tpu.pipeline_mode<synchronous>, transform_indices = @transform_4, window_bounds = array<i64: 1, 64>}, {pipeline_mode = #tpu.pipeline_mode<synchronous>, transform_indices = @transform_5, window_bounds = array<i64: 12, 64, 16>}, {pipeline_mode = #tpu.pipeline_mode<synchronous>, transform_indices = @transform_6, window_bounds = array<i64: 4, 16, 64>}, {pipeline_mode = #tpu.pipeline_mode<synchronous>, transform_indices = @transform_7, window_bounds = array<i64: 1, 64>}, {pipeline_mode = #tpu.pipeline_mode<synchronous>, transform_indices = @transform_8, window_bounds = array<i64: 1, 64>}, {pipeline_mode = #tpu.pipeline_mode<synchronous>, transform_indices = @transform_9, window_bounds = array<i64: 1, 64>}, {pipeline_mode = #tpu.pipeline_mode<synchronous>, transform_indices = @transform_10, window_bounds = array<i64: 64, 256>}, {pipeline_mode = #tpu.pipeline_mode<synchronous>, transform_indices = @transform_11, window_bounds = array<i64: 1, 256>}, {pipeline_mode = #tpu.pipeline_mode<synchronous>, transform_indices = @transform_12, window_bounds = array<i64: 256, 64>}, {pipeline_mode = #tpu.pipeline_mode<synchronous>, transform_indices = @transform_13, window_bounds = array<i64: 1, 64>}, {transform_indices = @transform_14, window_bounds = array<i64: 1, 5, 64>}]} {
    %c0 = arith.constant 0 : index
    %c0_0 = arith.constant 0 : index
    %c0_1 = arith.constant 0 : index
    %0 = vector.load %arg1[%c0, %c0_0, %c0_1] : memref<1x5x144xf32, #tpu.memory_space<vmem>>, vector<1x5x144xf32>
    %1 = vector.shape_cast %0 : vector<1x5x144xf32> to vector<5x144xf32>
    %2 = arith.truncf %1 : vector<5x144xf32> to vector<5x144xbf16>
    %c0_2 = arith.constant 0 : index
    %c0_3 = arith.constant 0 : index
    %3 = vector.load %arg2[%c0_2, %c0_3] : memref<144x64xbf16, #tpu.memory_space<vmem>>, vector<144x64xbf16>
    %cst = arith.constant dense<0.000000e+00> : vector<5x64xf32>
    %4 = tpu.matmul %2, %3, %cst {dimension_numbers = #tpu.dot_dimension_numbers<[1], [0], [0], [1], [0, 0, 1, 1], [], []>} : vector<5x144xbf16>, vector<144x64xbf16>, vector<5x64xf32> -> vector<5x64xf32>
    %c0_4 = arith.constant 0 : index
    %c0_5 = arith.constant 0 : index
    %c0_6 = arith.constant 0 : index
    %5 = vector.load %arg3[%c0_4, %c0_5, %c0_6] : memref<1x5x64xf32, #tpu.memory_space<vmem>>, vector<1x5x64xf32>
    %6 = vector.shape_cast %5 : vector<1x5x64xf32> to vector<5x64xf32>
    %7 = arith.addf %4, %6 : vector<5x64xf32>
    %c0_7 = arith.constant 0 : index
    %c0_8 = arith.constant 0 : index
    %8 = vector.load %arg4[%c0_7, %c0_8] : memref<1x64xf32, #tpu.memory_space<vmem>>, vector<1x64xf32>
    %c0_9 = arith.constant 0 : index
    %c0_10 = arith.constant 0 : index
    %9 = vector.load %arg5[%c0_9, %c0_10] : memref<1x64xf32, #tpu.memory_space<vmem>>, vector<1x64xf32>
    %cst_11 = arith.constant dense<0.000000e+00> : vector<5xf32>
    %10 = vector.multi_reduction <add>, %7, %cst_11 [1] : vector<5x64xf32> to vector<5xf32>
    %11 = vector.shape_cast %10 : vector<5xf32> to vector<5x1xf32>
    %cst_12 = arith.constant 6.400000e+01 : f32
    %12 = vector.broadcast %cst_12 : f32 to vector<5x1xf32>
    %13 = arith.divf %11, %12 : vector<5x1xf32>
    %14 = vector.broadcast %13 : vector<5x1xf32> to vector<5x64xf32>
    %15 = arith.subf %7, %14 : vector<5x64xf32>
    %16 = arith.mulf %15, %15 : vector<5x64xf32>
    %cst_13 = arith.constant dense<0.000000e+00> : vector<5xf32>
    %17 = vector.multi_reduction <add>, %16, %cst_13 [1] : vector<5x64xf32> to vector<5xf32>
    %18 = vector.shape_cast %17 : vector<5xf32> to vector<5x1xf32>
    %cst_14 = arith.constant 6.400000e+01 : f32
    %19 = vector.broadcast %cst_14 : f32 to vector<5x1xf32>
    %20 = arith.divf %18, %19 : vector<5x1xf32>
    %cst_15 = arith.constant 9.99999974E-6 : f32
    %21 = vector.broadcast %cst_15 : f32 to vector<5x1xf32>
    %22 = arith.addf %20, %21 : vector<5x1xf32>
    %23 = math.rsqrt %22 : vector<5x1xf32>
    %24 = vector.broadcast %23 : vector<5x1xf32> to vector<5x64xf32>
    %25 = arith.mulf %15, %24 : vector<5x64xf32>
    %26 = vector.broadcast %8 : vector<1x64xf32> to vector<5x64xf32>
    %27 = arith.mulf %25, %26 : vector<5x64xf32>
    %28 = vector.broadcast %9 : vector<1x64xf32> to vector<5x64xf32>
    %29 = arith.addf %27, %28 : vector<5x64xf32>
    %30 = arith.truncf %29 : vector<5x64xf32> to vector<5x64xbf16>
    %cst_16 = arith.constant 0.000000e+00 : f32
    %31 = vector.broadcast %cst_16 : f32 to vector<5x64xf32>
    %c0_17 = arith.constant 0 : index
    %c0_18 = arith.constant 0 : index
    %c0_19 = arith.constant 0 : index
    %32 = vector.load %arg6[%c0_17, %c0_18, %c0_19] : memref<12x64x16xbf16, #tpu.memory_space<vmem>>, vector<1x64x16xbf16>
    %33 = vector.shape_cast %32 : vector<1x64x16xbf16> to vector<64x16xbf16>
    %cst_20 = arith.constant dense<0.000000e+00> : vector<5x16xf32>
    %34 = tpu.matmul %30, %33, %cst_20 {dimension_numbers = #tpu.dot_dimension_numbers<[1], [0], [0], [1], [0, 0, 1, 1], [], []>} : vector<5x64xbf16>, vector<64x16xbf16>, vector<5x16xf32> -> vector<5x16xf32>
    %c4 = arith.constant 4 : index
    %c0_21 = arith.constant 0 : index
    %c0_22 = arith.constant 0 : index
    %35 = vector.load %arg6[%c4, %c0_21, %c0_22] : memref<12x64x16xbf16, #tpu.memory_space<vmem>>, vector<1x64x16xbf16>
    %36 = vector.shape_cast %35 : vector<1x64x16xbf16> to vector<64x16xbf16>
    %cst_23 = arith.constant dense<0.000000e+00> : vector<5x16xf32>
    %37 = tpu.matmul %30, %36, %cst_23 {dimension_numbers = #tpu.dot_dimension_numbers<[1], [0], [0], [1], [0, 0, 1, 1], [], []>} : vector<5x64xbf16>, vector<64x16xbf16>, vector<5x16xf32> -> vector<5x16xf32>
    %c8 = arith.constant 8 : index
    %c0_24 = arith.constant 0 : index
    %c0_25 = arith.constant 0 : index
    %38 = vector.load %arg6[%c8, %c0_24, %c0_25] : memref<12x64x16xbf16, #tpu.memory_space<vmem>>, vector<1x64x16xbf16>
    %39 = vector.shape_cast %38 : vector<1x64x16xbf16> to vector<64x16xbf16>
    %cst_26 = arith.constant dense<0.000000e+00> : vector<5x16xf32>
    %40 = tpu.matmul %30, %39, %cst_26 {dimension_numbers = #tpu.dot_dimension_numbers<[1], [0], [0], [1], [0, 0, 1, 1], [], []>} : vector<5x64xbf16>, vector<64x16xbf16>, vector<5x16xf32> -> vector<5x16xf32>
    %cst_27 = arith.constant dense<0.000000e+00> : vector<5x5xf32>
    %41 = tpu.matmul %34, %37, %cst_27 {dimension_numbers = #tpu.dot_dimension_numbers<[1], [1], [0], [0], [0, 0, 1, 0], [], []>} : vector<5x16xf32>, vector<5x16xf32>, vector<5x5xf32> -> vector<5x5xf32>
    %cst_28 = arith.constant 2.500000e-01 : f32
    %42 = vector.broadcast %cst_28 : f32 to vector<5x5xf32>
    %43 = arith.mulf %41, %42 : vector<5x5xf32>
    %cst_29 = arith.constant dense<0xFF800000> : vector<5xf32>
    %44 = vector.multi_reduction <maximumf>, %43, %cst_29 [1] : vector<5x5xf32> to vector<5xf32>
    %45 = vector.shape_cast %44 : vector<5xf32> to vector<5x1xf32>
    %46 = vector.broadcast %45 : vector<5x1xf32> to vector<5x5xf32>
    %47 = arith.subf %43, %46 : vector<5x5xf32>
    %48 = math.exp %47 : vector<5x5xf32>
    %cst_30 = arith.constant dense<0.000000e+00> : vector<5xf32>
    %49 = vector.multi_reduction <add>, %48, %cst_30 [1] : vector<5x5xf32> to vector<5xf32>
    %50 = vector.shape_cast %49 : vector<5xf32> to vector<5x1xf32>
    %51 = tpu.reciprocal %50 {approx = true} : vector<5x1xf32> -> vector<5x1xf32>
    %52 = vector.broadcast %51 : vector<5x1xf32> to vector<5x5xf32>
    %53 = arith.mulf %48, %52 : vector<5x5xf32>
    %54 = arith.truncf %53 : vector<5x5xf32> to vector<5x5xbf16>
    %55 = arith.truncf %40 : vector<5x16xf32> to vector<5x16xbf16>
    %cst_31 = arith.constant dense<0.000000e+00> : vector<5x16xf32>
    %56 = tpu.matmul %54, %55, %cst_31 {dimension_numbers = #tpu.dot_dimension_numbers<[1], [0], [0], [1], [0, 0, 1, 1], [], []>} : vector<5x5xbf16>, vector<5x16xbf16>, vector<5x16xf32> -> vector<5x16xf32>
    %57 = arith.truncf %56 : vector<5x16xf32> to vector<5x16xbf16>
    %c0_32 = arith.constant 0 : index
    %c0_33 = arith.constant 0 : index
    %c0_34 = arith.constant 0 : index
    %58 = vector.load %arg7[%c0_32, %c0_33, %c0_34] : memref<4x16x64xbf16, #tpu.memory_space<vmem>>, vector<1x16x64xbf16>
    %59 = vector.shape_cast %58 : vector<1x16x64xbf16> to vector<16x64xbf16>
    %cst_35 = arith.constant dense<0.000000e+00> : vector<5x64xf32>
    %60 = tpu.matmul %57, %59, %cst_35 {dimension_numbers = #tpu.dot_dimension_numbers<[1], [0], [0], [1], [0, 0, 1, 1], [], []>} : vector<5x16xbf16>, vector<16x64xbf16>, vector<5x64xf32> -> vector<5x64xf32>
    %61 = arith.addf %31, %60 : vector<5x64xf32>
    %c1 = arith.constant 1 : index
    %c0_36 = arith.constant 0 : index
    %c0_37 = arith.constant 0 : index
    %62 = vector.load %arg6[%c1, %c0_36, %c0_37] : memref<12x64x16xbf16, #tpu.memory_space<vmem>>, vector<1x64x16xbf16>
    %63 = vector.shape_cast %62 : vector<1x64x16xbf16> to vector<64x16xbf16>
    %cst_38 = arith.constant dense<0.000000e+00> : vector<5x16xf32>
    %64 = tpu.matmul %30, %63, %cst_38 {dimension_numbers = #tpu.dot_dimension_numbers<[1], [0], [0], [1], [0, 0, 1, 1], [], []>} : vector<5x64xbf16>, vector<64x16xbf16>, vector<5x16xf32> -> vector<5x16xf32>
    %c5 = arith.constant 5 : index
    %c0_39 = arith.constant 0 : index
    %c0_40 = arith.constant 0 : index
    %65 = vector.load %arg6[%c5, %c0_39, %c0_40] : memref<12x64x16xbf16, #tpu.memory_space<vmem>>, vector<1x64x16xbf16>
    %66 = vector.shape_cast %65 : vector<1x64x16xbf16> to vector<64x16xbf16>
    %cst_41 = arith.constant dense<0.000000e+00> : vector<5x16xf32>
    %67 = tpu.matmul %30, %66, %cst_41 {dimension_numbers = #tpu.dot_dimension_numbers<[1], [0], [0], [1], [0, 0, 1, 1], [], []>} : vector<5x64xbf16>, vector<64x16xbf16>, vector<5x16xf32> -> vector<5x16xf32>
    %c9 = arith.constant 9 : index
    %c0_42 = arith.constant 0 : index
    %c0_43 = arith.constant 0 : index
    %68 = vector.load %arg6[%c9, %c0_42, %c0_43] : memref<12x64x16xbf16, #tpu.memory_space<vmem>>, vector<1x64x16xbf16>
    %69 = vector.shape_cast %68 : vector<1x64x16xbf16> to vector<64x16xbf16>
    %cst_44 = arith.constant dense<0.000000e+00> : vector<5x16xf32>
    %70 = tpu.matmul %30, %69, %cst_44 {dimension_numbers = #tpu.dot_dimension_numbers<[1], [0], [0], [1], [0, 0, 1, 1], [], []>} : vector<5x64xbf16>, vector<64x16xbf16>, vector<5x16xf32> -> vector<5x16xf32>
    %cst_45 = arith.constant dense<0.000000e+00> : vector<5x5xf32>
    %71 = tpu.matmul %64, %67, %cst_45 {dimension_numbers = #tpu.dot_dimension_numbers<[1], [1], [0], [0], [0, 0, 1, 0], [], []>} : vector<5x16xf32>, vector<5x16xf32>, vector<5x5xf32> -> vector<5x5xf32>
    %cst_46 = arith.constant 2.500000e-01 : f32
    %72 = vector.broadcast %cst_46 : f32 to vector<5x5xf32>
    %73 = arith.mulf %71, %72 : vector<5x5xf32>
    %cst_47 = arith.constant dense<0xFF800000> : vector<5xf32>
    %74 = vector.multi_reduction <maximumf>, %73, %cst_47 [1] : vector<5x5xf32> to vector<5xf32>
    %75 = vector.shape_cast %74 : vector<5xf32> to vector<5x1xf32>
    %76 = vector.broadcast %75 : vector<5x1xf32> to vector<5x5xf32>
    %77 = arith.subf %73, %76 : vector<5x5xf32>
    %78 = math.exp %77 : vector<5x5xf32>
    %cst_48 = arith.constant dense<0.000000e+00> : vector<5xf32>
    %79 = vector.multi_reduction <add>, %78, %cst_48 [1] : vector<5x5xf32> to vector<5xf32>
    %80 = vector.shape_cast %79 : vector<5xf32> to vector<5x1xf32>
    %81 = tpu.reciprocal %80 {approx = true} : vector<5x1xf32> -> vector<5x1xf32>
    %82 = vector.broadcast %81 : vector<5x1xf32> to vector<5x5xf32>
    %83 = arith.mulf %78, %82 : vector<5x5xf32>
    %84 = arith.truncf %83 : vector<5x5xf32> to vector<5x5xbf16>
    %85 = arith.truncf %70 : vector<5x16xf32> to vector<5x16xbf16>
    %cst_49 = arith.constant dense<0.000000e+00> : vector<5x16xf32>
    %86 = tpu.matmul %84, %85, %cst_49 {dimension_numbers = #tpu.dot_dimension_numbers<[1], [0], [0], [1], [0, 0, 1, 1], [], []>} : vector<5x5xbf16>, vector<5x16xbf16>, vector<5x16xf32> -> vector<5x16xf32>
    %87 = arith.truncf %86 : vector<5x16xf32> to vector<5x16xbf16>
    %c1_50 = arith.constant 1 : index
    %c0_51 = arith.constant 0 : index
    %c0_52 = arith.constant 0 : index
    %88 = vector.load %arg7[%c1_50, %c0_51, %c0_52] : memref<4x16x64xbf16, #tpu.memory_space<vmem>>, vector<1x16x64xbf16>
    %89 = vector.shape_cast %88 : vector<1x16x64xbf16> to vector<16x64xbf16>
    %cst_53 = arith.constant dense<0.000000e+00> : vector<5x64xf32>
    %90 = tpu.matmul %87, %89, %cst_53 {dimension_numbers = #tpu.dot_dimension_numbers<[1], [0], [0], [1], [0, 0, 1, 1], [], []>} : vector<5x16xbf16>, vector<16x64xbf16>, vector<5x64xf32> -> vector<5x64xf32>
    %91 = arith.addf %61, %90 : vector<5x64xf32>
    %c2 = arith.constant 2 : index
    %c0_54 = arith.constant 0 : index
    %c0_55 = arith.constant 0 : index
    %92 = vector.load %arg6[%c2, %c0_54, %c0_55] : memref<12x64x16xbf16, #tpu.memory_space<vmem>>, vector<1x64x16xbf16>
    %93 = vector.shape_cast %92 : vector<1x64x16xbf16> to vector<64x16xbf16>
    %cst_56 = arith.constant dense<0.000000e+00> : vector<5x16xf32>
    %94 = tpu.matmul %30, %93, %cst_56 {dimension_numbers = #tpu.dot_dimension_numbers<[1], [0], [0], [1], [0, 0, 1, 1], [], []>} : vector<5x64xbf16>, vector<64x16xbf16>, vector<5x16xf32> -> vector<5x16xf32>
    %c6 = arith.constant 6 : index
    %c0_57 = arith.constant 0 : index
    %c0_58 = arith.constant 0 : index
    %95 = vector.load %arg6[%c6, %c0_57, %c0_58] : memref<12x64x16xbf16, #tpu.memory_space<vmem>>, vector<1x64x16xbf16>
    %96 = vector.shape_cast %95 : vector<1x64x16xbf16> to vector<64x16xbf16>
    %cst_59 = arith.constant dense<0.000000e+00> : vector<5x16xf32>
    %97 = tpu.matmul %30, %96, %cst_59 {dimension_numbers = #tpu.dot_dimension_numbers<[1], [0], [0], [1], [0, 0, 1, 1], [], []>} : vector<5x64xbf16>, vector<64x16xbf16>, vector<5x16xf32> -> vector<5x16xf32>
    %c10 = arith.constant 10 : index
    %c0_60 = arith.constant 0 : index
    %c0_61 = arith.constant 0 : index
    %98 = vector.load %arg6[%c10, %c0_60, %c0_61] : memref<12x64x16xbf16, #tpu.memory_space<vmem>>, vector<1x64x16xbf16>
    %99 = vector.shape_cast %98 : vector<1x64x16xbf16> to vector<64x16xbf16>
    %cst_62 = arith.constant dense<0.000000e+00> : vector<5x16xf32>
    %100 = tpu.matmul %30, %99, %cst_62 {dimension_numbers = #tpu.dot_dimension_numbers<[1], [0], [0], [1], [0, 0, 1, 1], [], []>} : vector<5x64xbf16>, vector<64x16xbf16>, vector<5x16xf32> -> vector<5x16xf32>
    %cst_63 = arith.constant dense<0.000000e+00> : vector<5x5xf32>
    %101 = tpu.matmul %94, %97, %cst_63 {dimension_numbers = #tpu.dot_dimension_numbers<[1], [1], [0], [0], [0, 0, 1, 0], [], []>} : vector<5x16xf32>, vector<5x16xf32>, vector<5x5xf32> -> vector<5x5xf32>
    %cst_64 = arith.constant 2.500000e-01 : f32
    %102 = vector.broadcast %cst_64 : f32 to vector<5x5xf32>
    %103 = arith.mulf %101, %102 : vector<5x5xf32>
    %cst_65 = arith.constant dense<0xFF800000> : vector<5xf32>
    %104 = vector.multi_reduction <maximumf>, %103, %cst_65 [1] : vector<5x5xf32> to vector<5xf32>
    %105 = vector.shape_cast %104 : vector<5xf32> to vector<5x1xf32>
    %106 = vector.broadcast %105 : vector<5x1xf32> to vector<5x5xf32>
    %107 = arith.subf %103, %106 : vector<5x5xf32>
    %108 = math.exp %107 : vector<5x5xf32>
    %cst_66 = arith.constant dense<0.000000e+00> : vector<5xf32>
    %109 = vector.multi_reduction <add>, %108, %cst_66 [1] : vector<5x5xf32> to vector<5xf32>
    %110 = vector.shape_cast %109 : vector<5xf32> to vector<5x1xf32>
    %111 = tpu.reciprocal %110 {approx = true} : vector<5x1xf32> -> vector<5x1xf32>
    %112 = vector.broadcast %111 : vector<5x1xf32> to vector<5x5xf32>
    %113 = arith.mulf %108, %112 : vector<5x5xf32>
    %114 = arith.truncf %113 : vector<5x5xf32> to vector<5x5xbf16>
    %115 = arith.truncf %100 : vector<5x16xf32> to vector<5x16xbf16>
    %cst_67 = arith.constant dense<0.000000e+00> : vector<5x16xf32>
    %116 = tpu.matmul %114, %115, %cst_67 {dimension_numbers = #tpu.dot_dimension_numbers<[1], [0], [0], [1], [0, 0, 1, 1], [], []>} : vector<5x5xbf16>, vector<5x16xbf16>, vector<5x16xf32> -> vector<5x16xf32>
    %117 = arith.truncf %116 : vector<5x16xf32> to vector<5x16xbf16>
    %c2_68 = arith.constant 2 : index
    %c0_69 = arith.constant 0 : index
    %c0_70 = arith.constant 0 : index
    %118 = vector.load %arg7[%c2_68, %c0_69, %c0_70] : memref<4x16x64xbf16, #tpu.memory_space<vmem>>, vector<1x16x64xbf16>
    %119 = vector.shape_cast %118 : vector<1x16x64xbf16> to vector<16x64xbf16>
    %cst_71 = arith.constant dense<0.000000e+00> : vector<5x64xf32>
    %120 = tpu.matmul %117, %119, %cst_71 {dimension_numbers = #tpu.dot_dimension_numbers<[1], [0], [0], [1], [0, 0, 1, 1], [], []>} : vector<5x16xbf16>, vector<16x64xbf16>, vector<5x64xf32> -> vector<5x64xf32>
    %121 = arith.addf %91, %120 : vector<5x64xf32>
    %c3 = arith.constant 3 : index
    %c0_72 = arith.constant 0 : index
    %c0_73 = arith.constant 0 : index
    %122 = vector.load %arg6[%c3, %c0_72, %c0_73] : memref<12x64x16xbf16, #tpu.memory_space<vmem>>, vector<1x64x16xbf16>
    %123 = vector.shape_cast %122 : vector<1x64x16xbf16> to vector<64x16xbf16>
    %cst_74 = arith.constant dense<0.000000e+00> : vector<5x16xf32>
    %124 = tpu.matmul %30, %123, %cst_74 {dimension_numbers = #tpu.dot_dimension_numbers<[1], [0], [0], [1], [0, 0, 1, 1], [], []>} : vector<5x64xbf16>, vector<64x16xbf16>, vector<5x16xf32> -> vector<5x16xf32>
    %c7 = arith.constant 7 : index
    %c0_75 = arith.constant 0 : index
    %c0_76 = arith.constant 0 : index
    %125 = vector.load %arg6[%c7, %c0_75, %c0_76] : memref<12x64x16xbf16, #tpu.memory_space<vmem>>, vector<1x64x16xbf16>
    %126 = vector.shape_cast %125 : vector<1x64x16xbf16> to vector<64x16xbf16>
    %cst_77 = arith.constant dense<0.000000e+00> : vector<5x16xf32>
    %127 = tpu.matmul %30, %126, %cst_77 {dimension_numbers = #tpu.dot_dimension_numbers<[1], [0], [0], [1], [0, 0, 1, 1], [], []>} : vector<5x64xbf16>, vector<64x16xbf16>, vector<5x16xf32> -> vector<5x16xf32>
    %c11 = arith.constant 11 : index
    %c0_78 = arith.constant 0 : index
    %c0_79 = arith.constant 0 : index
    %128 = vector.load %arg6[%c11, %c0_78, %c0_79] : memref<12x64x16xbf16, #tpu.memory_space<vmem>>, vector<1x64x16xbf16>
    %129 = vector.shape_cast %128 : vector<1x64x16xbf16> to vector<64x16xbf16>
    %cst_80 = arith.constant dense<0.000000e+00> : vector<5x16xf32>
    %130 = tpu.matmul %30, %129, %cst_80 {dimension_numbers = #tpu.dot_dimension_numbers<[1], [0], [0], [1], [0, 0, 1, 1], [], []>} : vector<5x64xbf16>, vector<64x16xbf16>, vector<5x16xf32> -> vector<5x16xf32>
    %cst_81 = arith.constant dense<0.000000e+00> : vector<5x5xf32>
    %131 = tpu.matmul %124, %127, %cst_81 {dimension_numbers = #tpu.dot_dimension_numbers<[1], [1], [0], [0], [0, 0, 1, 0], [], []>} : vector<5x16xf32>, vector<5x16xf32>, vector<5x5xf32> -> vector<5x5xf32>
    %cst_82 = arith.constant 2.500000e-01 : f32
    %132 = vector.broadcast %cst_82 : f32 to vector<5x5xf32>
    %133 = arith.mulf %131, %132 : vector<5x5xf32>
    %cst_83 = arith.constant dense<0xFF800000> : vector<5xf32>
    %134 = vector.multi_reduction <maximumf>, %133, %cst_83 [1] : vector<5x5xf32> to vector<5xf32>
    %135 = vector.shape_cast %134 : vector<5xf32> to vector<5x1xf32>
    %136 = vector.broadcast %135 : vector<5x1xf32> to vector<5x5xf32>
    %137 = arith.subf %133, %136 : vector<5x5xf32>
    %138 = math.exp %137 : vector<5x5xf32>
    %cst_84 = arith.constant dense<0.000000e+00> : vector<5xf32>
    %139 = vector.multi_reduction <add>, %138, %cst_84 [1] : vector<5x5xf32> to vector<5xf32>
    %140 = vector.shape_cast %139 : vector<5xf32> to vector<5x1xf32>
    %141 = tpu.reciprocal %140 {approx = true} : vector<5x1xf32> -> vector<5x1xf32>
    %142 = vector.broadcast %141 : vector<5x1xf32> to vector<5x5xf32>
    %143 = arith.mulf %138, %142 : vector<5x5xf32>
    %144 = arith.truncf %143 : vector<5x5xf32> to vector<5x5xbf16>
    %145 = arith.truncf %130 : vector<5x16xf32> to vector<5x16xbf16>
    %cst_85 = arith.constant dense<0.000000e+00> : vector<5x16xf32>
    %146 = tpu.matmul %144, %145, %cst_85 {dimension_numbers = #tpu.dot_dimension_numbers<[1], [0], [0], [1], [0, 0, 1, 1], [], []>} : vector<5x5xbf16>, vector<5x16xbf16>, vector<5x16xf32> -> vector<5x16xf32>
    %147 = arith.truncf %146 : vector<5x16xf32> to vector<5x16xbf16>
    %c3_86 = arith.constant 3 : index
    %c0_87 = arith.constant 0 : index
    %c0_88 = arith.constant 0 : index
    %148 = vector.load %arg7[%c3_86, %c0_87, %c0_88] : memref<4x16x64xbf16, #tpu.memory_space<vmem>>, vector<1x16x64xbf16>
    %149 = vector.shape_cast %148 : vector<1x16x64xbf16> to vector<16x64xbf16>
    %cst_89 = arith.constant dense<0.000000e+00> : vector<5x64xf32>
    %150 = tpu.matmul %147, %149, %cst_89 {dimension_numbers = #tpu.dot_dimension_numbers<[1], [0], [0], [1], [0, 0, 1, 1], [], []>} : vector<5x16xbf16>, vector<16x64xbf16>, vector<5x64xf32> -> vector<5x64xf32>
    %151 = arith.addf %121, %150 : vector<5x64xf32>
    %152 = arith.addf %7, %151 : vector<5x64xf32>
    %c0_90 = arith.constant 0 : index
    %c0_91 = arith.constant 0 : index
    %153 = vector.load %arg8[%c0_90, %c0_91] : memref<1x64xf32, #tpu.memory_space<vmem>>, vector<1x64xf32>
    %154 = vector.broadcast %153 : vector<1x64xf32> to vector<5x64xf32>
    %155 = arith.addf %152, %154 : vector<5x64xf32>
    %c0_92 = arith.constant 0 : index
    %c0_93 = arith.constant 0 : index
    %156 = vector.load %arg9[%c0_92, %c0_93] : memref<1x64xf32, #tpu.memory_space<vmem>>, vector<1x64xf32>
    %c0_94 = arith.constant 0 : index
    %c0_95 = arith.constant 0 : index
    %157 = vector.load %arg10[%c0_94, %c0_95] : memref<1x64xf32, #tpu.memory_space<vmem>>, vector<1x64xf32>
    %cst_96 = arith.constant dense<0.000000e+00> : vector<5xf32>
    %158 = vector.multi_reduction <add>, %155, %cst_96 [1] : vector<5x64xf32> to vector<5xf32>
    %159 = vector.shape_cast %158 : vector<5xf32> to vector<5x1xf32>
    %cst_97 = arith.constant 6.400000e+01 : f32
    %160 = vector.broadcast %cst_97 : f32 to vector<5x1xf32>
    %161 = arith.divf %159, %160 : vector<5x1xf32>
    %162 = vector.broadcast %161 : vector<5x1xf32> to vector<5x64xf32>
    %163 = arith.subf %155, %162 : vector<5x64xf32>
    %164 = arith.mulf %163, %163 : vector<5x64xf32>
    %cst_98 = arith.constant dense<0.000000e+00> : vector<5xf32>
    %165 = vector.multi_reduction <add>, %164, %cst_98 [1] : vector<5x64xf32> to vector<5xf32>
    %166 = vector.shape_cast %165 : vector<5xf32> to vector<5x1xf32>
    %cst_99 = arith.constant 6.400000e+01 : f32
    %167 = vector.broadcast %cst_99 : f32 to vector<5x1xf32>
    %168 = arith.divf %166, %167 : vector<5x1xf32>
    %cst_100 = arith.constant 9.99999974E-6 : f32
    %169 = vector.broadcast %cst_100 : f32 to vector<5x1xf32>
    %170 = arith.addf %168, %169 : vector<5x1xf32>
    %171 = math.rsqrt %170 : vector<5x1xf32>
    %172 = vector.broadcast %171 : vector<5x1xf32> to vector<5x64xf32>
    %173 = arith.mulf %163, %172 : vector<5x64xf32>
    %174 = vector.broadcast %156 : vector<1x64xf32> to vector<5x64xf32>
    %175 = arith.mulf %173, %174 : vector<5x64xf32>
    %176 = vector.broadcast %157 : vector<1x64xf32> to vector<5x64xf32>
    %177 = arith.addf %175, %176 : vector<5x64xf32>
    %178 = arith.truncf %177 : vector<5x64xf32> to vector<5x64xbf16>
    %c0_101 = arith.constant 0 : index
    %c0_102 = arith.constant 0 : index
    %179 = vector.load %arg11[%c0_101, %c0_102] : memref<64x256xbf16, #tpu.memory_space<vmem>>, vector<64x256xbf16>
    %cst_103 = arith.constant dense<0.000000e+00> : vector<5x256xf32>
    %180 = tpu.matmul %178, %179, %cst_103 {dimension_numbers = #tpu.dot_dimension_numbers<[1], [0], [0], [1], [0, 0, 1, 1], [], []>} : vector<5x64xbf16>, vector<64x256xbf16>, vector<5x256xf32> -> vector<5x256xf32>
    %c0_104 = arith.constant 0 : index
    %c0_105 = arith.constant 0 : index
    %181 = vector.load %arg12[%c0_104, %c0_105] : memref<1x256xf32, #tpu.memory_space<vmem>>, vector<1x256xf32>
    %182 = vector.broadcast %181 : vector<1x256xf32> to vector<5x256xf32>
    %183 = arith.addf %180, %182 : vector<5x256xf32>
    %cst_106 = arith.constant 5.000000e-01 : f32
    %184 = vector.broadcast %cst_106 : f32 to vector<5x256xf32>
    %185 = arith.mulf %184, %183 : vector<5x256xf32>
    %cst_107 = arith.constant 4.471500e-02 : f32
    %186 = vector.broadcast %cst_107 : f32 to vector<5x256xf32>
    %187 = arith.mulf %186, %183 : vector<5x256xf32>
    %188 = arith.mulf %187, %183 : vector<5x256xf32>
    %189 = arith.mulf %188, %183 : vector<5x256xf32>
    %190 = arith.addf %183, %189 : vector<5x256xf32>
    %cst_108 = arith.constant 0.797884583 : f32
    %191 = vector.broadcast %cst_108 : f32 to vector<5x256xf32>
    %192 = arith.mulf %191, %190 : vector<5x256xf32>
    %193 = math.tanh %192 : vector<5x256xf32>
    %cst_109 = arith.constant 1.000000e+00 : f32
    %194 = vector.broadcast %cst_109 : f32 to vector<5x256xf32>
    %195 = arith.addf %194, %193 : vector<5x256xf32>
    %196 = arith.mulf %185, %195 : vector<5x256xf32>
    %197 = arith.truncf %196 : vector<5x256xf32> to vector<5x256xbf16>
    %c0_110 = arith.constant 0 : index
    %c0_111 = arith.constant 0 : index
    %198 = vector.load %arg13[%c0_110, %c0_111] : memref<256x64xbf16, #tpu.memory_space<vmem>>, vector<256x64xbf16>
    %cst_112 = arith.constant dense<0.000000e+00> : vector<5x64xf32>
    %199 = tpu.matmul %197, %198, %cst_112 {dimension_numbers = #tpu.dot_dimension_numbers<[1], [0], [0], [1], [0, 0, 1, 1], [], []>} : vector<5x256xbf16>, vector<256x64xbf16>, vector<5x64xf32> -> vector<5x64xf32>
    %200 = arith.addf %155, %199 : vector<5x64xf32>
    %c0_113 = arith.constant 0 : index
    %c0_114 = arith.constant 0 : index
    %201 = vector.load %arg14[%c0_113, %c0_114] : memref<1x64xf32, #tpu.memory_space<vmem>>, vector<1x64xf32>
    %202 = vector.broadcast %201 : vector<1x64xf32> to vector<5x64xf32>
    %203 = arith.addf %200, %202 : vector<5x64xf32>
    %c0_115 = arith.constant 0 : index
    %c0_116 = arith.constant 0 : index
    %c0_117 = arith.constant 0 : index
    %204 = vector.load %arg15[%c0_115, %c0_116, %c0_117] : memref<1x5x64xf32, #tpu.memory_space<vmem>>, vector<1x5x64xf32>
    %205 = vector.shape_cast %204 : vector<1x5x64xf32> to vector<5x64xf32>
    %206 = vector.shape_cast %203 : vector<5x64xf32> to vector<1x5x64xf32>
    tpu.vector_store %arg15[%c0_115, %c0_116, %c0_117], %206 {strides = array<i32>} : memref<1x5x64xf32, #tpu.memory_space<vmem>>, vector<1x5x64xf32>,
    return
  }
  func.func @transform_0(%arg0: i32) -> (i32, i32, i32) {
    %c0_i32 = arith.constant 0 : i32
    %c0_i32_0 = arith.constant 0 : i32
    %c0_i32_1 = arith.constant 0 : i32
    return %arg0, %c0_i32, %c0_i32_0 : i32, i32, i32
  }
  func.func @transform_1(%arg0: i32) -> (i32, i32) {
    %c0_i32 = arith.constant 0 : i32
    %c0_i32_0 = arith.constant 0 : i32
    %c0_i32_1 = arith.constant 0 : i32
    return %c0_i32, %c0_i32_0 : i32, i32
  }
  func.func @transform_2(%arg0: i32) -> (i32, i32, i32) {
    %c0_i32 = arith.constant 0 : i32
    %c0_i32_0 = arith.constant 0 : i32
    %c0_i32_1 = arith.constant 0 : i32
    %c0_i32_2 = arith.constant 0 : i32
    return %c0_i32, %c0_i32_0, %c0_i32_1 : i32, i32, i32
  }
  func.func @transform_3(%arg0: i32) -> (i32, i32) {
    %c0_i32 = arith.constant 0 : i32
    %c0_i32_0 = arith.constant 0 : i32
    %c0_i32_1 = arith.constant 0 : i32
    return %c0_i32, %c0_i32_0 : i32, i32
  }
  func.func @transform_4(%arg0: i32) -> (i32, i32) {
    %c0_i32 = arith.constant 0 : i32
    %c0_i32_0 = arith.constant 0 : i32
    %c0_i32_1 = arith.constant 0 : i32
    return %c0_i32, %c0_i32_0 : i32, i32
  }
  func.func @transform_5(%arg0: i32) -> (i32, i32, i32) {
    %c0_i32 = arith.constant 0 : i32
    %c0_i32_0 = arith.constant 0 : i32
    %c0_i32_1 = arith.constant 0 : i32
    %c0_i32_2 = arith.constant 0 : i32
    return %c0_i32, %c0_i32_0, %c0_i32_1 : i32, i32, i32
  }
  func.func @transform_6(%arg0: i32) -> (i32, i32, i32) {
    %c0_i32 = arith.constant 0 : i32
    %c0_i32_0 = arith.constant 0 : i32
    %c0_i32_1 = arith.constant 0 : i32
    %c0_i32_2 = arith.constant 0 : i32
    return %c0_i32, %c0_i32_0, %c0_i32_1 : i32, i32, i32
  }
  func.func @transform_7(%arg0: i32) -> (i32, i32) {
    %c0_i32 = arith.constant 0 : i32
    %c0_i32_0 = arith.constant 0 : i32
    %c0_i32_1 = arith.constant 0 : i32
    return %c0_i32, %c0_i32_0 : i32, i32
  }
  func.func @transform_8(%arg0: i32) -> (i32, i32) {
    %c0_i32 = arith.constant 0 : i32
    %c0_i32_0 = arith.constant 0 : i32
    %c0_i32_1 = arith.constant 0 : i32
    return %c0_i32, %c0_i32_0 : i32, i32
  }
  func.func @transform_9(%arg0: i32) -> (i32, i32) {
    %c0_i32 = arith.constant 0 : i32
    %c0_i32_0 = arith.constant 0 : i32
    %c0_i32_1 = arith.constant 0 : i32
    return %c0_i32, %c0_i32_0 : i32, i32
  }
  func.func @transform_10(%arg0: i32) -> (i32, i32) {
    %c0_i32 = arith.constant 0 : i32
    %c0_i32_0 = arith.constant 0 : i32
    %c0_i32_1 = arith.constant 0 : i32
    return %c0_i32, %c0_i32_0 : i32, i32
  }
  func.func @transform_11(%arg0: i32) -> (i32, i32) {
    %c0_i32 = arith.constant 0 : i32
    %c0_i32_0 = arith.constant 0 : i32
    %c0_i32_1 = arith.constant 0 : i32
    return %c0_i32, %c0_i32_0 : i32, i32
  }
  func.func @transform_12(%arg0: i32) -> (i32, i32) {
    %c0_i32 = arith.constant 0 : i32
    %c0_i32_0 = arith.constant 0 : i32
    %c0_i32_1 = arith.constant 0 : i32
    return %c0_i32, %c0_i32_0 : i32, i32
  }
  func.func @transform_13(%arg0: i32) -> (i32, i32) {
    %c0_i32 = arith.constant 0 : i32
    %c0_i32_0 = arith.constant 0 : i32
    %c0_i32_1 = arith.constant 0 : i32
    return %c0_i32, %c0_i32_0 : i32, i32
  }
  func.func @transform_14(%arg0: i32) -> (i32, i32, i32) {
    %c0_i32 = arith.constant 0 : i32
    %c0_i32_0 = arith.constant 0 : i32
    %c0_i32_1 = arith.constant 0 : i32
    return %arg0, %c0_i32, %c0_i32_0 : i32, i32, i32
  }
}

</mosaic_0001>

<llo_original>
// kernel: t2t_vit_feature_forward.5
$region0: #{t2t_vit_feature_forward.5}
  #allocation0 [shape = 'u32[]', space=smem, size = 0x4, offset = 0x4, fixed_abs, tag = 'smem constant byte address 0x4 - core index']
  #allocation1 [shape = 'u32[144,128]{1,0:T(1,128)}', space=vmem, size = 0x12000, scoped, tag = 'internal scratch']
  %s0 = inlined_call_operand.vmem [shape: f32[2,16,144], index: 0, kind: input, shape index: {}]
  %s1 = inlined_call_operand.vmem [shape: f32[1,144], index: 1, kind: input, shape index: {}]
  %s2 = inlined_call_operand.vmem [shape: f32[1,144], index: 2, kind: input, shape index: {}]
  %s3 = inlined_call_operand.vmem [shape: bf16[3,144,16], index: 3, kind: input, shape index: {}]
  %s4 = inlined_call_operand.vmem [shape: f32[3,1,16], index: 4, kind: input, shape index: {}]
  %s5 = inlined_call_operand.vmem [shape: f32[16,8], index: 5, kind: input, shape index: {}]
  %s6 = inlined_call_operand.vmem [shape: bf16[16,16], index: 6, kind: input, shape index: {}]
  %s7 = inlined_call_operand.vmem [shape: f32[1,16], index: 7, kind: input, shape index: {}]
  %s8 = inlined_call_operand.vmem [shape: f32[1,16], index: 8, kind: input, shape index: {}]
  %s9 = inlined_call_operand.vmem [shape: f32[1,16], index: 9, kind: input, shape index: {}]
  %s10 = inlined_call_operand.vmem [shape: bf16[16,16], index: 10, kind: input, shape index: {}]
  %s11 = inlined_call_operand.vmem [shape: f32[1,16], index: 11, kind: input, shape index: {}]
  %s12 = inlined_call_operand.vmem [shape: bf16[16,16], index: 12, kind: input, shape index: {}]
  %s13 = inlined_call_operand.vmem [shape: f32[1,16], index: 13, kind: input, shape index: {}]
  %s14 = inlined_call_operand.vmem [shape: f32[2,16,16], index: 14, kind: output, shape index: {}]
  %s15 = sld [smem:[#allocation0]]
  $region89: #{t2t_vit_feature_forward.5} parent=0
    _
  %s17 = ssub.s32 1, %s15
  %s18 = scalar_select 0, %s17, %s15
  loop: start=0, step=1, limit=4
  $region2: #{t2t_vit_feature_forward.5} parent=0 // loop_pre_header
    _
  $region3: #{t2t_vit_feature_forward.5} parent=0 // loop_header
    %s20 = sphi 0, %s24
    %p21 = scmp.ge.s32.totalorder %s20, 4
    %s30 = sphi 0, %s32
    %s33 = sphi 0, %s30
    %s34 = sphi 0, %s33
    %s50 = sphi 0, %s34
    %s54 = sphi 0, %s54
    %s56 = sphi 0, %s54
    %s57 = sphi 0, %s56
    %s71 = sphi 0, %s57
    %s75 = sphi 0, %s75
    %s77 = sphi 0, %s75
    %s78 = sphi 0, %s77
    %s92 = sphi 0, %s78
    %s96 = sphi 0, %s96
    %s98 = sphi 0, %s96
    %s99 = sphi 0, %s98
    %s113 = sphi 0, %s99
    %s117 = sphi 0, %s117
    %s119 = sphi 0, %s117
    %s120 = sphi 0, %s119
    %s134 = sphi 0, %s120
    %s138 = sphi 0, %s138
    %s140 = sphi 0, %s138
    %s141 = sphi 0, %s140
    %s155 = sphi 0, %s141
    %s159 = sphi 0, %s159
    %s161 = sphi 0, %s159
    %s162 = sphi 0, %s161
    %s176 = sphi 0, %s162
    %s180 = sphi 0, %s180
    %s182 = sphi 0, %s180
    %s183 = sphi 0, %s182
    %s197 = sphi 0, %s183
    %s201 = sphi 0, %s201
    %s203 = sphi 0, %s201
    %s204 = sphi 0, %s203
    %s218 = sphi 0, %s204
    %s222 = sphi 0, %s222
    %s224 = sphi 0, %s222
    %s225 = sphi 0, %s224
    %s239 = sphi 0, %s225
    %s243 = sphi 0, %s243
    %s245 = sphi 0, %s243
    %s246 = sphi 0, %s245
    %s260 = sphi 0, %s246
    %s264 = sphi 0, %s264
    %s266 = sphi 0, %s264
    %s267 = sphi 0, %s266
    %s281 = sphi 0, %s267
    %s285 = sphi 0, %s285
    %s287 = sphi 0, %s285
    %s288 = sphi 0, %s287
    %s302 = sphi 0, %s288
    %s306 = sphi 0, %s306
    %s308 = sphi 0, %s306
    %s309 = sphi 0, %s308
    %s323 = sphi 0, %s309
    %s329 = sphi 0, %s331
    %s332 = sphi 0, %s329
    %s333 = sphi 0, %s332
    %s349 = sphi 0, %s333
  $region4: #{t2t_vit_feature_forward.5} parent=0 // loop_header_branch
    %23 = sbr.rel (%p21) target = $region8
  $region5: #{t2t_vit_feature_forward.5} parent=0 // loop_body
    %s25 = ssub.s32 %s20, 1
    %s26 = ssub.s32 %s20, 2
    %s27 = sadd.s32 %s20, 1
    %s28 = ssub.s32 %s20, %s27
    %p29 = scmp.eq.s32.totalorder %s28, 0
    %s31 = sadd.s32 %s30, 1
    %s32 = scalar_select %p29, %s30, %s31
    %p35 = pneg %p29
    %p36 = scmp.eq.s32.totalorder %s20, 1
    %p37 = por %p35, %p36
    %p38 = scmp.ne.s32.totalorder %s30, %s33
    %p39 = scmp.eq.s32.totalorder %s20, 0
    %p40 = por %p38, %p39
    %p41 = scmp.ne.s32.totalorder %s30, %s33
    %p42 = scmp.eq.s32.totalorder %s25, 1
    %p43 = por %p41, %p42
    %p44 = scmp.ne.s32.totalorder %s33, %s34
    %p45 = scmp.eq.s32.totalorder %s25, 0
    %p46 = por %p44, %p45
    %p47 = scmp.ne.s32.totalorder %s33, %s34
    %p48 = scmp.eq.s32.totalorder %s26, 1
    %p49 = por %p47, %p48
    %p51 = scmp.ne.s32.totalorder %s34, %s50
    %p52 = scmp.eq.s32.totalorder %s26, 0
    %p53 = por %p51, %p52
    %s55 = sadd.s32 %s54, 1
    %p58 = scmp.eq.s32.totalorder %s20, 1
    %p59 = scmp.ne.s32.totalorder %s54, %s56
    %p60 = scmp.eq.s32.totalorder %s20, 0
    %p61 = por %p59, %p60
    %p62 = scmp.ne.s32.totalorder %s54, %s56
    %p63 = scmp.eq.s32.totalorder %s25, 1
    %p64 = por %p62, %p63
    %p65 = scmp.ne.s32.totalorder %s56, %s57
    %p66 = scmp.eq.s32.totalorder %s25, 0
    %p67 = por %p65, %p66
    %p68 = scmp.ne.s32.totalorder %s56, %s57
    %p69 = scmp.eq.s32.totalorder %s26, 1
    %p70 = por %p68, %p69
    %p72 = scmp.ne.s32.totalorder %s57, %s71
    %p73 = scmp.eq.s32.totalorder %s26, 0
    %p74 = por %p72, %p73
    %s76 = sadd.s32 %s75, 1
    %p79 = scmp.eq.s32.totalorder %s20, 1
    %p80 = scmp.ne.s32.totalorder %s75, %s77
    %p81 = scmp.eq.s32.totalorder %s20, 0
    %p82 = por %p80, %p81
    %p83 = scmp.ne.s32.totalorder %s75, %s77
    %p84 = scmp.eq.s32.totalorder %s25, 1
    %p85 = por %p83, %p84
    %p86 = scmp.ne.s32.totalorder %s77, %s78
    %p87 = scmp.eq.s32.totalorder %s25, 0
    %p88 = por %p86, %p87
    %p89 = scmp.ne.s32.totalorder %s77, %s78
    %p90 = scmp.eq.s32.totalorder %s26, 1
    %p91 = por %p89, %p90
    %p93 = scmp.ne.s32.totalorder %s78, %s92
    %p94 = scmp.eq.s32.totalorder %s26, 0
    %p95 = por %p93, %p94
    %s97 = sadd.s32 %s96, 1
    %p100 = scmp.eq.s32.totalorder %s20, 1
    %p101 = scmp.ne.s32.totalorder %s96, %s98
    %p102 = scmp.eq.s32.totalorder %s20, 0
    %p103 = por %p101, %p102
    %p104 = scmp.ne.s32.totalorder %s96, %s98
    %p105 = scmp.eq.s32.totalorder %s25, 1
    %p106 = por %p104, %p105
    %p107 = scmp.ne.s32.totalorder %s98, %s99
    %p108 = scmp.eq.s32.totalorder %s25, 0
    %p109 = por %p107, %p108
    %p110 = scmp.ne.s32.totalorder %s98, %s99
    %p111 = scmp.eq.s32.totalorder %s26, 1
    %p112 = por %p110, %p111
    %p114 = scmp.ne.s32.totalorder %s99, %s113
    %p115 = scmp.eq.s32.totalorder %s26, 0
    %p116 = por %p114, %p115
    %s118 = sadd.s32 %s117, 1
    %p121 = scmp.eq.s32.totalorder %s20, 1
    %p122 = scmp.ne.s32.totalorder %s117, %s119
    %p123 = scmp.eq.s32.totalorder %s20, 0
    %p124 = por %p122, %p123
    %p125 = scmp.ne.s32.totalorder %s117, %s119
    %p126 = scmp.eq.s32.totalorder %s25, 1
    %p127 = por %p125, %p126
    %p128 = scmp.ne.s32.totalorder %s119, %s120
    %p129 = scmp.eq.s32.totalorder %s25, 0
    %p130 = por %p128, %p129
    %p131 = scmp.ne.s32.totalorder %s119, %s120
    %p132 = scmp.eq.s32.totalorder %s26, 1
    %p133 = por %p131, %p132
    %p135 = scmp.ne.s32.totalorder %s120, %s134
    %p136 = scmp.eq.s32.totalorder %s26, 0
    %p137 = por %p135, %p136
    %s139 = sadd.s32 %s138, 1
    %p142 = scmp.eq.s32.totalorder %s20, 1
    %p143 = scmp.ne.s32.totalorder %s138, %s140
    %p144 = scmp.eq.s32.totalorder %s20, 0
    %p145 = por %p143, %p144
    %p146 = scmp.ne.s32.totalorder %s138, %s140
    %p147 = scmp.eq.s32.totalorder %s25, 1
    %p148 = por %p146, %p147
    %p149 = scmp.ne.s32.totalorder %s140, %s141
    %p150 = scmp.eq.s32.totalorder %s25, 0
    %p151 = por %p149, %p150
    %p152 = scmp.ne.s32.totalorder %s140, %s141
    %p153 = scmp.eq.s32.totalorder %s26, 1
    %p154 = por %p152, %p153
    %p156 = scmp.ne.s32.totalorder %s141, %s155
    %p157 = scmp.eq.s32.totalorder %s26, 0
    %p158 = por %p156, %p157
    %s160 = sadd.s32 %s159, 1
    %p163 = scmp.eq.s32.totalorder %s20, 1
    %p164 = scmp.ne.s32.totalorder %s159, %s161
    %p165 = scmp.eq.s32.totalorder %s20, 0
    %p166 = por %p164, %p165
    %p167 = scmp.ne.s32.totalorder %s159, %s161
    %p168 = scmp.eq.s32.totalorder %s25, 1
    %p169 = por %p167, %p168
    %p170 = scmp.ne.s32.totalorder %s161, %s162
    %p171 = scmp.eq.s32.totalorder %s25, 0
    %p172 = por %p170, %p171
    %p173 = scmp.ne.s32.totalorder %s161, %s162
    %p174 = scmp.eq.s32.totalorder %s26, 1
    %p175 = por %p173, %p174
    %p177 = scmp.ne.s32.totalorder %s162, %s176
    %p178 = scmp.eq.s32.totalorder %s26, 0
    %p179 = por %p177, %p178
    %s181 = sadd.s32 %s180, 1
    %p184 = scmp.eq.s32.totalorder %s20, 1
    %p185 = scmp.ne.s32.totalorder %s180, %s182
    %p186 = scmp.eq.s32.totalorder %s20, 0
    %p187 = por %p185, %p186
    %p188 = scmp.ne.s32.totalorder %s180, %s182
    %p189 = scmp.eq.s32.totalorder %s25, 1
    %p190 = por %p188, %p189
    %p191 = scmp.ne.s32.totalorder %s182, %s183
    %p192 = scmp.eq.s32.totalorder %s25, 0
    %p193 = por %p191, %p192
    %p194 = scmp.ne.s32.totalorder %s182, %s183
    %p195 = scmp.eq.s32.totalorder %s26, 1
    %p196 = por %p194, %p195
    %p198 = scmp.ne.s32.totalorder %s183, %s197
    %p199 = scmp.eq.s32.totalorder %s26, 0
    %p200 = por %p198, %p199
    %s202 = sadd.s32 %s201, 1
    %p205 = scmp.eq.s32.totalorder %s20, 1
    %p206 = scmp.ne.s32.totalorder %s201, %s203
    %p207 = scmp.eq.s32.totalorder %s20, 0
    %p208 = por %p206, %p207
    %p209 = scmp.ne.s32.totalorder %s201, %s203
    %p210 = scmp.eq.s32.totalorder %s25, 1
    %p211 = por %p209, %p210
    %p212 = scmp.ne.s32.totalorder %s203, %s204
    %p213 = scmp.eq.s32.totalorder %s25, 0
    %p214 = por %p212, %p213
    %p215 = scmp.ne.s32.totalorder %s203, %s204
    %p216 = scmp.eq.s32.totalorder %s26, 1
    %p217 = por %p215, %p216
    %p219 = scmp.ne.s32.totalorder %s204, %s218
    %p220 = scmp.eq.s32.totalorder %s26, 0
    %p221 = por %p219, %p220
    %s223 = sadd.s32 %s222, 1
    %p226 = scmp.eq.s32.totalorder %s20, 1
    %p227 = scmp.ne.s32.totalorder %s222, %s224
    %p228 = scmp.eq.s32.totalorder %s20, 0
    %p229 = por %p227, %p228
    %p230 = scmp.ne.s32.totalorder %s222, %s224
    %p231 = scmp.eq.s32.totalorder %s25, 1
    %p232 = por %p230, %p231
    %p233 = scmp.ne.s32.totalorder %s224, %s225
    %p234 = scmp.eq.s32.totalorder %s25, 0
    %p235 = por %p233, %p234
    %p236 = scmp.ne.s32.totalorder %s224, %s225
    %p237 = scmp.eq.s32.totalorder %s26, 1
    %p238 = por %p236, %p237
    %p240 = scmp.ne.s32.totalorder %s225, %s239
    %p241 = scmp.eq.s32.totalorder %s26, 0
    %p242 = por %p240, %p241
    %s244 = sadd.s32 %s243, 1
    %p247 = scmp.eq.s32.totalorder %s20, 1
    %p248 = scmp.ne.s32.totalorder %s243, %s245
    %p249 = scmp.eq.s32.totalorder %s20, 0
    %p250 = por %p248, %p249
    %p251 = scmp.ne.s32.totalorder %s243, %s245
    %p252 = scmp.eq.s32.totalorder %s25, 1
    %p253 = por %p251, %p252
    %p254 = scmp.ne.s32.totalorder %s245, %s246
    %p255 = scmp.eq.s32.totalorder %s25, 0
    %p256 = por %p254, %p255
    %p257 = scmp.ne.s32.totalorder %s245, %s246
    %p258 = scmp.eq.s32.totalorder %s26, 1
    %p259 = por %p257, %p258
    %p261 = scmp.ne.s32.totalorder %s246, %s260
    %p262 = scmp.eq.s32.totalorder %s26, 0
    %p263 = por %p261, %p262
    %s265 = sadd.s32 %s264, 1
    %p268 = scmp.eq.s32.totalorder %s20, 1
    %p269 = scmp.ne.s32.totalorder %s264, %s266
    %p270 = scmp.eq.s32.totalorder %s20, 0
    %p271 = por %p269, %p270
    %p272 = scmp.ne.s32.totalorder %s264, %s266
    %p273 = scmp.eq.s32.totalorder %s25, 1
    %p274 = por %p272, %p273
    %p275 = scmp.ne.s32.totalorder %s266, %s267
    %p276 = scmp.eq.s32.totalorder %s25, 0
    %p277 = por %p275, %p276
    %p278 = scmp.ne.s32.totalorder %s266, %s267
    %p279 = scmp.eq.s32.totalorder %s26, 1
    %p280 = por %p278, %p279
    %p282 = scmp.ne.s32.totalorder %s267, %s281
    %p283 = scmp.eq.s32.totalorder %s26, 0
    %p284 = por %p282, %p283
    %s286 = sadd.s32 %s285, 1
    %p289 = scmp.eq.s32.totalorder %s20, 1
    %p290 = scmp.ne.s32.totalorder %s285, %s287
    %p291 = scmp.eq.s32.totalorder %s20, 0
    %p292 = por %p290, %p291
    %p293 = scmp.ne.s32.totalorder %s285, %s287
    %p294 = scmp.eq.s32.totalorder %s25, 1
    %p295 = por %p293, %p294
    %p296 = scmp.ne.s32.totalorder %s287, %s288
    %p297 = scmp.eq.s32.totalorder %s25, 0
    %p298 = por %p296, %p297
    %p299 = scmp.ne.s32.totalorder %s287, %s288
    %p300 = scmp.eq.s32.totalorder %s26, 1
    %p301 = por %p299, %p300
    %p303 = scmp.ne.s32.totalorder %s288, %s302
    %p304 = scmp.eq.s32.totalorder %s26, 0
    %p305 = por %p303, %p304
    %s307 = sadd.s32 %s306, 1
    %p310 = scmp.eq.s32.totalorder %s20, 1
    %p311 = scmp.ne.s32.totalorder %s306, %s308
    %p312 = scmp.eq.s32.totalorder %s20, 0
    %p313 = por %p311, %p312
    %p314 = scmp.ne.s32.totalorder %s306, %s308
    %p315 = scmp.eq.s32.totalorder %s25, 1
    %p316 = por %p314, %p315
    %p317 = scmp.ne.s32.totalorder %s308, %s309
    %p318 = scmp.eq.s32.totalorder %s25, 0
    %p319 = por %p317, %p318
    %p320 = scmp.ne.s32.totalorder %s308, %s309
    %p321 = scmp.eq.s32.totalorder %s26, 1
    %p322 = por %p320, %p321
    %p324 = scmp.ne.s32.totalorder %s309, %s323
    %p325 = scmp.eq.s32.totalorder %s26, 0
    %p326 = por %p324, %p325
    %s327 = ssub.s32 %s20, %s27
    %p328 = scmp.eq.s32.totalorder %s327, 0
    %s330 = sadd.s32 %s329, 1
    %s331 = scalar_select %p328, %s329, %s330
    %p334 = pneg %p328
    %p335 = scmp.eq.s32.totalorder %s20, 1
    %p336 = por %p334, %p335
    %p337 = scmp.ne.s32.totalorder %s329, %s332
    %p338 = scmp.eq.s32.totalorder %s20, 0
    %p339 = por %p337, %p338
    %p340 = scmp.ne.s32.totalorder %s329, %s332
    %p341 = scmp.eq.s32.totalorder %s25, 1
    %p342 = por %p340, %p341
    %p343 = scmp.ne.s32.totalorder %s332, %s333
    %p344 = scmp.eq.s32.totalorder %s25, 0
    %p345 = por %p343, %p344
    %p346 = scmp.ne.s32.totalorder %s332, %s333
    %p347 = scmp.eq.s32.totalorder %s26, 1
    %p348 = por %p346, %p347
    %p350 = scmp.ne.s32.totalorder %s333, %s349
    %p351 = scmp.eq.s32.totalorder %s26, 0
    %p352 = por %p350, %p351
    %p353 = scmp.le.s32.totalorder 1, %s20
    %p354 = scmp.lt.s32.totalorder %s20, 3
    %p355 = pnand %p353, %p354
    %p356 = pneg %p355
    // Predicated region
    $region9: #{t2t_vit_feature_forward.5} parent=5 // pred_check
      _
    $region10: #{t2t_vit_feature_forward.5} parent=5 // pred_check_branch
      %358 = sbr.rel (%p355) target = $region12
    $region11: #{t2t_vit_feature_forward.5} parent=5 // pred_region
      %s359 = ssub.s32 %s20, 1
      // Predicated region
      $region13: #{t2t_vit_feature_forward.5} parent=11 // pred_check
        %p360 = pneg %p67
      $region14: #{t2t_vit_feature_forward.5} parent=11 // pred_check_branch
        %362 = sbr.rel (%p360) target = $region16
      $region15: #{t2t_vit_feature_forward.5} parent=11 // pred_region
        _
      $region16: #{t2t_vit_feature_forward.5} parent=11 // pred_fallthru
        _
      // Predicated region
      $region17: #{t2t_vit_feature_forward.5} parent=11 // pred_check
        %p363 = pneg %p88
      $region18: #{t2t_vit_feature_forward.5} parent=11 // pred_check_branch
        %365 = sbr.rel (%p363) target = $region20
      $region19: #{t2t_vit_feature_forward.5} parent=11 // pred_region
        _
      $region20: #{t2t_vit_feature_forward.5} parent=11 // pred_fallthru
        _
      // Predicated region
      $region21: #{t2t_vit_feature_forward.5} parent=11 // pred_check
        %p366 = pneg %p109
      $region22: #{t2t_vit_feature_forward.5} parent=11 // pred_check_branch
        %368 = sbr.rel (%p366) target = $region24
      $region23: #{t2t_vit_feature_forward.5} parent=11 // pred_region
        _
      $region24: #{t2t_vit_feature_forward.5} parent=11 // pred_fallthru
        _
      // Predicated region
      $region25: #{t2t_vit_feature_forward.5} parent=11 // pred_check
        %p369 = pneg %p130
      $region26: #{t2t_vit_feature_forward.5} parent=11 // pred_check_branch
        %371 = sbr.rel (%p369) target = $region28
      $region27: #{t2t_vit_feature_forward.5} parent=11 // pred_region
        _
      $region28: #{t2t_vit_feature_forward.5} parent=11 // pred_fallthru
        _
      // Predicated region
      $region29: #{t2t_vit_feature_forward.5} parent=11 // pred_check
        %p372 = pneg %p151
      $region30: #{t2t_vit_feature_forward.5} parent=11 // pred_check_branch
        %374 = sbr.rel (%p372) target = $region32
      $region31: #{t2t_vit_feature_forward.5} parent=11 // pred_region
        _
      $region32: #{t2t_vit_feature_forward.5} parent=11 // pred_fallthru
        _
      // Predicated region
      $region33: #{t2t_vit_feature_forward.5} parent=11 // pred_check
        %p375 = pneg %p172
      $region34: #{t2t_vit_feature_forward.5} parent=11 // pred_check_branch
        %377 = sbr.rel (%p375) target = $region36
      $region35: #{t2t_vit_feature_forward.5} parent=11 // pred_region
        _
      $region36: #{t2t_vit_feature_forward.5} parent=11 // pred_fallthru
        _
      // Predicated region
      $region37: #{t2t_vit_feature_forward.5} parent=11 // pred_check
        %p378 = pneg %p193
      $region38: #{t2t_vit_feature_forward.5} parent=11 // pred_check_branch
        %380 = sbr.rel (%p378) target = $region40
      $region39: #{t2t_vit_feature_forward.5} parent=11 // pred_region
        _
      $region40: #{t2t_vit_feature_forward.5} parent=11 // pred_fallthru
        _
      // Predicated region
      $region41: #{t2t_vit_feature_forward.5} parent=11 // pred_check
        %p381 = pneg %p214
      $region42: #{t2t_vit_feature_forward.5} parent=11 // pred_check_branch
        %383 = sbr.rel (%p381) target = $region44
      $region43: #{t2t_vit_feature_forward.5} parent=11 // pred_region
        _
      $region44: #{t2t_vit_feature_forward.5} parent=11 // pred_fallthru
        _
      // Predicated region
      $region45: #{t2t_vit_feature_forward.5} parent=11 // pred_check
        %p384 = pneg %p235
      $region46: #{t2t_vit_feature_forward.5} parent=11 // pred_check_branch
        %386 = sbr.rel (%p384) target = $region48
      $region47: #{t2t_vit_feature_forward.5} parent=11 // pred_region
        _
      $region48: #{t2t_vit_feature_forward.5} parent=11 // pred_fallthru
        _
      // Predicated region
      $region49: #{t2t_vit_feature_forward.5} parent=11 // pred_check
        %p387 = pneg %p256
      $region50: #{t2t_vit_feature_forward.5} parent=11 // pred_check_branch
        %389 = sbr.rel (%p387) target = $region52
      $region51: #{t2t_vit_feature_forward.5} parent=11 // pred_region
        _
      $region52: #{t2t_vit_feature_forward.5} parent=11 // pred_fallthru
        _
      // Predicated region
      $region53: #{t2t_vit_feature_forward.5} parent=11 // pred_check
        %p390 = pneg %p277
      $region54: #{t2t_vit_feature_forward.5} parent=11 // pred_check_branch
        %392 = sbr.rel (%p390) target = $region56
      $region55: #{t2t_vit_feature_forward.5} parent=11 // pred_region
        _
      $region56: #{t2t_vit_feature_forward.5} parent=11 // pred_fallthru
        _
      // Predicated region
      $region57: #{t2t_vit_feature_forward.5} parent=11 // pred_check
        %p393 = pneg %p298
      $region58: #{t2t_vit_feature_forward.5} parent=11 // pred_check_branch
        %395 = sbr.rel (%p393) target = $region60
      $region59: #{t2t_vit_feature_forward.5} parent=11 // pred_region
        _
      $region60: #{t2t_vit_feature_forward.5} parent=11 // pred_fallthru
        _
      // Predicated region
      $region61: #{t2t_vit_feature_forward.5} parent=11 // pred_check
        %p396 = pneg %p319
      $region62: #{t2t_vit_feature_forward.5} parent=11 // pred_check_branch
        %398 = sbr.rel (%p396) target = $region64
      $region63: #{t2t_vit_feature_forward.5} parent=11 // pred_region
        _
      $region64: #{t2t_vit_feature_forward.5} parent=11 // pred_fallthru
        _
    $region12: #{t2t_vit_feature_forward.5} parent=5 // pred_fallthru
      _
    %p399 = scmp.lt.s32.totalorder %s20, 2
    // Predicated region
    $region65: #{t2t_vit_feature_forward.5} parent=5 // pred_check
      %p400 = pneg %p399
    $region66: #{t2t_vit_feature_forward.5} parent=5 // pred_check_branch
      %402 = sbr.rel (%p400) target = $region68
    $region67: #{t2t_vit_feature_forward.5} parent=5 // pred_region
      // Predicated region
      $region69: #{t2t_vit_feature_forward.5} parent=67 // pred_check
        %p403 = pneg %p40
      $region70: #{t2t_vit_feature_forward.5} parent=67 // pred_check_branch
        %405 = sbr.rel (%p403) target = $region72
      $region71: #{t2t_vit_feature_forward.5} parent=67 // pred_region
        %p406 = scmp.lt.s32.totalorder %s20, 1
        %s407 = scalar_select %p406, %s20, 1
        %s408 = smul.addr %s407, 4
        %s409 = smul.addr %s408, 8
        %s410 = scalar_lea.vmem %s0, %s409
      $region72: #{t2t_vit_feature_forward.5} parent=67 // pred_fallthru
        _
    $region68: #{t2t_vit_feature_forward.5} parent=5 // pred_fallthru
      _
    %p411 = scmp.le.s32.totalorder 1, %s20
    %p412 = scmp.lt.s32.totalorder %s20, 3
    %p413 = pnand %p411, %p412
    %p414 = pneg %p413
    // Predicated region
    $region73: #{t2t_vit_feature_forward.5} parent=5 // pred_check
      _
    $region74: #{t2t_vit_feature_forward.5} parent=5 // pred_check_branch
      %416 = sbr.rel (%p413) target = $region76
    $region75: #{t2t_vit_feature_forward.5} parent=5 // pred_region
      %s417 = ssub.s32 %s20, 1
      %p418 = scmp.lt.s32.totalorder %s25, 1
      %s419 = scalar_select %p418, %s25, 1
      %s420 = smul.addr %s419, 4
      %s421 = smul.addr %s420, 8
      %s422 = scalar_lea.vmem %s0, %s421
      %p423 = pneg %p46
      %p424 = pneg %p43
      %p425 = pneg %p67
      %p426 = pneg %p64
      %p427 = pneg %p88
      %p428 = pneg %p85
      %p429 = pneg %p109
      %p430 = pneg %p106
      %p431 = pneg %p130
      %p432 = pneg %p127
      %p433 = pneg %p151
      %p434 = pneg %p148
      %p435 = pneg %p172
      %p436 = pneg %p169
      %p437 = pneg %p193
      %p438 = pneg %p190
      %p439 = pneg %p214
      %p440 = pneg %p211
      %p441 = pneg %p235
      %p442 = pneg %p232
      %p443 = pneg %p256
      %p444 = pneg %p253
      %p445 = pneg %p277
      %p446 = pneg %p274
      %p447 = pneg %p298
      %p448 = pneg %p295
      %p449 = pneg %p319
      %p450 = pneg %p316
      %p451 = pneg %p345
      %p452 = pneg %p342
      %p453 = scmp.lt.s32.totalorder %s25, 1
      %s454 = scalar_select %p453, %s25, 1
      %s455 = smul.addr %s454, 2
      %s456 = smul.addr %s455, 8
      %s457 = scalar_lea.vmem %s14, %s456
      %p458 = scmp.lt.s32.totalorder %s25, 1
      %s459 = scalar_select %p458, %s25, 1
      %s460 = smul.addr %s459, 4
      %s461 = smul.addr %s460, 8
      %s462 = scalar_lea.vmem %s0, %s461
      %p463 = scmp.lt.s32.totalorder %s25, 1
      %s464 = scalar_select %p463, %s25, 1
      %s465 = smul.addr %s464, 2
      %s466 = smul.addr %s465, 8
      %s467 = scalar_lea.vmem %s14, %s466
      %v469 = vld [vmem:[%s462] sm:$0xff]
      %v470 = vld [vmem:[%s462 + $0x8] sm:$0xff]
      %v471 = vld [vmem:[%s462 + $0x10] sm:$0xff]
      %v472 = vld [vmem:[%s462 + $0x18] sm:$0xff]
      %v473 = vld [vmem:[%s1] sm:$0x3]
      %v474 = vld [vmem:[%s2] sm:$0x3]
      %vm475 = vcmask 130048
      %v476 = vsel %vm475, %v470, 0.0
      %v477 = vadd.f32 %v469, %v476
      %478 = vadd.xlane.f32.xlu0 %v477
      %v479 = vpop.xlane.xlu0 %478
      %v480 = vsel %vm475, %v472, 0.0
      %v481 = vadd.f32 %v471, %v480
      %482 = vadd.xlane.f32.xlu0 %v481
      %v483 = vpop.xlane.xlu0 %482
      %v484 = vrcp.pop 144.0
      %v485 = vmul.f32 %v479, %v484
      %v486 = vmul.f32 %v483, %v484
      %v487 = vsub.f32 %v469, %v485
      %v488 = vsub.f32 %v470, %v485
      %v489 = vsub.f32 %v471, %v486
      %v490 = vsub.f32 %v472, %v486
      %v491 = vmul.f32 %v487, %v487
      %v492 = vmul.f32 %v488, %v488
      %v493 = vmul.f32 %v489, %v489
      %v494 = vmul.f32 %v490, %v490
      %v495 = vsel %vm475, %v492, 0.0
      %v496 = vadd.f32 %v491, %v495
      %497 = vadd.xlane.f32.xlu0 %v496
      %v498 = vpop.xlane.xlu0 %497
      %v499 = vsel %vm475, %v494, 0.0
      %v500 = vadd.f32 %v493, %v499
      %501 = vadd.xlane.f32.xlu0 %v500
      %v502 = vpop.xlane.xlu0 %501
      %v503 = vmul.f32 %v498, %v484
      %v504 = vmul.f32 %v502, %v484
      %v505 = vadd.f32 %v503, 1e-05
      %v506 = vadd.f32 %v504, 1e-05
      %v507 = vrsqrt.pop %v505
      %v508 = vrsqrt.pop %v506
      %v509 = vmul.f32 %v487, %v507
      %v510 = vmul.f32 %v488, %v507
      %v511 = vmul.f32 %v489, %v508
      %v512 = vmul.f32 %v490, %v508
      %v514 = vlaneseq
      %v515 = vshrl.u32 %v514, 7
      %v516 = vsub.s32 0, %v515
      %v517 = vrot.slane %v473, %v516
      %v518 = vlaneseq
      %v519 = vshrl.u32 %v518, 7
      %v520 = vsub.s32 1, %v519
      %v521 = vrot.slane %v473, %v520
      %v524 = vmul.f32 %v509, %v517
      %v525 = vmul.f32 %v510, %v521
      %v526 = vmul.f32 %v511, %v517
      %v527 = vmul.f32 %v512, %v521
      %v529 = vlaneseq
      %v530 = vshrl.u32 %v529, 7
      %v531 = vsub.s32 0, %v530
      %v532 = vrot.slane %v474, %v531
      %v533 = vlaneseq
      %v534 = vshrl.u32 %v533, 7
      %v535 = vsub.s32 1, %v534
      %v536 = vrot.slane %v474, %v535
      %v539 = vadd.f32 %v524, %v532
      %v540 = vadd.f32 %v525, %v536
      %v541 = vadd.f32 %v526, %v532
      %v542 = vadd.f32 %v527, %v536
      %v543 = vpack.c.bf16 %v541, %v539
      %v544 = vpack.c.bf16 %v542, %v540
      %v545 = vld [vmem:[%s3] sm:$0xf]
      %v546 = vld [vmem:[%s3 + $0x4] sm:$0xf]
      %v547 = vld [vmem:[%s3 + $0x8] sm:$0xf]
      %v548 = vld [vmem:[%s3 + $0xc] sm:$0xf]
      %v549 = vld [vmem:[%s3 + $0x10] sm:$0xf]
      %v550 = vld [vmem:[%s3 + $0x14] sm:$0xf]
      %v551 = vld [vmem:[%s3 + $0x18] sm:$0xf]
      %v552 = vld [vmem:[%s3 + $0x1c] sm:$0xf]
      %v553 = vld [vmem:[%s3 + $0x20] sm:$0xf]
      %v554 = vld [vmem:[%s3 + $0x24] sm:$0xf]
      %v555 = vld [vmem:[%s3 + $0x28] sm:$0xf]
      %v556 = vld [vmem:[%s3 + $0x2c] sm:$0xf]
      %v557 = vld [vmem:[%s3 + $0x30] sm:$0xf]
      %v558 = vld [vmem:[%s3 + $0x34] sm:$0xf]
      %v559 = vld [vmem:[%s3 + $0x38] sm:$0xf]
      %v560 = vld [vmem:[%s3 + $0x3c] sm:$0xf]
      %v561 = vld [vmem:[%s3 + $0x40] sm:$0xf]
      %v562 = vld [vmem:[%s3 + $0x44] sm:$0xf]
      %v563 = vld [vmem:[%s4] sm:$0x1]
      %v565 = vlaneseq
      %v566 = vshrl.u32 %v565, 7
      %v567 = vsub.s32 0, %v566
      %v568 = vrot.slane %v563, %v567
      %v588 = vunpack.c.l.b16 %v545
      %v589 = vunpack.c.l.b16 %v546
      %v590 = vunpack.c.l.b16 %v547
      %v591 = vunpack.c.l.b16 %v548
      %v592 = vunpack.c.l.b16 %v549
      %v593 = vunpack.c.l.b16 %v550
      %v594 = vunpack.c.l.b16 %v551
      %v595 = vunpack.c.l.b16 %v552
      %v596 = vunpack.c.l.b16 %v553
      %v597 = vunpack.c.l.b16 %v554
      %v598 = vunpack.c.l.b16 %v555
      %v599 = vunpack.c.l.b16 %v556
      %v600 = vunpack.c.l.b16 %v557
      %v601 = vunpack.c.l.b16 %v558
      %v602 = vunpack.c.l.b16 %v559
      %v603 = vunpack.c.l.b16 %v560
      %v604 = vunpack.c.l.b16 %v561
      %v605 = vunpack.c.l.b16 %v562
      %v606 = vpack.c.b16 %v589, %v588
      %v607 = vpack.c.b16 %v591, %v590
      %v608 = vpack.c.b16 %v593, %v592
      %v609 = vpack.c.b16 %v595, %v594
      %v610 = vpack.c.b16 %v597, %v596
      %v611 = vpack.c.b16 %v599, %v598
      %v612 = vpack.c.b16 %v601, %v600
      %v613 = vpack.c.b16 %v603, %v602
      %v614 = vpack.c.b16 %v605, %v604
      %v625 = vsel %vm475, %v544, 0
      %627 = vmatprep.subr.bf16.mxu0 0
      %628 = vmatpush1.bf16.msra.mxu0 %v606
      %629 = vmatprep.subr.bf16.mxu0 0
      %630 = vmatpush1.bf16.msra.mxu0 %v607
      %631 = vmatprep.subr.bf16.mxu0 0
      %632 = vmatpush1.bf16.msra.mxu0 %v608
      %633 = vmatprep.subr.bf16.mxu0 0
      %634 = vmatpush1.bf16.msra.mxu0 %v609
      %635 = vmatprep.subr.bf16.mxu0 0
      %636 = vmatpush1.bf16.msra.mxu0 %v610
      %637 = vmatprep.subr.bf16.mxu0 0
      %638 = vmatpush1.bf16.msra.mxu0 %v611
      %639 = vmatprep.subr.bf16.mxu0 0
      %640 = vmatpush1.bf16.msra.mxu0 %v612
      %641 = vmatprep.subr.bf16.mxu0 0
      %642 = vmatpush1.bf16.msra.mxu0 %v613
      %643 = vmatprep.subr.bf16.mxu0 0
      %644 = vmatpush1.bf16.msra.mxu0 %v614
      %645 = vmatprep.subr.bf16.mxu0 0
      %646 = vmatpush1.bf16.msra.mxu0 0
      %647 = vmatprep.subr.bf16.mxu0 0
      %648 = vmatpush1.bf16.msra.mxu0 0
      %649 = vmatprep.subr.bf16.mxu0 0
      %650 = vmatpush1.bf16.msra.mxu0 0
      %651 = vmatprep.subr.bf16.mxu0 0
      %652 = vmatpush1.bf16.msra.mxu0 0
      %653 = vmatprep.subr.bf16.mxu0 0
      %654 = vmatpush1.bf16.msra.mxu0 0
      %655 = vmatprep.subr.bf16.mxu0 0
      %656 = vmatpush1.bf16.msra.mxu0 0
      %657 = vmatprep.subr.bf16.mxu0 0
      %658 = vmatpush1.bf16.msra.mxu0 0
      %659 = vmatprep.mubr.bf16.mxu0 %v625
      %660 = vmatmul.mubr.bf16.gmra.mrb[0].mxu0 %v543
      %v661 = vpop.f32.mrb[0].mxu0
      %v662 = vadd.f32 %v568, %v661
      %v663 = vpop.f32.mrb[0].mxu0
      %v664 = vpop.f32.mrb[0].mxu0
      %v665 = vadd.f32 %v568, %v664
      %v666 = vpop.f32.mrb[0].mxu0
      %667 = vdwg.mxu0
      %s668 = scalar_lea.vmem %s3, 72
      %v669 = vld [vmem:[%s668] sm:$0xf]
      %v670 = vld [vmem:[%s668 + $0x4] sm:$0xf]
      %v671 = vld [vmem:[%s668 + $0x8] sm:$0xf]
      %v672 = vld [vmem:[%s668 + $0xc] sm:$0xf]
      %v673 = vld [vmem:[%s668 + $0x10] sm:$0xf]
      %v674 = vld [vmem:[%s668 + $0x14] sm:$0xf]
      %v675 = vld [vmem:[%s668 + $0x18] sm:$0xf]
      %v676 = vld [vmem:[%s668 + $0x1c] sm:$0xf]
      %v677 = vld [vmem:[%s668 + $0x20] sm:$0xf]
      %v678 = vld [vmem:[%s668 + $0x24] sm:$0xf]
      %v679 = vld [vmem:[%s668 + $0x28] sm:$0xf]
      %v680 = vld [vmem:[%s668 + $0x2c] sm:$0xf]
      %v681 = vld [vmem:[%s668 + $0x30] sm:$0xf]
      %v682 = vld [vmem:[%s668 + $0x34] sm:$0xf]
      %v683 = vld [vmem:[%s668 + $0x38] sm:$0xf]
      %v684 = vld [vmem:[%s668 + $0x3c] sm:$0xf]
      %v685 = vld [vmem:[%s668 + $0x40] sm:$0xf]
      %v686 = vld [vmem:[%s668 + $0x44] sm:$0xf]
      %s687 = scalar_lea.vmem %s4, 1
      %v688 = vld [vmem:[%s687] sm:$0x1]
      %v690 = vlaneseq
      %v691 = vshrl.u32 %v690, 7
      %v692 = vsub.s32 0, %v691
      %v693 = vrot.slane %v688, %v692
      %v713 = vunpack.c.l.b16 %v669
      %v714 = vunpack.c.l.b16 %v670
      %v715 = vunpack.c.l.b16 %v671
      %v716 = vunpack.c.l.b16 %v672
      %v717 = vunpack.c.l.b16 %v673
      %v718 = vunpack.c.l.b16 %v674
      %v719 = vunpack.c.l.b16 %v675
      %v720 = vunpack.c.l.b16 %v676
      %v721 = vunpack.c.l.b16 %v677
      %v722 = vunpack.c.l.b16 %v678
      %v723 = vunpack.c.l.b16 %v679
      %v724 = vunpack.c.l.b16 %v680
      %v725 = vunpack.c.l.b16 %v681
      %v726 = vunpack.c.l.b16 %v682
      %v727 = vunpack.c.l.b16 %v683
      %v728 = vunpack.c.l.b16 %v684
      %v729 = vunpack.c.l.b16 %v685
      %v730 = vunpack.c.l.b16 %v686
      %v731 = vpack.c.b16 %v714, %v713
      %v732 = vpack.c.b16 %v716, %v715
      %v733 = vpack.c.b16 %v718, %v717
      %v734 = vpack.c.b16 %v720, %v719
      %v735 = vpack.c.b16 %v722, %v721
      %v736 = vpack.c.b16 %v724, %v723
      %v737 = vpack.c.b16 %v726, %v725
      %v738 = vpack.c.b16 %v728, %v727
      %v739 = vpack.c.b16 %v730, %v729
      %749 = vmatprep.subr.bf16.mxu0 0
      %750 = vmatpush1.bf16.msra.mxu0 %v731
      %751 = vmatprep.subr.bf16.mxu0 0
      %752 = vmatpush1.bf16.msra.mxu0 %v732
      %753 = vmatprep.subr.bf16.mxu0 0
      %754 = vmatpush1.bf16.msra.mxu0 %v733
      %755 = vmatprep.subr.bf16.mxu0 0
      %756 = vmatpush1.bf16.msra.mxu0 %v734
      %757 = vmatprep.subr.bf16.mxu0 0
      %758 = vmatpush1.bf16.msra.mxu0 %v735
      %759 = vmatprep.subr.bf16.mxu0 0
      %760 = vmatpush1.bf16.msra.mxu0 %v736
      %761 = vmatprep.subr.bf16.mxu0 0
      %762 = vmatpush1.bf16.msra.mxu0 %v737
      %763 = vmatprep.subr.bf16.mxu0 0
      %764 = vmatpush1.bf16.msra.mxu0 %v738
      %765 = vmatprep.subr.bf16.mxu0 0
      %766 = vmatpush1.bf16.msra.mxu0 %v739
      %767 = vmatprep.subr.bf16.mxu0 0
      %768 = vmatpush1.bf16.msra.mxu0 0
      %769 = vmatprep.subr.bf16.mxu0 0
      %770 = vmatpush1.bf16.msra.mxu0 0
      %771 = vmatprep.subr.bf16.mxu0 0
      %772 = vmatpush1.bf16.msra.mxu0 0
      %773 = vmatprep.subr.bf16.mxu0 0
      %774 = vmatpush1.bf16.msra.mxu0 0
      %775 = vmatprep.subr.bf16.mxu0 0
      %776 = vmatpush1.bf16.msra.mxu0 0
      %777 = vmatprep.subr.bf16.mxu0 0
      %778 = vmatpush1.bf16.msra.mxu0 0
      %779 = vmatprep.subr.bf16.mxu0 0
      %780 = vmatpush1.bf16.msra.mxu0 0
      %781 = vmatprep.mubr.bf16.mxu0 %v625
      %782 = vmatmul.mubr.bf16.gmra.mrb[0].mxu0 %v543
      %v783 = vpop.f32.mrb[0].mxu0
      %v784 = vadd.f32 %v693, %v783
      %v785 = vpop.f32.mrb[0].mxu0
      %v786 = vpop.f32.mrb[0].mxu0
      %v787 = vadd.f32 %v693, %v786
      %v788 = vpop.f32.mrb[0].mxu0
      %789 = vdwg.mxu0
      %s790 = scalar_lea.vmem %s3, 144
      %v791 = vld [vmem:[%s790] sm:$0xf]
      %v792 = vld [vmem:[%s790 + $0x4] sm:$0xf]
      %v793 = vld [vmem:[%s790 + $0x8] sm:$0xf]
      %v794 = vld [vmem:[%s790 + $0xc] sm:$0xf]
      %v795 = vld [vmem:[%s790 + $0x10] sm:$0xf]
      %v796 = vld [vmem:[%s790 + $0x14] sm:$0xf]
      %v797 = vld [vmem:[%s790 + $0x18] sm:$0xf]
      %v798 = vld [vmem:[%s790 + $0x1c] sm:$0xf]
      %v799 = vld [vmem:[%s790 + $0x20] sm:$0xf]
      %v800 = vld [vmem:[%s790 + $0x24] sm:$0xf]
      %v801 = vld [vmem:[%s790 + $0x28] sm:$0xf]
      %v802 = vld [vmem:[%s790 + $0x2c] sm:$0xf]
      %v803 = vld [vmem:[%s790 + $0x30] sm:$0xf]
      %v804 = vld [vmem:[%s790 + $0x34] sm:$0xf]
      %v805 = vld [vmem:[%s790 + $0x38] sm:$0xf]
      %v806 = vld [vmem:[%s790 + $0x3c] sm:$0xf]
      %v807 = vld [vmem:[%s790 + $0x40] sm:$0xf]
      %v808 = vld [vmem:[%s790 + $0x44] sm:$0xf]
      %s809 = scalar_lea.vmem %s4, 2
      %v810 = vld [vmem:[%s809] sm:$0x1]
      %v812 = vlaneseq
      %v813 = vshrl.u32 %v812, 7
      %v814 = vsub.s32 0, %v813
      %v815 = vrot.slane %v810, %v814
      %v835 = vunpack.c.l.b16 %v791
      %v836 = vunpack.c.l.b16 %v792
      %v837 = vunpack.c.l.b16 %v793
      %v838 = vunpack.c.l.b16 %v794
      %v839 = vunpack.c.l.b16 %v795
      %v840 = vunpack.c.l.b16 %v796
      %v841 = vunpack.c.l.b16 %v797
      %v842 = vunpack.c.l.b16 %v798
      %v843 = vunpack.c.l.b16 %v799
      %v844 = vunpack.c.l.b16 %v800
      %v845 = vunpack.c.l.b16 %v801
      %v846 = vunpack.c.l.b16 %v802
      %v847 = vunpack.c.l.b16 %v803
      %v848 = vunpack.c.l.b16 %v804
      %v849 = vunpack.c.l.b16 %v805
      %v850 = vunpack.c.l.b16 %v806
      %v851 = vunpack.c.l.b16 %v807
      %v852 = vunpack.c.l.b16 %v808
      %v853 = vpack.c.b16 %v836, %v835
      %v854 = vpack.c.b16 %v838, %v837
      %v855 = vpack.c.b16 %v840, %v839
      %v856 = vpack.c.b16 %v842, %v841
      %v857 = vpack.c.b16 %v844, %v843
      %v858 = vpack.c.b16 %v846, %v845
      %v859 = vpack.c.b16 %v848, %v847
      %v860 = vpack.c.b16 %v850, %v849
      %v861 = vpack.c.b16 %v852, %v851
      %871 = vmatprep.subr.bf16.mxu0 0
      %872 = vmatpush1.bf16.msra.mxu0 %v853
      %873 = vmatprep.subr.bf16.mxu0 0
      %874 = vmatpush1.bf16.msra.mxu0 %v854
      %875 = vmatprep.subr.bf16.mxu0 0
      %876 = vmatpush1.bf16.msra.mxu0 %v855
      %877 = vmatprep.subr.bf16.mxu0 0
      %878 = vmatpush1.bf16.msra.mxu0 %v856
      %879 = vmatprep.subr.bf16.mxu0 0
      %880 = vmatpush1.bf16.msra.mxu0 %v857
      %881 = vmatprep.subr.bf16.mxu0 0
      %882 = vmatpush1.bf16.msra.mxu0 %v858
      %883 = vmatprep.subr.bf16.mxu0 0
      %884 = vmatpush1.bf16.msra.mxu0 %v859
      %885 = vmatprep.subr.bf16.mxu0 0
      %886 = vmatpush1.bf16.msra.mxu0 %v860
      %887 = vmatprep.subr.bf16.mxu0 0
      %888 = vmatpush1.bf16.msra.mxu0 %v861
      %889 = vmatprep.subr.bf16.mxu0 0
      %890 = vmatpush1.bf16.msra.mxu0 0
      %891 = vmatprep.subr.bf16.mxu0 0
      %892 = vmatpush1.bf16.msra.mxu0 0
      %893 = vmatprep.subr.bf16.mxu0 0
      %894 = vmatpush1.bf16.msra.mxu0 0
      %895 = vmatprep.subr.bf16.mxu0 0
      %896 = vmatpush1.bf16.msra.mxu0 0
      %897 = vmatprep.subr.bf16.mxu0 0
      %898 = vmatpush1.bf16.msra.mxu0 0
      %899 = vmatprep.subr.bf16.mxu0 0
      %900 = vmatpush1.bf16.msra.mxu0 0
      %901 = vmatprep.subr.bf16.mxu0 0
      %902 = vmatpush1.bf16.msra.mxu0 0
      %903 = vmatprep.mubr.bf16.mxu0 %v625
      %904 = vmatmul.mubr.bf16.gmra.mrb[0].mxu0 %v543
      %v905 = vpop.f32.mrb[0].mxu0
      %v906 = vadd.f32 %v815, %v905
      %v907 = vpop.f32.mrb[0].mxu0
      %v908 = vpop.f32.mrb[0].mxu0
      %v909 = vadd.f32 %v815, %v908
      %v910 = vpop.f32.mrb[0].mxu0
      %911 = vdwg.mxu0
      %v912 = vld [vmem:[%s5] sm:$0xff]
      %v913 = vld [vmem:[%s5 + $0x8] sm:$0xff]
      %v914 = vmul.f32 %v662, %v662
      %v915 = vmul.f32 %v665, %v665
      %v916 = vsel %vm475, %v914, 0.0
      %917 = vadd.xlane.f32.xlu0 %v916
      %v918 = vpop.xlane.xlu0 %917
      %v919 = vsel %vm475, %v915, 0.0
      %920 = vadd.xlane.f32.xlu0 %v919
      %v921 = vpop.xlane.xlu0 %920
      %v922 = vmul.f32 %v918, 0.5
      %v923 = vmul.f32 %v921, 0.5
      %v924 = vmul.f32 %v784, %v784
      %v925 = vmul.f32 %v787, %v787
      %v926 = vsel %vm475, %v924, 0.0
      %927 = vadd.xlane.f32.xlu0 %v926
      %v928 = vpop.xlane.xlu0 %927
      %v929 = vsel %vm475, %v925, 0.0
      %930 = vadd.xlane.f32.xlu0 %v929
      %v931 = vpop.xlane.xlu0 %930
      %v932 = vmul.f32 %v928, 0.5
      %v933 = vmul.f32 %v931, 0.5
      %v935 = vsel %vm475, %v662, 0
      %v938 = vsel %vm475, %v665, 0
      %940 = vmatprep.subr.mxu0 0.0
      %941 = vmatpush1.msra.mxu0 %v912
      %942 = vmatprep.subr.mxu0 0.0
      %943 = vmatpush1.msra.mxu0 %v913
      %944 = vmatprep.subr.mxu0 0.0
      %945 = vmatpush1.msra.mxu0 0.0
      %946 = vmatprep.subr.mxu0 0.0
      %947 = vmatpush1.msra.mxu0 0.0
      %948 = vmatprep.subr.mxu0 0.0
      %949 = vmatpush1.msra.mxu0 0.0
      %950 = vmatprep.subr.mxu0 0.0
      %951 = vmatpush1.msra.mxu0 0.0
      %952 = vmatprep.subr.mxu0 0.0
      %953 = vmatpush1.msra.mxu0 0.0
      %954 = vmatprep.subr.mxu0 0.0
      %955 = vmatpush1.msra.mxu0 0.0
      %956 = vmatprep.subr.mxu0 0.0
      %957 = vmatpush1.msra.mxu0 0.0
      %958 = vmatprep.subr.mxu0 0.0
      %959 = vmatpush1.msra.mxu0 0.0
      %960 = vmatprep.subr.mxu0 0.0
      %961 = vmatpush1.msra.mxu0 0.0
      %962 = vmatprep.subr.mxu0 0.0
      %963 = vmatpush1.msra.mxu0 0.0
      %964 = vmatprep.subr.mxu0 0.0
      %965 = vmatpush1.msra.mxu0 0.0
      %966 = vmatprep.subr.mxu0 0.0
      %967 = vmatpush1.msra.mxu0 0.0
      %968 = vmatprep.subr.mxu0 0.0
      %969 = vmatpush1.msra.mxu0 0.0
      %970 = vmatprep.subr.mxu0 0.0
      %971 = vmatpush1.msra.mxu0 0.0
      %972 = vmatprep.subr.mxu0 0.0
      %973 = vmatpush1.msra.mxu0 0.0
      %974 = vmatprep.subr.mxu0 0.0
      %975 = vmatpush1.msra.mxu0 0.0
      %976 = vmatprep.subr.mxu0 0.0
      %977 = vmatpush1.msra.mxu0 0.0
      %978 = vmatprep.subr.mxu0 0.0
      %979 = vmatpush1.msra.mxu0 0.0
      %980 = vmatprep.subr.mxu0 0.0
      %981 = vmatpush1.msra.mxu0 0.0
      %982 = vmatprep.subr.mxu0 0.0
      %983 = vmatpush1.msra.mxu0 0.0
      %984 = vmatprep.subr.mxu0 0.0
      %985 = vmatpush1.msra.mxu0 0.0
      %986 = vmatprep.subr.mxu0 0.0
      %987 = vmatpush1.msra.mxu0 0.0
      %988 = vmatprep.subr.mxu0 0.0
      %989 = vmatpush1.msra.mxu0 0.0
      %990 = vmatprep.subr.mxu0 0.0
      %991 = vmatpush1.msra.mxu0 0.0
      %992 = vmatprep.subr.mxu0 0.0
      %993 = vmatpush1.msra.mxu0 0.0
      %994 = vmatprep.subr.mxu0 0.0
      %995 = vmatpush1.msra.mxu0 0.0
      %996 = vmatprep.subr.mxu0 0.0
      %997 = vmatpush1.msra.mxu0 0.0
      %998 = vmatprep.subr.mxu0 0.0
      %999 = vmatpush1.msra.mxu0 0.0
      %1000 = vmatprep.subr.mxu0 0.0
      %1001 = vmatpush1.msra.mxu0 0.0
      %1002 = vmatprep.subr.mxu0 0.0
      %1003 = vmatpush1.msra.mxu0 0.0
      %1004 = vmatprep.mubr.f32.mxu0 0.0
      %1005 = vmatmul.mubr.f32.gmra.mrb[0].mxu0 %v935
      %v1006 = vpop.f32.mrb[0].mxu0
      %v1007 = vadd.f32 0.0, %v1006
      %v1008 = vpop.f32.mrb[0].mxu0
      %1009 = vmatprep.mubr.f32.mxu0 0.0
      %1010 = vmatmul.mubr.f32.gmra.mrb[0].mxu0 %v938
      %v1011 = vpop.f32.mrb[0].mxu0
      %v1012 = vadd.f32 0.0, %v1011
      %v1013 = vpop.f32.mrb[0].mxu0
      %1014 = vdwg.mxu0
      %v1015 = vsub.f32 %v1007, %v922
      %v1016 = vsub.f32 %v1012, %v923
      %v1017 = vmul.f32 %v1015, 1.442695
      %v1018 = vpow.pop %v1017
      %v1019 = vmul.f32 %v1016, 1.442695
      %v1020 = vpow.pop %v1019
      %v1021 = vmul.f32 %v1018, 0.35355338
      %v1022 = vmul.f32 %v1020, 0.35355338
      %v1024 = vsel %vm475, %v784, 0
      %v1027 = vsel %vm475, %v787, 0
      %1029 = vmatprep.subr.mxu0 0.0
      %1030 = vmatpush1.msra.mxu0 %v912
      %1031 = vmatprep.subr.mxu0 0.0
      %1032 = vmatpush1.msra.mxu0 %v913
      %1033 = vmatprep.subr.mxu0 0.0
      %1034 = vmatpush1.msra.mxu0 0.0
      %1035 = vmatprep.subr.mxu0 0.0
      %1036 = vmatpush1.msra.mxu0 0.0
      %1037 = vmatprep.subr.mxu0 0.0
      %1038 = vmatpush1.msra.mxu0 0.0
      %1039 = vmatprep.subr.mxu0 0.0
      %1040 = vmatpush1.msra.mxu0 0.0
      %1041 = vmatprep.subr.mxu0 0.0
      %1042 = vmatpush1.msra.mxu0 0.0
      %1043 = vmatprep.subr.mxu0 0.0
      %1044 = vmatpush1.msra.mxu0 0.0
      %1045 = vmatprep.subr.mxu0 0.0
      %1046 = vmatpush1.msra.mxu0 0.0
      %1047 = vmatprep.subr.mxu0 0.0
      %1048 = vmatpush1.msra.mxu0 0.0
      %1049 = vmatprep.subr.mxu0 0.0
      %1050 = vmatpush1.msra.mxu0 0.0
      %1051 = vmatprep.subr.mxu0 0.0
      %1052 = vmatpush1.msra.mxu0 0.0
      %1053 = vmatprep.subr.mxu0 0.0
      %1054 = vmatpush1.msra.mxu0 0.0
      %1055 = vmatprep.subr.mxu0 0.0
      %1056 = vmatpush1.msra.mxu0 0.0
      %1057 = vmatprep.subr.mxu0 0.0
      %1058 = vmatpush1.msra.mxu0 0.0
      %1059 = vmatprep.subr.mxu0 0.0
      %1060 = vmatpush1.msra.mxu0 0.0
      %1061 = vmatprep.subr.mxu0 0.0
      %1062 = vmatpush1.msra.mxu0 0.0
      %1063 = vmatprep.subr.mxu0 0.0
      %1064 = vmatpush1.msra.mxu0 0.0
      %1065 = vmatprep.subr.mxu0 0.0
      %1066 = vmatpush1.msra.mxu0 0.0
      %1067 = vmatprep.subr.mxu0 0.0
      %1068 = vmatpush1.msra.mxu0 0.0
      %1069 = vmatprep.subr.mxu0 0.0
      %1070 = vmatpush1.msra.mxu0 0.0
      %1071 = vmatprep.subr.mxu0 0.0
      %1072 = vmatpush1.msra.mxu0 0.0
      %1073 = vmatprep.subr.mxu0 0.0
      %1074 = vmatpush1.msra.mxu0 0.0
      %1075 = vmatprep.subr.mxu0 0.0
      %1076 = vmatpush1.msra.mxu0 0.0
      %1077 = vmatprep.subr.mxu0 0.0
      %1078 = vmatpush1.msra.mxu0 0.0
      %1079 = vmatprep.subr.mxu0 0.0
      %1080 = vmatpush1.msra.mxu0 0.0
      %1081 = vmatprep.subr.mxu0 0.0
      %1082 = vmatpush1.msra.mxu0 0.0
      %1083 = vmatprep.subr.mxu0 0.0
      %1084 = vmatpush1.msra.mxu0 0.0
      %1085 = vmatprep.subr.mxu0 0.0
      %1086 = vmatpush1.msra.mxu0 0.0
      %1087 = vmatprep.subr.mxu0 0.0
      %1088 = vmatpush1.msra.mxu0 0.0
      %1089 = vmatprep.subr.mxu0 0.0
      %1090 = vmatpush1.msra.mxu0 0.0
      %1091 = vmatprep.subr.mxu0 0.0
      %1092 = vmatpush1.msra.mxu0 0.0
      %1093 = vmatprep.mubr.f32.mxu0 0.0
      %1094 = vmatmul.mubr.f32.gmra.mrb[0].mxu0 %v1024
      %v1095 = vpop.f32.mrb[0].mxu0
      %v1096 = vadd.f32 0.0, %v1095
      %v1097 = vpop.f32.mrb[0].mxu0
      %1098 = vmatprep.mubr.f32.mxu0 0.0
      %1099 = vmatmul.mubr.f32.gmra.mrb[0].mxu0 %v1027
      %v1100 = vpop.f32.mrb[0].mxu0
      %v1101 = vadd.f32 0.0, %v1100
      %v1102 = vpop.f32.mrb[0].mxu0
      %1103 = vdwg.mxu0
      %v1104 = vsub.f32 %v1096, %v932
      %v1105 = vsub.f32 %v1101, %v933
      %v1106 = vmul.f32 %v1104, 1.442695
      %v1107 = vpow.pop %v1106
      %v1108 = vmul.f32 %v1105, 1.442695
      %v1109 = vpow.pop %v1108
      %v1110 = vmul.f32 %v1107, 0.35355338
      %v1111 = vmul.f32 %v1109, 0.35355338
      %vm1112 = vcmask 64512
      %v1113 = vsel %vm1112, %v1021, 0.0
      %v1114 = vsel %vm1112, %v1022, 0.0
      %v1115 = vadd.f32 %v1113, %v1114
      %v1116 = vrot.slane %v1115, 4
      %v1117 = vadd.f32 %v1115, %v1116
      %v1118 = vrot.slane %v1117, 2
      %v1119 = vadd.f32 %v1117, %v1118
      %v1120 = vrot.slane %v1119, 1
      %v1121 = vadd.f32 %v1119, %v1120
      %v1122 = vmul.f32 %v1110, %v1121
      %v1123 = vmul.f32 %v1111, %v1121
      %v1124 = vsel %vm1112, %v1122, 0.0
      %1125 = vadd.xlane.f32.xlu0 %v1124
      %v1126 = vpop.xlane.xlu0 %1125
      %v1127 = vsel %vm1112, %v1123, 0.0
      %1128 = vadd.xlane.f32.xlu0 %v1127
      %v1129 = vpop.xlane.xlu0 %1128
      %1130 = vxpose.xlu0.b32.start [1/16] %v906, 128
      %1131 = vxpose.xlu0.b32.cont [2/16] %v909, 128
      %1132 = vxpose.xlu0.b32.cont [3/16] 0.0, 128
      %1133 = vxpose.xlu0.b32.cont [4/16] 0.0, 128
      %1134 = vxpose.xlu0.b32.cont [5/16] 0.0, 128
      %1135 = vxpose.xlu0.b32.cont [6/16] 0.0, 128
      %1136 = vxpose.xlu0.b32.cont [7/16] 0.0, 128
      %1137 = vxpose.xlu0.b32.cont [8/16] 0.0, 128
      %1138 = vxpose.xlu0.b32.cont [9/16] 0.0, 128
      %1139 = vxpose.xlu0.b32.cont [10/16] 0.0, 128
      %1140 = vxpose.xlu0.b32.cont [11/16] 0.0, 128
      %1141 = vxpose.xlu0.b32.cont [12/16] 0.0, 128
      %1142 = vxpose.xlu0.b32.cont [13/16] 0.0, 128
      %1143 = vxpose.xlu0.b32.cont [14/16] 0.0, 128
      %1144 = vxpose.xlu0.b32.cont [15/16] 0.0, 128
      %1145 = vxpose.xlu0.b32.end [16/16] 0.0, 128
      %v1146 = vpop.trf.xlu0
      %v1147 = vpop.trf.xlu0
      %v1148 = vpop.trf.xlu0
      %v1149 = vpop.trf.xlu0
      %v1150 = vpop.trf.xlu0
      %v1151 = vpop.trf.xlu0
      %v1152 = vpop.trf.xlu0
      %v1153 = vpop.trf.xlu0
      %v1154 = vpop.trf.xlu0
      %v1155 = vpop.trf.xlu0
      %v1156 = vpop.trf.xlu0
      %v1157 = vpop.trf.xlu0
      %v1158 = vpop.trf.xlu0
      %v1159 = vpop.trf.xlu0
      %v1160 = vpop.trf.xlu0
      %v1161 = vpop.trf.xlu0
      %v1163 = vsel %vm475, %v1146, 0
      %v1166 = vsel %vm475, %v1147, 0
      %1168 = vmatprep.subr.mxu0 0.0
      %1169 = vmatpush1.msra.mxu0 %v1021
      %1170 = vmatprep.subr.mxu0 0.0
      %1171 = vmatpush1.msra.mxu0 %v1022
      %1172 = vmatprep.subr.mxu0 0.0
      %1173 = vmatpush1.msra.mxu0 0.0
      %1174 = vmatprep.subr.mxu0 0.0
      %1175 = vmatpush1.msra.mxu0 0.0
      %1176 = vmatprep.subr.mxu0 0.0
      %1177 = vmatpush1.msra.mxu0 0.0
      %1178 = vmatprep.subr.mxu0 0.0
      %1179 = vmatpush1.msra.mxu0 0.0
      %1180 = vmatprep.subr.mxu0 0.0
      %1181 = vmatpush1.msra.mxu0 0.0
      %1182 = vmatprep.subr.mxu0 0.0
      %1183 = vmatpush1.msra.mxu0 0.0
      %1184 = vmatprep.subr.mxu0 0.0
      %1185 = vmatpush1.msra.mxu0 0.0
      %1186 = vmatprep.subr.mxu0 0.0
      %1187 = vmatpush1.msra.mxu0 0.0
      %1188 = vmatprep.subr.mxu0 0.0
      %1189 = vmatpush1.msra.mxu0 0.0
      %1190 = vmatprep.subr.mxu0 0.0
      %1191 = vmatpush1.msra.mxu0 0.0
      %1192 = vmatprep.subr.mxu0 0.0
      %1193 = vmatpush1.msra.mxu0 0.0
      %1194 = vmatprep.subr.mxu0 0.0
      %1195 = vmatpush1.msra.mxu0 0.0
      %1196 = vmatprep.subr.mxu0 0.0
      %1197 = vmatpush1.msra.mxu0 0.0
      %1198 = vmatprep.subr.mxu0 0.0
      %1199 = vmatpush1.msra.mxu0 0.0
      %1200 = vmatprep.subr.mxu0 0.0
      %1201 = vmatpush1.msra.mxu0 0.0
      %1202 = vmatprep.subr.mxu0 0.0
      %1203 = vmatpush1.msra.mxu0 0.0
      %1204 = vmatprep.subr.mxu0 0.0
      %1205 = vmatpush1.msra.mxu0 0.0
      %1206 = vmatprep.subr.mxu0 0.0
      %1207 = vmatpush1.msra.mxu0 0.0
      %1208 = vmatprep.subr.mxu0 0.0
      %1209 = vmatpush1.msra.mxu0 0.0
      %1210 = vmatprep.subr.mxu0 0.0
      %1211 = vmatpush1.msra.mxu0 0.0
      %1212 = vmatprep.subr.mxu0 0.0
      %1213 = vmatpush1.msra.mxu0 0.0
      %1214 = vmatprep.subr.mxu0 0.0
      %1215 = vmatpush1.msra.mxu0 0.0
      %1216 = vmatprep.subr.mxu0 0.0
      %1217 = vmatpush1.msra.mxu0 0.0
      %1218 = vmatprep.subr.mxu0 0.0
      %1219 = vmatpush1.msra.mxu0 0.0
      %1220 = vmatprep.subr.mxu0 0.0
      %1221 = vmatpush1.msra.mxu0 0.0
      %1222 = vmatprep.subr.mxu0 0.0
      %1223 = vmatpush1.msra.mxu0 0.0
      %1224 = vmatprep.subr.mxu0 0.0
      %1225 = vmatpush1.msra.mxu0 0.0
      %1226 = vmatprep.subr.mxu0 0.0
      %1227 = vmatpush1.msra.mxu0 0.0
      %1228 = vmatprep.subr.mxu0 0.0
      %1229 = vmatpush1.msra.mxu0 0.0
      %1230 = vmatprep.subr.mxu0 0.0
      %1231 = vmatpush1.msra.mxu0 0.0
      %1232 = vmatprep.mubr.f32.mxu0 0.0
      %1233 = vmatmul.mubr.f32.gmra.mrb[0].mxu0 %v1163
      %v1234 = vpop.f32.mrb[0].mxu0
      %v1235 = vadd.f32 0.0, %v1234
      %v1236 = vpop.f32.mrb[0].mxu0
      %1237 = vmatprep.mubr.f32.mxu0 0.0
      %1238 = vmatmul.mubr.f32.gmra.mrb[0].mxu0 %v1166
      %v1239 = vpop.f32.mrb[0].mxu0
      %v1240 = vadd.f32 0.0, %v1239
      %v1241 = vpop.f32.mrb[0].mxu0
      %1242 = vdwg.mxu0
      %v1244 = vsel %vm1112, %v1110, 0
      %v1247 = vsel %vm1112, %v1111, 0
      %v1250 = vsel %vm1112, %v1235, 0
      %v1253 = vsel %vm1112, %v1240, 0
      %1255 = vmatprep.subr.mxu0 0.0
      %1256 = vmatpush1.xpose.msra.mxu0 %v1250
      %1257 = vmatprep.subr.mxu0 0.0
      %1258 = vmatpush1.xpose.msra.mxu0 %v1253
      %1259 = vmatprep.subr.mxu0 0.0
      %1260 = vmatpush1.xpose.msra.mxu0 0.0
      %1261 = vmatprep.subr.mxu0 0.0
      %1262 = vmatpush1.xpose.msra.mxu0 0.0
      %1263 = vmatprep.subr.mxu0 0.0
      %1264 = vmatpush1.xpose.msra.mxu0 0.0
      %1265 = vmatprep.subr.mxu0 0.0
      %1266 = vmatpush1.xpose.msra.mxu0 0.0
      %1267 = vmatprep.subr.mxu0 0.0
      %1268 = vmatpush1.xpose.msra.mxu0 0.0
      %1269 = vmatprep.subr.mxu0 0.0
      %1270 = vmatpush1.xpose.msra.mxu0 0.0
      %1271 = vmatprep.subr.mxu0 0.0
      %1272 = vmatpush1.xpose.msra.mxu0 0.0
      %1273 = vmatprep.subr.mxu0 0.0
      %1274 = vmatpush1.xpose.msra.mxu0 0.0
      %1275 = vmatprep.subr.mxu0 0.0
      %1276 = vmatpush1.xpose.msra.mxu0 0.0
      %1277 = vmatprep.subr.mxu0 0.0
      %1278 = vmatpush1.xpose.msra.mxu0 0.0
      %1279 = vmatprep.subr.mxu0 0.0
      %1280 = vmatpush1.xpose.msra.mxu0 0.0
      %1281 = vmatprep.subr.mxu0 0.0
      %1282 = vmatpush1.xpose.msra.mxu0 0.0
      %1283 = vmatprep.subr.mxu0 0.0
      %1284 = vmatpush1.xpose.msra.mxu0 0.0
      %1285 = vmatprep.subr.mxu0 0.0
      %1286 = vmatpush1.xpose.msra.mxu0 0.0
      %1287 = vmatprep.subr.mxu0 0.0
      %1288 = vmatpush1.xpose.msra.mxu0 0.0
      %1289 = vmatprep.subr.mxu0 0.0
      %1290 = vmatpush1.xpose.msra.mxu0 0.0
      %1291 = vmatprep.subr.mxu0 0.0
      %1292 = vmatpush1.xpose.msra.mxu0 0.0
      %1293 = vmatprep.subr.mxu0 0.0
      %1294 = vmatpush1.xpose.msra.mxu0 0.0
      %1295 = vmatprep.subr.mxu0 0.0
      %1296 = vmatpush1.xpose.msra.mxu0 0.0
      %1297 = vmatprep.subr.mxu0 0.0
      %1298 = vmatpush1.xpose.msra.mxu0 0.0
      %1299 = vmatprep.subr.mxu0 0.0
      %1300 = vmatpush1.xpose.msra.mxu0 0.0
      %1301 = vmatprep.subr.mxu0 0.0
      %1302 = vmatpush1.xpose.msra.mxu0 0.0
      %1303 = vmatprep.subr.mxu0 0.0
      %1304 = vmatpush1.xpose.msra.mxu0 0.0
      %1305 = vmatprep.subr.mxu0 0.0
      %1306 = vmatpush1.xpose.msra.mxu0 0.0
      %1307 = vmatprep.subr.mxu0 0.0
      %1308 = vmatpush1.xpose.msra.mxu0 0.0
      %1309 = vmatprep.subr.mxu0 0.0
      %1310 = vmatpush1.xpose.msra.mxu0 0.0
      %1311 = vmatprep.subr.mxu0 0.0
      %1312 = vmatpush1.xpose.msra.mxu0 0.0
      %1313 = vmatprep.subr.mxu0 0.0
      %1314 = vmatpush1.xpose.msra.mxu0 0.0
      %1315 = vmatprep.subr.mxu0 0.0
      %1316 = vmatpush1.xpose.msra.mxu0 0.0
      %1317 = vmatprep.subr.mxu0 0.0
      %1318 = vmatpush1.xpose.msra.mxu0 0.0
      %1319 = vmatprep.mubr.f32.mxu0 0.0
      %1320 = vmatmul.mubr.f32.gmra.mrb[0].mxu0 %v1244
      %v1321 = vpop.f32.mrb[0].mxu0
      %v1322 = vadd.f32 0.0, %v1321
      %v1323 = vpop.f32.mrb[0].mxu0
      %1324 = vmatprep.mubr.f32.mxu0 0.0
      %1325 = vmatmul.mubr.f32.gmra.mrb[0].mxu0 %v1247
      %v1326 = vpop.f32.mrb[0].mxu0
      %v1327 = vadd.f32 0.0, %v1326
      %v1328 = vpop.f32.mrb[0].mxu0
      %1329 = vdwg.mxu0
      %v1330 = vadd.f32 %v1126, 1e-08
      %v1331 = vadd.f32 %v1129, 1e-08
      %v1332 = vrcp.pop %v1330
      %v1333 = vrcp.pop %v1331
      %v1334 = vmul.f32 %v1322, %v1332
      %v1335 = vmul.f32 %v1327, %v1333
      %v1336 = vpack.c.bf16 %v1335, %v1334
      %v1337 = vld [vmem:[%s6] sm:$0xf]
      %v1338 = vld [vmem:[%s6 + $0x4] sm:$0xf]
      %v1341 = vunpack.c.l.b16 %v1337
      %v1342 = vunpack.c.l.b16 %v1338
      %v1343 = vpack.c.b16 %v1342, %v1341
      %v1346 = vsel %vm475, %v1336, 0
      %1348 = vmatprep.subr.bf16.mxu0 0
      %1349 = vmatpush1.bf16.msra.mxu0 %v1343
      %1350 = vmatprep.subr.bf16.mxu0 0
      %1351 = vmatpush1.bf16.msra.mxu0 0
      %1352 = vmatprep.subr.bf16.mxu0 0
      %1353 = vmatpush1.bf16.msra.mxu0 0
      %1354 = vmatprep.subr.bf16.mxu0 0
      %1355 = vmatpush1.bf16.msra.mxu0 0
      %1356 = vmatprep.subr.bf16.mxu0 0
      %1357 = vmatpush1.bf16.msra.mxu0 0
      %1358 = vmatprep.subr.bf16.mxu0 0
      %1359 = vmatpush1.bf16.msra.mxu0 0
      %1360 = vmatprep.subr.bf16.mxu0 0
      %1361 = vmatpush1.bf16.msra.mxu0 0
      %1362 = vmatprep.subr.bf16.mxu0 0
      %1363 = vmatpush1.bf16.msra.mxu0 0
      %1364 = vmatprep.subr.bf16.mxu0 0
      %1365 = vmatpush1.bf16.msra.mxu0 0
      %1366 = vmatprep.subr.bf16.mxu0 0
      %1367 = vmatpush1.bf16.msra.mxu0 0
      %1368 = vmatprep.subr.bf16.mxu0 0
      %1369 = vmatpush1.bf16.msra.mxu0 0
      %1370 = vmatprep.subr.bf16.mxu0 0
      %1371 = vmatpush1.bf16.msra.mxu0 0
      %1372 = vmatprep.subr.bf16.mxu0 0
      %1373 = vmatpush1.bf16.msra.mxu0 0
      %1374 = vmatprep.subr.bf16.mxu0 0
      %1375 = vmatpush1.bf16.msra.mxu0 0
      %1376 = vmatprep.subr.bf16.mxu0 0
      %1377 = vmatpush1.bf16.msra.mxu0 0
      %1378 = vmatprep.subr.bf16.mxu0 0
      %1379 = vmatpush1.bf16.msra.mxu0 0
      %1380 = vmatprep.mubr.bf16.mxu0 0
      %1381 = vmatmul.mubr.bf16.gmra.mrb[0].mxu0 %v1346
      %v1382 = vpop.f32.mrb[0].mxu0
      %v1383 = vadd.f32 0.0, %v1382
      %v1384 = vpop.f32.mrb[0].mxu0
      %v1385 = vpop.f32.mrb[0].mxu0
      %v1386 = vadd.f32 0.0, %v1385
      %v1387 = vpop.f32.mrb[0].mxu0
      %1388 = vdwg.mxu0
      %v1389 = vadd.f32 %v906, %v1383
      %v1390 = vadd.f32 %v909, %v1386
      %v1391 = vld [vmem:[%s7] sm:$0x1]
      %v1393 = vlaneseq
      %v1394 = vshrl.u32 %v1393, 7
      %v1395 = vsub.s32 0, %v1394
      %v1396 = vrot.slane %v1391, %v1395
      %v1398 = vadd.f32 %v1389, %v1396
      %v1399 = vadd.f32 %v1390, %v1396
      %v1400 = vld [vmem:[%s8] sm:$0x1]
      %v1401 = vld [vmem:[%s9] sm:$0x1]
      %v1402 = vsel %vm475, %v1398, 0.0
      %1403 = vadd.xlane.f32.xlu0 %v1402
      %v1404 = vpop.xlane.xlu0 %1403
      %v1405 = vsel %vm475, %v1399, 0.0
      %1406 = vadd.xlane.f32.xlu0 %v1405
      %v1407 = vpop.xlane.xlu0 %1406
      %v1408 = vrcp.pop 16.0
      %v1409 = vmul.f32 %v1404, %v1408
      %v1410 = vmul.f32 %v1407, %v1408
      %v1411 = vsub.f32 %v1398, %v1409
      %v1412 = vsub.f32 %v1399, %v1410
      %v1413 = vmul.f32 %v1411, %v1411
      %v1414 = vmul.f32 %v1412, %v1412
      %v1415 = vsel %vm475, %v1413, 0.0
      %1416 = vadd.xlane.f32.xlu0 %v1415
      %v1417 = vpop.xlane.xlu0 %1416
      %v1418 = vsel %vm475, %v1414, 0.0
      %1419 = vadd.xlane.f32.xlu0 %v1418
      %v1420 = vpop.xlane.xlu0 %1419
      %v1421 = vmul.f32 %v1417, %v1408
      %v1422 = vmul.f32 %v1420, %v1408
      %v1423 = vadd.f32 %v1421, 1e-05
      %v1424 = vadd.f32 %v1422, 1e-05
      %v1425 = vrsqrt.pop %v1423
      %v1426 = vrsqrt.pop %v1424
      %v1427 = vmul.f32 %v1411, %v1425
      %v1428 = vmul.f32 %v1412, %v1426
      %v1430 = vlaneseq
      %v1431 = vshrl.u32 %v1430, 7
      %v1432 = vsub.s32 0, %v1431
      %v1433 = vrot.slane %v1400, %v1432
      %v1435 = vmul.f32 %v1427, %v1433
      %v1436 = vmul.f32 %v1428, %v1433
      %v1438 = vlaneseq
      %v1439 = vshrl.u32 %v1438, 7
      %v1440 = vsub.s32 0, %v1439
      %v1441 = vrot.slane %v1401, %v1440
      %v1443 = vadd.f32 %v1435, %v1441
      %v1444 = vadd.f32 %v1436, %v1441
      %v1445 = vpack.c.bf16 %v1444, %v1443
      %v1446 = vld [vmem:[%s10] sm:$0xf]
      %v1447 = vld [vmem:[%s10 + $0x4] sm:$0xf]
      %v1448 = vld [vmem:[%s11] sm:$0x1]
      %v1450 = vlaneseq
      %v1451 = vshrl.u32 %v1450, 7
      %v1452 = vsub.s32 0, %v1451
      %v1453 = vrot.slane %v1448, %v1452
      %v1457 = vunpack.c.l.b16 %v1446
      %v1458 = vunpack.c.l.b16 %v1447
      %v1459 = vpack.c.b16 %v1458, %v1457
      %v1462 = vsel %vm475, %v1445, 0
      %1464 = vmatprep.subr.bf16.mxu0 0
      %1465 = vmatpush1.bf16.msra.mxu0 %v1459
      %1466 = vmatprep.subr.bf16.mxu0 0
      %1467 = vmatpush1.bf16.msra.mxu0 0
      %1468 = vmatprep.subr.bf16.mxu0 0
      %1469 = vmatpush1.bf16.msra.mxu0 0
      %1470 = vmatprep.subr.bf16.mxu0 0
      %1471 = vmatpush1.bf16.msra.mxu0 0
      %1472 = vmatprep.subr.bf16.mxu0 0
      %1473 = vmatpush1.bf16.msra.mxu0 0
      %1474 = vmatprep.subr.bf16.mxu0 0
      %1475 = vmatpush1.bf16.msra.mxu0 0
      %1476 = vmatprep.subr.bf16.mxu0 0
      %1477 = vmatpush1.bf16.msra.mxu0 0
      %1478 = vmatprep.subr.bf16.mxu0 0
      %1479 = vmatpush1.bf16.msra.mxu0 0
      %1480 = vmatprep.subr.bf16.mxu0 0
      %1481 = vmatpush1.bf16.msra.mxu0 0
      %1482 = vmatprep.subr.bf16.mxu0 0
      %1483 = vmatpush1.bf16.msra.mxu0 0
      %1484 = vmatprep.subr.bf16.mxu0 0
      %1485 = vmatpush1.bf16.msra.mxu0 0
      %1486 = vmatprep.subr.bf16.mxu0 0
      %1487 = vmatpush1.bf16.msra.mxu0 0
      %1488 = vmatprep.subr.bf16.mxu0 0
      %1489 = vmatpush1.bf16.msra.mxu0 0
      %1490 = vmatprep.subr.bf16.mxu0 0
      %1491 = vmatpush1.bf16.msra.mxu0 0
      %1492 = vmatprep.subr.bf16.mxu0 0
      %1493 = vmatpush1.bf16.msra.mxu0 0
      %1494 = vmatprep.subr.bf16.mxu0 0
      %1495 = vmatpush1.bf16.msra.mxu0 0
      %1496 = vmatprep.mubr.bf16.mxu0 0
      %1497 = vmatmul.mubr.bf16.gmra.mrb[0].mxu0 %v1462
      %v1498 = vpop.f32.mrb[0].mxu0
      %v1499 = vadd.f32 %v1453, %v1498
      %v1500 = vpop.f32.mrb[0].mxu0
      %v1501 = vpop.f32.mrb[0].mxu0
      %v1502 = vadd.f32 %v1453, %v1501
      %v1503 = vpop.f32.mrb[0].mxu0
      %1504 = vdwg.mxu0
      %v1505 = vmul.f32 %v1499, 0.5
      %v1506 = vmul.f32 %v1502, 0.5
      %v1507 = vmul.f32 %v1499, 0.044715
      %v1508 = vmul.f32 %v1502, 0.044715
      %v1509 = vmul.f32 %v1507, %v1499
      %v1510 = vmul.f32 %v1508, %v1502
      %v1511 = vmul.f32 %v1509, %v1499
      %v1512 = vmul.f32 %v1510, %v1502
      %v1513 = vadd.f32 %v1499, %v1511
      %v1514 = vadd.f32 %v1502, %v1512
      %v1515 = vmul.f32 %v1513, 0.7978846
      %v1516 = vmul.f32 %v1514, 0.7978846
      %v1517 = vtanh.pop %v1515
      %v1518 = vtanh.pop %v1516
      %v1519 = vadd.f32 %v1517, 1.0
      %v1520 = vadd.f32 %v1518, 1.0
      %v1521 = vmul.f32 %v1505, %v1519
      %v1522 = vmul.f32 %v1506, %v1520
      %v1523 = vpack.c.bf16 %v1522, %v1521
      %v1524 = vld [vmem:[%s12] sm:$0xf]
      %v1525 = vld [vmem:[%s12 + $0x4] sm:$0xf]
      %v1526 = vld [vmem:[%s13] sm:$0x1]
      %v1528 = vlaneseq
      %v1529 = vshrl.u32 %v1528, 7
      %v1530 = vsub.s32 0, %v1529
      %v1531 = vrot.slane %v1526, %v1530
      %v1535 = vunpack.c.l.b16 %v1524
      %v1536 = vunpack.c.l.b16 %v1525
      %v1537 = vpack.c.b16 %v1536, %v1535
      %v1540 = vsel %vm475, %v1523, 0
      %1542 = vmatprep.subr.bf16.mxu0 0
      %1543 = vmatpush1.bf16.msra.mxu0 %v1537
      %1544 = vmatprep.subr.bf16.mxu0 0
      %1545 = vmatpush1.bf16.msra.mxu0 0
      %1546 = vmatprep.subr.bf16.mxu0 0
      %1547 = vmatpush1.bf16.msra.mxu0 0
      %1548 = vmatprep.subr.bf16.mxu0 0
      %1549 = vmatpush1.bf16.msra.mxu0 0
      %1550 = vmatprep.subr.bf16.mxu0 0
      %1551 = vmatpush1.bf16.msra.mxu0 0
      %1552 = vmatprep.subr.bf16.mxu0 0
      %1553 = vmatpush1.bf16.msra.mxu0 0
      %1554 = vmatprep.subr.bf16.mxu0 0
      %1555 = vmatpush1.bf16.msra.mxu0 0
      %1556 = vmatprep.subr.bf16.mxu0 0
      %1557 = vmatpush1.bf16.msra.mxu0 0
      %1558 = vmatprep.subr.bf16.mxu0 0
      %1559 = vmatpush1.bf16.msra.mxu0 0
      %1560 = vmatprep.subr.bf16.mxu0 0
      %1561 = vmatpush1.bf16.msra.mxu0 0
      %1562 = vmatprep.subr.bf16.mxu0 0
      %1563 = vmatpush1.bf16.msra.mxu0 0
      %1564 = vmatprep.subr.bf16.mxu0 0
      %1565 = vmatpush1.bf16.msra.mxu0 0
      %1566 = vmatprep.subr.bf16.mxu0 0
      %1567 = vmatpush1.bf16.msra.mxu0 0
      %1568 = vmatprep.subr.bf16.mxu0 0
      %1569 = vmatpush1.bf16.msra.mxu0 0
      %1570 = vmatprep.subr.bf16.mxu0 0
      %1571 = vmatpush1.bf16.msra.mxu0 0
      %1572 = vmatprep.subr.bf16.mxu0 0
      %1573 = vmatpush1.bf16.msra.mxu0 0
      %1574 = vmatprep.mubr.bf16.mxu0 0
      %1575 = vmatmul.mubr.bf16.gmra.mrb[0].mxu0 %v1540
      %v1576 = vpop.f32.mrb[0].mxu0
      %v1577 = vadd.f32 %v1531, %v1576
      %v1578 = vpop.f32.mrb[0].mxu0
      %v1579 = vpop.f32.mrb[0].mxu0
      %v1580 = vadd.f32 %v1531, %v1579
      %v1581 = vpop.f32.mrb[0].mxu0
      %1582 = vdwg.mxu0
      %v1583 = vadd.f32 %v1398, %v1577
      %v1584 = vadd.f32 %v1399, %v1580
      %1585 = vst.msk [vmem:[%s467] sm:$0xff] %vm475, %v1583
      %1586 = vst.msk [vmem:[%s467 + $0x8] sm:$0xff] %vm475, %v1584
      %p1587 = scmp.lt.s32.totalorder %s25, 1
      %s1588 = scalar_select %p1587, %s25, 1
      %s1589 = smul.addr %s1588, 2
      %s1590 = smul.addr %s1589, 8
      %s1591 = scalar_lea.vmem %s14, %s1590
      // Predicated region
      $region77: #{t2t_vit_feature_forward.5} parent=75 // pred_check
        %p1592 = pneg %p342
      $region78: #{t2t_vit_feature_forward.5} parent=75 // pred_check_branch
        %1594 = sbr.rel (%p1592) target = $region80
      $region79: #{t2t_vit_feature_forward.5} parent=75 // pred_region
        _
      $region80: #{t2t_vit_feature_forward.5} parent=75 // pred_fallthru
        _
    $region76: #{t2t_vit_feature_forward.5} parent=5 // pred_fallthru
      _
    %p1595 = scmp.le.s32.totalorder 2, %s20
    // Predicated region
    $region81: #{t2t_vit_feature_forward.5} parent=5 // pred_check
      %p1596 = pneg %p1595
    $region82: #{t2t_vit_feature_forward.5} parent=5 // pred_check_branch
      %1598 = sbr.rel (%p1596) target = $region84
    $region83: #{t2t_vit_feature_forward.5} parent=5 // pred_region
      %s1599 = ssub.s32 %s20, 2
      // Predicated region
      $region85: #{t2t_vit_feature_forward.5} parent=83 // pred_check
        %p1600 = pneg %p348
      $region86: #{t2t_vit_feature_forward.5} parent=83 // pred_check_branch
        %1602 = sbr.rel (%p1600) target = $region88
      $region87: #{t2t_vit_feature_forward.5} parent=83 // pred_region
        %p1603 = scmp.lt.s32.totalorder %s26, 1
        %s1604 = scalar_select %p1603, %s26, 1
        %s1605 = smul.addr %s1604, 2
        %s1606 = smul.addr %s1605, 8
        %s1607 = scalar_lea.vmem %s14, %s1606
      $region88: #{t2t_vit_feature_forward.5} parent=83 // pred_fallthru
        _
    $region84: #{t2t_vit_feature_forward.5} parent=5 // pred_fallthru
      _
  $region6: #{t2t_vit_feature_forward.5} parent=0 // loop_footer
    %s24 = sadd.s32 1, %s20
  $region7: #{t2t_vit_feature_forward.5} parent=0 // loop_footer_branch
    %19 = sbr.rel target = $region3
  $region8: #{t2t_vit_feature_forward.5} parent=0 // loop_exit
    _

// kernel: t2t_vit_feature_forward.4
$region0: #{t2t_vit_feature_forward.4}
  #allocation0 [shape = 'u32[]', space=smem, size = 0x4, offset = 0x4, fixed_abs, tag = 'smem constant byte address 0x4 - core index']
  #allocation1 [shape = 'u32[144,128]{1,0:T(1,128)}', space=vmem, size = 0x12000, scoped, tag = 'internal scratch']
  %s0 = inlined_call_operand.vmem [shape: f32[2,64,147], index: 0, kind: input, shape index: {}]
  %s1 = inlined_call_operand.vmem [shape: f32[1,147], index: 1, kind: input, shape index: {}]
  %s2 = inlined_call_operand.vmem [shape: f32[1,147], index: 2, kind: input, shape index: {}]
  %s3 = inlined_call_operand.vmem [shape: bf16[3,147,16], index: 3, kind: input, shape index: {}]
  %s4 = inlined_call_operand.vmem [shape: f32[3,1,16], index: 4, kind: input, shape index: {}]
  %s5 = inlined_call_operand.vmem [shape: f32[16,8], index: 5, kind: input, shape index: {}]
  %s6 = inlined_call_operand.vmem [shape: bf16[16,16], index: 6, kind: input, shape index: {}]
  %s7 = inlined_call_operand.vmem [shape: f32[1,16], index: 7, kind: input, shape index: {}]
  %s8 = inlined_call_operand.vmem [shape: f32[1,16], index: 8, kind: input, shape index: {}]
  %s9 = inlined_call_operand.vmem [shape: f32[1,16], index: 9, kind: input, shape index: {}]
  %s10 = inlined_call_operand.vmem [shape: bf16[16,16], index: 10, kind: input, shape index: {}]
  %s11 = inlined_call_operand.vmem [shape: f32[1,16], index: 11, kind: input, shape index: {}]
  %s12 = inlined_call_operand.vmem [shape: bf16[16,16], index: 12, kind: input, shape index: {}]
  %s13 = inlined_call_operand.vmem [shape: f32[1,16], index: 13, kind: input, shape index: {}]
  %s14 = inlined_call_operand.vmem [shape: f32[2,64,16], index: 14, kind: output, shape index: {}]
  %s15 = sld [smem:[#allocation0]]
  $region89: #{t2t_vit_feature_forward.4} parent=0
    _
  %s17 = ssub.s32 1, %s15
  %s18 = scalar_select 0, %s17, %s15
  loop: start=0, step=1, limit=4
  $region2: #{t2t_vit_feature_forward.4} parent=0 // loop_pre_header
    _
  $region3: #{t2t_vit_feature_forward.4} parent=0 // loop_header
    %s20 = sphi 0, %s24
    %p21 = scmp.ge.s32.totalorder %s20, 4
    %s30 = sphi 0, %s32
    %s33 = sphi 0, %s30
    %s34 = sphi 0, %s33
    %s50 = sphi 0, %s34
    %s54 = sphi 0, %s54
    %s56 = sphi 0, %s54
    %s57 = sphi 0, %s56
    %s71 = sphi 0, %s57
    %s75 = sphi 0, %s75
    %s77 = sphi 0, %s75
    %s78 = sphi 0, %s77
    %s92 = sphi 0, %s78
    %s96 = sphi 0, %s96
    %s98 = sphi 0, %s96
    %s99 = sphi 0, %s98
    %s113 = sphi 0, %s99
    %s117 = sphi 0, %s117
    %s119 = sphi 0, %s117
    %s120 = sphi 0, %s119
    %s134 = sphi 0, %s120
    %s138 = sphi 0, %s138
    %s140 = sphi 0, %s138
    %s141 = sphi 0, %s140
    %s155 = sphi 0, %s141
    %s159 = sphi 0, %s159
    %s161 = sphi 0, %s159
    %s162 = sphi 0, %s161
    %s176 = sphi 0, %s162
    %s180 = sphi 0, %s180
    %s182 = sphi 0, %s180
    %s183 = sphi 0, %s182
    %s197 = sphi 0, %s183
    %s201 = sphi 0, %s201
    %s203 = sphi 0, %s201
    %s204 = sphi 0, %s203
    %s218 = sphi 0, %s204
    %s222 = sphi 0, %s222
    %s224 = sphi 0, %s222
    %s225 = sphi 0, %s224
    %s239 = sphi 0, %s225
    %s243 = sphi 0, %s243
    %s245 = sphi 0, %s243
    %s246 = sphi 0, %s245
    %s260 = sphi 0, %s246
    %s264 = sphi 0, %s264
    %s266 = sphi 0, %s264
    %s267 = sphi 0, %s266
    %s281 = sphi 0, %s267
    %s285 = sphi 0, %s285
    %s287 = sphi 0, %s285
    %s288 = sphi 0, %s287
    %s302 = sphi 0, %s288
    %s306 = sphi 0, %s306
    %s308 = sphi 0, %s306
    %s309 = sphi 0, %s308
    %s323 = sphi 0, %s309
    %s329 = sphi 0, %s331
    %s332 = sphi 0, %s329
    %s333 = sphi 0, %s332
    %s349 = sphi 0, %s333
  $region4: #{t2t_vit_feature_forward.4} parent=0 // loop_header_branch
    %23 = sbr.rel (%p21) target = $region8
  $region5: #{t2t_vit_feature_forward.4} parent=0 // loop_body
    %s25 = ssub.s32 %s20, 1
    %s26 = ssub.s32 %s20, 2
    %s27 = sadd.s32 %s20, 1
    %s28 = ssub.s32 %s20, %s27
    %p29 = scmp.eq.s32.totalorder %s28, 0
    %s31 = sadd.s32 %s30, 1
    %s32 = scalar_select %p29, %s30, %s31
    %p35 = pneg %p29
    %p36 = scmp.eq.s32.totalorder %s20, 1
    %p37 = por %p35, %p36
    %p38 = scmp.ne.s32.totalorder %s30, %s33
    %p39 = scmp.eq.s32.totalorder %s20, 0
    %p40 = por %p38, %p39
    %p41 = scmp.ne.s32.totalorder %s30, %s33
    %p42 = scmp.eq.s32.totalorder %s25, 1
    %p43 = por %p41, %p42
    %p44 = scmp.ne.s32.totalorder %s33, %s34
    %p45 = scmp.eq.s32.totalorder %s25, 0
    %p46 = por %p44, %p45
    %p47 = scmp.ne.s32.totalorder %s33, %s34
    %p48 = scmp.eq.s32.totalorder %s26, 1
    %p49 = por %p47, %p48
    %p51 = scmp.ne.s32.totalorder %s34, %s50
    %p52 = scmp.eq.s32.totalorder %s26, 0
    %p53 = por %p51, %p52
    %s55 = sadd.s32 %s54, 1
    %p58 = scmp.eq.s32.totalorder %s20, 1
    %p59 = scmp.ne.s32.totalorder %s54, %s56
    %p60 = scmp.eq.s32.totalorder %s20, 0
    %p61 = por %p59, %p60
    %p62 = scmp.ne.s32.totalorder %s54, %s56
    %p63 = scmp.eq.s32.totalorder %s25, 1
    %p64 = por %p62, %p63
    %p65 = scmp.ne.s32.totalorder %s56, %s57
    %p66 = scmp.eq.s32.totalorder %s25, 0
    %p67 = por %p65, %p66
    %p68 = scmp.ne.s32.totalorder %s56, %s57
    %p69 = scmp.eq.s32.totalorder %s26, 1
    %p70 = por %p68, %p69
    %p72 = scmp.ne.s32.totalorder %s57, %s71
    %p73 = scmp.eq.s32.totalorder %s26, 0
    %p74 = por %p72, %p73
    %s76 = sadd.s32 %s75, 1
    %p79 = scmp.eq.s32.totalorder %s20, 1
    %p80 = scmp.ne.s32.totalorder %s75, %s77
    %p81 = scmp.eq.s32.totalorder %s20, 0
    %p82 = por %p80, %p81
    %p83 = scmp.ne.s32.totalorder %s75, %s77
    %p84 = scmp.eq.s32.totalorder %s25, 1
    %p85 = por %p83, %p84
    %p86 = scmp.ne.s32.totalorder %s77, %s78
    %p87 = scmp.eq.s32.totalorder %s25, 0
    %p88 = por %p86, %p87
    %p89 = scmp.ne.s32.totalorder %s77, %s78
    %p90 = scmp.eq.s32.totalorder %s26, 1
    %p91 = por %p89, %p90
    %p93 = scmp.ne.s32.totalorder %s78, %s92
    %p94 = scmp.eq.s32.totalorder %s26, 0
    %p95 = por %p93, %p94
    %s97 = sadd.s32 %s96, 1
    %p100 = scmp.eq.s32.totalorder %s20, 1
    %p101 = scmp.ne.s32.totalorder %s96, %s98
    %p102 = scmp.eq.s32.totalorder %s20, 0
    %p103 = por %p101, %p102
    %p104 = scmp.ne.s32.totalorder %s96, %s98
    %p105 = scmp.eq.s32.totalorder %s25, 1
    %p106 = por %p104, %p105
    %p107 = scmp.ne.s32.totalorder %s98, %s99
    %p108 = scmp.eq.s32.totalorder %s25, 0
    %p109 = por %p107, %p108
    %p110 = scmp.ne.s32.totalorder %s98, %s99
    %p111 = scmp.eq.s32.totalorder %s26, 1
    %p112 = por %p110, %p111
    %p114 = scmp.ne.s32.totalorder %s99, %s113
    %p115 = scmp.eq.s32.totalorder %s26, 0
    %p116 = por %p114, %p115
    %s118 = sadd.s32 %s117, 1
    %p121 = scmp.eq.s32.totalorder %s20, 1
    %p122 = scmp.ne.s32.totalorder %s117, %s119
    %p123 = scmp.eq.s32.totalorder %s20, 0
    %p124 = por %p122, %p123
    %p125 = scmp.ne.s32.totalorder %s117, %s119
    %p126 = scmp.eq.s32.totalorder %s25, 1
    %p127 = por %p125, %p126
    %p128 = scmp.ne.s32.totalorder %s119, %s120
    %p129 = scmp.eq.s32.totalorder %s25, 0
    %p130 = por %p128, %p129
    %p131 = scmp.ne.s32.totalorder %s119, %s120
    %p132 = scmp.eq.s32.totalorder %s26, 1
    %p133 = por %p131, %p132
    %p135 = scmp.ne.s32.totalorder %s120, %s134
    %p136 = scmp.eq.s32.totalorder %s26, 0
    %p137 = por %p135, %p136
    %s139 = sadd.s32 %s138, 1
    %p142 = scmp.eq.s32.totalorder %s20, 1
    %p143 = scmp.ne.s32.totalorder %s138, %s140
    %p144 = scmp.eq.s32.totalorder %s20, 0
    %p145 = por %p143, %p144
    %p146 = scmp.ne.s32.totalorder %s138, %s140
    %p147 = scmp.eq.s32.totalorder %s25, 1
    %p148 = por %p146, %p147
    %p149 = scmp.ne.s32.totalorder %s140, %s141
    %p150 = scmp.eq.s32.totalorder %s25, 0
    %p151 = por %p149, %p150
    %p152 = scmp.ne.s32.totalorder %s140, %s141
    %p153 = scmp.eq.s32.totalorder %s26, 1
    %p154 = por %p152, %p153
    %p156 = scmp.ne.s32.totalorder %s141, %s155
    %p157 = scmp.eq.s32.totalorder %s26, 0
    %p158 = por %p156, %p157
    %s160 = sadd.s32 %s159, 1
    %p163 = scmp.eq.s32.totalorder %s20, 1
    %p164 = scmp.ne.s32.totalorder %s159, %s161
    %p165 = scmp.eq.s32.totalorder %s20, 0
    %p166 = por %p164, %p165
    %p167 = scmp.ne.s32.totalorder %s159, %s161
    %p168 = scmp.eq.s32.totalorder %s25, 1
    %p169 = por %p167, %p168
    %p170 = scmp.ne.s32.totalorder %s161, %s162
    %p171 = scmp.eq.s32.totalorder %s25, 0
    %p172 = por %p170, %p171
    %p173 = scmp.ne.s32.totalorder %s161, %s162
    %p174 = scmp.eq.s32.totalorder %s26, 1
    %p175 = por %p173, %p174
    %p177 = scmp.ne.s32.totalorder %s162, %s176
    %p178 = scmp.eq.s32.totalorder %s26, 0
    %p179 = por %p177, %p178
    %s181 = sadd.s32 %s180, 1
    %p184 = scmp.eq.s32.totalorder %s20, 1
    %p185 = scmp.ne.s32.totalorder %s180, %s182
    %p186 = scmp.eq.s32.totalorder %s20, 0
    %p187 = por %p185, %p186
    %p188 = scmp.ne.s32.totalorder %s180, %s182
    %p189 = scmp.eq.s32.totalorder %s25, 1
    %p190 = por %p188, %p189
    %p191 = scmp.ne.s32.totalorder %s182, %s183
    %p192 = scmp.eq.s32.totalorder %s25, 0
    %p193 = por %p191, %p192
    %p194 = scmp.ne.s32.totalorder %s182, %s183
    %p195 = scmp.eq.s32.totalorder %s26, 1
    %p196 = por %p194, %p195
    %p198 = scmp.ne.s32.totalorder %s183, %s197
    %p199 = scmp.eq.s32.totalorder %s26, 0
    %p200 = por %p198, %p199
    %s202 = sadd.s32 %s201, 1
    %p205 = scmp.eq.s32.totalorder %s20, 1
    %p206 = scmp.ne.s32.totalorder %s201, %s203
    %p207 = scmp.eq.s32.totalorder %s20, 0
    %p208 = por %p206, %p207
    %p209 = scmp.ne.s32.totalorder %s201, %s203
    %p210 = scmp.eq.s32.totalorder %s25, 1
    %p211 = por %p209, %p210
    %p212 = scmp.ne.s32.totalorder %s203, %s204
    %p213 = scmp.eq.s32.totalorder %s25, 0
    %p214 = por %p212, %p213
    %p215 = scmp.ne.s32.totalorder %s203, %s204
    %p216 = scmp.eq.s32.totalorder %s26, 1
    %p217 = por %p215, %p216
    %p219 = scmp.ne.s32.totalorder %s204, %s218
    %p220 = scmp.eq.s32.totalorder %s26, 0
    %p221 = por %p219, %p220
    %s223 = sadd.s32 %s222, 1
    %p226 = scmp.eq.s32.totalorder %s20, 1
    %p227 = scmp.ne.s32.totalorder %s222, %s224
    %p228 = scmp.eq.s32.totalorder %s20, 0
    %p229 = por %p227, %p228
    %p230 = scmp.ne.s32.totalorder %s222, %s224
    %p231 = scmp.eq.s32.totalorder %s25, 1
    %p232 = por %p230, %p231
    %p233 = scmp.ne.s32.totalorder %s224, %s225
    %p234 = scmp.eq.s32.totalorder %s25, 0
    %p235 = por %p233, %p234
    %p236 = scmp.ne.s32.totalorder %s224, %s225
    %p237 = scmp.eq.s32.totalorder %s26, 1
    %p238 = por %p236, %p237
    %p240 = scmp.ne.s32.totalorder %s225, %s239
    %p241 = scmp.eq.s32.totalorder %s26, 0
    %p242 = por %p240, %p241
    %s244 = sadd.s32 %s243, 1
    %p247 = scmp.eq.s32.totalorder %s20, 1
    %p248 = scmp.ne.s32.totalorder %s243, %s245
    %p249 = scmp.eq.s32.totalorder %s20, 0
    %p250 = por %p248, %p249
    %p251 = scmp.ne.s32.totalorder %s243, %s245
    %p252 = scmp.eq.s32.totalorder %s25, 1
    %p253 = por %p251, %p252
    %p254 = scmp.ne.s32.totalorder %s245, %s246
    %p255 = scmp.eq.s32.totalorder %s25, 0
    %p256 = por %p254, %p255
    %p257 = scmp.ne.s32.totalorder %s245, %s246
    %p258 = scmp.eq.s32.totalorder %s26, 1
    %p259 = por %p257, %p258
    %p261 = scmp.ne.s32.totalorder %s246, %s260
    %p262 = scmp.eq.s32.totalorder %s26, 0
    %p263 = por %p261, %p262
    %s265 = sadd.s32 %s264, 1
    %p268 = scmp.eq.s32.totalorder %s20, 1
    %p269 = scmp.ne.s32.totalorder %s264, %s266
    %p270 = scmp.eq.s32.totalorder %s20, 0
    %p271 = por %p269, %p270
    %p272 = scmp.ne.s32.totalorder %s264, %s266
    %p273 = scmp.eq.s32.totalorder %s25, 1
    %p274 = por %p272, %p273
    %p275 = scmp.ne.s32.totalorder %s266, %s267
    %p276 = scmp.eq.s32.totalorder %s25, 0
    %p277 = por %p275, %p276
    %p278 = scmp.ne.s32.totalorder %s266, %s267
    %p279 = scmp.eq.s32.totalorder %s26, 1
    %p280 = por %p278, %p279
    %p282 = scmp.ne.s32.totalorder %s267, %s281
    %p283 = scmp.eq.s32.totalorder %s26, 0
    %p284 = por %p282, %p283
    %s286 = sadd.s32 %s285, 1
    %p289 = scmp.eq.s32.totalorder %s20, 1
    %p290 = scmp.ne.s32.totalorder %s285, %s287
    %p291 = scmp.eq.s32.totalorder %s20, 0
    %p292 = por %p290, %p291
    %p293 = scmp.ne.s32.totalorder %s285, %s287
    %p294 = scmp.eq.s32.totalorder %s25, 1
    %p295 = por %p293, %p294
    %p296 = scmp.ne.s32.totalorder %s287, %s288
    %p297 = scmp.eq.s32.totalorder %s25, 0
    %p298 = por %p296, %p297
    %p299 = scmp.ne.s32.totalorder %s287, %s288
    %p300 = scmp.eq.s32.totalorder %s26, 1
    %p301 = por %p299, %p300
    %p303 = scmp.ne.s32.totalorder %s288, %s302
    %p304 = scmp.eq.s32.totalorder %s26, 0
    %p305 = por %p303, %p304
    %s307 = sadd.s32 %s306, 1
    %p310 = scmp.eq.s32.totalorder %s20, 1
    %p311 = scmp.ne.s32.totalorder %s306, %s308
    %p312 = scmp.eq.s32.totalorder %s20, 0
    %p313 = por %p311, %p312
    %p314 = scmp.ne.s32.totalorder %s306, %s308
    %p315 = scmp.eq.s32.totalorder %s25, 1
    %p316 = por %p314, %p315
    %p317 = scmp.ne.s32.totalorder %s308, %s309
    %p318 = scmp.eq.s32.totalorder %s25, 0
    %p319 = por %p317, %p318
    %p320 = scmp.ne.s32.totalorder %s308, %s309
    %p321 = scmp.eq.s32.totalorder %s26, 1
    %p322 = por %p320, %p321
    %p324 = scmp.ne.s32.totalorder %s309, %s323
    %p325 = scmp.eq.s32.totalorder %s26, 0
    %p326 = por %p324, %p325
    %s327 = ssub.s32 %s20, %s27
    %p328 = scmp.eq.s32.totalorder %s327, 0
    %s330 = sadd.s32 %s329, 1
    %s331 = scalar_select %p328, %s329, %s330
    %p334 = pneg %p328
    %p335 = scmp.eq.s32.totalorder %s20, 1
    %p336 = por %p334, %p335
    %p337 = scmp.ne.s32.totalorder %s329, %s332
    %p338 = scmp.eq.s32.totalorder %s20, 0
    %p339 = por %p337, %p338
    %p340 = scmp.ne.s32.totalorder %s329, %s332
    %p341 = scmp.eq.s32.totalorder %s25, 1
    %p342 = por %p340, %p341
    %p343 = scmp.ne.s32.totalorder %s332, %s333
    %p344 = scmp.eq.s32.totalorder %s25, 0
    %p345 = por %p343, %p344
    %p346 = scmp.ne.s32.totalorder %s332, %s333
    %p347 = scmp.eq.s32.totalorder %s26, 1
    %p348 = por %p346, %p347
    %p350 = scmp.ne.s32.totalorder %s333, %s349
    %p351 = scmp.eq.s32.totalorder %s26, 0
    %p352 = por %p350, %p351
    %p353 = scmp.le.s32.totalorder 1, %s20
    %p354 = scmp.lt.s32.totalorder %s20, 3
    %p355 = pnand %p353, %p354
    %p356 = pneg %p355
    // Predicated region
    $region9: #{t2t_vit_feature_forward.4} parent=5 // pred_check
      _
    $region10: #{t2t_vit_feature_forward.4} parent=5 // pred_check_branch
      %358 = sbr.rel (%p355) target = $region12
    $region11: #{t2t_vit_feature_forward.4} parent=5 // pred_region
      %s359 = ssub.s32 %s20, 1
      // Predicated region
      $region13: #{t2t_vit_feature_forward.4} parent=11 // pred_check
        %p360 = pneg %p67
      $region14: #{t2t_vit_feature_forward.4} parent=11 // pred_check_branch
        %362 = sbr.rel (%p360) target = $region16
      $region15: #{t2t_vit_feature_forward.4} parent=11 // pred_region
        _
      $region16: #{t2t_vit_feature_forward.4} parent=11 // pred_fallthru
        _
      // Predicated region
      $region17: #{t2t_vit_feature_forward.4} parent=11 // pred_check
        %p363 = pneg %p88
      $region18: #{t2t_vit_feature_forward.4} parent=11 // pred_check_branch
        %365 = sbr.rel (%p363) target = $region20
      $region19: #{t2t_vit_feature_forward.4} parent=11 // pred_region
        _
      $region20: #{t2t_vit_feature_forward.4} parent=11 // pred_fallthru
        _
      // Predicated region
      $region21: #{t2t_vit_feature_forward.4} parent=11 // pred_check
        %p366 = pneg %p109
      $region22: #{t2t_vit_feature_forward.4} parent=11 // pred_check_branch
        %368 = sbr.rel (%p366) target = $region24
      $region23: #{t2t_vit_feature_forward.4} parent=11 // pred_region
        _
      $region24: #{t2t_vit_feature_forward.4} parent=11 // pred_fallthru
        _
      // Predicated region
      $region25: #{t2t_vit_feature_forward.4} parent=11 // pred_check
        %p369 = pneg %p130
      $region26: #{t2t_vit_feature_forward.4} parent=11 // pred_check_branch
        %371 = sbr.rel (%p369) target = $region28
      $region27: #{t2t_vit_feature_forward.4} parent=11 // pred_region
        _
      $region28: #{t2t_vit_feature_forward.4} parent=11 // pred_fallthru
        _
      // Predicated region
      $region29: #{t2t_vit_feature_forward.4} parent=11 // pred_check
        %p372 = pneg %p151
      $region30: #{t2t_vit_feature_forward.4} parent=11 // pred_check_branch
        %374 = sbr.rel (%p372) target = $region32
      $region31: #{t2t_vit_feature_forward.4} parent=11 // pred_region
        _
      $region32: #{t2t_vit_feature_forward.4} parent=11 // pred_fallthru
        _
      // Predicated region
      $region33: #{t2t_vit_feature_forward.4} parent=11 // pred_check
        %p375 = pneg %p172
      $region34: #{t2t_vit_feature_forward.4} parent=11 // pred_check_branch
        %377 = sbr.rel (%p375) target = $region36
      $region35: #{t2t_vit_feature_forward.4} parent=11 // pred_region
        _
      $region36: #{t2t_vit_feature_forward.4} parent=11 // pred_fallthru
        _
      // Predicated region
      $region37: #{t2t_vit_feature_forward.4} parent=11 // pred_check
        %p378 = pneg %p193
      $region38: #{t2t_vit_feature_forward.4} parent=11 // pred_check_branch
        %380 = sbr.rel (%p378) target = $region40
      $region39: #{t2t_vit_feature_forward.4} parent=11 // pred_region
        _
      $region40: #{t2t_vit_feature_forward.4} parent=11 // pred_fallthru
        _
      // Predicated region
      $region41: #{t2t_vit_feature_forward.4} parent=11 // pred_check
        %p381 = pneg %p214
      $region42: #{t2t_vit_feature_forward.4} parent=11 // pred_check_branch
        %383 = sbr.rel (%p381) target = $region44
      $region43: #{t2t_vit_feature_forward.4} parent=11 // pred_region
        _
      $region44: #{t2t_vit_feature_forward.4} parent=11 // pred_fallthru
        _
      // Predicated region
      $region45: #{t2t_vit_feature_forward.4} parent=11 // pred_check
        %p384 = pneg %p235
      $region46: #{t2t_vit_feature_forward.4} parent=11 // pred_check_branch
        %386 = sbr.rel (%p384) target = $region48
      $region47: #{t2t_vit_feature_forward.4} parent=11 // pred_region
        _
      $region48: #{t2t_vit_feature_forward.4} parent=11 // pred_fallthru
        _
      // Predicated region
      $region49: #{t2t_vit_feature_forward.4} parent=11 // pred_check
        %p387 = pneg %p256
      $region50: #{t2t_vit_feature_forward.4} parent=11 // pred_check_branch
        %389 = sbr.rel (%p387) target = $region52
      $region51: #{t2t_vit_feature_forward.4} parent=11 // pred_region
        _
      $region52: #{t2t_vit_feature_forward.4} parent=11 // pred_fallthru
        _
      // Predicated region
      $region53: #{t2t_vit_feature_forward.4} parent=11 // pred_check
        %p390 = pneg %p277
      $region54: #{t2t_vit_feature_forward.4} parent=11 // pred_check_branch
        %392 = sbr.rel (%p390) target = $region56
      $region55: #{t2t_vit_feature_forward.4} parent=11 // pred_region
        _
      $region56: #{t2t_vit_feature_forward.4} parent=11 // pred_fallthru
        _
      // Predicated region
      $region57: #{t2t_vit_feature_forward.4} parent=11 // pred_check
        %p393 = pneg %p298
      $region58: #{t2t_vit_feature_forward.4} parent=11 // pred_check_branch
        %395 = sbr.rel (%p393) target = $region60
      $region59: #{t2t_vit_feature_forward.4} parent=11 // pred_region
        _
      $region60: #{t2t_vit_feature_forward.4} parent=11 // pred_fallthru
        _
      // Predicated region
      $region61: #{t2t_vit_feature_forward.4} parent=11 // pred_check
        %p396 = pneg %p319
      $region62: #{t2t_vit_feature_forward.4} parent=11 // pred_check_branch
        %398 = sbr.rel (%p396) target = $region64
      $region63: #{t2t_vit_feature_forward.4} parent=11 // pred_region
        _
      $region64: #{t2t_vit_feature_forward.4} parent=11 // pred_fallthru
        _
    $region12: #{t2t_vit_feature_forward.4} parent=5 // pred_fallthru
      _
    %p399 = scmp.lt.s32.totalorder %s20, 2
    // Predicated region
    $region65: #{t2t_vit_feature_forward.4} parent=5 // pred_check
      %p400 = pneg %p399
    $region66: #{t2t_vit_feature_forward.4} parent=5 // pred_check_branch
      %402 = sbr.rel (%p400) target = $region68
    $region67: #{t2t_vit_feature_forward.4} parent=5 // pred_region
      // Predicated region
      $region69: #{t2t_vit_feature_forward.4} parent=67 // pred_check
        %p403 = pneg %p40
      $region70: #{t2t_vit_feature_forward.4} parent=67 // pred_check_branch
        %405 = sbr.rel (%p403) target = $region72
      $region71: #{t2t_vit_feature_forward.4} parent=67 // pred_region
        %p406 = scmp.lt.s32.totalorder %s20, 1
        %s407 = scalar_select %p406, %s20, 1
        %s408 = smul.addr %s407, 16
        %s409 = smul.addr %s408, 8
        %s410 = scalar_lea.vmem %s0, %s409
      $region72: #{t2t_vit_feature_forward.4} parent=67 // pred_fallthru
        _
    $region68: #{t2t_vit_feature_forward.4} parent=5 // pred_fallthru
      _
    %p411 = scmp.le.s32.totalorder 1, %s20
    %p412 = scmp.lt.s32.totalorder %s20, 3
    %p413 = pnand %p411, %p412
    %p414 = pneg %p413
    // Predicated region
    $region73: #{t2t_vit_feature_forward.4} parent=5 // pred_check
      _
    $region74: #{t2t_vit_feature_forward.4} parent=5 // pred_check_branch
      %416 = sbr.rel (%p413) target = $region76
    $region75: #{t2t_vit_feature_forward.4} parent=5 // pred_region
      %s417 = ssub.s32 %s20, 1
      %p418 = scmp.lt.s32.totalorder %s25, 1
      %s419 = scalar_select %p418, %s25, 1
      %s420 = smul.addr %s419, 16
      %s421 = smul.addr %s420, 8
      %s422 = scalar_lea.vmem %s0, %s421
      %p423 = pneg %p46
      %p424 = pneg %p43
      %p425 = pneg %p67
      %p426 = pneg %p64
      %p427 = pneg %p88
      %p428 = pneg %p85
      %p429 = pneg %p109
      %p430 = pneg %p106
      %p431 = pneg %p130
      %p432 = pneg %p127
      %p433 = pneg %p151
      %p434 = pneg %p148
      %p435 = pneg %p172
      %p436 = pneg %p169
      %p437 = pneg %p193
      %p438 = pneg %p190
      %p439 = pneg %p214
      %p440 = pneg %p211
      %p441 = pneg %p235
      %p442 = pneg %p232
      %p443 = pneg %p256
      %p444 = pneg %p253
      %p445 = pneg %p277
      %p446 = pneg %p274
      %p447 = pneg %p298
      %p448 = pneg %p295
      %p449 = pneg %p319
      %p450 = pneg %p316
      %p451 = pneg %p345
      %p452 = pneg %p342
      %p453 = scmp.lt.s32.totalorder %s25, 1
      %s454 = scalar_select %p453, %s25, 1
      %s455 = smul.addr %s454, 8
      %s456 = smul.addr %s455, 8
      %s457 = scalar_lea.vmem %s14, %s456
      %p458 = scmp.lt.s32.totalorder %s25, 1
      %s459 = scalar_select %p458, %s25, 1
      %s460 = smul.addr %s459, 16
      %s461 = smul.addr %s460, 8
      %s462 = scalar_lea.vmem %s0, %s461
      %p463 = scmp.lt.s32.totalorder %s25, 1
      %s464 = scalar_select %p463, %s25, 1
      %s465 = smul.addr %s464, 8
      %s466 = smul.addr %s465, 8
      %s467 = scalar_lea.vmem %s14, %s466
      %v469 = vld [vmem:[%s462] sm:$0xff]
      %v470 = vld [vmem:[%s462 + $0x8] sm:$0xff]
      %v471 = vld [vmem:[%s462 + $0x10] sm:$0xff]
      %v472 = vld [vmem:[%s462 + $0x18] sm:$0xff]
      %v473 = vld [vmem:[%s462 + $0x20] sm:$0xff]
      %v474 = vld [vmem:[%s462 + $0x28] sm:$0xff]
      %v475 = vld [vmem:[%s462 + $0x30] sm:$0xff]
      %v476 = vld [vmem:[%s462 + $0x38] sm:$0xff]
      %v477 = vld [vmem:[%s462 + $0x40] sm:$0xff]
      %v478 = vld [vmem:[%s462 + $0x48] sm:$0xff]
      %v479 = vld [vmem:[%s462 + $0x50] sm:$0xff]
      %v480 = vld [vmem:[%s462 + $0x58] sm:$0xff]
      %v481 = vld [vmem:[%s462 + $0x60] sm:$0xff]
      %v482 = vld [vmem:[%s462 + $0x68] sm:$0xff]
      %v483 = vld [vmem:[%s462 + $0x70] sm:$0xff]
      %v484 = vld [vmem:[%s462 + $0x78] sm:$0xff]
      %v485 = vld [vmem:[%s1] sm:$0x3]
      %v486 = vld [vmem:[%s2] sm:$0x3]
      %vm487 = vcmask 154624
      %v488 = vsel %vm487, %v470, 0.0
      %v489 = vadd.f32 %v469, %v488
      %490 = vadd.xlane.f32.xlu0 %v489
      %v491 = vpop.xlane.xlu0 %490
      %v492 = vsel %vm487, %v472, 0.0
      %v493 = vadd.f32 %v471, %v492
      %494 = vadd.xlane.f32.xlu0 %v493
      %v495 = vpop.xlane.xlu0 %494
      %v496 = vsel %vm487, %v474, 0.0
      %v497 = vadd.f32 %v473, %v496
      %498 = vadd.xlane.f32.xlu0 %v497
      %v499 = vpop.xlane.xlu0 %498
      %v500 = vsel %vm487, %v476, 0.0
      %v501 = vadd.f32 %v475, %v500
      %502 = vadd.xlane.f32.xlu0 %v501
      %v503 = vpop.xlane.xlu0 %502
      %v504 = vsel %vm487, %v478, 0.0
      %v505 = vadd.f32 %v477, %v504
      %506 = vadd.xlane.f32.xlu0 %v505
      %v507 = vpop.xlane.xlu0 %506
      %v508 = vsel %vm487, %v480, 0.0
      %v509 = vadd.f32 %v479, %v508
      %510 = vadd.xlane.f32.xlu0 %v509
      %v511 = vpop.xlane.xlu0 %510
      %v512 = vsel %vm487, %v482, 0.0
      %v513 = vadd.f32 %v481, %v512
      %514 = vadd.xlane.f32.xlu0 %v513
      %v515 = vpop.xlane.xlu0 %514
      %v516 = vsel %vm487, %v484, 0.0
      %v517 = vadd.f32 %v483, %v516
      %518 = vadd.xlane.f32.xlu0 %v517
      %v519 = vpop.xlane.xlu0 %518
      %v520 = vrcp.pop 147.0
      %v521 = vmul.f32 %v491, %v520
      %v522 = vmul.f32 %v495, %v520
      %v523 = vmul.f32 %v499, %v520
      %v524 = vmul.f32 %v503, %v520
      %v525 = vmul.f32 %v507, %v520
      %v526 = vmul.f32 %v511, %v520
      %v527 = vmul.f32 %v515, %v520
      %v528 = vmul.f32 %v519, %v520
      %v529 = vsub.f32 %v469, %v521
      %v530 = vsub.f32 %v470, %v521
      %v531 = vsub.f32 %v471, %v522
      %v532 = vsub.f32 %v472, %v522
      %v533 = vsub.f32 %v473, %v523
      %v534 = vsub.f32 %v474, %v523
      %v535 = vsub.f32 %v475, %v524
      %v536 = vsub.f32 %v476, %v524
      %v537 = vsub.f32 %v477, %v525
      %v538 = vsub.f32 %v478, %v525
      %v539 = vsub.f32 %v479, %v526
      %v540 = vsub.f32 %v480, %v526
      %v541 = vsub.f32 %v481, %v527
      %v542 = vsub.f32 %v482, %v527
      %v543 = vsub.f32 %v483, %v528
      %v544 = vsub.f32 %v484, %v528
      %v545 = vmul.f32 %v529, %v529
      %v546 = vmul.f32 %v530, %v530
      %v547 = vmul.f32 %v531, %v531
      %v548 = vmul.f32 %v532, %v532
      %v549 = vmul.f32 %v533, %v533
      %v550 = vmul.f32 %v534, %v534
      %v551 = vmul.f32 %v535, %v535
      %v552 = vmul.f32 %v536, %v536
      %v553 = vmul.f32 %v537, %v537
      %v554 = vmul.f32 %v538, %v538
      %v555 = vmul.f32 %v539, %v539
      %v556 = vmul.f32 %v540, %v540
      %v557 = vmul.f32 %v541, %v541
      %v558 = vmul.f32 %v542, %v542
      %v559 = vmul.f32 %v543, %v543
      %v560 = vmul.f32 %v544, %v544
      %v561 = vsel %vm487, %v546, 0.0
      %v562 = vadd.f32 %v545, %v561
      %563 = vadd.xlane.f32.xlu0 %v562
      %v564 = vpop.xlane.xlu0 %563
      %v565 = vsel %vm487, %v548, 0.0
      %v566 = vadd.f32 %v547, %v565
      %567 = vadd.xlane.f32.xlu0 %v566
      %v568 = vpop.xlane.xlu0 %567
      %v569 = vsel %vm487, %v550, 0.0
      %v570 = vadd.f32 %v549, %v569
      %571 = vadd.xlane.f32.xlu0 %v570
      %v572 = vpop.xlane.xlu0 %571
      %v573 = vsel %vm487, %v552, 0.0
      %v574 = vadd.f32 %v551, %v573
      %575 = vadd.xlane.f32.xlu0 %v574
      %v576 = vpop.xlane.xlu0 %575
      %v577 = vsel %vm487, %v554, 0.0
      %v578 = vadd.f32 %v553, %v577
      %579 = vadd.xlane.f32.xlu0 %v578
      %v580 = vpop.xlane.xlu0 %579
      %v581 = vsel %vm487, %v556, 0.0
      %v582 = vadd.f32 %v555, %v581
      %583 = vadd.xlane.f32.xlu0 %v582
      %v584 = vpop.xlane.xlu0 %583
      %v585 = vsel %vm487, %v558, 0.0
      %v586 = vadd.f32 %v557, %v585
      %587 = vadd.xlane.f32.xlu0 %v586
      %v588 = vpop.xlane.xlu0 %587
      %v589 = vsel %vm487, %v560, 0.0
      %v590 = vadd.f32 %v559, %v589
      %591 = vadd.xlane.f32.xlu0 %v590
      %v592 = vpop.xlane.xlu0 %591
      %v593 = vmul.f32 %v564, %v520
      %v594 = vmul.f32 %v568, %v520
      %v595 = vmul.f32 %v572, %v520
      %v596 = vmul.f32 %v576, %v520
      %v597 = vmul.f32 %v580, %v520
      %v598 = vmul.f32 %v584, %v520
      %v599 = vmul.f32 %v588, %v520
      %v600 = vmul.f32 %v592, %v520
      %v601 = vadd.f32 %v593, 1e-05
      %v602 = vadd.f32 %v594, 1e-05
      %v603 = vadd.f32 %v595, 1e-05
      %v604 = vadd.f32 %v596, 1e-05
      %v605 = vadd.f32 %v597, 1e-05
      %v606 = vadd.f32 %v598, 1e-05
      %v607 = vadd.f32 %v599, 1e-05
      %v608 = vadd.f32 %v600, 1e-05
      %v609 = vrsqrt.pop %v601
      %v610 = vrsqrt.pop %v602
      %v611 = vrsqrt.pop %v603
      %v612 = vrsqrt.pop %v604
      %v613 = vrsqrt.pop %v605
      %v614 = vrsqrt.pop %v606
      %v615 = vrsqrt.pop %v607
      %v616 = vrsqrt.pop %v608
      %v617 = vmul.f32 %v529, %v609
      %v618 = vmul.f32 %v530, %v609
      %v619 = vmul.f32 %v531, %v610
      %v620 = vmul.f32 %v532, %v610
      %v621 = vmul.f32 %v533, %v611
      %v622 = vmul.f32 %v534, %v611
      %v623 = vmul.f32 %v535, %v612
      %v624 = vmul.f32 %v536, %v612
      %v625 = vmul.f32 %v537, %v613
      %v626 = vmul.f32 %v538, %v613
      %v627 = vmul.f32 %v539, %v614
      %v628 = vmul.f32 %v540, %v614
      %v629 = vmul.f32 %v541, %v615
      %v630 = vmul.f32 %v542, %v615
      %v631 = vmul.f32 %v543, %v616
      %v632 = vmul.f32 %v544, %v616
      %v634 = vlaneseq
      %v635 = vshrl.u32 %v634, 7
      %v636 = vsub.s32 0, %v635
      %v637 = vrot.slane %v485, %v636
      %v638 = vlaneseq
      %v639 = vshrl.u32 %v638, 7
      %v640 = vsub.s32 1, %v639
      %v641 = vrot.slane %v485, %v640
      %v644 = vmul.f32 %v617, %v637
      %v645 = vmul.f32 %v618, %v641
      %v646 = vmul.f32 %v619, %v637
      %v647 = vmul.f32 %v620, %v641
      %v648 = vmul.f32 %v621, %v637
      %v649 = vmul.f32 %v622, %v641
      %v650 = vmul.f32 %v623, %v637
      %v651 = vmul.f32 %v624, %v641
      %v652 = vmul.f32 %v625, %v637
      %v653 = vmul.f32 %v626, %v641
      %v654 = vmul.f32 %v627, %v637
      %v655 = vmul.f32 %v628, %v641
      %v656 = vmul.f32 %v629, %v637
      %v657 = vmul.f32 %v630, %v641
      %v658 = vmul.f32 %v631, %v637
      %v659 = vmul.f32 %v632, %v641
      %v661 = vlaneseq
      %v662 = vshrl.u32 %v661, 7
      %v663 = vsub.s32 0, %v662
      %v664 = vrot.slane %v486, %v663
      %v665 = vlaneseq
      %v666 = vshrl.u32 %v665, 7
      %v667 = vsub.s32 1, %v666
      %v668 = vrot.slane %v486, %v667
      %v671 = vadd.f32 %v644, %v664
      %v672 = vadd.f32 %v645, %v668
      %v673 = vadd.f32 %v646, %v664
      %v674 = vadd.f32 %v647, %v668
      %v675 = vadd.f32 %v648, %v664
      %v676 = vadd.f32 %v649, %v668
      %v677 = vadd.f32 %v650, %v664
      %v678 = vadd.f32 %v651, %v668
      %v679 = vadd.f32 %v652, %v664
      %v680 = vadd.f32 %v653, %v668
      %v681 = vadd.f32 %v654, %v664
      %v682 = vadd.f32 %v655, %v668
      %v683 = vadd.f32 %v656, %v664
      %v684 = vadd.f32 %v657, %v668
      %v685 = vadd.f32 %v658, %v664
      %v686 = vadd.f32 %v659, %v668
      %v687 = vpack.c.bf16 %v673, %v671
      %v688 = vpack.c.bf16 %v674, %v672
      %v689 = vpack.c.bf16 %v677, %v675
      %v690 = vpack.c.bf16 %v678, %v676
      %v691 = vpack.c.bf16 %v681, %v679
      %v692 = vpack.c.bf16 %v682, %v680
      %v693 = vpack.c.bf16 %v685, %v683
      %v694 = vpack.c.bf16 %v686, %v684
      %v695 = vld [vmem:[%s3] sm:$0xf]
      %v696 = vld [vmem:[%s3 + $0x4] sm:$0xf]
      %v697 = vld [vmem:[%s3 + $0x8] sm:$0xf]
      %v698 = vld [vmem:[%s3 + $0xc] sm:$0xf]
      %v699 = vld [vmem:[%s3 + $0x10] sm:$0xf]
      %v700 = vld [vmem:[%s3 + $0x14] sm:$0xf]
      %v701 = vld [vmem:[%s3 + $0x18] sm:$0xf]
      %v702 = vld [vmem:[%s3 + $0x1c] sm:$0xf]
      %v703 = vld [vmem:[%s3 + $0x20] sm:$0xf]
      %v704 = vld [vmem:[%s3 + $0x24] sm:$0xf]
      %v705 = vld [vmem:[%s3 + $0x28] sm:$0xf]
      %v706 = vld [vmem:[%s3 + $0x2c] sm:$0xf]
      %v707 = vld [vmem:[%s3 + $0x30] sm:$0xf]
      %v708 = vld [vmem:[%s3 + $0x34] sm:$0xf]
      %v709 = vld [vmem:[%s3 + $0x38] sm:$0xf]
      %v710 = vld [vmem:[%s3 + $0x3c] sm:$0xf]
      %v711 = vld [vmem:[%s3 + $0x40] sm:$0xf]
      %v712 = vld [vmem:[%s3 + $0x44] sm:$0xf]
      %v713 = vld [vmem:[%s3 + $0x48] sm:$0x3]
      %v714 = vld [vmem:[%s4] sm:$0x1]
      %v716 = vlaneseq
      %v717 = vshrl.u32 %v716, 7
      %v718 = vsub.s32 0, %v717
      %v719 = vrot.slane %v714, %v718
      %v740 = vunpack.c.l.b16 %v695
      %v741 = vunpack.c.l.b16 %v696
      %v742 = vunpack.c.l.b16 %v697
      %v743 = vunpack.c.l.b16 %v698
      %v744 = vunpack.c.l.b16 %v699
      %v745 = vunpack.c.l.b16 %v700
      %v746 = vunpack.c.l.b16 %v701
      %v747 = vunpack.c.l.b16 %v702
      %v748 = vunpack.c.l.b16 %v703
      %v749 = vunpack.c.l.b16 %v704
      %v750 = vunpack.c.l.b16 %v705
      %v751 = vunpack.c.l.b16 %v706
      %v752 = vunpack.c.l.b16 %v707
      %v753 = vunpack.c.l.b16 %v708
      %v754 = vunpack.c.l.b16 %v709
      %v755 = vunpack.c.l.b16 %v710
      %v756 = vunpack.c.l.b16 %v711
      %v757 = vunpack.c.l.b16 %v712
      %v758 = vunpack.c.l.b16 %v713
      %v759 = vpack.c.b16 %v741, %v740
      %v760 = vpack.c.b16 %v743, %v742
      %v761 = vpack.c.b16 %v745, %v744
      %v762 = vpack.c.b16 %v747, %v746
      %v763 = vpack.c.b16 %v749, %v748
      %v764 = vpack.c.b16 %v751, %v750
      %v765 = vpack.c.b16 %v753, %v752
      %v766 = vpack.c.b16 %v755, %v754
      %v767 = vpack.c.b16 %v757, %v756
      %v768 = vpack.c.b16 %v758, %v758
      %v779 = vsel %vm487, %v688, 0
      %v782 = vsel %vm487, %v690, 0
      %v785 = vsel %vm487, %v692, 0
      %v788 = vsel %vm487, %v694, 0
      %vm790 = vcmask 1040384
      %vm791 = vcmask 1041408
      %v792 = vsel %vm790, 4294967295, 65535
      %v793 = vsel %vm791, %v792, 0
      %v795 = vand.u32 %v768, %v793
      %797 = vmatprep.subr.bf16.mxu0 0
      %798 = vmatpush1.bf16.msra.mxu0 %v759
      %799 = vmatprep.subr.bf16.mxu0 0
      %800 = vmatpush1.bf16.msra.mxu0 %v760
      %801 = vmatprep.subr.bf16.mxu0 0
      %802 = vmatpush1.bf16.msra.mxu0 %v761
      %803 = vmatprep.subr.bf16.mxu0 0
      %804 = vmatpush1.bf16.msra.mxu0 %v762
      %805 = vmatprep.subr.bf16.mxu0 0
      %806 = vmatpush1.bf16.msra.mxu0 %v763
      %807 = vmatprep.subr.bf16.mxu0 0
      %808 = vmatpush1.bf16.msra.mxu0 %v764
      %809 = vmatprep.subr.bf16.mxu0 0
      %810 = vmatpush1.bf16.msra.mxu0 %v765
      %811 = vmatprep.subr.bf16.mxu0 0
      %812 = vmatpush1.bf16.msra.mxu0 %v766
      %813 = vmatprep.subr.bf16.mxu0 0
      %814 = vmatpush1.bf16.msra.mxu0 %v767
      %815 = vmatprep.subr.bf16.mxu0 0
      %816 = vmatpush1.bf16.msra.mxu0 %v795
      %817 = vmatprep.subr.bf16.mxu0 0
      %818 = vmatpush1.bf16.msra.mxu0 0
      %819 = vmatprep.subr.bf16.mxu0 0
      %820 = vmatpush1.bf16.msra.mxu0 0
      %821 = vmatprep.subr.bf16.mxu0 0
      %822 = vmatpush1.bf16.msra.mxu0 0
      %823 = vmatprep.subr.bf16.mxu0 0
      %824 = vmatpush1.bf16.msra.mxu0 0
      %825 = vmatprep.subr.bf16.mxu0 0
      %826 = vmatpush1.bf16.msra.mxu0 0
      %827 = vmatprep.subr.bf16.mxu0 0
      %828 = vmatpush1.bf16.msra.mxu0 0
      %829 = vmatprep.mubr.bf16.mxu0 %v779
      %830 = vmatmul.mubr.bf16.gmra.mrb[0].mxu0 %v687
      %v831 = vpop.f32.mrb[0].mxu0
      %v832 = vadd.f32 %v719, %v831
      %v833 = vpop.f32.mrb[0].mxu0
      %v834 = vpop.f32.mrb[0].mxu0
      %v835 = vadd.f32 %v719, %v834
      %v836 = vpop.f32.mrb[0].mxu0
      %837 = vmatprep.mubr.bf16.mxu0 %v782
      %838 = vmatmul.mubr.bf16.gmra.mrb[0].mxu0 %v689
      %v839 = vpop.f32.mrb[0].mxu0
      %v840 = vadd.f32 %v719, %v839
      %v841 = vpop.f32.mrb[0].mxu0
      %v842 = vpop.f32.mrb[0].mxu0
      %v843 = vadd.f32 %v719, %v842
      %v844 = vpop.f32.mrb[0].mxu0
      %845 = vmatprep.mubr.bf16.mxu0 %v785
      %846 = vmatmul.mubr.bf16.gmra.mrb[0].mxu0 %v691
      %v847 = vpop.f32.mrb[0].mxu0
      %v848 = vadd.f32 %v719, %v847
      %v849 = vpop.f32.mrb[0].mxu0
      %v850 = vpop.f32.mrb[0].mxu0
      %v851 = vadd.f32 %v719, %v850
      %v852 = vpop.f32.mrb[0].mxu0
      %853 = vmatprep.mubr.bf16.mxu0 %v788
      %854 = vmatmul.mubr.bf16.gmra.mrb[0].mxu0 %v693
      %v855 = vpop.f32.mrb[0].mxu0
      %v856 = vadd.f32 %v719, %v855
      %v857 = vpop.f32.mrb[0].mxu0
      %v858 = vpop.f32.mrb[0].mxu0
      %v859 = vadd.f32 %v719, %v858
      %v860 = vpop.f32.mrb[0].mxu0
      %861 = vdwg.mxu0
      %s862 = scalar_lea.vmem %s3, 76
      %v863 = vld [vmem:[%s862] sm:$0xf]
      %v864 = vld [vmem:[%s862 + $0x4] sm:$0xf]
      %v865 = vld [vmem:[%s862 + $0x8] sm:$0xf]
      %v866 = vld [vmem:[%s862 + $0xc] sm:$0xf]
      %v867 = vld [vmem:[%s862 + $0x10] sm:$0xf]
      %v868 = vld [vmem:[%s862 + $0x14] sm:$0xf]
      %v869 = vld [vmem:[%s862 + $0x18] sm:$0xf]
      %v870 = vld [vmem:[%s862 + $0x1c] sm:$0xf]
      %v871 = vld [vmem:[%s862 + $0x20] sm:$0xf]
      %v872 = vld [vmem:[%s862 + $0x24] sm:$0xf]
      %v873 = vld [vmem:[%s862 + $0x28] sm:$0xf]
      %v874 = vld [vmem:[%s862 + $0x2c] sm:$0xf]
      %v875 = vld [vmem:[%s862 + $0x30] sm:$0xf]
      %v876 = vld [vmem:[%s862 + $0x34] sm:$0xf]
      %v877 = vld [vmem:[%s862 + $0x38] sm:$0xf]
      %v878 = vld [vmem:[%s862 + $0x3c] sm:$0xf]
      %v879 = vld [vmem:[%s862 + $0x40] sm:$0xf]
      %v880 = vld [vmem:[%s862 + $0x44] sm:$0xf]
      %v881 = vld [vmem:[%s862 + $0x48] sm:$0x3]
      %s882 = scalar_lea.vmem %s4, 1
      %v883 = vld [vmem:[%s882] sm:$0x1]
      %v885 = vlaneseq
      %v886 = vshrl.u32 %v885, 7
      %v887 = vsub.s32 0, %v886
      %v888 = vrot.slane %v883, %v887
      %v909 = vunpack.c.l.b16 %v863
      %v910 = vunpack.c.l.b16 %v864
      %v911 = vunpack.c.l.b16 %v865
      %v912 = vunpack.c.l.b16 %v866
      %v913 = vunpack.c.l.b16 %v867
      %v914 = vunpack.c.l.b16 %v868
      %v915 = vunpack.c.l.b16 %v869
      %v916 = vunpack.c.l.b16 %v870
      %v917 = vunpack.c.l.b16 %v871
      %v918 = vunpack.c.l.b16 %v872
      %v919 = vunpack.c.l.b16 %v873
      %v920 = vunpack.c.l.b16 %v874
      %v921 = vunpack.c.l.b16 %v875
      %v922 = vunpack.c.l.b16 %v876
      %v923 = vunpack.c.l.b16 %v877
      %v924 = vunpack.c.l.b16 %v878
      %v925 = vunpack.c.l.b16 %v879
      %v926 = vunpack.c.l.b16 %v880
      %v927 = vunpack.c.l.b16 %v881
      %v928 = vpack.c.b16 %v910, %v909
      %v929 = vpack.c.b16 %v912, %v911
      %v930 = vpack.c.b16 %v914, %v913
      %v931 = vpack.c.b16 %v916, %v915
      %v932 = vpack.c.b16 %v918, %v917
      %v933 = vpack.c.b16 %v920, %v919
      %v934 = vpack.c.b16 %v922, %v921
      %v935 = vpack.c.b16 %v924, %v923
      %v936 = vpack.c.b16 %v926, %v925
      %v937 = vpack.c.b16 %v927, %v927
      %v948 = vand.u32 %v937, %v793
      %950 = vmatprep.subr.bf16.mxu0 0
      %951 = vmatpush1.bf16.msra.mxu0 %v928
      %952 = vmatprep.subr.bf16.mxu0 0
      %953 = vmatpush1.bf16.msra.mxu0 %v929
      %954 = vmatprep.subr.bf16.mxu0 0
      %955 = vmatpush1.bf16.msra.mxu0 %v930
      %956 = vmatprep.subr.bf16.mxu0 0
      %957 = vmatpush1.bf16.msra.mxu0 %v931
      %958 = vmatprep.subr.bf16.mxu0 0
      %959 = vmatpush1.bf16.msra.mxu0 %v932
      %960 = vmatprep.subr.bf16.mxu0 0
      %961 = vmatpush1.bf16.msra.mxu0 %v933
      %962 = vmatprep.subr.bf16.mxu0 0
      %963 = vmatpush1.bf16.msra.mxu0 %v934
      %964 = vmatprep.subr.bf16.mxu0 0
      %965 = vmatpush1.bf16.msra.mxu0 %v935
      %966 = vmatprep.subr.bf16.mxu0 0
      %967 = vmatpush1.bf16.msra.mxu0 %v936
      %968 = vmatprep.subr.bf16.mxu0 0
      %969 = vmatpush1.bf16.msra.mxu0 %v948
      %970 = vmatprep.subr.bf16.mxu0 0
      %971 = vmatpush1.bf16.msra.mxu0 0
      %972 = vmatprep.subr.bf16.mxu0 0
      %973 = vmatpush1.bf16.msra.mxu0 0
      %974 = vmatprep.subr.bf16.mxu0 0
      %975 = vmatpush1.bf16.msra.mxu0 0
      %976 = vmatprep.subr.bf16.mxu0 0
      %977 = vmatpush1.bf16.msra.mxu0 0
      %978 = vmatprep.subr.bf16.mxu0 0
      %979 = vmatpush1.bf16.msra.mxu0 0
      %980 = vmatprep.subr.bf16.mxu0 0
      %981 = vmatpush1.bf16.msra.mxu0 0
      %982 = vmatprep.mubr.bf16.mxu0 %v779
      %983 = vmatmul.mubr.bf16.gmra.mrb[0].mxu0 %v687
      %v984 = vpop.f32.mrb[0].mxu0
      %v985 = vadd.f32 %v888, %v984
      %v986 = vpop.f32.mrb[0].mxu0
      %v987 = vpop.f32.mrb[0].mxu0
      %v988 = vadd.f32 %v888, %v987
      %v989 = vpop.f32.mrb[0].mxu0
      %990 = vmatprep.mubr.bf16.mxu0 %v782
      %991 = vmatmul.mubr.bf16.gmra.mrb[0].mxu0 %v689
      %v992 = vpop.f32.mrb[0].mxu0
      %v993 = vadd.f32 %v888, %v992
      %v994 = vpop.f32.mrb[0].mxu0
      %v995 = vpop.f32.mrb[0].mxu0
      %v996 = vadd.f32 %v888, %v995
      %v997 = vpop.f32.mrb[0].mxu0
      %998 = vmatprep.mubr.bf16.mxu0 %v785
      %999 = vmatmul.mubr.bf16.gmra.mrb[0].mxu0 %v691
      %v1000 = vpop.f32.mrb[0].mxu0
      %v1001 = vadd.f32 %v888, %v1000
      %v1002 = vpop.f32.mrb[0].mxu0
      %v1003 = vpop.f32.mrb[0].mxu0
      %v1004 = vadd.f32 %v888, %v1003
      %v1005 = vpop.f32.mrb[0].mxu0
      %1006 = vmatprep.mubr.bf16.mxu0 %v788
      %1007 = vmatmul.mubr.bf16.gmra.mrb[0].mxu0 %v693
      %v1008 = vpop.f32.mrb[0].mxu0
      %v1009 = vadd.f32 %v888, %v1008
      %v1010 = vpop.f32.mrb[0].mxu0
      %v1011 = vpop.f32.mrb[0].mxu0
      %v1012 = vadd.f32 %v888, %v1011
      %v1013 = vpop.f32.mrb[0].mxu0
      %1014 = vdwg.mxu0
      %s1015 = scalar_lea.vmem %s3, 152
      %v1016 = vld [vmem:[%s1015] sm:$0xf]
      %v1017 = vld [vmem:[%s1015 + $0x4] sm:$0xf]
      %v1018 = vld [vmem:[%s1015 + $0x8] sm:$0xf]
      %v1019 = vld [vmem:[%s1015 + $0xc] sm:$0xf]
      %v1020 = vld [vmem:[%s1015 + $0x10] sm:$0xf]
      %v1021 = vld [vmem:[%s1015 + $0x14] sm:$0xf]
      %v1022 = vld [vmem:[%s1015 + $0x18] sm:$0xf]
      %v1023 = vld [vmem:[%s1015 + $0x1c] sm:$0xf]
      %v1024 = vld [vmem:[%s1015 + $0x20] sm:$0xf]
      %v1025 = vld [vmem:[%s1015 + $0x24] sm:$0xf]
      %v1026 = vld [vmem:[%s1015 + $0x28] sm:$0xf]
      %v1027 = vld [vmem:[%s1015 + $0x2c] sm:$0xf]
      %v1028 = vld [vmem:[%s1015 + $0x30] sm:$0xf]
      %v1029 = vld [vmem:[%s1015 + $0x34] sm:$0xf]
      %v1030 = vld [vmem:[%s1015 + $0x38] sm:$0xf]
      %v1031 = vld [vmem:[%s1015 + $0x3c] sm:$0xf]
      %v1032 = vld [vmem:[%s1015 + $0x40] sm:$0xf]
      %v1033 = vld [vmem:[%s1015 + $0x44] sm:$0xf]
      %v1034 = vld [vmem:[%s1015 + $0x48] sm:$0x3]
      %s1035 = scalar_lea.vmem %s4, 2
      %v1036 = vld [vmem:[%s1035] sm:$0x1]
      %v1038 = vlaneseq
      %v1039 = vshrl.u32 %v1038, 7
      %v1040 = vsub.s32 0, %v1039
      %v1041 = vrot.slane %v1036, %v1040
      %v1062 = vunpack.c.l.b16 %v1016
      %v1063 = vunpack.c.l.b16 %v1017
      %v1064 = vunpack.c.l.b16 %v1018
      %v1065 = vunpack.c.l.b16 %v1019
      %v1066 = vunpack.c.l.b16 %v1020
      %v1067 = vunpack.c.l.b16 %v1021
      %v1068 = vunpack.c.l.b16 %v1022
      %v1069 = vunpack.c.l.b16 %v1023
      %v1070 = vunpack.c.l.b16 %v1024
      %v1071 = vunpack.c.l.b16 %v1025
      %v1072 = vunpack.c.l.b16 %v1026
      %v1073 = vunpack.c.l.b16 %v1027
      %v1074 = vunpack.c.l.b16 %v1028
      %v1075 = vunpack.c.l.b16 %v1029
      %v1076 = vunpack.c.l.b16 %v1030
      %v1077 = vunpack.c.l.b16 %v1031
      %v1078 = vunpack.c.l.b16 %v1032
      %v1079 = vunpack.c.l.b16 %v1033
      %v1080 = vunpack.c.l.b16 %v1034
      %v1081 = vpack.c.b16 %v1063, %v1062
      %v1082 = vpack.c.b16 %v1065, %v1064
      %v1083 = vpack.c.b16 %v1067, %v1066
      %v1084 = vpack.c.b16 %v1069, %v1068
      %v1085 = vpack.c.b16 %v1071, %v1070
      %v1086 = vpack.c.b16 %v1073, %v1072
      %v1087 = vpack.c.b16 %v1075, %v1074
      %v1088 = vpack.c.b16 %v1077, %v1076
      %v1089 = vpack.c.b16 %v1079, %v1078
      %v1090 = vpack.c.b16 %v1080, %v1080
      %v1101 = vand.u32 %v1090, %v793
      %1103 = vmatprep.subr.bf16.mxu0 0
      %1104 = vmatpush1.bf16.msra.mxu0 %v1081
      %1105 = vmatprep.subr.bf16.mxu0 0
      %1106 = vmatpush1.bf16.msra.mxu0 %v1082
      %1107 = vmatprep.subr.bf16.mxu0 0
      %1108 = vmatpush1.bf16.msra.mxu0 %v1083
      %1109 = vmatprep.subr.bf16.mxu0 0
      %1110 = vmatpush1.bf16.msra.mxu0 %v1084
      %1111 = vmatprep.subr.bf16.mxu0 0
      %1112 = vmatpush1.bf16.msra.mxu0 %v1085
      %1113 = vmatprep.subr.bf16.mxu0 0
      %1114 = vmatpush1.bf16.msra.mxu0 %v1086
      %1115 = vmatprep.subr.bf16.mxu0 0
      %1116 = vmatpush1.bf16.msra.mxu0 %v1087
      %1117 = vmatprep.subr.bf16.mxu0 0
      %1118 = vmatpush1.bf16.msra.mxu0 %v1088
      %1119 = vmatprep.subr.bf16.mxu0 0
      %1120 = vmatpush1.bf16.msra.mxu0 %v1089
      %1121 = vmatprep.subr.bf16.mxu0 0
      %1122 = vmatpush1.bf16.msra.mxu0 %v1101
      %1123 = vmatprep.subr.bf16.mxu0 0
      %1124 = vmatpush1.bf16.msra.mxu0 0
      %1125 = vmatprep.subr.bf16.mxu0 0
      %1126 = vmatpush1.bf16.msra.mxu0 0
      %1127 = vmatprep.subr.bf16.mxu0 0
      %1128 = vmatpush1.bf16.msra.mxu0 0
      %1129 = vmatprep.subr.bf16.mxu0 0
      %1130 = vmatpush1.bf16.msra.mxu0 0
      %1131 = vmatprep.subr.bf16.mxu0 0
      %1132 = vmatpush1.bf16.msra.mxu0 0
      %1133 = vmatprep.subr.bf16.mxu0 0
      %1134 = vmatpush1.bf16.msra.mxu0 0
      %1135 = vmatprep.mubr.bf16.mxu0 %v779
      %1136 = vmatmul.mubr.bf16.gmra.mrb[0].mxu0 %v687
      %v1137 = vpop.f32.mrb[0].mxu0
      %v1138 = vadd.f32 %v1041, %v1137
      %v1139 = vpop.f32.mrb[0].mxu0
      %v1140 = vpop.f32.mrb[0].mxu0
      %v1141 = vadd.f32 %v1041, %v1140
      %v1142 = vpop.f32.mrb[0].mxu0
      %1143 = vmatprep.mubr.bf16.mxu0 %v782
      %1144 = vmatmul.mubr.bf16.gmra.mrb[0].mxu0 %v689
      %v1145 = vpop.f32.mrb[0].mxu0
      %v1146 = vadd.f32 %v1041, %v1145
      %v1147 = vpop.f32.mrb[0].mxu0
      %v1148 = vpop.f32.mrb[0].mxu0
      %v1149 = vadd.f32 %v1041, %v1148
      %v1150 = vpop.f32.mrb[0].mxu0
      %1151 = vmatprep.mubr.bf16.mxu0 %v785
      %1152 = vmatmul.mubr.bf16.gmra.mrb[0].mxu0 %v691
      %v1153 = vpop.f32.mrb[0].mxu0
      %v1154 = vadd.f32 %v1041, %v1153
      %v1155 = vpop.f32.mrb[0].mxu0
      %v1156 = vpop.f32.mrb[0].mxu0
      %v1157 = vadd.f32 %v1041, %v1156
      %v1158 = vpop.f32.mrb[0].mxu0
      %1159 = vmatprep.mubr.bf16.mxu0 %v788
      %1160 = vmatmul.mubr.bf16.gmra.mrb[0].mxu0 %v693
      %v1161 = vpop.f32.mrb[0].mxu0
      %v1162 = vadd.f32 %v1041, %v1161
      %v1163 = vpop.f32.mrb[0].mxu0
      %v1164 = vpop.f32.mrb[0].mxu0
      %v1165 = vadd.f32 %v1041, %v1164
      %v1166 = vpop.f32.mrb[0].mxu0
      %1167 = vdwg.mxu0
      %v1168 = vld [vmem:[%s5] sm:$0xff]
      %v1169 = vld [vmem:[%s5 + $0x8] sm:$0xff]
      %v1170 = vmul.f32 %v832, %v832
      %v1171 = vmul.f32 %v835, %v835
      %v1172 = vmul.f32 %v840, %v840
      %v1173 = vmul.f32 %v843, %v843
      %v1174 = vmul.f32 %v848, %v848
      %v1175 = vmul.f32 %v851, %v851
      %v1176 = vmul.f32 %v856, %v856
      %v1177 = vmul.f32 %v859, %v859
      %vm1178 = vcmask 130048
      %v1179 = vsel %vm1178, %v1170, 0.0
      %1180 = vadd.xlane.f32.xlu0 %v1179
      %v1181 = vpop.xlane.xlu0 %1180
      %v1182 = vsel %vm1178, %v1171, 0.0
      %1183 = vadd.xlane.f32.xlu0 %v1182
      %v1184 = vpop.xlane.xlu0 %1183
      %v1185 = vsel %vm1178, %v1172, 0.0
      %1186 = vadd.xlane.f32.xlu0 %v1185
      %v1187 = vpop.xlane.xlu0 %1186
      %v1188 = vsel %vm1178, %v1173, 0.0
      %1189 = vadd.xlane.f32.xlu0 %v1188
      %v1190 = vpop.xlane.xlu0 %1189
      %v1191 = vsel %vm1178, %v1174, 0.0
      %1192 = vadd.xlane.f32.xlu0 %v1191
      %v1193 = vpop.xlane.xlu0 %1192
      %v1194 = vsel %vm1178, %v1175, 0.0
      %1195 = vadd.xlane.f32.xlu0 %v1194
      %v1196 = vpop.xlane.xlu0 %1195
      %v1197 = vsel %vm1178, %v1176, 0.0
      %1198 = vadd.xlane.f32.xlu0 %v1197
      %v1199 = vpop.xlane.xlu0 %1198
      %v1200 = vsel %vm1178, %v1177, 0.0
      %1201 = vadd.xlane.f32.xlu0 %v1200
      %v1202 = vpop.xlane.xlu0 %1201
      %v1203 = vmul.f32 %v1181, 0.5
      %v1204 = vmul.f32 %v1184, 0.5
      %v1205 = vmul.f32 %v1187, 0.5
      %v1206 = vmul.f32 %v1190, 0.5
      %v1207 = vmul.f32 %v1193, 0.5
      %v1208 = vmul.f32 %v1196, 0.5
      %v1209 = vmul.f32 %v1199, 0.5
      %v1210 = vmul.f32 %v1202, 0.5
      %v1211 = vmul.f32 %v985, %v985
      %v1212 = vmul.f32 %v988, %v988
      %v1213 = vmul.f32 %v993, %v993
      %v1214 = vmul.f32 %v996, %v996
      %v1215 = vmul.f32 %v1001, %v1001
      %v1216 = vmul.f32 %v1004, %v1004
      %v1217 = vmul.f32 %v1009, %v1009
      %v1218 = vmul.f32 %v1012, %v1012
      %v1219 = vsel %vm1178, %v1211, 0.0
      %1220 = vadd.xlane.f32.xlu0 %v1219
      %v1221 = vpop.xlane.xlu0 %1220
      %v1222 = vsel %vm1178, %v1212, 0.0
      %1223 = vadd.xlane.f32.xlu0 %v1222
      %v1224 = vpop.xlane.xlu0 %1223
      %v1225 = vsel %vm1178, %v1213, 0.0
      %1226 = vadd.xlane.f32.xlu0 %v1225
      %v1227 = vpop.xlane.xlu0 %1226
      %v1228 = vsel %vm1178, %v1214, 0.0
      %1229 = vadd.xlane.f32.xlu0 %v1228
      %v1230 = vpop.xlane.xlu0 %1229
      %v1231 = vsel %vm1178, %v1215, 0.0
      %1232 = vadd.xlane.f32.xlu0 %v1231
      %v1233 = vpop.xlane.xlu0 %1232
      %v1234 = vsel %vm1178, %v1216, 0.0
      %1235 = vadd.xlane.f32.xlu0 %v1234
      %v1236 = vpop.xlane.xlu0 %1235
      %v1237 = vsel %vm1178, %v1217, 0.0
      %1238 = vadd.xlane.f32.xlu0 %v1237
      %v1239 = vpop.xlane.xlu0 %1238
      %v1240 = vsel %vm1178, %v1218, 0.0
      %1241 = vadd.xlane.f32.xlu0 %v1240
      %v1242 = vpop.xlane.xlu0 %1241
      %v1243 = vmul.f32 %v1221, 0.5
      %v1244 = vmul.f32 %v1224, 0.5
      %v1245 = vmul.f32 %v1227, 0.5
      %v1246 = vmul.f32 %v1230, 0.5
      %v1247 = vmul.f32 %v1233, 0.5
      %v1248 = vmul.f32 %v1236, 0.5
      %v1249 = vmul.f32 %v1239, 0.5
      %v1250 = vmul.f32 %v1242, 0.5
      %v1252 = vsel %vm1178, %v832, 0
      %v1255 = vsel %vm1178, %v835, 0
      %v1258 = vsel %vm1178, %v840, 0
      %v1261 = vsel %vm1178, %v843, 0
      %v1264 = vsel %vm1178, %v848, 0
      %v1267 = vsel %vm1178, %v851, 0
      %v1270 = vsel %vm1178, %v856, 0
      %v1273 = vsel %vm1178, %v859, 0
      %1275 = vmatprep.subr.mxu0 0.0
      %1276 = vmatpush1.msra.mxu0 %v1168
      %1277 = vmatprep.subr.mxu0 0.0
      %1278 = vmatpush1.msra.mxu0 %v1169
      %1279 = vmatprep.subr.mxu0 0.0
      %1280 = vmatpush1.msra.mxu0 0.0
      %1281 = vmatprep.subr.mxu0 0.0
      %1282 = vmatpush1.msra.mxu0 0.0
      %1283 = vmatprep.subr.mxu0 0.0
      %1284 = vmatpush1.msra.mxu0 0.0
      %1285 = vmatprep.subr.mxu0 0.0
      %1286 = vmatpush1.msra.mxu0 0.0
      %1287 = vmatprep.subr.mxu0 0.0
      %1288 = vmatpush1.msra.mxu0 0.0
      %1289 = vmatprep.subr.mxu0 0.0
      %1290 = vmatpush1.msra.mxu0 0.0
      %1291 = vmatprep.subr.mxu0 0.0
      %1292 = vmatpush1.msra.mxu0 0.0
      %1293 = vmatprep.subr.mxu0 0.0
      %1294 = vmatpush1.msra.mxu0 0.0
      %1295 = vmatprep.subr.mxu0 0.0
      %1296 = vmatpush1.msra.mxu0 0.0
      %1297 = vmatprep.subr.mxu0 0.0
      %1298 = vmatpush1.msra.mxu0 0.0
      %1299 = vmatprep.subr.mxu0 0.0
      %1300 = vmatpush1.msra.mxu0 0.0
      %1301 = vmatprep.subr.mxu0 0.0
      %1302 = vmatpush1.msra.mxu0 0.0
      %1303 = vmatprep.subr.mxu0 0.0
      %1304 = vmatpush1.msra.mxu0 0.0
      %1305 = vmatprep.subr.mxu0 0.0
      %1306 = vmatpush1.msra.mxu0 0.0
      %1307 = vmatprep.subr.mxu0 0.0
      %1308 = vmatpush1.msra.mxu0 0.0
      %1309 = vmatprep.subr.mxu0 0.0
      %1310 = vmatpush1.msra.mxu0 0.0
      %1311 = vmatprep.subr.mxu0 0.0
      %1312 = vmatpush1.msra.mxu0 0.0
      %1313 = vmatprep.subr.mxu0 0.0
      %1314 = vmatpush1.msra.mxu0 0.0
      %1315 = vmatprep.subr.mxu0 0.0
      %1316 = vmatpush1.msra.mxu0 0.0
      %1317 = vmatprep.subr.mxu0 0.0
      %1318 = vmatpush1.msra.mxu0 0.0
      %1319 = vmatprep.subr.mxu0 0.0
      %1320 = vmatpush1.msra.mxu0 0.0
      %1321 = vmatprep.subr.mxu0 0.0
      %1322 = vmatpush1.msra.mxu0 0.0
      %1323 = vmatprep.subr.mxu0 0.0
      %1324 = vmatpush1.msra.mxu0 0.0
      %1325 = vmatprep.subr.mxu0 0.0
      %1326 = vmatpush1.msra.mxu0 0.0
      %1327 = vmatprep.subr.mxu0 0.0
      %1328 = vmatpush1.msra.mxu0 0.0
      %1329 = vmatprep.subr.mxu0 0.0
      %1330 = vmatpush1.msra.mxu0 0.0
      %1331 = vmatprep.subr.mxu0 0.0
      %1332 = vmatpush1.msra.mxu0 0.0
      %1333 = vmatprep.subr.mxu0 0.0
      %1334 = vmatpush1.msra.mxu0 0.0
      %1335 = vmatprep.subr.mxu0 0.0
      %1336 = vmatpush1.msra.mxu0 0.0
      %1337 = vmatprep.subr.mxu0 0.0
      %1338 = vmatpush1.msra.mxu0 0.0
      %1339 = vmatprep.mubr.f32.mxu0 0.0
      %1340 = vmatmul.mubr.f32.gmra.mrb[0].mxu0 %v1252
      %v1341 = vpop.f32.mrb[0].mxu0
      %v1342 = vadd.f32 0.0, %v1341
      %v1343 = vpop.f32.mrb[0].mxu0
      %1344 = vmatprep.mubr.f32.mxu0 0.0
      %1345 = vmatmul.mubr.f32.gmra.mrb[0].mxu0 %v1255
      %v1346 = vpop.f32.mrb[0].mxu0
      %v1347 = vadd.f32 0.0, %v1346
      %v1348 = vpop.f32.mrb[0].mxu0
      %1349 = vmatprep.mubr.f32.mxu0 0.0
      %1350 = vmatmul.mubr.f32.gmra.mrb[0].mxu0 %v1258
      %v1351 = vpop.f32.mrb[0].mxu0
      %v1352 = vadd.f32 0.0, %v1351
      %v1353 = vpop.f32.mrb[0].mxu0
      %1354 = vmatprep.mubr.f32.mxu0 0.0
      %1355 = vmatmul.mubr.f32.gmra.mrb[0].mxu0 %v1261
      %v1356 = vpop.f32.mrb[0].mxu0
      %v1357 = vadd.f32 0.0, %v1356
      %v1358 = vpop.f32.mrb[0].mxu0
      %1359 = vmatprep.mubr.f32.mxu0 0.0
      %1360 = vmatmul.mubr.f32.gmra.mrb[0].mxu0 %v1264
      %v1361 = vpop.f32.mrb[0].mxu0
      %v1362 = vadd.f32 0.0, %v1361
      %v1363 = vpop.f32.mrb[0].mxu0
      %1364 = vmatprep.mubr.f32.mxu0 0.0
      %1365 = vmatmul.mubr.f32.gmra.mrb[0].mxu0 %v1267
      %v1366 = vpop.f32.mrb[0].mxu0
      %v1367 = vadd.f32 0.0, %v1366
      %v1368 = vpop.f32.mrb[0].mxu0
      %1369 = vmatprep.mubr.f32.mxu0 0.0
      %1370 = vmatmul.mubr.f32.gmra.mrb[0].mxu0 %v1270
      %v1371 = vpop.f32.mrb[0].mxu0
      %v1372 = vadd.f32 0.0, %v1371
      %v1373 = vpop.f32.mrb[0].mxu0
      %1374 = vmatprep.mubr.f32.mxu0 0.0
      %1375 = vmatmul.mubr.f32.gmra.mrb[0].mxu0 %v1273
      %v1376 = vpop.f32.mrb[0].mxu0
      %v1377 = vadd.f32 0.0, %v1376
      %v1378 = vpop.f32.mrb[0].mxu0
      %1379 = vdwg.mxu0
      %v1380 = vsub.f32 %v1342, %v1203
      %v1381 = vsub.f32 %v1347, %v1204
      %v1382 = vsub.f32 %v1352, %v1205
      %v1383 = vsub.f32 %v1357, %v1206
      %v1384 = vsub.f32 %v1362, %v1207
      %v1385 = vsub.f32 %v1367, %v1208
      %v1386 = vsub.f32 %v1372, %v1209
      %v1387 = vsub.f32 %v1377, %v1210
      %v1388 = vmul.f32 %v1380, 1.442695
      %v1389 = vpow.pop %v1388
      %v1390 = vmul.f32 %v1381, 1.442695
      %v1391 = vpow.pop %v1390
      %v1392 = vmul.f32 %v1382, 1.442695
      %v1393 = vpow.pop %v1392
      %v1394 = vmul.f32 %v1383, 1.442695
      %v1395 = vpow.pop %v1394
      %v1396 = vmul.f32 %v1384, 1.442695
      %v1397 = vpow.pop %v1396
      %v1398 = vmul.f32 %v1385, 1.442695
      %v1399 = vpow.pop %v1398
      %v1400 = vmul.f32 %v1386, 1.442695
      %v1401 = vpow.pop %v1400
      %v1402 = vmul.f32 %v1387, 1.442695
      %v1403 = vpow.pop %v1402
      %v1404 = vmul.f32 %v1389, 0.35355338
      %v1405 = vmul.f32 %v1391, 0.35355338
      %v1406 = vmul.f32 %v1393, 0.35355338
      %v1407 = vmul.f32 %v1395, 0.35355338
      %v1408 = vmul.f32 %v1397, 0.35355338
      %v1409 = vmul.f32 %v1399, 0.35355338
      %v1410 = vmul.f32 %v1401, 0.35355338
      %v1411 = vmul.f32 %v1403, 0.35355338
      %v1413 = vsel %vm1178, %v985, 0
      %v1416 = vsel %vm1178, %v988, 0
      %v1419 = vsel %vm1178, %v993, 0
      %v1422 = vsel %vm1178, %v996, 0
      %v1425 = vsel %vm1178, %v1001, 0
      %v1428 = vsel %vm1178, %v1004, 0
      %v1431 = vsel %vm1178, %v1009, 0
      %v1434 = vsel %vm1178, %v1012, 0
      %1436 = vmatprep.subr.mxu0 0.0
      %1437 = vmatpush1.msra.mxu0 %v1168
      %1438 = vmatprep.subr.mxu0 0.0
      %1439 = vmatpush1.msra.mxu0 %v1169
      %1440 = vmatprep.subr.mxu0 0.0
      %1441 = vmatpush1.msra.mxu0 0.0
      %1442 = vmatprep.subr.mxu0 0.0
      %1443 = vmatpush1.msra.mxu0 0.0
      %1444 = vmatprep.subr.mxu0 0.0
      %1445 = vmatpush1.msra.mxu0 0.0
      %1446 = vmatprep.subr.mxu0 0.0
      %1447 = vmatpush1.msra.mxu0 0.0
      %1448 = vmatprep.subr.mxu0 0.0
      %1449 = vmatpush1.msra.mxu0 0.0
      %1450 = vmatprep.subr.mxu0 0.0
      %1451 = vmatpush1.msra.mxu0 0.0
      %1452 = vmatprep.subr.mxu0 0.0
      %1453 = vmatpush1.msra.mxu0 0.0
      %1454 = vmatprep.subr.mxu0 0.0
      %1455 = vmatpush1.msra.mxu0 0.0
      %1456 = vmatprep.subr.mxu0 0.0
      %1457 = vmatpush1.msra.mxu0 0.0
      %1458 = vmatprep.subr.mxu0 0.0
      %1459 = vmatpush1.msra.mxu0 0.0
      %1460 = vmatprep.subr.mxu0 0.0
      %1461 = vmatpush1.msra.mxu0 0.0
      %1462 = vmatprep.subr.mxu0 0.0
      %1463 = vmatpush1.msra.mxu0 0.0
      %1464 = vmatprep.subr.mxu0 0.0
      %1465 = vmatpush1.msra.mxu0 0.0
      %1466 = vmatprep.subr.mxu0 0.0
      %1467 = vmatpush1.msra.mxu0 0.0
      %1468 = vmatprep.subr.mxu0 0.0
      %1469 = vmatpush1.msra.mxu0 0.0
      %1470 = vmatprep.subr.mxu0 0.0
      %1471 = vmatpush1.msra.mxu0 0.0
      %1472 = vmatprep.subr.mxu0 0.0
      %1473 = vmatpush1.msra.mxu0 0.0
      %1474 = vmatprep.subr.mxu0 0.0
      %1475 = vmatpush1.msra.mxu0 0.0
      %1476 = vmatprep.subr.mxu0 0.0
      %1477 = vmatpush1.msra.mxu0 0.0
      %1478 = vmatprep.subr.mxu0 0.0
      %1479 = vmatpush1.msra.mxu0 0.0
      %1480 = vmatprep.subr.mxu0 0.0
      %1481 = vmatpush1.msra.mxu0 0.0
      %1482 = vmatprep.subr.mxu0 0.0
      %1483 = vmatpush1.msra.mxu0 0.0
      %1484 = vmatprep.subr.mxu0 0.0
      %1485 = vmatpush1.msra.mxu0 0.0
      %1486 = vmatprep.subr.mxu0 0.0
      %1487 = vmatpush1.msra.mxu0 0.0
      %1488 = vmatprep.subr.mxu0 0.0
      %1489 = vmatpush1.msra.mxu0 0.0
      %1490 = vmatprep.subr.mxu0 0.0
      %1491 = vmatpush1.msra.mxu0 0.0
      %1492 = vmatprep.subr.mxu0 0.0
      %1493 = vmatpush1.msra.mxu0 0.0
      %1494 = vmatprep.subr.mxu0 0.0
      %1495 = vmatpush1.msra.mxu0 0.0
      %1496 = vmatprep.subr.mxu0 0.0
      %1497 = vmatpush1.msra.mxu0 0.0
      %1498 = vmatprep.subr.mxu0 0.0
      %1499 = vmatpush1.msra.mxu0 0.0
      %1500 = vmatprep.mubr.f32.mxu0 0.0
      %1501 = vmatmul.mubr.f32.gmra.mrb[0].mxu0 %v1413
      %v1502 = vpop.f32.mrb[0].mxu0
      %v1503 = vadd.f32 0.0, %v1502
      %v1504 = vpop.f32.mrb[0].mxu0
      %1505 = vmatprep.mubr.f32.mxu0 0.0
      %1506 = vmatmul.mubr.f32.gmra.mrb[0].mxu0 %v1416
      %v1507 = vpop.f32.mrb[0].mxu0
      %v1508 = vadd.f32 0.0, %v1507
      %v1509 = vpop.f32.mrb[0].mxu0
      %1510 = vmatprep.mubr.f32.mxu0 0.0
      %1511 = vmatmul.mubr.f32.gmra.mrb[0].mxu0 %v1419
      %v1512 = vpop.f32.mrb[0].mxu0
      %v1513 = vadd.f32 0.0, %v1512
      %v1514 = vpop.f32.mrb[0].mxu0
      %1515 = vmatprep.mubr.f32.mxu0 0.0
      %1516 = vmatmul.mubr.f32.gmra.mrb[0].mxu0 %v1422
      %v1517 = vpop.f32.mrb[0].mxu0
      %v1518 = vadd.f32 0.0, %v1517
      %v1519 = vpop.f32.mrb[0].mxu0
      %1520 = vmatprep.mubr.f32.mxu0 0.0
      %1521 = vmatmul.mubr.f32.gmra.mrb[0].mxu0 %v1425
      %v1522 = vpop.f32.mrb[0].mxu0
      %v1523 = vadd.f32 0.0, %v1522
      %v1524 = vpop.f32.mrb[0].mxu0
      %1525 = vmatprep.mubr.f32.mxu0 0.0
      %1526 = vmatmul.mubr.f32.gmra.mrb[0].mxu0 %v1428
      %v1527 = vpop.f32.mrb[0].mxu0
      %v1528 = vadd.f32 0.0, %v1527
      %v1529 = vpop.f32.mrb[0].mxu0
      %1530 = vmatprep.mubr.f32.mxu0 0.0
      %1531 = vmatmul.mubr.f32.gmra.mrb[0].mxu0 %v1431
      %v1532 = vpop.f32.mrb[0].mxu0
      %v1533 = vadd.f32 0.0, %v1532
      %v1534 = vpop.f32.mrb[0].mxu0
      %1535 = vmatprep.mubr.f32.mxu0 0.0
      %1536 = vmatmul.mubr.f32.gmra.mrb[0].mxu0 %v1434
      %v1537 = vpop.f32.mrb[0].mxu0
      %v1538 = vadd.f32 0.0, %v1537
      %v1539 = vpop.f32.mrb[0].mxu0
      %1540 = vdwg.mxu0
      %v1541 = vsub.f32 %v1503, %v1243
      %v1542 = vsub.f32 %v1508, %v1244
      %v1543 = vsub.f32 %v1513, %v1245
      %v1544 = vsub.f32 %v1518, %v1246
      %v1545 = vsub.f32 %v1523, %v1247
      %v1546 = vsub.f32 %v1528, %v1248
      %v1547 = vsub.f32 %v1533, %v1249
      %v1548 = vsub.f32 %v1538, %v1250
      %v1549 = vmul.f32 %v1541, 1.442695
      %v1550 = vpow.pop %v1549
      %v1551 = vmul.f32 %v1542, 1.442695
      %v1552 = vpow.pop %v1551
      %v1553 = vmul.f32 %v1543, 1.442695
      %v1554 = vpow.pop %v1553
      %v1555 = vmul.f32 %v1544, 1.442695
      %v1556 = vpow.pop %v1555
      %v1557 = vmul.f32 %v1545, 1.442695
      %v1558 = vpow.pop %v1557
      %v1559 = vmul.f32 %v1546, 1.442695
      %v1560 = vpow.pop %v1559
      %v1561 = vmul.f32 %v1547, 1.442695
      %v1562 = vpow.pop %v1561
      %v1563 = vmul.f32 %v1548, 1.442695
      %v1564 = vpow.pop %v1563
      %v1565 = vmul.f32 %v1550, 0.35355338
      %v1566 = vmul.f32 %v1552, 0.35355338
      %v1567 = vmul.f32 %v1554, 0.35355338
      %v1568 = vmul.f32 %v1556, 0.35355338
      %v1569 = vmul.f32 %v1558, 0.35355338
      %v1570 = vmul.f32 %v1560, 0.35355338
      %v1571 = vmul.f32 %v1562, 0.35355338
      %v1572 = vmul.f32 %v1564, 0.35355338
      %vm1573 = vcmask 64512
      %v1574 = vsel %vm1573, %v1404, 0.0
      %v1575 = vsel %vm1573, %v1405, 0.0
      %v1576 = vadd.f32 %v1574, %v1575
      %v1577 = vsel %vm1573, %v1406, 0.0
      %v1578 = vadd.f32 %v1576, %v1577
      %v1579 = vsel %vm1573, %v1407, 0.0
      %v1580 = vadd.f32 %v1578, %v1579
      %v1581 = vsel %vm1573, %v1408, 0.0
      %v1582 = vadd.f32 %v1580, %v1581
      %v1583 = vsel %vm1573, %v1409, 0.0
      %v1584 = vadd.f32 %v1582, %v1583
      %v1585 = vsel %vm1573, %v1410, 0.0
      %v1586 = vadd.f32 %v1584, %v1585
      %v1587 = vsel %vm1573, %v1411, 0.0
      %v1588 = vadd.f32 %v1586, %v1587
      %v1589 = vrot.slane %v1588, 4
      %v1590 = vadd.f32 %v1588, %v1589
      %v1591 = vrot.slane %v1590, 2
      %v1592 = vadd.f32 %v1590, %v1591
      %v1593 = vrot.slane %v1592, 1
      %v1594 = vadd.f32 %v1592, %v1593
      %v1595 = vmul.f32 %v1565, %v1594
      %v1596 = vmul.f32 %v1566, %v1594
      %v1597 = vmul.f32 %v1567, %v1594
      %v1598 = vmul.f32 %v1568, %v1594
      %v1599 = vmul.f32 %v1569, %v1594
      %v1600 = vmul.f32 %v1570, %v1594
      %v1601 = vmul.f32 %v1571, %v1594
      %v1602 = vmul.f32 %v1572, %v1594
      %v1603 = vsel %vm1573, %v1595, 0.0
      %1604 = vadd.xlane.f32.xlu0 %v1603
      %v1605 = vpop.xlane.xlu0 %1604
      %v1606 = vsel %vm1573, %v1596, 0.0
      %1607 = vadd.xlane.f32.xlu0 %v1606
      %v1608 = vpop.xlane.xlu0 %1607
      %v1609 = vsel %vm1573, %v1597, 0.0
      %1610 = vadd.xlane.f32.xlu0 %v1609
      %v1611 = vpop.xlane.xlu0 %1610
      %v1612 = vsel %vm1573, %v1598, 0.0
      %1613 = vadd.xlane.f32.xlu0 %v1612
      %v1614 = vpop.xlane.xlu0 %1613
      %v1615 = vsel %vm1573, %v1599, 0.0
      %1616 = vadd.xlane.f32.xlu0 %v1615
      %v1617 = vpop.xlane.xlu0 %1616
      %v1618 = vsel %vm1573, %v1600, 0.0
      %1619 = vadd.xlane.f32.xlu0 %v1618
      %v1620 = vpop.xlane.xlu0 %1619
      %v1621 = vsel %vm1573, %v1601, 0.0
      %1622 = vadd.xlane.f32.xlu0 %v1621
      %v1623 = vpop.xlane.xlu0 %1622
      %v1624 = vsel %vm1573, %v1602, 0.0
      %1625 = vadd.xlane.f32.xlu0 %v1624
      %v1626 = vpop.xlane.xlu0 %1625
      %1627 = vxpose.xlu0.b32.start [1/16] %v1138, 128
      %1628 = vxpose.xlu0.b32.cont [2/16] %v1141, 128
      %1629 = vxpose.xlu0.b32.cont [3/16] %v1146, 128
      %1630 = vxpose.xlu0.b32.cont [4/16] %v1149, 128
      %1631 = vxpose.xlu0.b32.cont [5/16] %v1154, 128
      %1632 = vxpose.xlu0.b32.cont [6/16] %v1157, 128
      %1633 = vxpose.xlu0.b32.cont [7/16] %v1162, 128
      %1634 = vxpose.xlu0.b32.cont [8/16] %v1165, 128
      %1635 = vxpose.xlu0.b32.cont [9/16] 0.0, 128
      %1636 = vxpose.xlu0.b32.cont [10/16] 0.0, 128
      %1637 = vxpose.xlu0.b32.cont [11/16] 0.0, 128
      %1638 = vxpose.xlu0.b32.cont [12/16] 0.0, 128
      %1639 = vxpose.xlu0.b32.cont [13/16] 0.0, 128
      %1640 = vxpose.xlu0.b32.cont [14/16] 0.0, 128
      %1641 = vxpose.xlu0.b32.cont [15/16] 0.0, 128
      %1642 = vxpose.xlu0.b32.end [16/16] 0.0, 128
      %v1643 = vpop.trf.xlu0
      %v1644 = vpop.trf.xlu0
      %v1645 = vpop.trf.xlu0
      %v1646 = vpop.trf.xlu0
      %v1647 = vpop.trf.xlu0
      %v1648 = vpop.trf.xlu0
      %v1649 = vpop.trf.xlu0
      %v1650 = vpop.trf.xlu0
      %v1651 = vpop.trf.xlu0
      %v1652 = vpop.trf.xlu0
      %v1653 = vpop.trf.xlu0
      %v1654 = vpop.trf.xlu0
      %v1655 = vpop.trf.xlu0
      %v1656 = vpop.trf.xlu0
      %v1657 = vpop.trf.xlu0
      %v1658 = vpop.trf.xlu0
      %vm1659 = vcmask 523264
      %v1661 = vsel %vm1659, %v1643, 0
      %v1664 = vsel %vm1659, %v1644, 0
      %1666 = vmatprep.subr.mxu0 0.0
      %1667 = vmatpush1.msra.mxu0 %v1404
      %1668 = vmatprep.subr.mxu0 0.0
      %1669 = vmatpush1.msra.mxu0 %v1405
      %1670 = vmatprep.subr.mxu0 0.0
      %1671 = vmatpush1.msra.mxu0 %v1406
      %1672 = vmatprep.subr.mxu0 0.0
      %1673 = vmatpush1.msra.mxu0 %v1407
      %1674 = vmatprep.subr.mxu0 0.0
      %1675 = vmatpush1.msra.mxu0 %v1408
      %1676 = vmatprep.subr.mxu0 0.0
      %1677 = vmatpush1.msra.mxu0 %v1409
      %1678 = vmatprep.subr.mxu0 0.0
      %1679 = vmatpush1.msra.mxu0 %v1410
      %1680 = vmatprep.subr.mxu0 0.0
      %1681 = vmatpush1.msra.mxu0 %v1411
      %1682 = vmatprep.subr.mxu0 0.0
      %1683 = vmatpush1.msra.mxu0 0.0
      %1684 = vmatprep.subr.mxu0 0.0
      %1685 = vmatpush1.msra.mxu0 0.0
      %1686 = vmatprep.subr.mxu0 0.0
      %1687 = vmatpush1.msra.mxu0 0.0
      %1688 = vmatprep.subr.mxu0 0.0
      %1689 = vmatpush1.msra.mxu0 0.0
      %1690 = vmatprep.subr.mxu0 0.0
      %1691 = vmatpush1.msra.mxu0 0.0
      %1692 = vmatprep.subr.mxu0 0.0
      %1693 = vmatpush1.msra.mxu0 0.0
      %1694 = vmatprep.subr.mxu0 0.0
      %1695 = vmatpush1.msra.mxu0 0.0
      %1696 = vmatprep.subr.mxu0 0.0
      %1697 = vmatpush1.msra.mxu0 0.0
      %1698 = vmatprep.subr.mxu0 0.0
      %1699 = vmatpush1.msra.mxu0 0.0
      %1700 = vmatprep.subr.mxu0 0.0
      %1701 = vmatpush1.msra.mxu0 0.0
      %1702 = vmatprep.subr.mxu0 0.0
      %1703 = vmatpush1.msra.mxu0 0.0
      %1704 = vmatprep.subr.mxu0 0.0
      %1705 = vmatpush1.msra.mxu0 0.0
      %1706 = vmatprep.subr.mxu0 0.0
      %1707 = vmatpush1.msra.mxu0 0.0
      %1708 = vmatprep.subr.mxu0 0.0
      %1709 = vmatpush1.msra.mxu0 0.0
      %1710 = vmatprep.subr.mxu0 0.0
      %1711 = vmatpush1.msra.mxu0 0.0
      %1712 = vmatprep.subr.mxu0 0.0
      %1713 = vmatpush1.msra.mxu0 0.0
      %1714 = vmatprep.subr.mxu0 0.0
      %1715 = vmatpush1.msra.mxu0 0.0
      %1716 = vmatprep.subr.mxu0 0.0
      %1717 = vmatpush1.msra.mxu0 0.0
      %1718 = vmatprep.subr.mxu0 0.0
      %1719 = vmatpush1.msra.mxu0 0.0
      %1720 = vmatprep.subr.mxu0 0.0
      %1721 = vmatpush1.msra.mxu0 0.0
      %1722 = vmatprep.subr.mxu0 0.0
      %1723 = vmatpush1.msra.mxu0 0.0
      %1724 = vmatprep.subr.mxu0 0.0
      %1725 = vmatpush1.msra.mxu0 0.0
      %1726 = vmatprep.subr.mxu0 0.0
      %1727 = vmatpush1.msra.mxu0 0.0
      %1728 = vmatprep.subr.mxu0 0.0
      %1729 = vmatpush1.msra.mxu0 0.0
      %1730 = vmatprep.mubr.f32.mxu0 0.0
      %1731 = vmatmul.mubr.f32.gmra.mrb[0].mxu0 %v1661
      %v1732 = vpop.f32.mrb[0].mxu0
      %v1733 = vadd.f32 0.0, %v1732
      %v1734 = vpop.f32.mrb[0].mxu0
      %1735 = vmatprep.mubr.f32.mxu0 0.0
      %1736 = vmatmul.mubr.f32.gmra.mrb[0].mxu0 %v1664
      %v1737 = vpop.f32.mrb[0].mxu0
      %v1738 = vadd.f32 0.0, %v1737
      %v1739 = vpop.f32.mrb[0].mxu0
      %1740 = vdwg.mxu0
      %v1742 = vsel %vm1573, %v1565, 0
      %v1745 = vsel %vm1573, %v1566, 0
      %v1748 = vsel %vm1573, %v1567, 0
      %v1751 = vsel %vm1573, %v1568, 0
      %v1754 = vsel %vm1573, %v1569, 0
      %v1757 = vsel %vm1573, %v1570, 0
      %v1760 = vsel %vm1573, %v1571, 0
      %v1763 = vsel %vm1573, %v1572, 0
      %v1766 = vsel %vm1573, %v1733, 0
      %v1769 = vsel %vm1573, %v1738, 0
      %1771 = vmatprep.subr.mxu0 0.0
      %1772 = vmatpush1.xpose.msra.mxu0 %v1766
      %1773 = vmatprep.subr.mxu0 0.0
      %1774 = vmatpush1.xpose.msra.mxu0 %v1769
      %1775 = vmatprep.subr.mxu0 0.0
      %1776 = vmatpush1.xpose.msra.mxu0 0.0
      %1777 = vmatprep.subr.mxu0 0.0
      %1778 = vmatpush1.xpose.msra.mxu0 0.0
      %1779 = vmatprep.subr.mxu0 0.0
      %1780 = vmatpush1.xpose.msra.mxu0 0.0
      %1781 = vmatprep.subr.mxu0 0.0
      %1782 = vmatpush1.xpose.msra.mxu0 0.0
      %1783 = vmatprep.subr.mxu0 0.0
      %1784 = vmatpush1.xpose.msra.mxu0 0.0
      %1785 = vmatprep.subr.mxu0 0.0
      %1786 = vmatpush1.xpose.msra.mxu0 0.0
      %1787 = vmatprep.subr.mxu0 0.0
      %1788 = vmatpush1.xpose.msra.mxu0 0.0
      %1789 = vmatprep.subr.mxu0 0.0
      %1790 = vmatpush1.xpose.msra.mxu0 0.0
      %1791 = vmatprep.subr.mxu0 0.0
      %1792 = vmatpush1.xpose.msra.mxu0 0.0
      %1793 = vmatprep.subr.mxu0 0.0
      %1794 = vmatpush1.xpose.msra.mxu0 0.0
      %1795 = vmatprep.subr.mxu0 0.0
      %1796 = vmatpush1.xpose.msra.mxu0 0.0
      %1797 = vmatprep.subr.mxu0 0.0
      %1798 = vmatpush1.xpose.msra.mxu0 0.0
      %1799 = vmatprep.subr.mxu0 0.0
      %1800 = vmatpush1.xpose.msra.mxu0 0.0
      %1801 = vmatprep.subr.mxu0 0.0
      %1802 = vmatpush1.xpose.msra.mxu0 0.0
      %1803 = vmatprep.subr.mxu0 0.0
      %1804 = vmatpush1.xpose.msra.mxu0 0.0
      %1805 = vmatprep.subr.mxu0 0.0
      %1806 = vmatpush1.xpose.msra.mxu0 0.0
      %1807 = vmatprep.subr.mxu0 0.0
      %1808 = vmatpush1.xpose.msra.mxu0 0.0
      %1809 = vmatprep.subr.mxu0 0.0
      %1810 = vmatpush1.xpose.msra.mxu0 0.0
      %1811 = vmatprep.subr.mxu0 0.0
      %1812 = vmatpush1.xpose.msra.mxu0 0.0
      %1813 = vmatprep.subr.mxu0 0.0
      %1814 = vmatpush1.xpose.msra.mxu0 0.0
      %1815 = vmatprep.subr.mxu0 0.0
      %1816 = vmatpush1.xpose.msra.mxu0 0.0
      %1817 = vmatprep.subr.mxu0 0.0
      %1818 = vmatpush1.xpose.msra.mxu0 0.0
      %1819 = vmatprep.subr.mxu0 0.0
      %1820 = vmatpush1.xpose.msra.mxu0 0.0
      %1821 = vmatprep.subr.mxu0 0.0
      %1822 = vmatpush1.xpose.msra.mxu0 0.0
      %1823 = vmatprep.subr.mxu0 0.0
      %1824 = vmatpush1.xpose.msra.mxu0 0.0
      %1825 = vmatprep.subr.mxu0 0.0
      %1826 = vmatpush1.xpose.msra.mxu0 0.0
      %1827 = vmatprep.subr.mxu0 0.0
      %1828 = vmatpush1.xpose.msra.mxu0 0.0
      %1829 = vmatprep.subr.mxu0 0.0
      %1830 = vmatpush1.xpose.msra.mxu0 0.0
      %1831 = vmatprep.subr.mxu0 0.0
      %1832 = vmatpush1.xpose.msra.mxu0 0.0
      %1833 = vmatprep.subr.mxu0 0.0
      %1834 = vmatpush1.xpose.msra.mxu0 0.0
      %1835 = vmatprep.mubr.f32.mxu0 0.0
      %1836 = vmatmul.mubr.f32.gmra.mrb[0].mxu0 %v1742
      %v1837 = vpop.f32.mrb[0].mxu0
      %v1838 = vadd.f32 0.0, %v1837
      %v1839 = vpop.f32.mrb[0].mxu0
      %1840 = vmatprep.mubr.f32.mxu0 0.0
      %1841 = vmatmul.mubr.f32.gmra.mrb[0].mxu0 %v1745
      %v1842 = vpop.f32.mrb[0].mxu0
      %v1843 = vadd.f32 0.0, %v1842
      %v1844 = vpop.f32.mrb[0].mxu0
      %1845 = vmatprep.mubr.f32.mxu0 0.0
      %1846 = vmatmul.mubr.f32.gmra.mrb[0].mxu0 %v1748
      %v1847 = vpop.f32.mrb[0].mxu0
      %v1848 = vadd.f32 0.0, %v1847
      %v1849 = vpop.f32.mrb[0].mxu0
      %1850 = vmatprep.mubr.f32.mxu0 0.0
      %1851 = vmatmul.mubr.f32.gmra.mrb[0].mxu0 %v1751
      %v1852 = vpop.f32.mrb[0].mxu0
      %v1853 = vadd.f32 0.0, %v1852
      %v1854 = vpop.f32.mrb[0].mxu0
      %1855 = vmatprep.mubr.f32.mxu0 0.0
      %1856 = vmatmul.mubr.f32.gmra.mrb[0].mxu0 %v1754
      %v1857 = vpop.f32.mrb[0].mxu0
      %v1858 = vadd.f32 0.0, %v1857
      %v1859 = vpop.f32.mrb[0].mxu0
      %1860 = vmatprep.mubr.f32.mxu0 0.0
      %1861 = vmatmul.mubr.f32.gmra.mrb[0].mxu0 %v1757
      %v1862 = vpop.f32.mrb[0].mxu0
      %v1863 = vadd.f32 0.0, %v1862
      %v1864 = vpop.f32.mrb[0].mxu0
      %1865 = vmatprep.mubr.f32.mxu0 0.0
      %1866 = vmatmul.mubr.f32.gmra.mrb[0].mxu0 %v1760
      %v1867 = vpop.f32.mrb[0].mxu0
      %v1868 = vadd.f32 0.0, %v1867
      %v1869 = vpop.f32.mrb[0].mxu0
      %1870 = vmatprep.mubr.f32.mxu0 0.0
      %1871 = vmatmul.mubr.f32.gmra.mrb[0].mxu0 %v1763
      %v1872 = vpop.f32.mrb[0].mxu0
      %v1873 = vadd.f32 0.0, %v1872
      %v1874 = vpop.f32.mrb[0].mxu0
      %1875 = vdwg.mxu0
      %v1876 = vadd.f32 %v1605, 1e-08
      %v1877 = vadd.f32 %v1608, 1e-08
      %v1878 = vadd.f32 %v1611, 1e-08
      %v1879 = vadd.f32 %v1614, 1e-08
      %v1880 = vadd.f32 %v1617, 1e-08
      %v1881 = vadd.f32 %v1620, 1e-08
      %v1882 = vadd.f32 %v1623, 1e-08
      %v1883 = vadd.f32 %v1626, 1e-08
      %v1884 = vrcp.pop %v1876
      %v1885 = vrcp.pop %v1877
      %v1886 = vrcp.pop %v1878
      %v1887 = vrcp.pop %v1879
      %v1888 = vrcp.pop %v1880
      %v1889 = vrcp.pop %v1881
      %v1890 = vrcp.pop %v1882
      %v1891 = vrcp.pop %v1883
      %v1892 = vmul.f32 %v1838, %v1884
      %v1893 = vmul.f32 %v1843, %v1885
      %v1894 = vmul.f32 %v1848, %v1886
      %v1895 = vmul.f32 %v1853, %v1887
      %v1896 = vmul.f32 %v1858, %v1888
      %v1897 = vmul.f32 %v1863, %v1889
      %v1898 = vmul.f32 %v1868, %v1890
      %v1899 = vmul.f32 %v1873, %v1891
      %v1900 = vpack.c.bf16 %v1893, %v1892
      %v1901 = vpack.c.bf16 %v1895, %v1894
      %v1902 = vpack.c.bf16 %v1897, %v1896
      %v1903 = vpack.c.bf16 %v1899, %v1898
      %v1904 = vld [vmem:[%s6] sm:$0xf]
      %v1905 = vld [vmem:[%s6 + $0x4] sm:$0xf]
      %v1908 = vunpack.c.l.b16 %v1904
      %v1909 = vunpack.c.l.b16 %v1905
      %v1910 = vpack.c.b16 %v1909, %v1908
      %v1913 = vsel %vm1178, %v1900, 0
      %v1916 = vsel %vm1178, %v1901, 0
      %v1919 = vsel %vm1178, %v1902, 0
      %v1922 = vsel %vm1178, %v1903, 0
      %1924 = vmatprep.subr.bf16.mxu0 0
      %1925 = vmatpush1.bf16.msra.mxu0 %v1910
      %1926 = vmatprep.subr.bf16.mxu0 0
      %1927 = vmatpush1.bf16.msra.mxu0 0
      %1928 = vmatprep.subr.bf16.mxu0 0
      %1929 = vmatpush1.bf16.msra.mxu0 0
      %1930 = vmatprep.subr.bf16.mxu0 0
      %1931 = vmatpush1.bf16.msra.mxu0 0
      %1932 = vmatprep.subr.bf16.mxu0 0
      %1933 = vmatpush1.bf16.msra.mxu0 0
      %1934 = vmatprep.subr.bf16.mxu0 0
      %1935 = vmatpush1.bf16.msra.mxu0 0
      %1936 = vmatprep.subr.bf16.mxu0 0
      %1937 = vmatpush1.bf16.msra.mxu0 0
      %1938 = vmatprep.subr.bf16.mxu0 0
      %1939 = vmatpush1.bf16.msra.mxu0 0
      %1940 = vmatprep.subr.bf16.mxu0 0
      %1941 = vmatpush1.bf16.msra.mxu0 0
      %1942 = vmatprep.subr.bf16.mxu0 0
      %1943 = vmatpush1.bf16.msra.mxu0 0
      %1944 = vmatprep.subr.bf16.mxu0 0
      %1945 = vmatpush1.bf16.msra.mxu0 0
      %1946 = vmatprep.subr.bf16.mxu0 0
      %1947 = vmatpush1.bf16.msra.mxu0 0
      %1948 = vmatprep.subr.bf16.mxu0 0
      %1949 = vmatpush1.bf16.msra.mxu0 0
      %1950 = vmatprep.subr.bf16.mxu0 0
      %1951 = vmatpush1.bf16.msra.mxu0 0
      %1952 = vmatprep.subr.bf16.mxu0 0
      %1953 = vmatpush1.bf16.msra.mxu0 0
      %1954 = vmatprep.subr.bf16.mxu0 0
      %1955 = vmatpush1.bf16.msra.mxu0 0
      %1956 = vmatprep.mubr.bf16.mxu0 0
      %1957 = vmatmul.mubr.bf16.gmra.mrb[0].mxu0 %v1913
      %v1958 = vpop.f32.mrb[0].mxu0
      %v1959 = vadd.f32 0.0, %v1958
      %v1960 = vpop.f32.mrb[0].mxu0
      %v1961 = vpop.f32.mrb[0].mxu0
      %v1962 = vadd.f32 0.0, %v1961
      %v1963 = vpop.f32.mrb[0].mxu0
      %1964 = vmatprep.mubr.bf16.mxu0 0
      %1965 = vmatmul.mubr.bf16.gmra.mrb[0].mxu0 %v1916
      %v1966 = vpop.f32.mrb[0].mxu0
      %v1967 = vadd.f32 0.0, %v1966
      %v1968 = vpop.f32.mrb[0].mxu0
      %v1969 = vpop.f32.mrb[0].mxu0
      %v1970 = vadd.f32 0.0, %v1969
      %v1971 = vpop.f32.mrb[0].mxu0
      %1972 = vmatprep.mubr.bf16.mxu0 0
      %1973 = vmatmul.mubr.bf16.gmra.mrb[0].mxu0 %v1919
      %v1974 = vpop.f32.mrb[0].mxu0
      %v1975 = vadd.f32 0.0, %v1974
      %v1976 = vpop.f32.mrb[0].mxu0
      %v1977 = vpop.f32.mrb[0].mxu0
      %v1978 = vadd.f32 0.0, %v1977
      %v1979 = vpop.f32.mrb[0].mxu0
      %1980 = vmatprep.mubr.bf16.mxu0 0
      %1981 = vmatmul.mubr.bf16.gmra.mrb[0].mxu0 %v1922
      %v1982 = vpop.f32.mrb[0].mxu0
      %v1983 = vadd.f32 0.0, %v1982
      %v1984 = vpop.f32.mrb[0].mxu0
      %v1985 = vpop.f32.mrb[0].mxu0
      %v1986 = vadd.f32 0.0, %v1985
      %v1987 = vpop.f32.mrb[0].mxu0
      %1988 = vdwg.mxu0
      %v1989 = vadd.f32 %v1138, %v1959
      %v1990 = vadd.f32 %v1141, %v1962
      %v1991 = vadd.f32 %v1146, %v1967
      %v1992 = vadd.f32 %v1149, %v1970
      %v1993 = vadd.f32 %v1154, %v1975
      %v1994 = vadd.f32 %v1157, %v1978
      %v1995 = vadd.f32 %v1162, %v1983
      %v1996 = vadd.f32 %v1165, %v1986
      %v1997 = vld [vmem:[%s7] sm:$0x1]
      %v1999 = vlaneseq
      %v2000 = vshrl.u32 %v1999, 7
      %v2001 = vsub.s32 0, %v2000
      %v2002 = vrot.slane %v1997, %v2001
      %v2004 = vadd.f32 %v1989, %v2002
      %v2005 = vadd.f32 %v1990, %v2002
      %v2006 = vadd.f32 %v1991, %v2002
      %v2007 = vadd.f32 %v1992, %v2002
      %v2008 = vadd.f32 %v1993, %v2002
      %v2009 = vadd.f32 %v1994, %v2002
      %v2010 = vadd.f32 %v1995, %v2002
      %v2011 = vadd.f32 %v1996, %v2002
      %v2012 = vld [vmem:[%s8] sm:$0x1]
      %v2013 = vld [vmem:[%s9] sm:$0x1]
      %v2014 = vsel %vm1178, %v2004, 0.0
      %2015 = vadd.xlane.f32.xlu0 %v2014
      %v2016 = vpop.xlane.xlu0 %2015
      %v2017 = vsel %vm1178, %v2005, 0.0
      %2018 = vadd.xlane.f32.xlu0 %v2017
      %v2019 = vpop.xlane.xlu0 %2018
      %v2020 = vsel %vm1178, %v2006, 0.0
      %2021 = vadd.xlane.f32.xlu0 %v2020
      %v2022 = vpop.xlane.xlu0 %2021
      %v2023 = vsel %vm1178, %v2007, 0.0
      %2024 = vadd.xlane.f32.xlu0 %v2023
      %v2025 = vpop.xlane.xlu0 %2024
      %v2026 = vsel %vm1178, %v2008, 0.0
      %2027 = vadd.xlane.f32.xlu0 %v2026
      %v2028 = vpop.xlane.xlu0 %2027
      %v2029 = vsel %vm1178, %v2009, 0.0
      %2030 = vadd.xlane.f32.xlu0 %v2029
      %v2031 = vpop.xlane.xlu0 %2030
      %v2032 = vsel %vm1178, %v2010, 0.0
      %2033 = vadd.xlane.f32.xlu0 %v2032
      %v2034 = vpop.xlane.xlu0 %2033
      %v2035 = vsel %vm1178, %v2011, 0.0
      %2036 = vadd.xlane.f32.xlu0 %v2035
      %v2037 = vpop.xlane.xlu0 %2036
      %v2038 = vrcp.pop 16.0
      %v2039 = vmul.f32 %v2016, %v2038
      %v2040 = vmul.f32 %v2019, %v2038
      %v2041 = vmul.f32 %v2022, %v2038
      %v2042 = vmul.f32 %v2025, %v2038
      %v2043 = vmul.f32 %v2028, %v2038
      %v2044 = vmul.f32 %v2031, %v2038
      %v2045 = vmul.f32 %v2034, %v2038
      %v2046 = vmul.f32 %v2037, %v2038
      %v2047 = vsub.f32 %v2004, %v2039
      %v2048 = vsub.f32 %v2005, %v2040
      %v2049 = vsub.f32 %v2006, %v2041
      %v2050 = vsub.f32 %v2007, %v2042
      %v2051 = vsub.f32 %v2008, %v2043
      %v2052 = vsub.f32 %v2009, %v2044
      %v2053 = vsub.f32 %v2010, %v2045
      %v2054 = vsub.f32 %v2011, %v2046
      %v2055 = vmul.f32 %v2047, %v2047
      %v2056 = vmul.f32 %v2048, %v2048
      %v2057 = vmul.f32 %v2049, %v2049
      %v2058 = vmul.f32 %v2050, %v2050
      %v2059 = vmul.f32 %v2051, %v2051
      %v2060 = vmul.f32 %v2052, %v2052
      %v2061 = vmul.f32 %v2053, %v2053
      %v2062 = vmul.f32 %v2054, %v2054
      %v2063 = vsel %vm1178, %v2055, 0.0
      %2064 = vadd.xlane.f32.xlu0 %v2063
      %v2065 = vpop.xlane.xlu0 %2064
      %v2066 = vsel %vm1178, %v2056, 0.0
      %2067 = vadd.xlane.f32.xlu0 %v2066
      %v2068 = vpop.xlane.xlu0 %2067
      %v2069 = vsel %vm1178, %v2057, 0.0
      %2070 = vadd.xlane.f32.xlu0 %v2069
      %v2071 = vpop.xlane.xlu0 %2070
      %v2072 = vsel %vm1178, %v2058, 0.0
      %2073 = vadd.xlane.f32.xlu0 %v2072
      %v2074 = vpop.xlane.xlu0 %2073
      %v2075 = vsel %vm1178, %v2059, 0.0
      %2076 = vadd.xlane.f32.xlu0 %v2075
      %v2077 = vpop.xlane.xlu0 %2076
      %v2078 = vsel %vm1178, %v2060, 0.0
      %2079 = vadd.xlane.f32.xlu0 %v2078
      %v2080 = vpop.xlane.xlu0 %2079
      %v2081 = vsel %vm1178, %v2061, 0.0
      %2082 = vadd.xlane.f32.xlu0 %v2081
      %v2083 = vpop.xlane.xlu0 %2082
      %v2084 = vsel %vm1178, %v2062, 0.0
      %2085 = vadd.xlane.f32.xlu0 %v2084
      %v2086 = vpop.xlane.xlu0 %2085
      %v2087 = vmul.f32 %v2065, %v2038
      %v2088 = vmul.f32 %v2068, %v2038
      %v2089 = vmul.f32 %v2071, %v2038
      %v2090 = vmul.f32 %v2074, %v2038
      %v2091 = vmul.f32 %v2077, %v2038
      %v2092 = vmul.f32 %v2080, %v2038
      %v2093 = vmul.f32 %v2083, %v2038
      %v2094 = vmul.f32 %v2086, %v2038
      %v2095 = vadd.f32 %v2087, 1e-05
      %v2096 = vadd.f32 %v2088, 1e-05
      %v2097 = vadd.f32 %v2089, 1e-05
      %v2098 = vadd.f32 %v2090, 1e-05
      %v2099 = vadd.f32 %v2091, 1e-05
      %v2100 = vadd.f32 %v2092, 1e-05
      %v2101 = vadd.f32 %v2093, 1e-05
      %v2102 = vadd.f32 %v2094, 1e-05
      %v2103 = vrsqrt.pop %v2095
      %v2104 = vrsqrt.pop %v2096
      %v2105 = vrsqrt.pop %v2097
      %v2106 = vrsqrt.pop %v2098
      %v2107 = vrsqrt.pop %v2099
      %v2108 = vrsqrt.pop %v2100
      %v2109 = vrsqrt.pop %v2101
      %v2110 = vrsqrt.pop %v2102
      %v2111 = vmul.f32 %v2047, %v2103
      %v2112 = vmul.f32 %v2048, %v2104
      %v2113 = vmul.f32 %v2049, %v2105
      %v2114 = vmul.f32 %v2050, %v2106
      %v2115 = vmul.f32 %v2051, %v2107
      %v2116 = vmul.f32 %v2052, %v2108
      %v2117 = vmul.f32 %v2053, %v2109
      %v2118 = vmul.f32 %v2054, %v2110
      %v2120 = vlaneseq
      %v2121 = vshrl.u32 %v2120, 7
      %v2122 = vsub.s32 0, %v2121
      %v2123 = vrot.slane %v2012, %v2122
      %v2125 = vmul.f32 %v2111, %v2123
      %v2126 = vmul.f32 %v2112, %v2123
      %v2127 = vmul.f32 %v2113, %v2123
      %v2128 = vmul.f32 %v2114, %v2123
      %v2129 = vmul.f32 %v2115, %v2123
      %v2130 = vmul.f32 %v2116, %v2123
      %v2131 = vmul.f32 %v2117, %v2123
      %v2132 = vmul.f32 %v2118, %v2123
      %v2134 = vlaneseq
      %v2135 = vshrl.u32 %v2134, 7
      %v2136 = vsub.s32 0, %v2135
      %v2137 = vrot.slane %v2013, %v2136
      %v2139 = vadd.f32 %v2125, %v2137
      %v2140 = vadd.f32 %v2126, %v2137
      %v2141 = vadd.f32 %v2127, %v2137
      %v2142 = vadd.f32 %v2128, %v2137
      %v2143 = vadd.f32 %v2129, %v2137
      %v2144 = vadd.f32 %v2130, %v2137
      %v2145 = vadd.f32 %v2131, %v2137
      %v2146 = vadd.f32 %v2132, %v2137
      %v2147 = vpack.c.bf16 %v2140, %v2139
      %v2148 = vpack.c.bf16 %v2142, %v2141
      %v2149 = vpack.c.bf16 %v2144, %v2143
      %v2150 = vpack.c.bf16 %v2146, %v2145
      %v2151 = vld [vmem:[%s10] sm:$0xf]
      %v2152 = vld [vmem:[%s10 + $0x4] sm:$0xf]
      %v2153 = vld [vmem:[%s11] sm:$0x1]
      %v2155 = vlaneseq
      %v2156 = vshrl.u32 %v2155, 7
      %v2157 = vsub.s32 0, %v2156
      %v2158 = vrot.slane %v2153, %v2157
      %v2162 = vunpack.c.l.b16 %v2151
      %v2163 = vunpack.c.l.b16 %v2152
      %v2164 = vpack.c.b16 %v2163, %v2162
      %v2167 = vsel %vm1178, %v2147, 0
      %v2170 = vsel %vm1178, %v2148, 0
      %v2173 = vsel %vm1178, %v2149, 0
      %v2176 = vsel %vm1178, %v2150, 0
      %2178 = vmatprep.subr.bf16.mxu0 0
      %2179 = vmatpush1.bf16.msra.mxu0 %v2164
      %2180 = vmatprep.subr.bf16.mxu0 0
      %2181 = vmatpush1.bf16.msra.mxu0 0
      %2182 = vmatprep.subr.bf16.mxu0 0
      %2183 = vmatpush1.bf16.msra.mxu0 0
      %2184 = vmatprep.subr.bf16.mxu0 0
      %2185 = vmatpush1.bf16.msra.mxu0 0
      %2186 = vmatprep.subr.bf16.mxu0 0
      %2187 = vmatpush1.bf16.msra.mxu0 0
      %2188 = vmatprep.subr.bf16.mxu0 0
      %2189 = vmatpush1.bf16.msra.mxu0 0
      %2190 = vmatprep.subr.bf16.mxu0 0
      %2191 = vmatpush1.bf16.msra.mxu0 0
      %2192 = vmatprep.subr.bf16.mxu0 0
      %2193 = vmatpush1.bf16.msra.mxu0 0
      %2194 = vmatprep.subr.bf16.mxu0 0
      %2195 = vmatpush1.bf16.msra.mxu0 0
      %2196 = vmatprep.subr.bf16.mxu0 0
      %2197 = vmatpush1.bf16.msra.mxu0 0
      %2198 = vmatprep.subr.bf16.mxu0 0
      %2199 = vmatpush1.bf16.msra.mxu0 0
      %2200 = vmatprep.subr.bf16.mxu0 0
      %2201 = vmatpush1.bf16.msra.mxu0 0
      %2202 = vmatprep.subr.bf16.mxu0 0
      %2203 = vmatpush1.bf16.msra.mxu0 0
      %2204 = vmatprep.subr.bf16.mxu0 0
      %2205 = vmatpush1.bf16.msra.mxu0 0
      %2206 = vmatprep.subr.bf16.mxu0 0
      %2207 = vmatpush1.bf16.msra.mxu0 0
      %2208 = vmatprep.subr.bf16.mxu0 0
      %2209 = vmatpush1.bf16.msra.mxu0 0
      %2210 = vmatprep.mubr.bf16.mxu0 0
      %2211 = vmatmul.mubr.bf16.gmra.mrb[0].mxu0 %v2167
      %v2212 = vpop.f32.mrb[0].mxu0
      %v2213 = vadd.f32 %v2158, %v2212
      %v2214 = vpop.f32.mrb[0].mxu0
      %v2215 = vpop.f32.mrb[0].mxu0
      %v2216 = vadd.f32 %v2158, %v2215
      %v2217 = vpop.f32.mrb[0].mxu0
      %2218 = vmatprep.mubr.bf16.mxu0 0
      %2219 = vmatmul.mubr.bf16.gmra.mrb[0].mxu0 %v2170
      %v2220 = vpop.f32.mrb[0].mxu0
      %v2221 = vadd.f32 %v2158, %v2220
      %v2222 = vpop.f32.mrb[0].mxu0
      %v2223 = vpop.f32.mrb[0].mxu0
      %v2224 = vadd.f32 %v2158, %v2223
      %v2225 = vpop.f32.mrb[0].mxu0
      %2226 = vmatprep.mubr.bf16.mxu0 0
      %2227 = vmatmul.mubr.bf16.gmra.mrb[0].mxu0 %v2173
      %v2228 = vpop.f32.mrb[0].mxu0
      %v2229 = vadd.f32 %v2158, %v2228
      %v2230 = vpop.f32.mrb[0].mxu0
      %v2231 = vpop.f32.mrb[0].mxu0
      %v2232 = vadd.f32 %v2158, %v2231
      %v2233 = vpop.f32.mrb[0].mxu0
      %2234 = vmatprep.mubr.bf16.mxu0 0
      %2235 = vmatmul.mubr.bf16.gmra.mrb[0].mxu0 %v2176
      %v2236 = vpop.f32.mrb[0].mxu0
      %v2237 = vadd.f32 %v2158, %v2236
      %v2238 = vpop.f32.mrb[0].mxu0
      %v2239 = vpop.f32.mrb[0].mxu0
      %v2240 = vadd.f32 %v2158, %v2239
      %v2241 = vpop.f32.mrb[0].mxu0
      %2242 = vdwg.mxu0
      %v2243 = vmul.f32 %v2213, 0.5
      %v2244 = vmul.f32 %v2216, 0.5
      %v2245 = vmul.f32 %v2221, 0.5
      %v2246 = vmul.f32 %v2224, 0.5
      %v2247 = vmul.f32 %v2229, 0.5
      %v2248 = vmul.f32 %v2232, 0.5
      %v2249 = vmul.f32 %v2237, 0.5
      %v2250 = vmul.f32 %v2240, 0.5
      %v2251 = vmul.f32 %v2213, 0.044715
      %v2252 = vmul.f32 %v2216, 0.044715
      %v2253 = vmul.f32 %v2221, 0.044715
      %v2254 = vmul.f32 %v2224, 0.044715
      %v2255 = vmul.f32 %v2229, 0.044715
      %v2256 = vmul.f32 %v2232, 0.044715
      %v2257 = vmul.f32 %v2237, 0.044715
      %v2258 = vmul.f32 %v2240, 0.044715
      %v2259 = vmul.f32 %v2251, %v2213
      %v2260 = vmul.f32 %v2252, %v2216
      %v2261 = vmul.f32 %v2253, %v2221
      %v2262 = vmul.f32 %v2254, %v2224
      %v2263 = vmul.f32 %v2255, %v2229
      %v2264 = vmul.f32 %v2256, %v2232
      %v2265 = vmul.f32 %v2257, %v2237
      %v2266 = vmul.f32 %v2258, %v2240
      %v2267 = vmul.f32 %v2259, %v2213
      %v2268 = vmul.f32 %v2260, %v2216
      %v2269 = vmul.f32 %v2261, %v2221
      %v2270 = vmul.f32 %v2262, %v2224
      %v2271 = vmul.f32 %v2263, %v2229
      %v2272 = vmul.f32 %v2264, %v2232
      %v2273 = vmul.f32 %v2265, %v2237
      %v2274 = vmul.f32 %v2266, %v2240
      %v2275 = vadd.f32 %v2213, %v2267
      %v2276 = vadd.f32 %v2216, %v2268
      %v2277 = vadd.f32 %v2221, %v2269
      %v2278 = vadd.f32 %v2224, %v2270
      %v2279 = vadd.f32 %v2229, %v2271
      %v2280 = vadd.f32 %v2232, %v2272
      %v2281 = vadd.f32 %v2237, %v2273
      %v2282 = vadd.f32 %v2240, %v2274
      %v2283 = vmul.f32 %v2275, 0.7978846
      %v2284 = vmul.f32 %v2276, 0.7978846
      %v2285 = vmul.f32 %v2277, 0.7978846
      %v2286 = vmul.f32 %v2278, 0.7978846
      %v2287 = vmul.f32 %v2279, 0.7978846
      %v2288 = vmul.f32 %v2280, 0.7978846
      %v2289 = vmul.f32 %v2281, 0.7978846
      %v2290 = vmul.f32 %v2282, 0.7978846
      %v2291 = vtanh.pop %v2283
      %v2292 = vtanh.pop %v2284
      %v2293 = vtanh.pop %v2285
      %v2294 = vtanh.pop %v2286
      %v2295 = vtanh.pop %v2287
      %v2296 = vtanh.pop %v2288
      %v2297 = vtanh.pop %v2289
      %v2298 = vtanh.pop %v2290
      %v2299 = vadd.f32 %v2291, 1.0
      %v2300 = vadd.f32 %v2292, 1.0
      %v2301 = vadd.f32 %v2293, 1.0
      %v2302 = vadd.f32 %v2294, 1.0
      %v2303 = vadd.f32 %v2295, 1.0
      %v2304 = vadd.f32 %v2296, 1.0
      %v2305 = vadd.f32 %v2297, 1.0
      %v2306 = vadd.f32 %v2298, 1.0
      %v2307 = vmul.f32 %v2243, %v2299
      %v2308 = vmul.f32 %v2244, %v2300
      %v2309 = vmul.f32 %v2245, %v2301
      %v2310 = vmul.f32 %v2246, %v2302
      %v2311 = vmul.f32 %v2247, %v2303
      %v2312 = vmul.f32 %v2248, %v2304
      %v2313 = vmul.f32 %v2249, %v2305
      %v2314 = vmul.f32 %v2250, %v2306
      %v2315 = vpack.c.bf16 %v2308, %v2307
      %v2316 = vpack.c.bf16 %v2310, %v2309
      %v2317 = vpack.c.bf16 %v2312, %v2311
      %v2318 = vpack.c.bf16 %v2314, %v2313
      %v2319 = vld [vmem:[%s12] sm:$0xf]
      %v2320 = vld [vmem:[%s12 + $0x4] sm:$0xf]
      %v2321 = vld [vmem:[%s13] sm:$0x1]
      %v2323 = vlaneseq
      %v2324 = vshrl.u32 %v2323, 7
      %v2325 = vsub.s32 0, %v2324
      %v2326 = vrot.slane %v2321, %v2325
      %v2330 = vunpack.c.l.b16 %v2319
      %v2331 = vunpack.c.l.b16 %v2320
      %v2332 = vpack.c.b16 %v2331, %v2330
      %v2335 = vsel %vm1178, %v2315, 0
      %v2338 = vsel %vm1178, %v2316, 0
      %v2341 = vsel %vm1178, %v2317, 0
      %v2344 = vsel %vm1178, %v2318, 0
      %2346 = vmatprep.subr.bf16.mxu0 0
      %2347 = vmatpush1.bf16.msra.mxu0 %v2332
      %2348 = vmatprep.subr.bf16.mxu0 0
      %2349 = vmatpush1.bf16.msra.mxu0 0
      %2350 = vmatprep.subr.bf16.mxu0 0
      %2351 = vmatpush1.bf16.msra.mxu0 0
      %2352 = vmatprep.subr.bf16.mxu0 0
      %2353 = vmatpush1.bf16.msra.mxu0 0
      %2354 = vmatprep.subr.bf16.mxu0 0
      %2355 = vmatpush1.bf16.msra.mxu0 0
      %2356 = vmatprep.subr.bf16.mxu0 0
      %2357 = vmatpush1.bf16.msra.mxu0 0
      %2358 = vmatprep.subr.bf16.mxu0 0
      %2359 = vmatpush1.bf16.msra.mxu0 0
      %2360 = vmatprep.subr.bf16.mxu0 0
      %2361 = vmatpush1.bf16.msra.mxu0 0
      %2362 = vmatprep.subr.bf16.mxu0 0
      %2363 = vmatpush1.bf16.msra.mxu0 0
      %2364 = vmatprep.subr.bf16.mxu0 0
      %2365 = vmatpush1.bf16.msra.mxu0 0
      %2366 = vmatprep.subr.bf16.mxu0 0
      %2367 = vmatpush1.bf16.msra.mxu0 0
      %2368 = vmatprep.subr.bf16.mxu0 0
      %2369 = vmatpush1.bf16.msra.mxu0 0
      %2370 = vmatprep.subr.bf16.mxu0 0
      %2371 = vmatpush1.bf16.msra.mxu0 0
      %2372 = vmatprep.subr.bf16.mxu0 0
      %2373 = vmatpush1.bf16.msra.mxu0 0
      %2374 = vmatprep.subr.bf16.mxu0 0
      %2375 = vmatpush1.bf16.msra.mxu0 0
      %2376 = vmatprep.subr.bf16.mxu0 0
      %2377 = vmatpush1.bf16.msra.mxu0 0
      %2378 = vmatprep.mubr.bf16.mxu0 0
      %2379 = vmatmul.mubr.bf16.gmra.mrb[0].mxu0 %v2335
      %v2380 = vpop.f32.mrb[0].mxu0
      %v2381 = vadd.f32 %v2326, %v2380
      %v2382 = vpop.f32.mrb[0].mxu0
      %v2383 = vpop.f32.mrb[0].mxu0
      %v2384 = vadd.f32 %v2326, %v2383
      %v2385 = vpop.f32.mrb[0].mxu0
      %2386 = vmatprep.mubr.bf16.mxu0 0
      %2387 = vmatmul.mubr.bf16.gmra.mrb[0].mxu0 %v2338
      %v2388 = vpop.f32.mrb[0].mxu0
      %v2389 = vadd.f32 %v2326, %v2388
      %v2390 = vpop.f32.mrb[0].mxu0
      %v2391 = vpop.f32.mrb[0].mxu0
      %v2392 = vadd.f32 %v2326, %v2391
      %v2393 = vpop.f32.mrb[0].mxu0
      %2394 = vmatprep.mubr.bf16.mxu0 0
      %2395 = vmatmul.mubr.bf16.gmra.mrb[0].mxu0 %v2341
      %v2396 = vpop.f32.mrb[0].mxu0
      %v2397 = vadd.f32 %v2326, %v2396
      %v2398 = vpop.f32.mrb[0].mxu0
      %v2399 = vpop.f32.mrb[0].mxu0
      %v2400 = vadd.f32 %v2326, %v2399
      %v2401 = vpop.f32.mrb[0].mxu0
      %2402 = vmatprep.mubr.bf16.mxu0 0
      %2403 = vmatmul.mubr.bf16.gmra.mrb[0].mxu0 %v2344
      %v2404 = vpop.f32.mrb[0].mxu0
      %v2405 = vadd.f32 %v2326, %v2404
      %v2406 = vpop.f32.mrb[0].mxu0
      %v2407 = vpop.f32.mrb[0].mxu0
      %v2408 = vadd.f32 %v2326, %v2407
      %v2409 = vpop.f32.mrb[0].mxu0
      %2410 = vdwg.mxu0
      %v2411 = vadd.f32 %v2004, %v2381
      %v2412 = vadd.f32 %v2005, %v2384
      %v2413 = vadd.f32 %v2006, %v2389
      %v2414 = vadd.f32 %v2007, %v2392
      %v2415 = vadd.f32 %v2008, %v2397
      %v2416 = vadd.f32 %v2009, %v2400
      %v2417 = vadd.f32 %v2010, %v2405
      %v2418 = vadd.f32 %v2011, %v2408
      %2419 = vst.msk [vmem:[%s467] sm:$0xff] %vm1178, %v2411
      %2420 = vst.msk [vmem:[%s467 + $0x8] sm:$0xff] %vm1178, %v2412
      %2421 = vst.msk [vmem:[%s467 + $0x10] sm:$0xff] %vm1178, %v2413
      %2422 = vst.msk [vmem:[%s467 + $0x18] sm:$0xff] %vm1178, %v2414
      %2423 = vst.msk [vmem:[%s467 + $0x20] sm:$0xff] %vm1178, %v2415
      %2424 = vst.msk [vmem:[%s467 + $0x28] sm:$0xff] %vm1178, %v2416
      %2425 = vst.msk [vmem:[%s467 + $0x30] sm:$0xff] %vm1178, %v2417
      %2426 = vst.msk [vmem:[%s467 + $0x38] sm:$0xff] %vm1178, %v2418
      %p2427 = scmp.lt.s32.totalorder %s25, 1
      %s2428 = scalar_select %p2427, %s25, 1
      %s2429 = smul.addr %s2428, 8
      %s2430 = smul.addr %s2429, 8
      %s2431 = scalar_lea.vmem %s14, %s2430
      // Predicated region
      $region77: #{t2t_vit_feature_forward.4} parent=75 // pred_check
        %p2432 = pneg %p342
      $region78: #{t2t_vit_feature_forward.4} parent=75 // pred_check_branch
        %2434 = sbr.rel (%p2432) target = $region80
      $region79: #{t2t_vit_feature_forward.4} parent=75 // pred_region
        _
      $region80: #{t2t_vit_feature_forward.4} parent=75 // pred_fallthru
        _
    $region76: #{t2t_vit_feature_forward.4} parent=5 // pred_fallthru
      _
    %p2435 = scmp.le.s32.totalorder 2, %s20
    // Predicated region
    $region81: #{t2t_vit_feature_forward.4} parent=5 // pred_check
      %p2436 = pneg %p2435
    $region82: #{t2t_vit_feature_forward.4} parent=5 // pred_check_branch
      %2438 = sbr.rel (%p2436) target = $region84
    $region83: #{t2t_vit_feature_forward.4} parent=5 // pred_region
      %s2439 = ssub.s32 %s20, 2
      // Predicated region
      $region85: #{t2t_vit_feature_forward.4} parent=83 // pred_check
        %p2440 = pneg %p348
      $region86: #{t2t_vit_feature_forward.4} parent=83 // pred_check_branch
        %2442 = sbr.rel (%p2440) target = $region88
      $region87: #{t2t_vit_feature_forward.4} parent=83 // pred_region
        %p2443 = scmp.lt.s32.totalorder %s26, 1
        %s2444 = scalar_select %p2443, %s26, 1
        %s2445 = smul.addr %s2444, 8
        %s2446 = smul.addr %s2445, 8
        %s2447 = scalar_lea.vmem %s14, %s2446
      $region88: #{t2t_vit_feature_forward.4} parent=83 // pred_fallthru
        _
    $region84: #{t2t_vit_feature_forward.4} parent=5 // pred_fallthru
      _
  $region6: #{t2t_vit_feature_forward.4} parent=0 // loop_footer
    %s24 = sadd.s32 1, %s20
  $region7: #{t2t_vit_feature_forward.4} parent=0 // loop_footer_branch
    %19 = sbr.rel target = $region3
  $region8: #{t2t_vit_feature_forward.4} parent=0 // loop_exit
    _

// kernel: t2t_vit_feature_forward.6
$region0: #{t2t_vit_feature_forward.6}
  #allocation0 [shape = 'u32[]', space=smem, size = 0x4, offset = 0x4, fixed_abs, tag = 'smem constant byte address 0x4 - core index']
  #allocation1 [shape = 'u32[144,128]{1,0:T(1,128)}', space=vmem, size = 0x12000, scoped, tag = 'internal scratch']
  %s0 = inlined_call_operand.vmem [shape: f32[2,5,144], index: 0, kind: input, shape index: {}]
  %s1 = inlined_call_operand.vmem [shape: bf16[144,64], index: 1, kind: input, shape index: {}]
  %s2 = inlined_call_operand.vmem [shape: f32[1,5,64], index: 2, kind: input, shape index: {}]
  %s3 = inlined_call_operand.vmem [shape: f32[1,64], index: 3, kind: input, shape index: {}]
  %s4 = inlined_call_operand.vmem [shape: f32[1,64], index: 4, kind: input, shape index: {}]
  %s5 = inlined_call_operand.vmem [shape: bf16[12,64,16], index: 5, kind: input, shape index: {}]
  %s6 = inlined_call_operand.vmem [shape: bf16[4,16,64], index: 6, kind: input, shape index: {}]
  %s7 = inlined_call_operand.vmem [shape: f32[1,64], index: 7, kind: input, shape index: {}]
  %s8 = inlined_call_operand.vmem [shape: f32[1,64], index: 8, kind: input, shape index: {}]
  %s9 = inlined_call_operand.vmem [shape: f32[1,64], index: 9, kind: input, shape index: {}]
  %s10 = inlined_call_operand.vmem [shape: bf16[64,256], index: 10, kind: input, shape index: {}]
  %s11 = inlined_call_operand.vmem [shape: f32[1,256], index: 11, kind: input, shape index: {}]
  %s12 = inlined_call_operand.vmem [shape: bf16[256,64], index: 12, kind: input, shape index: {}]
  %s13 = inlined_call_operand.vmem [shape: f32[1,64], index: 13, kind: input, shape index: {}]
  %s14 = inlined_call_operand.vmem [shape: f32[2,5,64], index: 14, kind: output, shape index: {}]
  %s15 = sld [smem:[#allocation0]]
  $region89: #{t2t_vit_feature_forward.6} parent=0
    _
  %s17 = ssub.s32 1, %s15
  %s18 = scalar_select 0, %s17, %s15
  loop: start=0, step=1, limit=4
  $region2: #{t2t_vit_feature_forward.6} parent=0 // loop_pre_header
    _
  $region3: #{t2t_vit_feature_forward.6} parent=0 // loop_header
    %s20 = sphi 0, %s24
    %p21 = scmp.ge.s32.totalorder %s20, 4
    %s30 = sphi 0, %s32
    %s33 = sphi 0, %s30
    %s34 = sphi 0, %s33
    %s50 = sphi 0, %s34
    %s54 = sphi 0, %s54
    %s56 = sphi 0, %s54
    %s57 = sphi 0, %s56
    %s71 = sphi 0, %s57
    %s75 = sphi 0, %s75
    %s77 = sphi 0, %s75
    %s78 = sphi 0, %s77
    %s92 = sphi 0, %s78
    %s96 = sphi 0, %s96
    %s98 = sphi 0, %s96
    %s99 = sphi 0, %s98
    %s113 = sphi 0, %s99
    %s117 = sphi 0, %s117
    %s119 = sphi 0, %s117
    %s120 = sphi 0, %s119
    %s134 = sphi 0, %s120
    %s138 = sphi 0, %s138
    %s140 = sphi 0, %s138
    %s141 = sphi 0, %s140
    %s155 = sphi 0, %s141
    %s159 = sphi 0, %s159
    %s161 = sphi 0, %s159
    %s162 = sphi 0, %s161
    %s176 = sphi 0, %s162
    %s180 = sphi 0, %s180
    %s182 = sphi 0, %s180
    %s183 = sphi 0, %s182
    %s197 = sphi 0, %s183
    %s201 = sphi 0, %s201
    %s203 = sphi 0, %s201
    %s204 = sphi 0, %s203
    %s218 = sphi 0, %s204
    %s222 = sphi 0, %s222
    %s224 = sphi 0, %s222
    %s225 = sphi 0, %s224
    %s239 = sphi 0, %s225
    %s243 = sphi 0, %s243
    %s245 = sphi 0, %s243
    %s246 = sphi 0, %s245
    %s260 = sphi 0, %s246
    %s264 = sphi 0, %s264
    %s266 = sphi 0, %s264
    %s267 = sphi 0, %s266
    %s281 = sphi 0, %s267
    %s285 = sphi 0, %s285
    %s287 = sphi 0, %s285
    %s288 = sphi 0, %s287
    %s302 = sphi 0, %s288
    %s306 = sphi 0, %s306
    %s308 = sphi 0, %s306
    %s309 = sphi 0, %s308
    %s323 = sphi 0, %s309
    %s329 = sphi 0, %s331
    %s332 = sphi 0, %s329
    %s333 = sphi 0, %s332
    %s349 = sphi 0, %s333
  $region4: #{t2t_vit_feature_forward.6} parent=0 // loop_header_branch
    %23 = sbr.rel (%p21) target = $region8
  $region5: #{t2t_vit_feature_forward.6} parent=0 // loop_body
    %s25 = ssub.s32 %s20, 1
    %s26 = ssub.s32 %s20, 2
    %s27 = sadd.s32 %s20, 1
    %s28 = ssub.s32 %s20, %s27
    %p29 = scmp.eq.s32.totalorder %s28, 0
    %s31 = sadd.s32 %s30, 1
    %s32 = scalar_select %p29, %s30, %s31
    %p35 = pneg %p29
    %p36 = scmp.eq.s32.totalorder %s20, 1
    %p37 = por %p35, %p36
    %p38 = scmp.ne.s32.totalorder %s30, %s33
    %p39 = scmp.eq.s32.totalorder %s20, 0
    %p40 = por %p38, %p39
    %p41 = scmp.ne.s32.totalorder %s30, %s33
    %p42 = scmp.eq.s32.totalorder %s25, 1
    %p43 = por %p41, %p42
    %p44 = scmp.ne.s32.totalorder %s33, %s34
    %p45 = scmp.eq.s32.totalorder %s25, 0
    %p46 = por %p44, %p45
    %p47 = scmp.ne.s32.totalorder %s33, %s34
    %p48 = scmp.eq.s32.totalorder %s26, 1
    %p49 = por %p47, %p48
    %p51 = scmp.ne.s32.totalorder %s34, %s50
    %p52 = scmp.eq.s32.totalorder %s26, 0
    %p53 = por %p51, %p52
    %s55 = sadd.s32 %s54, 1
    %p58 = scmp.eq.s32.totalorder %s20, 1
    %p59 = scmp.ne.s32.totalorder %s54, %s56
    %p60 = scmp.eq.s32.totalorder %s20, 0
    %p61 = por %p59, %p60
    %p62 = scmp.ne.s32.totalorder %s54, %s56
    %p63 = scmp.eq.s32.totalorder %s25, 1
    %p64 = por %p62, %p63
    %p65 = scmp.ne.s32.totalorder %s56, %s57
    %p66 = scmp.eq.s32.totalorder %s25, 0
    %p67 = por %p65, %p66
    %p68 = scmp.ne.s32.totalorder %s56, %s57
    %p69 = scmp.eq.s32.totalorder %s26, 1
    %p70 = por %p68, %p69
    %p72 = scmp.ne.s32.totalorder %s57, %s71
    %p73 = scmp.eq.s32.totalorder %s26, 0
    %p74 = por %p72, %p73
    %s76 = sadd.s32 %s75, 1
    %p79 = scmp.eq.s32.totalorder %s20, 1
    %p80 = scmp.ne.s32.totalorder %s75, %s77
    %p81 = scmp.eq.s32.totalorder %s20, 0
    %p82 = por %p80, %p81
    %p83 = scmp.ne.s32.totalorder %s75, %s77
    %p84 = scmp.eq.s32.totalorder %s25, 1
    %p85 = por %p83, %p84
    %p86 = scmp.ne.s32.totalorder %s77, %s78
    %p87 = scmp.eq.s32.totalorder %s25, 0
    %p88 = por %p86, %p87
    %p89 = scmp.ne.s32.totalorder %s77, %s78
    %p90 = scmp.eq.s32.totalorder %s26, 1
    %p91 = por %p89, %p90
    %p93 = scmp.ne.s32.totalorder %s78, %s92
    %p94 = scmp.eq.s32.totalorder %s26, 0
    %p95 = por %p93, %p94
    %s97 = sadd.s32 %s96, 1
    %p100 = scmp.eq.s32.totalorder %s20, 1
    %p101 = scmp.ne.s32.totalorder %s96, %s98
    %p102 = scmp.eq.s32.totalorder %s20, 0
    %p103 = por %p101, %p102
    %p104 = scmp.ne.s32.totalorder %s96, %s98
    %p105 = scmp.eq.s32.totalorder %s25, 1
    %p106 = por %p104, %p105
    %p107 = scmp.ne.s32.totalorder %s98, %s99
    %p108 = scmp.eq.s32.totalorder %s25, 0
    %p109 = por %p107, %p108
    %p110 = scmp.ne.s32.totalorder %s98, %s99
    %p111 = scmp.eq.s32.totalorder %s26, 1
    %p112 = por %p110, %p111
    %p114 = scmp.ne.s32.totalorder %s99, %s113
    %p115 = scmp.eq.s32.totalorder %s26, 0
    %p116 = por %p114, %p115
    %s118 = sadd.s32 %s117, 1
    %p121 = scmp.eq.s32.totalorder %s20, 1
    %p122 = scmp.ne.s32.totalorder %s117, %s119
    %p123 = scmp.eq.s32.totalorder %s20, 0
    %p124 = por %p122, %p123
    %p125 = scmp.ne.s32.totalorder %s117, %s119
    %p126 = scmp.eq.s32.totalorder %s25, 1
    %p127 = por %p125, %p126
    %p128 = scmp.ne.s32.totalorder %s119, %s120
    %p129 = scmp.eq.s32.totalorder %s25, 0
    %p130 = por %p128, %p129
    %p131 = scmp.ne.s32.totalorder %s119, %s120
    %p132 = scmp.eq.s32.totalorder %s26, 1
    %p133 = por %p131, %p132
    %p135 = scmp.ne.s32.totalorder %s120, %s134
    %p136 = scmp.eq.s32.totalorder %s26, 0
    %p137 = por %p135, %p136
    %s139 = sadd.s32 %s138, 1
    %p142 = scmp.eq.s32.totalorder %s20, 1
    %p143 = scmp.ne.s32.totalorder %s138, %s140
    %p144 = scmp.eq.s32.totalorder %s20, 0
    %p145 = por %p143, %p144
    %p146 = scmp.ne.s32.totalorder %s138, %s140
    %p147 = scmp.eq.s32.totalorder %s25, 1
    %p148 = por %p146, %p147
    %p149 = scmp.ne.s32.totalorder %s140, %s141
    %p150 = scmp.eq.s32.totalorder %s25, 0
    %p151 = por %p149, %p150
    %p152 = scmp.ne.s32.totalorder %s140, %s141
    %p153 = scmp.eq.s32.totalorder %s26, 1
    %p154 = por %p152, %p153
    %p156 = scmp.ne.s32.totalorder %s141, %s155
    %p157 = scmp.eq.s32.totalorder %s26, 0
    %p158 = por %p156, %p157
    %s160 = sadd.s32 %s159, 1
    %p163 = scmp.eq.s32.totalorder %s20, 1
    %p164 = scmp.ne.s32.totalorder %s159, %s161
    %p165 = scmp.eq.s32.totalorder %s20, 0
    %p166 = por %p164, %p165
    %p167 = scmp.ne.s32.totalorder %s159, %s161
    %p168 = scmp.eq.s32.totalorder %s25, 1
    %p169 = por %p167, %p168
    %p170 = scmp.ne.s32.totalorder %s161, %s162
    %p171 = scmp.eq.s32.totalorder %s25, 0
    %p172 = por %p170, %p171
    %p173 = scmp.ne.s32.totalorder %s161, %s162
    %p174 = scmp.eq.s32.totalorder %s26, 1
    %p175 = por %p173, %p174
    %p177 = scmp.ne.s32.totalorder %s162, %s176
    %p178 = scmp.eq.s32.totalorder %s26, 0
    %p179 = por %p177, %p178
    %s181 = sadd.s32 %s180, 1
    %p184 = scmp.eq.s32.totalorder %s20, 1
    %p185 = scmp.ne.s32.totalorder %s180, %s182
    %p186 = scmp.eq.s32.totalorder %s20, 0
    %p187 = por %p185, %p186
    %p188 = scmp.ne.s32.totalorder %s180, %s182
    %p189 = scmp.eq.s32.totalorder %s25, 1
    %p190 = por %p188, %p189
    %p191 = scmp.ne.s32.totalorder %s182, %s183
    %p192 = scmp.eq.s32.totalorder %s25, 0
    %p193 = por %p191, %p192
    %p194 = scmp.ne.s32.totalorder %s182, %s183
    %p195 = scmp.eq.s32.totalorder %s26, 1
    %p196 = por %p194, %p195
    %p198 = scmp.ne.s32.totalorder %s183, %s197
    %p199 = scmp.eq.s32.totalorder %s26, 0
    %p200 = por %p198, %p199
    %s202 = sadd.s32 %s201, 1
    %p205 = scmp.eq.s32.totalorder %s20, 1
    %p206 = scmp.ne.s32.totalorder %s201, %s203
    %p207 = scmp.eq.s32.totalorder %s20, 0
    %p208 = por %p206, %p207
    %p209 = scmp.ne.s32.totalorder %s201, %s203
    %p210 = scmp.eq.s32.totalorder %s25, 1
    %p211 = por %p209, %p210
    %p212 = scmp.ne.s32.totalorder %s203, %s204
    %p213 = scmp.eq.s32.totalorder %s25, 0
    %p214 = por %p212, %p213
    %p215 = scmp.ne.s32.totalorder %s203, %s204
    %p216 = scmp.eq.s32.totalorder %s26, 1
    %p217 = por %p215, %p216
    %p219 = scmp.ne.s32.totalorder %s204, %s218
    %p220 = scmp.eq.s32.totalorder %s26, 0
    %p221 = por %p219, %p220
    %s223 = sadd.s32 %s222, 1
    %p226 = scmp.eq.s32.totalorder %s20, 1
    %p227 = scmp.ne.s32.totalorder %s222, %s224
    %p228 = scmp.eq.s32.totalorder %s20, 0
    %p229 = por %p227, %p228
    %p230 = scmp.ne.s32.totalorder %s222, %s224
    %p231 = scmp.eq.s32.totalorder %s25, 1
    %p232 = por %p230, %p231
    %p233 = scmp.ne.s32.totalorder %s224, %s225
    %p234 = scmp.eq.s32.totalorder %s25, 0
    %p235 = por %p233, %p234
    %p236 = scmp.ne.s32.totalorder %s224, %s225
    %p237 = scmp.eq.s32.totalorder %s26, 1
    %p238 = por %p236, %p237
    %p240 = scmp.ne.s32.totalorder %s225, %s239
    %p241 = scmp.eq.s32.totalorder %s26, 0
    %p242 = por %p240, %p241
    %s244 = sadd.s32 %s243, 1
    %p247 = scmp.eq.s32.totalorder %s20, 1
    %p248 = scmp.ne.s32.totalorder %s243, %s245
    %p249 = scmp.eq.s32.totalorder %s20, 0
    %p250 = por %p248, %p249
    %p251 = scmp.ne.s32.totalorder %s243, %s245
    %p252 = scmp.eq.s32.totalorder %s25, 1
    %p253 = por %p251, %p252
    %p254 = scmp.ne.s32.totalorder %s245, %s246
    %p255 = scmp.eq.s32.totalorder %s25, 0
    %p256 = por %p254, %p255
    %p257 = scmp.ne.s32.totalorder %s245, %s246
    %p258 = scmp.eq.s32.totalorder %s26, 1
    %p259 = por %p257, %p258
    %p261 = scmp.ne.s32.totalorder %s246, %s260
    %p262 = scmp.eq.s32.totalorder %s26, 0
    %p263 = por %p261, %p262
    %s265 = sadd.s32 %s264, 1
    %p268 = scmp.eq.s32.totalorder %s20, 1
    %p269 = scmp.ne.s32.totalorder %s264, %s266
    %p270 = scmp.eq.s32.totalorder %s20, 0
    %p271 = por %p269, %p270
    %p272 = scmp.ne.s32.totalorder %s264, %s266
    %p273 = scmp.eq.s32.totalorder %s25, 1
    %p274 = por %p272, %p273
    %p275 = scmp.ne.s32.totalorder %s266, %s267
    %p276 = scmp.eq.s32.totalorder %s25, 0
    %p277 = por %p275, %p276
    %p278 = scmp.ne.s32.totalorder %s266, %s267
    %p279 = scmp.eq.s32.totalorder %s26, 1
    %p280 = por %p278, %p279
    %p282 = scmp.ne.s32.totalorder %s267, %s281
    %p283 = scmp.eq.s32.totalorder %s26, 0
    %p284 = por %p282, %p283
    %s286 = sadd.s32 %s285, 1
    %p289 = scmp.eq.s32.totalorder %s20, 1
    %p290 = scmp.ne.s32.totalorder %s285, %s287
    %p291 = scmp.eq.s32.totalorder %s20, 0
    %p292 = por %p290, %p291
    %p293 = scmp.ne.s32.totalorder %s285, %s287
    %p294 = scmp.eq.s32.totalorder %s25, 1
    %p295 = por %p293, %p294
    %p296 = scmp.ne.s32.totalorder %s287, %s288
    %p297 = scmp.eq.s32.totalorder %s25, 0
    %p298 = por %p296, %p297
    %p299 = scmp.ne.s32.totalorder %s287, %s288
    %p300 = scmp.eq.s32.totalorder %s26, 1
    %p301 = por %p299, %p300
    %p303 = scmp.ne.s32.totalorder %s288, %s302
    %p304 = scmp.eq.s32.totalorder %s26, 0
    %p305 = por %p303, %p304
    %s307 = sadd.s32 %s306, 1
    %p310 = scmp.eq.s32.totalorder %s20, 1
    %p311 = scmp.ne.s32.totalorder %s306, %s308
    %p312 = scmp.eq.s32.totalorder %s20, 0
    %p313 = por %p311, %p312
    %p314 = scmp.ne.s32.totalorder %s306, %s308
    %p315 = scmp.eq.s32.totalorder %s25, 1
    %p316 = por %p314, %p315
    %p317 = scmp.ne.s32.totalorder %s308, %s309
    %p318 = scmp.eq.s32.totalorder %s25, 0
    %p319 = por %p317, %p318
    %p320 = scmp.ne.s32.totalorder %s308, %s309
    %p321 = scmp.eq.s32.totalorder %s26, 1
    %p322 = por %p320, %p321
    %p324 = scmp.ne.s32.totalorder %s309, %s323
    %p325 = scmp.eq.s32.totalorder %s26, 0
    %p326 = por %p324, %p325
    %s327 = ssub.s32 %s20, %s27
    %p328 = scmp.eq.s32.totalorder %s327, 0
    %s330 = sadd.s32 %s329, 1
    %s331 = scalar_select %p328, %s329, %s330
    %p334 = pneg %p328
    %p335 = scmp.eq.s32.totalorder %s20, 1
    %p336 = por %p334, %p335
    %p337 = scmp.ne.s32.totalorder %s329, %s332
    %p338 = scmp.eq.s32.totalorder %s20, 0
    %p339 = por %p337, %p338
    %p340 = scmp.ne.s32.totalorder %s329, %s332
    %p341 = scmp.eq.s32.totalorder %s25, 1
    %p342 = por %p340, %p341
    %p343 = scmp.ne.s32.totalorder %s332, %s333
    %p344 = scmp.eq.s32.totalorder %s25, 0
    %p345 = por %p343, %p344
    %p346 = scmp.ne.s32.totalorder %s332, %s333
    %p347 = scmp.eq.s32.totalorder %s26, 1
    %p348 = por %p346, %p347
    %p350 = scmp.ne.s32.totalorder %s333, %s349
    %p351 = scmp.eq.s32.totalorder %s26, 0
    %p352 = por %p350, %p351
    %p353 = scmp.le.s32.totalorder 1, %s20
    %p354 = scmp.lt.s32.totalorder %s20, 3
    %p355 = pnand %p353, %p354
    %p356 = pneg %p355
    // Predicated region
    $region9: #{t2t_vit_feature_forward.6} parent=5 // pred_check
      _
    $region10: #{t2t_vit_feature_forward.6} parent=5 // pred_check_branch
      %358 = sbr.rel (%p355) target = $region12
    $region11: #{t2t_vit_feature_forward.6} parent=5 // pred_region
      %s359 = ssub.s32 %s20, 1
      // Predicated region
      $region13: #{t2t_vit_feature_forward.6} parent=11 // pred_check
        %p360 = pneg %p67
      $region14: #{t2t_vit_feature_forward.6} parent=11 // pred_check_branch
        %362 = sbr.rel (%p360) target = $region16
      $region15: #{t2t_vit_feature_forward.6} parent=11 // pred_region
        _
      $region16: #{t2t_vit_feature_forward.6} parent=11 // pred_fallthru
        _
      // Predicated region
      $region17: #{t2t_vit_feature_forward.6} parent=11 // pred_check
        %p363 = pneg %p88
      $region18: #{t2t_vit_feature_forward.6} parent=11 // pred_check_branch
        %365 = sbr.rel (%p363) target = $region20
      $region19: #{t2t_vit_feature_forward.6} parent=11 // pred_region
        _
      $region20: #{t2t_vit_feature_forward.6} parent=11 // pred_fallthru
        _
      // Predicated region
      $region21: #{t2t_vit_feature_forward.6} parent=11 // pred_check
        %p366 = pneg %p109
      $region22: #{t2t_vit_feature_forward.6} parent=11 // pred_check_branch
        %368 = sbr.rel (%p366) target = $region24
      $region23: #{t2t_vit_feature_forward.6} parent=11 // pred_region
        _
      $region24: #{t2t_vit_feature_forward.6} parent=11 // pred_fallthru
        _
      // Predicated region
      $region25: #{t2t_vit_feature_forward.6} parent=11 // pred_check
        %p369 = pneg %p130
      $region26: #{t2t_vit_feature_forward.6} parent=11 // pred_check_branch
        %371 = sbr.rel (%p369) target = $region28
      $region27: #{t2t_vit_feature_forward.6} parent=11 // pred_region
        _
      $region28: #{t2t_vit_feature_forward.6} parent=11 // pred_fallthru
        _
      // Predicated region
      $region29: #{t2t_vit_feature_forward.6} parent=11 // pred_check
        %p372 = pneg %p151
      $region30: #{t2t_vit_feature_forward.6} parent=11 // pred_check_branch
        %374 = sbr.rel (%p372) target = $region32
      $region31: #{t2t_vit_feature_forward.6} parent=11 // pred_region
        _
      $region32: #{t2t_vit_feature_forward.6} parent=11 // pred_fallthru
        _
      // Predicated region
      $region33: #{t2t_vit_feature_forward.6} parent=11 // pred_check
        %p375 = pneg %p172
      $region34: #{t2t_vit_feature_forward.6} parent=11 // pred_check_branch
        %377 = sbr.rel (%p375) target = $region36
      $region35: #{t2t_vit_feature_forward.6} parent=11 // pred_region
        _
      $region36: #{t2t_vit_feature_forward.6} parent=11 // pred_fallthru
        _
      // Predicated region
      $region37: #{t2t_vit_feature_forward.6} parent=11 // pred_check
        %p378 = pneg %p193
      $region38: #{t2t_vit_feature_forward.6} parent=11 // pred_check_branch
        %380 = sbr.rel (%p378) target = $region40
      $region39: #{t2t_vit_feature_forward.6} parent=11 // pred_region
        _
      $region40: #{t2t_vit_feature_forward.6} parent=11 // pred_fallthru
        _
      // Predicated region
      $region41: #{t2t_vit_feature_forward.6} parent=11 // pred_check
        %p381 = pneg %p214
      $region42: #{t2t_vit_feature_forward.6} parent=11 // pred_check_branch
        %383 = sbr.rel (%p381) target = $region44
      $region43: #{t2t_vit_feature_forward.6} parent=11 // pred_region
        _
      $region44: #{t2t_vit_feature_forward.6} parent=11 // pred_fallthru
        _
      // Predicated region
      $region45: #{t2t_vit_feature_forward.6} parent=11 // pred_check
        %p384 = pneg %p235
      $region46: #{t2t_vit_feature_forward.6} parent=11 // pred_check_branch
        %386 = sbr.rel (%p384) target = $region48
      $region47: #{t2t_vit_feature_forward.6} parent=11 // pred_region
        _
      $region48: #{t2t_vit_feature_forward.6} parent=11 // pred_fallthru
        _
      // Predicated region
      $region49: #{t2t_vit_feature_forward.6} parent=11 // pred_check
        %p387 = pneg %p256
      $region50: #{t2t_vit_feature_forward.6} parent=11 // pred_check_branch
        %389 = sbr.rel (%p387) target = $region52
      $region51: #{t2t_vit_feature_forward.6} parent=11 // pred_region
        _
      $region52: #{t2t_vit_feature_forward.6} parent=11 // pred_fallthru
        _
      // Predicated region
      $region53: #{t2t_vit_feature_forward.6} parent=11 // pred_check
        %p390 = pneg %p277
      $region54: #{t2t_vit_feature_forward.6} parent=11 // pred_check_branch
        %392 = sbr.rel (%p390) target = $region56
      $region55: #{t2t_vit_feature_forward.6} parent=11 // pred_region
        _
      $region56: #{t2t_vit_feature_forward.6} parent=11 // pred_fallthru
        _
      // Predicated region
      $region57: #{t2t_vit_feature_forward.6} parent=11 // pred_check
        %p393 = pneg %p298
      $region58: #{t2t_vit_feature_forward.6} parent=11 // pred_check_branch
        %395 = sbr.rel (%p393) target = $region60
      $region59: #{t2t_vit_feature_forward.6} parent=11 // pred_region
        _
      $region60: #{t2t_vit_feature_forward.6} parent=11 // pred_fallthru
        _
      // Predicated region
      $region61: #{t2t_vit_feature_forward.6} parent=11 // pred_check
        %p396 = pneg %p319
      $region62: #{t2t_vit_feature_forward.6} parent=11 // pred_check_branch
        %398 = sbr.rel (%p396) target = $region64
      $region63: #{t2t_vit_feature_forward.6} parent=11 // pred_region
        _
      $region64: #{t2t_vit_feature_forward.6} parent=11 // pred_fallthru
        _
    $region12: #{t2t_vit_feature_forward.6} parent=5 // pred_fallthru
      _
    %p399 = scmp.lt.s32.totalorder %s20, 2
    // Predicated region
    $region65: #{t2t_vit_feature_forward.6} parent=5 // pred_check
      %p400 = pneg %p399
    $region66: #{t2t_vit_feature_forward.6} parent=5 // pred_check_branch
      %402 = sbr.rel (%p400) target = $region68
    $region67: #{t2t_vit_feature_forward.6} parent=5 // pred_region
      // Predicated region
      $region69: #{t2t_vit_feature_forward.6} parent=67 // pred_check
        %p403 = pneg %p40
      $region70: #{t2t_vit_feature_forward.6} parent=67 // pred_check_branch
        %405 = sbr.rel (%p403) target = $region72
      $region71: #{t2t_vit_feature_forward.6} parent=67 // pred_region
        %p406 = scmp.lt.s32.totalorder %s20, 1
        %s407 = scalar_select %p406, %s20, 1
        %s408 = smul.addr %s407, 2
        %s409 = smul.addr %s408, 8
        %s410 = scalar_lea.vmem %s0, %s409
      $region72: #{t2t_vit_feature_forward.6} parent=67 // pred_fallthru
        _
    $region68: #{t2t_vit_feature_forward.6} parent=5 // pred_fallthru
      _
    %p411 = scmp.le.s32.totalorder 1, %s20
    %p412 = scmp.lt.s32.totalorder %s20, 3
    %p413 = pnand %p411, %p412
    %p414 = pneg %p413
    // Predicated region
    $region73: #{t2t_vit_feature_forward.6} parent=5 // pred_check
      _
    $region74: #{t2t_vit_feature_forward.6} parent=5 // pred_check_branch
      %416 = sbr.rel (%p413) target = $region76
    $region75: #{t2t_vit_feature_forward.6} parent=5 // pred_region
      %s417 = ssub.s32 %s20, 1
      %p418 = scmp.lt.s32.totalorder %s25, 1
      %s419 = scalar_select %p418, %s25, 1
      %s420 = smul.addr %s419, 2
      %s421 = smul.addr %s420, 8
      %s422 = scalar_lea.vmem %s0, %s421
      %p423 = pneg %p46
      %p424 = pneg %p43
      %p425 = pneg %p67
      %p426 = pneg %p64
      %p427 = pneg %p88
      %p428 = pneg %p85
      %p429 = pneg %p109
      %p430 = pneg %p106
      %p431 = pneg %p130
      %p432 = pneg %p127
      %p433 = pneg %p151
      %p434 = pneg %p148
      %p435 = pneg %p172
      %p436 = pneg %p169
      %p437 = pneg %p193
      %p438 = pneg %p190
      %p439 = pneg %p214
      %p440 = pneg %p211
      %p441 = pneg %p235
      %p442 = pneg %p232
      %p443 = pneg %p256
      %p444 = pneg %p253
      %p445 = pneg %p277
      %p446 = pneg %p274
      %p447 = pneg %p298
      %p448 = pneg %p295
      %p449 = pneg %p319
      %p450 = pneg %p316
      %p451 = pneg %p345
      %p452 = pneg %p342
      %p453 = scmp.lt.s32.totalorder %s25, 1
      %s454 = scalar_select %p453, %s25, 1
      %s455 = smul.addr %s454, 8
      %s456 = scalar_lea.vmem %s14, %s455
      %p457 = scmp.lt.s32.totalorder %s25, 1
      %s458 = scalar_select %p457, %s25, 1
      %s459 = smul.addr %s458, 2
      %s460 = smul.addr %s459, 8
      %s461 = scalar_lea.vmem %s0, %s460
      %p462 = scmp.lt.s32.totalorder %s25, 1
      %s463 = scalar_select %p462, %s25, 1
      %s464 = smul.addr %s463, 8
      %s465 = scalar_lea.vmem %s14, %s464
      %v467 = vld [vmem:[%s461] sm:$0x1f]
      %v468 = vld [vmem:[%s461 + $0x8] sm:$0x1f]
      %v469 = vpack.c.bf16 %v467, %v467
      %v470 = vpack.c.bf16 %v468, %v468
      %v471 = vld [vmem:[%s1] sm:$0xf]
      %v472 = vld [vmem:[%s1 + $0x4] sm:$0xf]
      %v473 = vld [vmem:[%s1 + $0x8] sm:$0xf]
      %v474 = vld [vmem:[%s1 + $0xc] sm:$0xf]
      %v475 = vld [vmem:[%s1 + $0x10] sm:$0xf]
      %v476 = vld [vmem:[%s1 + $0x14] sm:$0xf]
      %v477 = vld [vmem:[%s1 + $0x18] sm:$0xf]
      %v478 = vld [vmem:[%s1 + $0x1c] sm:$0xf]
      %v479 = vld [vmem:[%s1 + $0x20] sm:$0xf]
      %v480 = vld [vmem:[%s1 + $0x24] sm:$0xf]
      %v481 = vld [vmem:[%s1 + $0x28] sm:$0xf]
      %v482 = vld [vmem:[%s1 + $0x2c] sm:$0xf]
      %v483 = vld [vmem:[%s1 + $0x30] sm:$0xf]
      %v484 = vld [vmem:[%s1 + $0x34] sm:$0xf]
      %v485 = vld [vmem:[%s1 + $0x38] sm:$0xf]
      %v486 = vld [vmem:[%s1 + $0x3c] sm:$0xf]
      %v487 = vld [vmem:[%s1 + $0x40] sm:$0xf]
      %v488 = vld [vmem:[%s1 + $0x44] sm:$0xf]
      %v489 = vld [vmem:[%s2] sm:$0x1f]
      %v508 = vunpack.c.l.b16 %v471
      %v509 = vunpack.c.l.b16 %v472
      %v510 = vunpack.c.l.b16 %v473
      %v511 = vunpack.c.l.b16 %v474
      %v512 = vunpack.c.l.b16 %v475
      %v513 = vunpack.c.l.b16 %v476
      %v514 = vunpack.c.l.b16 %v477
      %v515 = vunpack.c.l.b16 %v478
      %v516 = vunpack.c.l.b16 %v479
      %v517 = vunpack.c.l.b16 %v480
      %v518 = vunpack.c.l.b16 %v481
      %v519 = vunpack.c.l.b16 %v482
      %v520 = vunpack.c.l.b16 %v483
      %v521 = vunpack.c.l.b16 %v484
      %v522 = vunpack.c.l.b16 %v485
      %v523 = vunpack.c.l.b16 %v486
      %v524 = vunpack.c.l.b16 %v487
      %v525 = vunpack.c.l.b16 %v488
      %v526 = vpack.c.b16 %v509, %v508
      %v527 = vpack.c.b16 %v511, %v510
      %v528 = vpack.c.b16 %v513, %v512
      %v529 = vpack.c.b16 %v515, %v514
      %v530 = vpack.c.b16 %v517, %v516
      %v531 = vpack.c.b16 %v519, %v518
      %v532 = vpack.c.b16 %v521, %v520
      %v533 = vpack.c.b16 %v523, %v522
      %v534 = vpack.c.b16 %v525, %v524
      %vm544 = vcmask 130048
      %v546 = vsel %vm544, %v470, 0
      %548 = vmatprep.subr.bf16.mxu0 0
      %549 = vmatpush1.bf16.msra.mxu0 %v526
      %550 = vmatprep.subr.bf16.mxu0 0
      %551 = vmatpush1.bf16.msra.mxu0 %v527
      %552 = vmatprep.subr.bf16.mxu0 0
      %553 = vmatpush1.bf16.msra.mxu0 %v528
      %554 = vmatprep.subr.bf16.mxu0 0
      %555 = vmatpush1.bf16.msra.mxu0 %v529
      %556 = vmatprep.subr.bf16.mxu0 0
      %557 = vmatpush1.bf16.msra.mxu0 %v530
      %558 = vmatprep.subr.bf16.mxu0 0
      %559 = vmatpush1.bf16.msra.mxu0 %v531
      %560 = vmatprep.subr.bf16.mxu0 0
      %561 = vmatpush1.bf16.msra.mxu0 %v532
      %562 = vmatprep.subr.bf16.mxu0 0
      %563 = vmatpush1.bf16.msra.mxu0 %v533
      %564 = vmatprep.subr.bf16.mxu0 0
      %565 = vmatpush1.bf16.msra.mxu0 %v534
      %566 = vmatprep.subr.bf16.mxu0 0
      %567 = vmatpush1.bf16.msra.mxu0 0
      %568 = vmatprep.subr.bf16.mxu0 0
      %569 = vmatpush1.bf16.msra.mxu0 0
      %570 = vmatprep.subr.bf16.mxu0 0
      %571 = vmatpush1.bf16.msra.mxu0 0
      %572 = vmatprep.subr.bf16.mxu0 0
      %573 = vmatpush1.bf16.msra.mxu0 0
      %574 = vmatprep.subr.bf16.mxu0 0
      %575 = vmatpush1.bf16.msra.mxu0 0
      %576 = vmatprep.subr.bf16.mxu0 0
      %577 = vmatpush1.bf16.msra.mxu0 0
      %578 = vmatprep.subr.bf16.mxu0 0
      %579 = vmatpush1.bf16.msra.mxu0 0
      %580 = vmatprep.mubr.bf16.mxu0 %v546
      %581 = vmatmul.mubr.bf16.gmra.mrb[0].mxu0 %v469
      %v582 = vpop.f32.mrb[0].mxu0
      %v583 = vadd.f32 %v489, %v582
      %v584 = vpop.f32.mrb[0].mxu0
      %v585 = vpop.f32.mrb[0].mxu0
      %v586 = vpop.f32.mrb[0].mxu0
      %587 = vdwg.mxu0
      %v588 = vld [vmem:[%s3] sm:$0x1]
      %v589 = vld [vmem:[%s4] sm:$0x1]
      %vm590 = vcmask 520192
      %v591 = vsel %vm590, %v583, 0.0
      %592 = vadd.xlane.f32.xlu0 %v591
      %v593 = vpop.xlane.xlu0 %592
      %v594 = vrcp.pop 64.0
      %v595 = vmul.f32 %v593, %v594
      %v596 = vsub.f32 %v583, %v595
      %v597 = vmul.f32 %v596, %v596
      %v598 = vsel %vm590, %v597, 0.0
      %599 = vadd.xlane.f32.xlu0 %v598
      %v600 = vpop.xlane.xlu0 %599
      %v601 = vmul.f32 %v600, %v594
      %v602 = vadd.f32 %v601, 1e-05
      %v603 = vrsqrt.pop %v602
      %v604 = vmul.f32 %v596, %v603
      %v606 = vlaneseq
      %v607 = vshrl.u32 %v606, 7
      %v608 = vsub.s32 0, %v607
      %v609 = vrot.slane %v588, %v608
      %v611 = vmul.f32 %v604, %v609
      %v613 = vlaneseq
      %v614 = vshrl.u32 %v613, 7
      %v615 = vsub.s32 0, %v614
      %v616 = vrot.slane %v589, %v615
      %v618 = vadd.f32 %v611, %v616
      %v619 = vpack.c.bf16 %v618, %v618
      %v620 = vld [vmem:[%s5] sm:$0xf]
      %v621 = vld [vmem:[%s5 + $0x4] sm:$0xf]
      %v622 = vld [vmem:[%s5 + $0x8] sm:$0xf]
      %v623 = vld [vmem:[%s5 + $0xc] sm:$0xf]
      %v624 = vld [vmem:[%s5 + $0x10] sm:$0xf]
      %v625 = vld [vmem:[%s5 + $0x14] sm:$0xf]
      %v626 = vld [vmem:[%s5 + $0x18] sm:$0xf]
      %v627 = vld [vmem:[%s5 + $0x1c] sm:$0xf]
      %v636 = vunpack.c.l.b16 %v620
      %v637 = vunpack.c.l.b16 %v621
      %v638 = vunpack.c.l.b16 %v622
      %v639 = vunpack.c.l.b16 %v623
      %v640 = vunpack.c.l.b16 %v624
      %v641 = vunpack.c.l.b16 %v625
      %v642 = vunpack.c.l.b16 %v626
      %v643 = vunpack.c.l.b16 %v627
      %v644 = vpack.c.b16 %v637, %v636
      %v645 = vpack.c.b16 %v639, %v638
      %v646 = vpack.c.b16 %v641, %v640
      %v647 = vpack.c.b16 %v643, %v642
      %vm652 = vcmask 523264
      %v654 = vsel %vm652, %v619, 0
      %656 = vmatprep.subr.bf16.mxu0 0
      %657 = vmatpush1.bf16.msra.mxu0 %v644
      %658 = vmatprep.subr.bf16.mxu0 0
      %659 = vmatpush1.bf16.msra.mxu0 %v645
      %660 = vmatprep.subr.bf16.mxu0 0
      %661 = vmatpush1.bf16.msra.mxu0 %v646
      %662 = vmatprep.subr.bf16.mxu0 0
      %663 = vmatpush1.bf16.msra.mxu0 %v647
      %664 = vmatprep.subr.bf16.mxu0 0
      %665 = vmatpush1.bf16.msra.mxu0 0
      %666 = vmatprep.subr.bf16.mxu0 0
      %667 = vmatpush1.bf16.msra.mxu0 0
      %668 = vmatprep.subr.bf16.mxu0 0
      %669 = vmatpush1.bf16.msra.mxu0 0
      %670 = vmatprep.subr.bf16.mxu0 0
      %671 = vmatpush1.bf16.msra.mxu0 0
      %672 = vmatprep.subr.bf16.mxu0 0
      %673 = vmatpush1.bf16.msra.mxu0 0
      %674 = vmatprep.subr.bf16.mxu0 0
      %675 = vmatpush1.bf16.msra.mxu0 0
      %676 = vmatprep.subr.bf16.mxu0 0
      %677 = vmatpush1.bf16.msra.mxu0 0
      %678 = vmatprep.subr.bf16.mxu0 0
      %679 = vmatpush1.bf16.msra.mxu0 0
      %680 = vmatprep.subr.bf16.mxu0 0
      %681 = vmatpush1.bf16.msra.mxu0 0
      %682 = vmatprep.subr.bf16.mxu0 0
      %683 = vmatpush1.bf16.msra.mxu0 0
      %684 = vmatprep.subr.bf16.mxu0 0
      %685 = vmatpush1.bf16.msra.mxu0 0
      %686 = vmatprep.subr.bf16.mxu0 0
      %687 = vmatpush1.bf16.msra.mxu0 0
      %688 = vmatprep.mubr.bf16.mxu0 0
      %689 = vmatmul.mubr.bf16.gmra.mrb[0].mxu0 %v654
      %v690 = vpop.f32.mrb[0].mxu0
      %v691 = vadd.f32 0.0, %v690
      %v692 = vpop.f32.mrb[0].mxu0
      %v693 = vpop.f32.mrb[0].mxu0
      %v694 = vpop.f32.mrb[0].mxu0
      %695 = vdwg.mxu0
      %s696 = scalar_lea.vmem %s5, 128
      %v697 = vld [vmem:[%s696] sm:$0xf]
      %v698 = vld [vmem:[%s696 + $0x4] sm:$0xf]
      %v699 = vld [vmem:[%s696 + $0x8] sm:$0xf]
      %v700 = vld [vmem:[%s696 + $0xc] sm:$0xf]
      %v701 = vld [vmem:[%s696 + $0x10] sm:$0xf]
      %v702 = vld [vmem:[%s696 + $0x14] sm:$0xf]
      %v703 = vld [vmem:[%s696 + $0x18] sm:$0xf]
      %v704 = vld [vmem:[%s696 + $0x1c] sm:$0xf]
      %v713 = vunpack.c.l.b16 %v697
      %v714 = vunpack.c.l.b16 %v698
      %v715 = vunpack.c.l.b16 %v699
      %v716 = vunpack.c.l.b16 %v700
      %v717 = vunpack.c.l.b16 %v701
      %v718 = vunpack.c.l.b16 %v702
      %v719 = vunpack.c.l.b16 %v703
      %v720 = vunpack.c.l.b16 %v704
      %v721 = vpack.c.b16 %v714, %v713
      %v722 = vpack.c.b16 %v716, %v715
      %v723 = vpack.c.b16 %v718, %v717
      %v724 = vpack.c.b16 %v720, %v719
      %729 = vmatprep.subr.bf16.mxu0 0
      %730 = vmatpush1.bf16.msra.mxu0 %v721
      %731 = vmatprep.subr.bf16.mxu0 0
      %732 = vmatpush1.bf16.msra.mxu0 %v722
      %733 = vmatprep.subr.bf16.mxu0 0
      %734 = vmatpush1.bf16.msra.mxu0 %v723
      %735 = vmatprep.subr.bf16.mxu0 0
      %736 = vmatpush1.bf16.msra.mxu0 %v724
      %737 = vmatprep.subr.bf16.mxu0 0
      %738 = vmatpush1.bf16.msra.mxu0 0
      %739 = vmatprep.subr.bf16.mxu0 0
      %740 = vmatpush1.bf16.msra.mxu0 0
      %741 = vmatprep.subr.bf16.mxu0 0
      %742 = vmatpush1.bf16.msra.mxu0 0
      %743 = vmatprep.subr.bf16.mxu0 0
      %744 = vmatpush1.bf16.msra.mxu0 0
      %745 = vmatprep.subr.bf16.mxu0 0
      %746 = vmatpush1.bf16.msra.mxu0 0
      %747 = vmatprep.subr.bf16.mxu0 0
      %748 = vmatpush1.bf16.msra.mxu0 0
      %749 = vmatprep.subr.bf16.mxu0 0
      %750 = vmatpush1.bf16.msra.mxu0 0
      %751 = vmatprep.subr.bf16.mxu0 0
      %752 = vmatpush1.bf16.msra.mxu0 0
      %753 = vmatprep.subr.bf16.mxu0 0
      %754 = vmatpush1.bf16.msra.mxu0 0
      %755 = vmatprep.subr.bf16.mxu0 0
      %756 = vmatpush1.bf16.msra.mxu0 0
      %757 = vmatprep.subr.bf16.mxu0 0
      %758 = vmatpush1.bf16.msra.mxu0 0
      %759 = vmatprep.subr.bf16.mxu0 0
      %760 = vmatpush1.bf16.msra.mxu0 0
      %761 = vmatprep.mubr.bf16.mxu0 0
      %762 = vmatmul.mubr.bf16.gmra.mrb[0].mxu0 %v654
      %v763 = vpop.f32.mrb[0].mxu0
      %v764 = vadd.f32 0.0, %v763
      %v765 = vpop.f32.mrb[0].mxu0
      %v766 = vpop.f32.mrb[0].mxu0
      %v767 = vpop.f32.mrb[0].mxu0
      %768 = vdwg.mxu0
      %s769 = scalar_lea.vmem %s5, 256
      %v770 = vld [vmem:[%s769] sm:$0xf]
      %v771 = vld [vmem:[%s769 + $0x4] sm:$0xf]
      %v772 = vld [vmem:[%s769 + $0x8] sm:$0xf]
      %v773 = vld [vmem:[%s769 + $0xc] sm:$0xf]
      %v774 = vld [vmem:[%s769 + $0x10] sm:$0xf]
      %v775 = vld [vmem:[%s769 + $0x14] sm:$0xf]
      %v776 = vld [vmem:[%s769 + $0x18] sm:$0xf]
      %v777 = vld [vmem:[%s769 + $0x1c] sm:$0xf]
      %v786 = vunpack.c.l.b16 %v770
      %v787 = vunpack.c.l.b16 %v771
      %v788 = vunpack.c.l.b16 %v772
      %v789 = vunpack.c.l.b16 %v773
      %v790 = vunpack.c.l.b16 %v774
      %v791 = vunpack.c.l.b16 %v775
      %v792 = vunpack.c.l.b16 %v776
      %v793 = vunpack.c.l.b16 %v777
      %v794 = vpack.c.b16 %v787, %v786
      %v795 = vpack.c.b16 %v789, %v788
      %v796 = vpack.c.b16 %v791, %v790
      %v797 = vpack.c.b16 %v793, %v792
      %802 = vmatprep.subr.bf16.mxu0 0
      %803 = vmatpush1.bf16.msra.mxu0 %v794
      %804 = vmatprep.subr.bf16.mxu0 0
      %805 = vmatpush1.bf16.msra.mxu0 %v795
      %806 = vmatprep.subr.bf16.mxu0 0
      %807 = vmatpush1.bf16.msra.mxu0 %v796
      %808 = vmatprep.subr.bf16.mxu0 0
      %809 = vmatpush1.bf16.msra.mxu0 %v797
      %810 = vmatprep.subr.bf16.mxu0 0
      %811 = vmatpush1.bf16.msra.mxu0 0
      %812 = vmatprep.subr.bf16.mxu0 0
      %813 = vmatpush1.bf16.msra.mxu0 0
      %814 = vmatprep.subr.bf16.mxu0 0
      %815 = vmatpush1.bf16.msra.mxu0 0
      %816 = vmatprep.subr.bf16.mxu0 0
      %817 = vmatpush1.bf16.msra.mxu0 0
      %818 = vmatprep.subr.bf16.mxu0 0
      %819 = vmatpush1.bf16.msra.mxu0 0
      %820 = vmatprep.subr.bf16.mxu0 0
      %821 = vmatpush1.bf16.msra.mxu0 0
      %822 = vmatprep.subr.bf16.mxu0 0
      %823 = vmatpush1.bf16.msra.mxu0 0
      %824 = vmatprep.subr.bf16.mxu0 0
      %825 = vmatpush1.bf16.msra.mxu0 0
      %826 = vmatprep.subr.bf16.mxu0 0
      %827 = vmatpush1.bf16.msra.mxu0 0
      %828 = vmatprep.subr.bf16.mxu0 0
      %829 = vmatpush1.bf16.msra.mxu0 0
      %830 = vmatprep.subr.bf16.mxu0 0
      %831 = vmatpush1.bf16.msra.mxu0 0
      %832 = vmatprep.subr.bf16.mxu0 0
      %833 = vmatpush1.bf16.msra.mxu0 0
      %834 = vmatprep.mubr.bf16.mxu0 0
      %835 = vmatmul.mubr.bf16.gmra.mrb[0].mxu0 %v654
      %v836 = vpop.f32.mrb[0].mxu0
      %v837 = vadd.f32 0.0, %v836
      %v838 = vpop.f32.mrb[0].mxu0
      %v839 = vpop.f32.mrb[0].mxu0
      %v840 = vpop.f32.mrb[0].mxu0
      %841 = vdwg.mxu0
      %v843 = vsel %vm544, %v691, 0
      %v846 = vsel %vm544, %v764, 0
      %848 = vmatprep.subr.mxu0 0.0
      %849 = vmatpush1.xpose.msra.mxu0 %v846
      %850 = vmatprep.subr.mxu0 0.0
      %851 = vmatpush1.xpose.msra.mxu0 0.0
      %852 = vmatprep.subr.mxu0 0.0
      %853 = vmatpush1.xpose.msra.mxu0 0.0
      %854 = vmatprep.subr.mxu0 0.0
      %855 = vmatpush1.xpose.msra.mxu0 0.0
      %856 = vmatprep.subr.mxu0 0.0
      %857 = vmatpush1.xpose.msra.mxu0 0.0
      %858 = vmatprep.subr.mxu0 0.0
      %859 = vmatpush1.xpose.msra.mxu0 0.0
      %860 = vmatprep.subr.mxu0 0.0
      %861 = vmatpush1.xpose.msra.mxu0 0.0
      %862 = vmatprep.subr.mxu0 0.0
      %863 = vmatpush1.xpose.msra.mxu0 0.0
      %864 = vmatprep.subr.mxu0 0.0
      %865 = vmatpush1.xpose.msra.mxu0 0.0
      %866 = vmatprep.subr.mxu0 0.0
      %867 = vmatpush1.xpose.msra.mxu0 0.0
      %868 = vmatprep.subr.mxu0 0.0
      %869 = vmatpush1.xpose.msra.mxu0 0.0
      %870 = vmatprep.subr.mxu0 0.0
      %871 = vmatpush1.xpose.msra.mxu0 0.0
      %872 = vmatprep.subr.mxu0 0.0
      %873 = vmatpush1.xpose.msra.mxu0 0.0
      %874 = vmatprep.subr.mxu0 0.0
      %875 = vmatpush1.xpose.msra.mxu0 0.0
      %876 = vmatprep.subr.mxu0 0.0
      %877 = vmatpush1.xpose.msra.mxu0 0.0
      %878 = vmatprep.subr.mxu0 0.0
      %879 = vmatpush1.xpose.msra.mxu0 0.0
      %880 = vmatprep.subr.mxu0 0.0
      %881 = vmatpush1.xpose.msra.mxu0 0.0
      %882 = vmatprep.subr.mxu0 0.0
      %883 = vmatpush1.xpose.msra.mxu0 0.0
      %884 = vmatprep.subr.mxu0 0.0
      %885 = vmatpush1.xpose.msra.mxu0 0.0
      %886 = vmatprep.subr.mxu0 0.0
      %887 = vmatpush1.xpose.msra.mxu0 0.0
      %888 = vmatprep.subr.mxu0 0.0
      %889 = vmatpush1.xpose.msra.mxu0 0.0
      %890 = vmatprep.subr.mxu0 0.0
      %891 = vmatpush1.xpose.msra.mxu0 0.0
      %892 = vmatprep.subr.mxu0 0.0
      %893 = vmatpush1.xpose.msra.mxu0 0.0
      %894 = vmatprep.subr.mxu0 0.0
      %895 = vmatpush1.xpose.msra.mxu0 0.0
      %896 = vmatprep.subr.mxu0 0.0
      %897 = vmatpush1.xpose.msra.mxu0 0.0
      %898 = vmatprep.subr.mxu0 0.0
      %899 = vmatpush1.xpose.msra.mxu0 0.0
      %900 = vmatprep.subr.mxu0 0.0
      %901 = vmatpush1.xpose.msra.mxu0 0.0
      %902 = vmatprep.subr.mxu0 0.0
      %903 = vmatpush1.xpose.msra.mxu0 0.0
      %904 = vmatprep.subr.mxu0 0.0
      %905 = vmatpush1.xpose.msra.mxu0 0.0
      %906 = vmatprep.subr.mxu0 0.0
      %907 = vmatpush1.xpose.msra.mxu0 0.0
      %908 = vmatprep.subr.mxu0 0.0
      %909 = vmatpush1.xpose.msra.mxu0 0.0
      %910 = vmatprep.subr.mxu0 0.0
      %911 = vmatpush1.xpose.msra.mxu0 0.0
      %912 = vmatprep.mubr.f32.mxu0 0.0
      %913 = vmatmul.mubr.f32.gmra.mrb[0].mxu0 %v843
      %v914 = vpop.f32.mrb[0].mxu0
      %v915 = vadd.f32 0.0, %v914
      %v916 = vpop.f32.mrb[0].mxu0
      %917 = vdwg.mxu0
      %v918 = vmul.f32 %v915, 0.25
      %vm919 = vcmask 36864
      %v920 = vsel %vm919, %v918, -inf
      %921 = vmax.xlane.f32.xlu0 %v920
      %v922 = vpop.xlane.xlu0 %921
      %v923 = vsub.f32 %v918, %v922
      %v924 = vmul.f32 %v923, 1.442695
      %v925 = vpow.pop %v924
      %v926 = vsel %vm919, %v925, 0.0
      %927 = vadd.xlane.f32.xlu0 %v926
      %v928 = vpop.xlane.xlu0 %927
      %v929 = vrcp.pop %v928
      %v930 = vmul.f32 %v925, %v929
      %v931 = vpack.c.bf16 %v930, %v930
      %v932 = vpack.c.bf16 %v837, %v837
      %vm933 = vcmask 39936
      %v935 = vsel %vm933, %v931, 0
      %vm937 = vcmask 1041408
      %vm938 = vcmask 1042432
      %v939 = vsel %vm937, 4294967295, 65535
      %v940 = vsel %vm938, %v939, 0
      %v942 = vand.u32 %v932, %v940
      %944 = vmatprep.subr.bf16.mxu0 0
      %945 = vmatpush1.bf16.msra.mxu0 %v942
      %946 = vmatprep.subr.bf16.mxu0 0
      %947 = vmatpush1.bf16.msra.mxu0 0
      %948 = vmatprep.subr.bf16.mxu0 0
      %949 = vmatpush1.bf16.msra.mxu0 0
      %950 = vmatprep.subr.bf16.mxu0 0
      %951 = vmatpush1.bf16.msra.mxu0 0
      %952 = vmatprep.subr.bf16.mxu0 0
      %953 = vmatpush1.bf16.msra.mxu0 0
      %954 = vmatprep.subr.bf16.mxu0 0
      %955 = vmatpush1.bf16.msra.mxu0 0
      %956 = vmatprep.subr.bf16.mxu0 0
      %957 = vmatpush1.bf16.msra.mxu0 0
      %958 = vmatprep.subr.bf16.mxu0 0
      %959 = vmatpush1.bf16.msra.mxu0 0
      %960 = vmatprep.subr.bf16.mxu0 0
      %961 = vmatpush1.bf16.msra.mxu0 0
      %962 = vmatprep.subr.bf16.mxu0 0
      %963 = vmatpush1.bf16.msra.mxu0 0
      %964 = vmatprep.subr.bf16.mxu0 0
      %965 = vmatpush1.bf16.msra.mxu0 0
      %966 = vmatprep.subr.bf16.mxu0 0
      %967 = vmatpush1.bf16.msra.mxu0 0
      %968 = vmatprep.subr.bf16.mxu0 0
      %969 = vmatpush1.bf16.msra.mxu0 0
      %970 = vmatprep.subr.bf16.mxu0 0
      %971 = vmatpush1.bf16.msra.mxu0 0
      %972 = vmatprep.subr.bf16.mxu0 0
      %973 = vmatpush1.bf16.msra.mxu0 0
      %974 = vmatprep.subr.bf16.mxu0 0
      %975 = vmatpush1.bf16.msra.mxu0 0
      %976 = vmatprep.mubr.bf16.mxu0 0
      %977 = vmatmul.mubr.bf16.gmra.mrb[0].mxu0 %v935
      %v978 = vpop.f32.mrb[0].mxu0
      %v979 = vadd.f32 0.0, %v978
      %v980 = vpop.f32.mrb[0].mxu0
      %v981 = vpop.f32.mrb[0].mxu0
      %v982 = vpop.f32.mrb[0].mxu0
      %983 = vdwg.mxu0
      %v984 = vpack.c.bf16 %v979, %v979
      %v985 = vld [vmem:[%s6] sm:$0xf]
      %v986 = vld [vmem:[%s6 + $0x4] sm:$0xf]
      %s987 = scalar_lea.vmem %s5, 32
      %v988 = vld [vmem:[%s987] sm:$0xf]
      %v989 = vld [vmem:[%s987 + $0x4] sm:$0xf]
      %v990 = vld [vmem:[%s987 + $0x8] sm:$0xf]
      %v991 = vld [vmem:[%s987 + $0xc] sm:$0xf]
      %v992 = vld [vmem:[%s987 + $0x10] sm:$0xf]
      %v993 = vld [vmem:[%s987 + $0x14] sm:$0xf]
      %v994 = vld [vmem:[%s987 + $0x18] sm:$0xf]
      %v995 = vld [vmem:[%s987 + $0x1c] sm:$0xf]
      %v1004 = vunpack.c.l.b16 %v988
      %v1005 = vunpack.c.l.b16 %v989
      %v1006 = vunpack.c.l.b16 %v990
      %v1007 = vunpack.c.l.b16 %v991
      %v1008 = vunpack.c.l.b16 %v992
      %v1009 = vunpack.c.l.b16 %v993
      %v1010 = vunpack.c.l.b16 %v994
      %v1011 = vunpack.c.l.b16 %v995
      %v1012 = vpack.c.b16 %v1005, %v1004
      %v1013 = vpack.c.b16 %v1007, %v1006
      %v1014 = vpack.c.b16 %v1009, %v1008
      %v1015 = vpack.c.b16 %v1011, %v1010
      %1020 = vmatprep.subr.bf16.mxu0 0
      %1021 = vmatpush1.bf16.msra.mxu0 %v1012
      %1022 = vmatprep.subr.bf16.mxu0 0
      %1023 = vmatpush1.bf16.msra.mxu0 %v1013
      %1024 = vmatprep.subr.bf16.mxu0 0
      %1025 = vmatpush1.bf16.msra.mxu0 %v1014
      %1026 = vmatprep.subr.bf16.mxu0 0
      %1027 = vmatpush1.bf16.msra.mxu0 %v1015
      %1028 = vmatprep.subr.bf16.mxu0 0
      %1029 = vmatpush1.bf16.msra.mxu0 0
      %1030 = vmatprep.subr.bf16.mxu0 0
      %1031 = vmatpush1.bf16.msra.mxu0 0
      %1032 = vmatprep.subr.bf16.mxu0 0
      %1033 = vmatpush1.bf16.msra.mxu0 0
      %1034 = vmatprep.subr.bf16.mxu0 0
      %1035 = vmatpush1.bf16.msra.mxu0 0
      %1036 = vmatprep.subr.bf16.mxu0 0
      %1037 = vmatpush1.bf16.msra.mxu0 0
      %1038 = vmatprep.subr.bf16.mxu0 0
      %1039 = vmatpush1.bf16.msra.mxu0 0
      %1040 = vmatprep.subr.bf16.mxu0 0
      %1041 = vmatpush1.bf16.msra.mxu0 0
      %1042 = vmatprep.subr.bf16.mxu0 0
      %1043 = vmatpush1.bf16.msra.mxu0 0
      %1044 = vmatprep.subr.bf16.mxu0 0
      %1045 = vmatpush1.bf16.msra.mxu0 0
      %1046 = vmatprep.subr.bf16.mxu0 0
      %1047 = vmatpush1.bf16.msra.mxu0 0
      %1048 = vmatprep.subr.bf16.mxu0 0
      %1049 = vmatpush1.bf16.msra.mxu0 0
      %1050 = vmatprep.subr.bf16.mxu0 0
      %1051 = vmatpush1.bf16.msra.mxu0 0
      %1052 = vmatprep.mubr.bf16.mxu0 0
      %1053 = vmatmul.mubr.bf16.gmra.mrb[0].mxu0 %v654
      %v1054 = vpop.f32.mrb[0].mxu0
      %v1055 = vadd.f32 0.0, %v1054
      %v1056 = vpop.f32.mrb[0].mxu0
      %v1057 = vpop.f32.mrb[0].mxu0
      %v1058 = vpop.f32.mrb[0].mxu0
      %1059 = vdwg.mxu0
      %s1060 = scalar_lea.vmem %s5, 160
      %v1061 = vld [vmem:[%s1060] sm:$0xf]
      %v1062 = vld [vmem:[%s1060 + $0x4] sm:$0xf]
      %v1063 = vld [vmem:[%s1060 + $0x8] sm:$0xf]
      %v1064 = vld [vmem:[%s1060 + $0xc] sm:$0xf]
      %v1065 = vld [vmem:[%s1060 + $0x10] sm:$0xf]
      %v1066 = vld [vmem:[%s1060 + $0x14] sm:$0xf]
      %v1067 = vld [vmem:[%s1060 + $0x18] sm:$0xf]
      %v1068 = vld [vmem:[%s1060 + $0x1c] sm:$0xf]
      %v1077 = vunpack.c.l.b16 %v1061
      %v1078 = vunpack.c.l.b16 %v1062
      %v1079 = vunpack.c.l.b16 %v1063
      %v1080 = vunpack.c.l.b16 %v1064
      %v1081 = vunpack.c.l.b16 %v1065
      %v1082 = vunpack.c.l.b16 %v1066
      %v1083 = vunpack.c.l.b16 %v1067
      %v1084 = vunpack.c.l.b16 %v1068
      %v1085 = vpack.c.b16 %v1078, %v1077
      %v1086 = vpack.c.b16 %v1080, %v1079
      %v1087 = vpack.c.b16 %v1082, %v1081
      %v1088 = vpack.c.b16 %v1084, %v1083
      %1093 = vmatprep.subr.bf16.mxu0 0
      %1094 = vmatpush1.bf16.msra.mxu0 %v1085
      %1095 = vmatprep.subr.bf16.mxu0 0
      %1096 = vmatpush1.bf16.msra.mxu0 %v1086
      %1097 = vmatprep.subr.bf16.mxu0 0
      %1098 = vmatpush1.bf16.msra.mxu0 %v1087
      %1099 = vmatprep.subr.bf16.mxu0 0
      %1100 = vmatpush1.bf16.msra.mxu0 %v1088
      %1101 = vmatprep.subr.bf16.mxu0 0
      %1102 = vmatpush1.bf16.msra.mxu0 0
      %1103 = vmatprep.subr.bf16.mxu0 0
      %1104 = vmatpush1.bf16.msra.mxu0 0
      %1105 = vmatprep.subr.bf16.mxu0 0
      %1106 = vmatpush1.bf16.msra.mxu0 0
      %1107 = vmatprep.subr.bf16.mxu0 0
      %1108 = vmatpush1.bf16.msra.mxu0 0
      %1109 = vmatprep.subr.bf16.mxu0 0
      %1110 = vmatpush1.bf16.msra.mxu0 0
      %1111 = vmatprep.subr.bf16.mxu0 0
      %1112 = vmatpush1.bf16.msra.mxu0 0
      %1113 = vmatprep.subr.bf16.mxu0 0
      %1114 = vmatpush1.bf16.msra.mxu0 0
      %1115 = vmatprep.subr.bf16.mxu0 0
      %1116 = vmatpush1.bf16.msra.mxu0 0
      %1117 = vmatprep.subr.bf16.mxu0 0
      %1118 = vmatpush1.bf16.msra.mxu0 0
      %1119 = vmatprep.subr.bf16.mxu0 0
      %1120 = vmatpush1.bf16.msra.mxu0 0
      %1121 = vmatprep.subr.bf16.mxu0 0
      %1122 = vmatpush1.bf16.msra.mxu0 0
      %1123 = vmatprep.subr.bf16.mxu0 0
      %1124 = vmatpush1.bf16.msra.mxu0 0
      %1125 = vmatprep.mubr.bf16.mxu0 0
      %1126 = vmatmul.mubr.bf16.gmra.mrb[0].mxu0 %v654
      %v1127 = vpop.f32.mrb[0].mxu0
      %v1128 = vadd.f32 0.0, %v1127
      %v1129 = vpop.f32.mrb[0].mxu0
      %v1130 = vpop.f32.mrb[0].mxu0
      %v1131 = vpop.f32.mrb[0].mxu0
      %1132 = vdwg.mxu0
      %s1133 = scalar_lea.vmem %s5, 288
      %v1134 = vld [vmem:[%s1133] sm:$0xf]
      %v1135 = vld [vmem:[%s1133 + $0x4] sm:$0xf]
      %v1136 = vld [vmem:[%s1133 + $0x8] sm:$0xf]
      %v1137 = vld [vmem:[%s1133 + $0xc] sm:$0xf]
      %v1138 = vld [vmem:[%s1133 + $0x10] sm:$0xf]
      %v1139 = vld [vmem:[%s1133 + $0x14] sm:$0xf]
      %v1140 = vld [vmem:[%s1133 + $0x18] sm:$0xf]
      %v1141 = vld [vmem:[%s1133 + $0x1c] sm:$0xf]
      %v1150 = vunpack.c.l.b16 %v1134
      %v1151 = vunpack.c.l.b16 %v1135
      %v1152 = vunpack.c.l.b16 %v1136
      %v1153 = vunpack.c.l.b16 %v1137
      %v1154 = vunpack.c.l.b16 %v1138
      %v1155 = vunpack.c.l.b16 %v1139
      %v1156 = vunpack.c.l.b16 %v1140
      %v1157 = vunpack.c.l.b16 %v1141
      %v1158 = vpack.c.b16 %v1151, %v1150
      %v1159 = vpack.c.b16 %v1153, %v1152
      %v1160 = vpack.c.b16 %v1155, %v1154
      %v1161 = vpack.c.b16 %v1157, %v1156
      %1166 = vmatprep.subr.bf16.mxu0 0
      %1167 = vmatpush1.bf16.msra.mxu0 %v1158
      %1168 = vmatprep.subr.bf16.mxu0 0
      %1169 = vmatpush1.bf16.msra.mxu0 %v1159
      %1170 = vmatprep.subr.bf16.mxu0 0
      %1171 = vmatpush1.bf16.msra.mxu0 %v1160
      %1172 = vmatprep.subr.bf16.mxu0 0
      %1173 = vmatpush1.bf16.msra.mxu0 %v1161
      %1174 = vmatprep.subr.bf16.mxu0 0
      %1175 = vmatpush1.bf16.msra.mxu0 0
      %1176 = vmatprep.subr.bf16.mxu0 0
      %1177 = vmatpush1.bf16.msra.mxu0 0
      %1178 = vmatprep.subr.bf16.mxu0 0
      %1179 = vmatpush1.bf16.msra.mxu0 0
      %1180 = vmatprep.subr.bf16.mxu0 0
      %1181 = vmatpush1.bf16.msra.mxu0 0
      %1182 = vmatprep.subr.bf16.mxu0 0
      %1183 = vmatpush1.bf16.msra.mxu0 0
      %1184 = vmatprep.subr.bf16.mxu0 0
      %1185 = vmatpush1.bf16.msra.mxu0 0
      %1186 = vmatprep.subr.bf16.mxu0 0
      %1187 = vmatpush1.bf16.msra.mxu0 0
      %1188 = vmatprep.subr.bf16.mxu0 0
      %1189 = vmatpush1.bf16.msra.mxu0 0
      %1190 = vmatprep.subr.bf16.mxu0 0
      %1191 = vmatpush1.bf16.msra.mxu0 0
      %1192 = vmatprep.subr.bf16.mxu0 0
      %1193 = vmatpush1.bf16.msra.mxu0 0
      %1194 = vmatprep.subr.bf16.mxu0 0
      %1195 = vmatpush1.bf16.msra.mxu0 0
      %1196 = vmatprep.subr.bf16.mxu0 0
      %1197 = vmatpush1.bf16.msra.mxu0 0
      %1198 = vmatprep.mubr.bf16.mxu0 0
      %1199 = vmatmul.mubr.bf16.gmra.mrb[0].mxu0 %v654
      %v1200 = vpop.f32.mrb[0].mxu0
      %v1201 = vadd.f32 0.0, %v1200
      %v1202 = vpop.f32.mrb[0].mxu0
      %v1203 = vpop.f32.mrb[0].mxu0
      %v1204 = vpop.f32.mrb[0].mxu0
      %1205 = vdwg.mxu0
      %v1207 = vsel %vm544, %v1055, 0
      %v1210 = vsel %vm544, %v1128, 0
      %1212 = vmatprep.subr.mxu0 0.0
      %1213 = vmatpush1.xpose.msra.mxu0 %v1210
      %1214 = vmatprep.subr.mxu0 0.0
      %1215 = vmatpush1.xpose.msra.mxu0 0.0
      %1216 = vmatprep.subr.mxu0 0.0
      %1217 = vmatpush1.xpose.msra.mxu0 0.0
      %1218 = vmatprep.subr.mxu0 0.0
      %1219 = vmatpush1.xpose.msra.mxu0 0.0
      %1220 = vmatprep.subr.mxu0 0.0
      %1221 = vmatpush1.xpose.msra.mxu0 0.0
      %1222 = vmatprep.subr.mxu0 0.0
      %1223 = vmatpush1.xpose.msra.mxu0 0.0
      %1224 = vmatprep.subr.mxu0 0.0
      %1225 = vmatpush1.xpose.msra.mxu0 0.0
      %1226 = vmatprep.subr.mxu0 0.0
      %1227 = vmatpush1.xpose.msra.mxu0 0.0
      %1228 = vmatprep.subr.mxu0 0.0
      %1229 = vmatpush1.xpose.msra.mxu0 0.0
      %1230 = vmatprep.subr.mxu0 0.0
      %1231 = vmatpush1.xpose.msra.mxu0 0.0
      %1232 = vmatprep.subr.mxu0 0.0
      %1233 = vmatpush1.xpose.msra.mxu0 0.0
      %1234 = vmatprep.subr.mxu0 0.0
      %1235 = vmatpush1.xpose.msra.mxu0 0.0
      %1236 = vmatprep.subr.mxu0 0.0
      %1237 = vmatpush1.xpose.msra.mxu0 0.0
      %1238 = vmatprep.subr.mxu0 0.0
      %1239 = vmatpush1.xpose.msra.mxu0 0.0
      %1240 = vmatprep.subr.mxu0 0.0
      %1241 = vmatpush1.xpose.msra.mxu0 0.0
      %1242 = vmatprep.subr.mxu0 0.0
      %1243 = vmatpush1.xpose.msra.mxu0 0.0
      %1244 = vmatprep.subr.mxu0 0.0
      %1245 = vmatpush1.xpose.msra.mxu0 0.0
      %1246 = vmatprep.subr.mxu0 0.0
      %1247 = vmatpush1.xpose.msra.mxu0 0.0
      %1248 = vmatprep.subr.mxu0 0.0
      %1249 = vmatpush1.xpose.msra.mxu0 0.0
      %1250 = vmatprep.subr.mxu0 0.0
      %1251 = vmatpush1.xpose.msra.mxu0 0.0
      %1252 = vmatprep.subr.mxu0 0.0
      %1253 = vmatpush1.xpose.msra.mxu0 0.0
      %1254 = vmatprep.subr.mxu0 0.0
      %1255 = vmatpush1.xpose.msra.mxu0 0.0
      %1256 = vmatprep.subr.mxu0 0.0
      %1257 = vmatpush1.xpose.msra.mxu0 0.0
      %1258 = vmatprep.subr.mxu0 0.0
      %1259 = vmatpush1.xpose.msra.mxu0 0.0
      %1260 = vmatprep.subr.mxu0 0.0
      %1261 = vmatpush1.xpose.msra.mxu0 0.0
      %1262 = vmatprep.subr.mxu0 0.0
      %1263 = vmatpush1.xpose.msra.mxu0 0.0
      %1264 = vmatprep.subr.mxu0 0.0
      %1265 = vmatpush1.xpose.msra.mxu0 0.0
      %1266 = vmatprep.subr.mxu0 0.0
      %1267 = vmatpush1.xpose.msra.mxu0 0.0
      %1268 = vmatprep.subr.mxu0 0.0
      %1269 = vmatpush1.xpose.msra.mxu0 0.0
      %1270 = vmatprep.subr.mxu0 0.0
      %1271 = vmatpush1.xpose.msra.mxu0 0.0
      %1272 = vmatprep.subr.mxu0 0.0
      %1273 = vmatpush1.xpose.msra.mxu0 0.0
      %1274 = vmatprep.subr.mxu0 0.0
      %1275 = vmatpush1.xpose.msra.mxu0 0.0
      %1276 = vmatprep.mubr.f32.mxu0 0.0
      %1277 = vmatmul.mubr.f32.gmra.mrb[0].mxu0 %v1207
      %v1278 = vpop.f32.mrb[0].mxu0
      %v1279 = vadd.f32 0.0, %v1278
      %v1280 = vpop.f32.mrb[0].mxu0
      %1281 = vdwg.mxu0
      %v1282 = vmul.f32 %v1279, 0.25
      %v1283 = vsel %vm919, %v1282, -inf
      %1284 = vmax.xlane.f32.xlu0 %v1283
      %v1285 = vpop.xlane.xlu0 %1284
      %v1286 = vsub.f32 %v1282, %v1285
      %v1287 = vmul.f32 %v1286, 1.442695
      %v1288 = vpow.pop %v1287
      %v1289 = vsel %vm919, %v1288, 0.0
      %1290 = vadd.xlane.f32.xlu0 %v1289
      %v1291 = vpop.xlane.xlu0 %1290
      %v1292 = vrcp.pop %v1291
      %v1293 = vmul.f32 %v1288, %v1292
      %v1294 = vpack.c.bf16 %v1293, %v1293
      %v1295 = vpack.c.bf16 %v1201, %v1201
      %v1297 = vsel %vm933, %v1294, 0
      %v1300 = vand.u32 %v1295, %v940
      %1302 = vmatprep.subr.bf16.mxu0 0
      %1303 = vmatpush1.bf16.msra.mxu0 %v1300
      %1304 = vmatprep.subr.bf16.mxu0 0
      %1305 = vmatpush1.bf16.msra.mxu0 0
      %1306 = vmatprep.subr.bf16.mxu0 0
      %1307 = vmatpush1.bf16.msra.mxu0 0
      %1308 = vmatprep.subr.bf16.mxu0 0
      %1309 = vmatpush1.bf16.msra.mxu0 0
      %1310 = vmatprep.subr.bf16.mxu0 0
      %1311 = vmatpush1.bf16.msra.mxu0 0
      %1312 = vmatprep.subr.bf16.mxu0 0
      %1313 = vmatpush1.bf16.msra.mxu0 0
      %1314 = vmatprep.subr.bf16.mxu0 0
      %1315 = vmatpush1.bf16.msra.mxu0 0
      %1316 = vmatprep.subr.bf16.mxu0 0
      %1317 = vmatpush1.bf16.msra.mxu0 0
      %1318 = vmatprep.subr.bf16.mxu0 0
      %1319 = vmatpush1.bf16.msra.mxu0 0
      %1320 = vmatprep.subr.bf16.mxu0 0
      %1321 = vmatpush1.bf16.msra.mxu0 0
      %1322 = vmatprep.subr.bf16.mxu0 0
      %1323 = vmatpush1.bf16.msra.mxu0 0
      %1324 = vmatprep.subr.bf16.mxu0 0
      %1325 = vmatpush1.bf16.msra.mxu0 0
      %1326 = vmatprep.subr.bf16.mxu0 0
      %1327 = vmatpush1.bf16.msra.mxu0 0
      %1328 = vmatprep.subr.bf16.mxu0 0
      %1329 = vmatpush1.bf16.msra.mxu0 0
      %1330 = vmatprep.subr.bf16.mxu0 0
      %1331 = vmatpush1.bf16.msra.mxu0 0
      %1332 = vmatprep.subr.bf16.mxu0 0
      %1333 = vmatpush1.bf16.msra.mxu0 0
      %1334 = vmatprep.mubr.bf16.mxu0 0
      %1335 = vmatmul.mubr.bf16.gmra.mrb[0].mxu0 %v1297
      %v1336 = vpop.f32.mrb[0].mxu0
      %v1337 = vadd.f32 0.0, %v1336
      %v1338 = vpop.f32.mrb[0].mxu0
      %v1339 = vpop.f32.mrb[0].mxu0
      %v1340 = vpop.f32.mrb[0].mxu0
      %1341 = vdwg.mxu0
      %v1342 = vpack.c.bf16 %v1337, %v1337
      %s1343 = scalar_lea.vmem %s6, 8
      %v1344 = vld [vmem:[%s1343] sm:$0xf]
      %v1345 = vld [vmem:[%s1343 + $0x4] sm:$0xf]
      %v1348 = vunpack.c.l.b16 %v1344
      %v1349 = vunpack.c.l.b16 %v1345
      %v1350 = vpack.c.b16 %v1349, %v1348
      %v1353 = vsel %vm544, %v1342, 0
      %1355 = vmatprep.subr.bf16.mxu0 0
      %1356 = vmatpush1.bf16.msra.mxu0 %v1350
      %1357 = vmatprep.subr.bf16.mxu0 0
      %1358 = vmatpush1.bf16.msra.mxu0 0
      %1359 = vmatprep.subr.bf16.mxu0 0
      %1360 = vmatpush1.bf16.msra.mxu0 0
      %1361 = vmatprep.subr.bf16.mxu0 0
      %1362 = vmatpush1.bf16.msra.mxu0 0
      %1363 = vmatprep.subr.bf16.mxu0 0
      %1364 = vmatpush1.bf16.msra.mxu0 0
      %1365 = vmatprep.subr.bf16.mxu0 0
      %1366 = vmatpush1.bf16.msra.mxu0 0
      %1367 = vmatprep.subr.bf16.mxu0 0
      %1368 = vmatpush1.bf16.msra.mxu0 0
      %1369 = vmatprep.subr.bf16.mxu0 0
      %1370 = vmatpush1.bf16.msra.mxu0 0
      %1371 = vmatprep.subr.bf16.mxu0 0
      %1372 = vmatpush1.bf16.msra.mxu0 0
      %1373 = vmatprep.subr.bf16.mxu0 0
      %1374 = vmatpush1.bf16.msra.mxu0 0
      %1375 = vmatprep.subr.bf16.mxu0 0
      %1376 = vmatpush1.bf16.msra.mxu0 0
      %1377 = vmatprep.subr.bf16.mxu0 0
      %1378 = vmatpush1.bf16.msra.mxu0 0
      %1379 = vmatprep.subr.bf16.mxu0 0
      %1380 = vmatpush1.bf16.msra.mxu0 0
      %1381 = vmatprep.subr.bf16.mxu0 0
      %1382 = vmatpush1.bf16.msra.mxu0 0
      %1383 = vmatprep.subr.bf16.mxu0 0
      %1384 = vmatpush1.bf16.msra.mxu0 0
      %1385 = vmatprep.subr.bf16.mxu0 0
      %1386 = vmatpush1.bf16.msra.mxu0 0
      %1387 = vmatprep.mubr.bf16.mxu0 0
      %1388 = vmatmul.mubr.bf16.gmra.mrb[0].mxu0 %v1353
      %v1389 = vpop.f32.mrb[0].mxu0
      %v1390 = vadd.f32 0.0, %v1389
      %v1391 = vpop.f32.mrb[0].mxu0
      %v1392 = vpop.f32.mrb[0].mxu0
      %v1393 = vpop.f32.mrb[0].mxu0
      %1394 = vdwg.mxu0
      %v1397 = vunpack.c.l.b16 %v985
      %v1398 = vunpack.c.l.b16 %v986
      %v1399 = vpack.c.b16 %v1398, %v1397
      %v1402 = vsel %vm544, %v984, 0
      %1404 = vmatprep.subr.bf16.mxu0 0
      %1405 = vmatpush1.bf16.msra.mxu0 %v1399
      %1406 = vmatprep.subr.bf16.mxu0 0
      %1407 = vmatpush1.bf16.msra.mxu0 0
      %1408 = vmatprep.subr.bf16.mxu0 0
      %1409 = vmatpush1.bf16.msra.mxu0 0
      %1410 = vmatprep.subr.bf16.mxu0 0
      %1411 = vmatpush1.bf16.msra.mxu0 0
      %1412 = vmatprep.subr.bf16.mxu0 0
      %1413 = vmatpush1.bf16.msra.mxu0 0
      %1414 = vmatprep.subr.bf16.mxu0 0
      %1415 = vmatpush1.bf16.msra.mxu0 0
      %1416 = vmatprep.subr.bf16.mxu0 0
      %1417 = vmatpush1.bf16.msra.mxu0 0
      %1418 = vmatprep.subr.bf16.mxu0 0
      %1419 = vmatpush1.bf16.msra.mxu0 0
      %1420 = vmatprep.subr.bf16.mxu0 0
      %1421 = vmatpush1.bf16.msra.mxu0 0
      %1422 = vmatprep.subr.bf16.mxu0 0
      %1423 = vmatpush1.bf16.msra.mxu0 0
      %1424 = vmatprep.subr.bf16.mxu0 0
      %1425 = vmatpush1.bf16.msra.mxu0 0
      %1426 = vmatprep.subr.bf16.mxu0 0
      %1427 = vmatpush1.bf16.msra.mxu0 0
      %1428 = vmatprep.subr.bf16.mxu0 0
      %1429 = vmatpush1.bf16.msra.mxu0 0
      %1430 = vmatprep.subr.bf16.mxu0 0
      %1431 = vmatpush1.bf16.msra.mxu0 0
      %1432 = vmatprep.subr.bf16.mxu0 0
      %1433 = vmatpush1.bf16.msra.mxu0 0
      %1434 = vmatprep.subr.bf16.mxu0 0
      %1435 = vmatpush1.bf16.msra.mxu0 0
      %1436 = vmatprep.mubr.bf16.mxu0 0
      %1437 = vmatmul.mubr.bf16.gmra.mrb[0].mxu0 %v1402
      %v1438 = vpop.f32.mrb[0].mxu0
      %v1439 = vadd.f32 %v1390, %v1438
      %v1440 = vpop.f32.mrb[0].mxu0
      %v1441 = vpop.f32.mrb[0].mxu0
      %v1442 = vpop.f32.mrb[0].mxu0
      %1443 = vdwg.mxu0
      %s1444 = scalar_lea.vmem %s5, 64
      %v1445 = vld [vmem:[%s1444] sm:$0xf]
      %v1446 = vld [vmem:[%s1444 + $0x4] sm:$0xf]
      %v1447 = vld [vmem:[%s1444 + $0x8] sm:$0xf]
      %v1448 = vld [vmem:[%s1444 + $0xc] sm:$0xf]
      %v1449 = vld [vmem:[%s1444 + $0x10] sm:$0xf]
      %v1450 = vld [vmem:[%s1444 + $0x14] sm:$0xf]
      %v1451 = vld [vmem:[%s1444 + $0x18] sm:$0xf]
      %v1452 = vld [vmem:[%s1444 + $0x1c] sm:$0xf]
      %v1461 = vunpack.c.l.b16 %v1445
      %v1462 = vunpack.c.l.b16 %v1446
      %v1463 = vunpack.c.l.b16 %v1447
      %v1464 = vunpack.c.l.b16 %v1448
      %v1465 = vunpack.c.l.b16 %v1449
      %v1466 = vunpack.c.l.b16 %v1450
      %v1467 = vunpack.c.l.b16 %v1451
      %v1468 = vunpack.c.l.b16 %v1452
      %v1469 = vpack.c.b16 %v1462, %v1461
      %v1470 = vpack.c.b16 %v1464, %v1463
      %v1471 = vpack.c.b16 %v1466, %v1465
      %v1472 = vpack.c.b16 %v1468, %v1467
      %1477 = vmatprep.subr.bf16.mxu0 0
      %1478 = vmatpush1.bf16.msra.mxu0 %v1469
      %1479 = vmatprep.subr.bf16.mxu0 0
      %1480 = vmatpush1.bf16.msra.mxu0 %v1470
      %1481 = vmatprep.subr.bf16.mxu0 0
      %1482 = vmatpush1.bf16.msra.mxu0 %v1471
      %1483 = vmatprep.subr.bf16.mxu0 0
      %1484 = vmatpush1.bf16.msra.mxu0 %v1472
      %1485 = vmatprep.subr.bf16.mxu0 0
      %1486 = vmatpush1.bf16.msra.mxu0 0
      %1487 = vmatprep.subr.bf16.mxu0 0
      %1488 = vmatpush1.bf16.msra.mxu0 0
      %1489 = vmatprep.subr.bf16.mxu0 0
      %1490 = vmatpush1.bf16.msra.mxu0 0
      %1491 = vmatprep.subr.bf16.mxu0 0
      %1492 = vmatpush1.bf16.msra.mxu0 0
      %1493 = vmatprep.subr.bf16.mxu0 0
      %1494 = vmatpush1.bf16.msra.mxu0 0
      %1495 = vmatprep.subr.bf16.mxu0 0
      %1496 = vmatpush1.bf16.msra.mxu0 0
      %1497 = vmatprep.subr.bf16.mxu0 0
      %1498 = vmatpush1.bf16.msra.mxu0 0
      %1499 = vmatprep.subr.bf16.mxu0 0
      %1500 = vmatpush1.bf16.msra.mxu0 0
      %1501 = vmatprep.subr.bf16.mxu0 0
      %1502 = vmatpush1.bf16.msra.mxu0 0
      %1503 = vmatprep.subr.bf16.mxu0 0
      %1504 = vmatpush1.bf16.msra.mxu0 0
      %1505 = vmatprep.subr.bf16.mxu0 0
      %1506 = vmatpush1.bf16.msra.mxu0 0
      %1507 = vmatprep.subr.bf16.mxu0 0
      %1508 = vmatpush1.bf16.msra.mxu0 0
      %1509 = vmatprep.mubr.bf16.mxu0 0
      %1510 = vmatmul.mubr.bf16.gmra.mrb[0].mxu0 %v654
      %v1511 = vpop.f32.mrb[0].mxu0
      %v1512 = vadd.f32 0.0, %v1511
      %v1513 = vpop.f32.mrb[0].mxu0
      %v1514 = vpop.f32.mrb[0].mxu0
      %v1515 = vpop.f32.mrb[0].mxu0
      %1516 = vdwg.mxu0
      %s1517 = scalar_lea.vmem %s5, 192
      %v1518 = vld [vmem:[%s1517] sm:$0xf]
      %v1519 = vld [vmem:[%s1517 + $0x4] sm:$0xf]
      %v1520 = vld [vmem:[%s1517 + $0x8] sm:$0xf]
      %v1521 = vld [vmem:[%s1517 + $0xc] sm:$0xf]
      %v1522 = vld [vmem:[%s1517 + $0x10] sm:$0xf]
      %v1523 = vld [vmem:[%s1517 + $0x14] sm:$0xf]
      %v1524 = vld [vmem:[%s1517 + $0x18] sm:$0xf]
      %v1525 = vld [vmem:[%s1517 + $0x1c] sm:$0xf]
      %v1534 = vunpack.c.l.b16 %v1518
      %v1535 = vunpack.c.l.b16 %v1519
      %v1536 = vunpack.c.l.b16 %v1520
      %v1537 = vunpack.c.l.b16 %v1521
      %v1538 = vunpack.c.l.b16 %v1522
      %v1539 = vunpack.c.l.b16 %v1523
      %v1540 = vunpack.c.l.b16 %v1524
      %v1541 = vunpack.c.l.b16 %v1525
      %v1542 = vpack.c.b16 %v1535, %v1534
      %v1543 = vpack.c.b16 %v1537, %v1536
      %v1544 = vpack.c.b16 %v1539, %v1538
      %v1545 = vpack.c.b16 %v1541, %v1540
      %1550 = vmatprep.subr.bf16.mxu0 0
      %1551 = vmatpush1.bf16.msra.mxu0 %v1542
      %1552 = vmatprep.subr.bf16.mxu0 0
      %1553 = vmatpush1.bf16.msra.mxu0 %v1543
      %1554 = vmatprep.subr.bf16.mxu0 0
      %1555 = vmatpush1.bf16.msra.mxu0 %v1544
      %1556 = vmatprep.subr.bf16.mxu0 0
      %1557 = vmatpush1.bf16.msra.mxu0 %v1545
      %1558 = vmatprep.subr.bf16.mxu0 0
      %1559 = vmatpush1.bf16.msra.mxu0 0
      %1560 = vmatprep.subr.bf16.mxu0 0
      %1561 = vmatpush1.bf16.msra.mxu0 0
      %1562 = vmatprep.subr.bf16.mxu0 0
      %1563 = vmatpush1.bf16.msra.mxu0 0
      %1564 = vmatprep.subr.bf16.mxu0 0
      %1565 = vmatpush1.bf16.msra.mxu0 0
      %1566 = vmatprep.subr.bf16.mxu0 0
      %1567 = vmatpush1.bf16.msra.mxu0 0
      %1568 = vmatprep.subr.bf16.mxu0 0
      %1569 = vmatpush1.bf16.msra.mxu0 0
      %1570 = vmatprep.subr.bf16.mxu0 0
      %1571 = vmatpush1.bf16.msra.mxu0 0
      %1572 = vmatprep.subr.bf16.mxu0 0
      %1573 = vmatpush1.bf16.msra.mxu0 0
      %1574 = vmatprep.subr.bf16.mxu0 0
      %1575 = vmatpush1.bf16.msra.mxu0 0
      %1576 = vmatprep.subr.bf16.mxu0 0
      %1577 = vmatpush1.bf16.msra.mxu0 0
      %1578 = vmatprep.subr.bf16.mxu0 0
      %1579 = vmatpush1.bf16.msra.mxu0 0
      %1580 = vmatprep.subr.bf16.mxu0 0
      %1581 = vmatpush1.bf16.msra.mxu0 0
      %1582 = vmatprep.mubr.bf16.mxu0 0
      %1583 = vmatmul.mubr.bf16.gmra.mrb[0].mxu0 %v654
      %v1584 = vpop.f32.mrb[0].mxu0
      %v1585 = vadd.f32 0.0, %v1584
      %v1586 = vpop.f32.mrb[0].mxu0
      %v1587 = vpop.f32.mrb[0].mxu0
      %v1588 = vpop.f32.mrb[0].mxu0
      %1589 = vdwg.mxu0
      %s1590 = scalar_lea.vmem %s5, 320
      %v1591 = vld [vmem:[%s1590] sm:$0xf]
      %v1592 = vld [vmem:[%s1590 + $0x4] sm:$0xf]
      %v1593 = vld [vmem:[%s1590 + $0x8] sm:$0xf]
      %v1594 = vld [vmem:[%s1590 + $0xc] sm:$0xf]
      %v1595 = vld [vmem:[%s1590 + $0x10] sm:$0xf]
      %v1596 = vld [vmem:[%s1590 + $0x14] sm:$0xf]
      %v1597 = vld [vmem:[%s1590 + $0x18] sm:$0xf]
      %v1598 = vld [vmem:[%s1590 + $0x1c] sm:$0xf]
      %v1607 = vunpack.c.l.b16 %v1591
      %v1608 = vunpack.c.l.b16 %v1592
      %v1609 = vunpack.c.l.b16 %v1593
      %v1610 = vunpack.c.l.b16 %v1594
      %v1611 = vunpack.c.l.b16 %v1595
      %v1612 = vunpack.c.l.b16 %v1596
      %v1613 = vunpack.c.l.b16 %v1597
      %v1614 = vunpack.c.l.b16 %v1598
      %v1615 = vpack.c.b16 %v1608, %v1607
      %v1616 = vpack.c.b16 %v1610, %v1609
      %v1617 = vpack.c.b16 %v1612, %v1611
      %v1618 = vpack.c.b16 %v1614, %v1613
      %1623 = vmatprep.subr.bf16.mxu0 0
      %1624 = vmatpush1.bf16.msra.mxu0 %v1615
      %1625 = vmatprep.subr.bf16.mxu0 0
      %1626 = vmatpush1.bf16.msra.mxu0 %v1616
      %1627 = vmatprep.subr.bf16.mxu0 0
      %1628 = vmatpush1.bf16.msra.mxu0 %v1617
      %1629 = vmatprep.subr.bf16.mxu0 0
      %1630 = vmatpush1.bf16.msra.mxu0 %v1618
      %1631 = vmatprep.subr.bf16.mxu0 0
      %1632 = vmatpush1.bf16.msra.mxu0 0
      %1633 = vmatprep.subr.bf16.mxu0 0
      %1634 = vmatpush1.bf16.msra.mxu0 0
      %1635 = vmatprep.subr.bf16.mxu0 0
      %1636 = vmatpush1.bf16.msra.mxu0 0
      %1637 = vmatprep.subr.bf16.mxu0 0
      %1638 = vmatpush1.bf16.msra.mxu0 0
      %1639 = vmatprep.subr.bf16.mxu0 0
      %1640 = vmatpush1.bf16.msra.mxu0 0
      %1641 = vmatprep.subr.bf16.mxu0 0
      %1642 = vmatpush1.bf16.msra.mxu0 0
      %1643 = vmatprep.subr.bf16.mxu0 0
      %1644 = vmatpush1.bf16.msra.mxu0 0
      %1645 = vmatprep.subr.bf16.mxu0 0
      %1646 = vmatpush1.bf16.msra.mxu0 0
      %1647 = vmatprep.subr.bf16.mxu0 0
      %1648 = vmatpush1.bf16.msra.mxu0 0
      %1649 = vmatprep.subr.bf16.mxu0 0
      %1650 = vmatpush1.bf16.msra.mxu0 0
      %1651 = vmatprep.subr.bf16.mxu0 0
      %1652 = vmatpush1.bf16.msra.mxu0 0
      %1653 = vmatprep.subr.bf16.mxu0 0
      %1654 = vmatpush1.bf16.msra.mxu0 0
      %1655 = vmatprep.mubr.bf16.mxu0 0
      %1656 = vmatmul.mubr.bf16.gmra.mrb[0].mxu0 %v654
      %v1657 = vpop.f32.mrb[0].mxu0
      %v1658 = vadd.f32 0.0, %v1657
      %v1659 = vpop.f32.mrb[0].mxu0
      %v1660 = vpop.f32.mrb[0].mxu0
      %v1661 = vpop.f32.mrb[0].mxu0
      %1662 = vdwg.mxu0
      %v1664 = vsel %vm544, %v1512, 0
      %v1667 = vsel %vm544, %v1585, 0
      %1669 = vmatprep.subr.mxu0 0.0
      %1670 = vmatpush1.xpose.msra.mxu0 %v1667
      %1671 = vmatprep.subr.mxu0 0.0
      %1672 = vmatpush1.xpose.msra.mxu0 0.0
      %1673 = vmatprep.subr.mxu0 0.0
      %1674 = vmatpush1.xpose.msra.mxu0 0.0
      %1675 = vmatprep.subr.mxu0 0.0
      %1676 = vmatpush1.xpose.msra.mxu0 0.0
      %1677 = vmatprep.subr.mxu0 0.0
      %1678 = vmatpush1.xpose.msra.mxu0 0.0
      %1679 = vmatprep.subr.mxu0 0.0
      %1680 = vmatpush1.xpose.msra.mxu0 0.0
      %1681 = vmatprep.subr.mxu0 0.0
      %1682 = vmatpush1.xpose.msra.mxu0 0.0
      %1683 = vmatprep.subr.mxu0 0.0
      %1684 = vmatpush1.xpose.msra.mxu0 0.0
      %1685 = vmatprep.subr.mxu0 0.0
      %1686 = vmatpush1.xpose.msra.mxu0 0.0
      %1687 = vmatprep.subr.mxu0 0.0
      %1688 = vmatpush1.xpose.msra.mxu0 0.0
      %1689 = vmatprep.subr.mxu0 0.0
      %1690 = vmatpush1.xpose.msra.mxu0 0.0
      %1691 = vmatprep.subr.mxu0 0.0
      %1692 = vmatpush1.xpose.msra.mxu0 0.0
      %1693 = vmatprep.subr.mxu0 0.0
      %1694 = vmatpush1.xpose.msra.mxu0 0.0
      %1695 = vmatprep.subr.mxu0 0.0
      %1696 = vmatpush1.xpose.msra.mxu0 0.0
      %1697 = vmatprep.subr.mxu0 0.0
      %1698 = vmatpush1.xpose.msra.mxu0 0.0
      %1699 = vmatprep.subr.mxu0 0.0
      %1700 = vmatpush1.xpose.msra.mxu0 0.0
      %1701 = vmatprep.subr.mxu0 0.0
      %1702 = vmatpush1.xpose.msra.mxu0 0.0
      %1703 = vmatprep.subr.mxu0 0.0
      %1704 = vmatpush1.xpose.msra.mxu0 0.0
      %1705 = vmatprep.subr.mxu0 0.0
      %1706 = vmatpush1.xpose.msra.mxu0 0.0
      %1707 = vmatprep.subr.mxu0 0.0
      %1708 = vmatpush1.xpose.msra.mxu0 0.0
      %1709 = vmatprep.subr.mxu0 0.0
      %1710 = vmatpush1.xpose.msra.mxu0 0.0
      %1711 = vmatprep.subr.mxu0 0.0
      %1712 = vmatpush1.xpose.msra.mxu0 0.0
      %1713 = vmatprep.subr.mxu0 0.0
      %1714 = vmatpush1.xpose.msra.mxu0 0.0
      %1715 = vmatprep.subr.mxu0 0.0
      %1716 = vmatpush1.xpose.msra.mxu0 0.0
      %1717 = vmatprep.subr.mxu0 0.0
      %1718 = vmatpush1.xpose.msra.mxu0 0.0
      %1719 = vmatprep.subr.mxu0 0.0
      %1720 = vmatpush1.xpose.msra.mxu0 0.0
      %1721 = vmatprep.subr.mxu0 0.0
      %1722 = vmatpush1.xpose.msra.mxu0 0.0
      %1723 = vmatprep.subr.mxu0 0.0
      %1724 = vmatpush1.xpose.msra.mxu0 0.0
      %1725 = vmatprep.subr.mxu0 0.0
      %1726 = vmatpush1.xpose.msra.mxu0 0.0
      %1727 = vmatprep.subr.mxu0 0.0
      %1728 = vmatpush1.xpose.msra.mxu0 0.0
      %1729 = vmatprep.subr.mxu0 0.0
      %1730 = vmatpush1.xpose.msra.mxu0 0.0
      %1731 = vmatprep.subr.mxu0 0.0
      %1732 = vmatpush1.xpose.msra.mxu0 0.0
      %1733 = vmatprep.mubr.f32.mxu0 0.0
      %1734 = vmatmul.mubr.f32.gmra.mrb[0].mxu0 %v1664
      %v1735 = vpop.f32.mrb[0].mxu0
      %v1736 = vadd.f32 0.0, %v1735
      %v1737 = vpop.f32.mrb[0].mxu0
      %1738 = vdwg.mxu0
      %v1739 = vmul.f32 %v1736, 0.25
      %v1740 = vsel %vm919, %v1739, -inf
      %1741 = vmax.xlane.f32.xlu0 %v1740
      %v1742 = vpop.xlane.xlu0 %1741
      %v1743 = vsub.f32 %v1739, %v1742
      %v1744 = vmul.f32 %v1743, 1.442695
      %v1745 = vpow.pop %v1744
      %v1746 = vsel %vm919, %v1745, 0.0
      %1747 = vadd.xlane.f32.xlu0 %v1746
      %v1748 = vpop.xlane.xlu0 %1747
      %v1749 = vrcp.pop %v1748
      %v1750 = vmul.f32 %v1745, %v1749
      %v1751 = vpack.c.bf16 %v1750, %v1750
      %v1752 = vpack.c.bf16 %v1658, %v1658
      %v1754 = vsel %vm933, %v1751, 0
      %v1757 = vand.u32 %v1752, %v940
      %1759 = vmatprep.subr.bf16.mxu0 0
      %1760 = vmatpush1.bf16.msra.mxu0 %v1757
      %1761 = vmatprep.subr.bf16.mxu0 0
      %1762 = vmatpush1.bf16.msra.mxu0 0
      %1763 = vmatprep.subr.bf16.mxu0 0
      %1764 = vmatpush1.bf16.msra.mxu0 0
      %1765 = vmatprep.subr.bf16.mxu0 0
      %1766 = vmatpush1.bf16.msra.mxu0 0
      %1767 = vmatprep.subr.bf16.mxu0 0
      %1768 = vmatpush1.bf16.msra.mxu0 0
      %1769 = vmatprep.subr.bf16.mxu0 0
      %1770 = vmatpush1.bf16.msra.mxu0 0
      %1771 = vmatprep.subr.bf16.mxu0 0
      %1772 = vmatpush1.bf16.msra.mxu0 0
      %1773 = vmatprep.subr.bf16.mxu0 0
      %1774 = vmatpush1.bf16.msra.mxu0 0
      %1775 = vmatprep.subr.bf16.mxu0 0
      %1776 = vmatpush1.bf16.msra.mxu0 0
      %1777 = vmatprep.subr.bf16.mxu0 0
      %1778 = vmatpush1.bf16.msra.mxu0 0
      %1779 = vmatprep.subr.bf16.mxu0 0
      %1780 = vmatpush1.bf16.msra.mxu0 0
      %1781 = vmatprep.subr.bf16.mxu0 0
      %1782 = vmatpush1.bf16.msra.mxu0 0
      %1783 = vmatprep.subr.bf16.mxu0 0
      %1784 = vmatpush1.bf16.msra.mxu0 0
      %1785 = vmatprep.subr.bf16.mxu0 0
      %1786 = vmatpush1.bf16.msra.mxu0 0
      %1787 = vmatprep.subr.bf16.mxu0 0
      %1788 = vmatpush1.bf16.msra.mxu0 0
      %1789 = vmatprep.subr.bf16.mxu0 0
      %1790 = vmatpush1.bf16.msra.mxu0 0
      %1791 = vmatprep.mubr.bf16.mxu0 0
      %1792 = vmatmul.mubr.bf16.gmra.mrb[0].mxu0 %v1754
      %v1793 = vpop.f32.mrb[0].mxu0
      %v1794 = vadd.f32 0.0, %v1793
      %v1795 = vpop.f32.mrb[0].mxu0
      %v1796 = vpop.f32.mrb[0].mxu0
      %v1797 = vpop.f32.mrb[0].mxu0
      %1798 = vdwg.mxu0
      %v1799 = vpack.c.bf16 %v1794, %v1794
      %s1800 = scalar_lea.vmem %s6, 16
      %v1801 = vld [vmem:[%s1800] sm:$0xf]
      %v1802 = vld [vmem:[%s1800 + $0x4] sm:$0xf]
      %v1805 = vunpack.c.l.b16 %v1801
      %v1806 = vunpack.c.l.b16 %v1802
      %v1807 = vpack.c.b16 %v1806, %v1805
      %v1810 = vsel %vm544, %v1799, 0
      %1812 = vmatprep.subr.bf16.mxu0 0
      %1813 = vmatpush1.bf16.msra.mxu0 %v1807
      %1814 = vmatprep.subr.bf16.mxu0 0
      %1815 = vmatpush1.bf16.msra.mxu0 0
      %1816 = vmatprep.subr.bf16.mxu0 0
      %1817 = vmatpush1.bf16.msra.mxu0 0
      %1818 = vmatprep.subr.bf16.mxu0 0
      %1819 = vmatpush1.bf16.msra.mxu0 0
      %1820 = vmatprep.subr.bf16.mxu0 0
      %1821 = vmatpush1.bf16.msra.mxu0 0
      %1822 = vmatprep.subr.bf16.mxu0 0
      %1823 = vmatpush1.bf16.msra.mxu0 0
      %1824 = vmatprep.subr.bf16.mxu0 0
      %1825 = vmatpush1.bf16.msra.mxu0 0
      %1826 = vmatprep.subr.bf16.mxu0 0
      %1827 = vmatpush1.bf16.msra.mxu0 0
      %1828 = vmatprep.subr.bf16.mxu0 0
      %1829 = vmatpush1.bf16.msra.mxu0 0
      %1830 = vmatprep.subr.bf16.mxu0 0
      %1831 = vmatpush1.bf16.msra.mxu0 0
      %1832 = vmatprep.subr.bf16.mxu0 0
      %1833 = vmatpush1.bf16.msra.mxu0 0
      %1834 = vmatprep.subr.bf16.mxu0 0
      %1835 = vmatpush1.bf16.msra.mxu0 0
      %1836 = vmatprep.subr.bf16.mxu0 0
      %1837 = vmatpush1.bf16.msra.mxu0 0
      %1838 = vmatprep.subr.bf16.mxu0 0
      %1839 = vmatpush1.bf16.msra.mxu0 0
      %1840 = vmatprep.subr.bf16.mxu0 0
      %1841 = vmatpush1.bf16.msra.mxu0 0
      %1842 = vmatprep.subr.bf16.mxu0 0
      %1843 = vmatpush1.bf16.msra.mxu0 0
      %1844 = vmatprep.mubr.bf16.mxu0 0
      %1845 = vmatmul.mubr.bf16.gmra.mrb[0].mxu0 %v1810
      %v1846 = vpop.f32.mrb[0].mxu0
      %v1847 = vadd.f32 0.0, %v1846
      %v1848 = vpop.f32.mrb[0].mxu0
      %v1849 = vpop.f32.mrb[0].mxu0
      %v1850 = vpop.f32.mrb[0].mxu0
      %1851 = vdwg.mxu0
      %v1852 = vadd.f32 %v1439, %v1847
      %s1853 = scalar_lea.vmem %s5, 96
      %v1854 = vld [vmem:[%s1853] sm:$0xf]
      %v1855 = vld [vmem:[%s1853 + $0x4] sm:$0xf]
      %v1856 = vld [vmem:[%s1853 + $0x8] sm:$0xf]
      %v1857 = vld [vmem:[%s1853 + $0xc] sm:$0xf]
      %v1858 = vld [vmem:[%s1853 + $0x10] sm:$0xf]
      %v1859 = vld [vmem:[%s1853 + $0x14] sm:$0xf]
      %v1860 = vld [vmem:[%s1853 + $0x18] sm:$0xf]
      %v1861 = vld [vmem:[%s1853 + $0x1c] sm:$0xf]
      %v1870 = vunpack.c.l.b16 %v1854
      %v1871 = vunpack.c.l.b16 %v1855
      %v1872 = vunpack.c.l.b16 %v1856
      %v1873 = vunpack.c.l.b16 %v1857
      %v1874 = vunpack.c.l.b16 %v1858
      %v1875 = vunpack.c.l.b16 %v1859
      %v1876 = vunpack.c.l.b16 %v1860
      %v1877 = vunpack.c.l.b16 %v1861
      %v1878 = vpack.c.b16 %v1871, %v1870
      %v1879 = vpack.c.b16 %v1873, %v1872
      %v1880 = vpack.c.b16 %v1875, %v1874
      %v1881 = vpack.c.b16 %v1877, %v1876
      %1886 = vmatprep.subr.bf16.mxu0 0
      %1887 = vmatpush1.bf16.msra.mxu0 %v1878
      %1888 = vmatprep.subr.bf16.mxu0 0
      %1889 = vmatpush1.bf16.msra.mxu0 %v1879
      %1890 = vmatprep.subr.bf16.mxu0 0
      %1891 = vmatpush1.bf16.msra.mxu0 %v1880
      %1892 = vmatprep.subr.bf16.mxu0 0
      %1893 = vmatpush1.bf16.msra.mxu0 %v1881
      %1894 = vmatprep.subr.bf16.mxu0 0
      %1895 = vmatpush1.bf16.msra.mxu0 0
      %1896 = vmatprep.subr.bf16.mxu0 0
      %1897 = vmatpush1.bf16.msra.mxu0 0
      %1898 = vmatprep.subr.bf16.mxu0 0
      %1899 = vmatpush1.bf16.msra.mxu0 0
      %1900 = vmatprep.subr.bf16.mxu0 0
      %1901 = vmatpush1.bf16.msra.mxu0 0
      %1902 = vmatprep.subr.bf16.mxu0 0
      %1903 = vmatpush1.bf16.msra.mxu0 0
      %1904 = vmatprep.subr.bf16.mxu0 0
      %1905 = vmatpush1.bf16.msra.mxu0 0
      %1906 = vmatprep.subr.bf16.mxu0 0
      %1907 = vmatpush1.bf16.msra.mxu0 0
      %1908 = vmatprep.subr.bf16.mxu0 0
      %1909 = vmatpush1.bf16.msra.mxu0 0
      %1910 = vmatprep.subr.bf16.mxu0 0
      %1911 = vmatpush1.bf16.msra.mxu0 0
      %1912 = vmatprep.subr.bf16.mxu0 0
      %1913 = vmatpush1.bf16.msra.mxu0 0
      %1914 = vmatprep.subr.bf16.mxu0 0
      %1915 = vmatpush1.bf16.msra.mxu0 0
      %1916 = vmatprep.subr.bf16.mxu0 0
      %1917 = vmatpush1.bf16.msra.mxu0 0
      %1918 = vmatprep.mubr.bf16.mxu0 0
      %1919 = vmatmul.mubr.bf16.gmra.mrb[0].mxu0 %v654
      %v1920 = vpop.f32.mrb[0].mxu0
      %v1921 = vadd.f32 0.0, %v1920
      %v1922 = vpop.f32.mrb[0].mxu0
      %v1923 = vpop.f32.mrb[0].mxu0
      %v1924 = vpop.f32.mrb[0].mxu0
      %1925 = vdwg.mxu0
      %s1926 = scalar_lea.vmem %s5, 224
      %v1927 = vld [vmem:[%s1926] sm:$0xf]
      %v1928 = vld [vmem:[%s1926 + $0x4] sm:$0xf]
      %v1929 = vld [vmem:[%s1926 + $0x8] sm:$0xf]
      %v1930 = vld [vmem:[%s1926 + $0xc] sm:$0xf]
      %v1931 = vld [vmem:[%s1926 + $0x10] sm:$0xf]
      %v1932 = vld [vmem:[%s1926 + $0x14] sm:$0xf]
      %v1933 = vld [vmem:[%s1926 + $0x18] sm:$0xf]
      %v1934 = vld [vmem:[%s1926 + $0x1c] sm:$0xf]
      %v1943 = vunpack.c.l.b16 %v1927
      %v1944 = vunpack.c.l.b16 %v1928
      %v1945 = vunpack.c.l.b16 %v1929
      %v1946 = vunpack.c.l.b16 %v1930
      %v1947 = vunpack.c.l.b16 %v1931
      %v1948 = vunpack.c.l.b16 %v1932
      %v1949 = vunpack.c.l.b16 %v1933
      %v1950 = vunpack.c.l.b16 %v1934
      %v1951 = vpack.c.b16 %v1944, %v1943
      %v1952 = vpack.c.b16 %v1946, %v1945
      %v1953 = vpack.c.b16 %v1948, %v1947
      %v1954 = vpack.c.b16 %v1950, %v1949
      %1959 = vmatprep.subr.bf16.mxu0 0
      %1960 = vmatpush1.bf16.msra.mxu0 %v1951
      %1961 = vmatprep.subr.bf16.mxu0 0
      %1962 = vmatpush1.bf16.msra.mxu0 %v1952
      %1963 = vmatprep.subr.bf16.mxu0 0
      %1964 = vmatpush1.bf16.msra.mxu0 %v1953
      %1965 = vmatprep.subr.bf16.mxu0 0
      %1966 = vmatpush1.bf16.msra.mxu0 %v1954
      %1967 = vmatprep.subr.bf16.mxu0 0
      %1968 = vmatpush1.bf16.msra.mxu0 0
      %1969 = vmatprep.subr.bf16.mxu0 0
      %1970 = vmatpush1.bf16.msra.mxu0 0
      %1971 = vmatprep.subr.bf16.mxu0 0
      %1972 = vmatpush1.bf16.msra.mxu0 0
      %1973 = vmatprep.subr.bf16.mxu0 0
      %1974 = vmatpush1.bf16.msra.mxu0 0
      %1975 = vmatprep.subr.bf16.mxu0 0
      %1976 = vmatpush1.bf16.msra.mxu0 0
      %1977 = vmatprep.subr.bf16.mxu0 0
      %1978 = vmatpush1.bf16.msra.mxu0 0
      %1979 = vmatprep.subr.bf16.mxu0 0
      %1980 = vmatpush1.bf16.msra.mxu0 0
      %1981 = vmatprep.subr.bf16.mxu0 0
      %1982 = vmatpush1.bf16.msra.mxu0 0
      %1983 = vmatprep.subr.bf16.mxu0 0
      %1984 = vmatpush1.bf16.msra.mxu0 0
      %1985 = vmatprep.subr.bf16.mxu0 0
      %1986 = vmatpush1.bf16.msra.mxu0 0
      %1987 = vmatprep.subr.bf16.mxu0 0
      %1988 = vmatpush1.bf16.msra.mxu0 0
      %1989 = vmatprep.subr.bf16.mxu0 0
      %1990 = vmatpush1.bf16.msra.mxu0 0
      %1991 = vmatprep.mubr.bf16.mxu0 0
      %1992 = vmatmul.mubr.bf16.gmra.mrb[0].mxu0 %v654
      %v1993 = vpop.f32.mrb[0].mxu0
      %v1994 = vadd.f32 0.0, %v1993
      %v1995 = vpop.f32.mrb[0].mxu0
      %v1996 = vpop.f32.mrb[0].mxu0
      %v1997 = vpop.f32.mrb[0].mxu0
      %1998 = vdwg.mxu0
      %s1999 = scalar_lea.vmem %s5, 352
      %v2000 = vld [vmem:[%s1999] sm:$0xf]
      %v2001 = vld [vmem:[%s1999 + $0x4] sm:$0xf]
      %v2002 = vld [vmem:[%s1999 + $0x8] sm:$0xf]
      %v2003 = vld [vmem:[%s1999 + $0xc] sm:$0xf]
      %v2004 = vld [vmem:[%s1999 + $0x10] sm:$0xf]
      %v2005 = vld [vmem:[%s1999 + $0x14] sm:$0xf]
      %v2006 = vld [vmem:[%s1999 + $0x18] sm:$0xf]
      %v2007 = vld [vmem:[%s1999 + $0x1c] sm:$0xf]
      %v2016 = vunpack.c.l.b16 %v2000
      %v2017 = vunpack.c.l.b16 %v2001
      %v2018 = vunpack.c.l.b16 %v2002
      %v2019 = vunpack.c.l.b16 %v2003
      %v2020 = vunpack.c.l.b16 %v2004
      %v2021 = vunpack.c.l.b16 %v2005
      %v2022 = vunpack.c.l.b16 %v2006
      %v2023 = vunpack.c.l.b16 %v2007
      %v2024 = vpack.c.b16 %v2017, %v2016
      %v2025 = vpack.c.b16 %v2019, %v2018
      %v2026 = vpack.c.b16 %v2021, %v2020
      %v2027 = vpack.c.b16 %v2023, %v2022
      %2032 = vmatprep.subr.bf16.mxu0 0
      %2033 = vmatpush1.bf16.msra.mxu0 %v2024
      %2034 = vmatprep.subr.bf16.mxu0 0
      %2035 = vmatpush1.bf16.msra.mxu0 %v2025
      %2036 = vmatprep.subr.bf16.mxu0 0
      %2037 = vmatpush1.bf16.msra.mxu0 %v2026
      %2038 = vmatprep.subr.bf16.mxu0 0
      %2039 = vmatpush1.bf16.msra.mxu0 %v2027
      %2040 = vmatprep.subr.bf16.mxu0 0
      %2041 = vmatpush1.bf16.msra.mxu0 0
      %2042 = vmatprep.subr.bf16.mxu0 0
      %2043 = vmatpush1.bf16.msra.mxu0 0
      %2044 = vmatprep.subr.bf16.mxu0 0
      %2045 = vmatpush1.bf16.msra.mxu0 0
      %2046 = vmatprep.subr.bf16.mxu0 0
      %2047 = vmatpush1.bf16.msra.mxu0 0
      %2048 = vmatprep.subr.bf16.mxu0 0
      %2049 = vmatpush1.bf16.msra.mxu0 0
      %2050 = vmatprep.subr.bf16.mxu0 0
      %2051 = vmatpush1.bf16.msra.mxu0 0
      %2052 = vmatprep.subr.bf16.mxu0 0
      %2053 = vmatpush1.bf16.msra.mxu0 0
      %2054 = vmatprep.subr.bf16.mxu0 0
      %2055 = vmatpush1.bf16.msra.mxu0 0
      %2056 = vmatprep.subr.bf16.mxu0 0
      %2057 = vmatpush1.bf16.msra.mxu0 0
      %2058 = vmatprep.subr.bf16.mxu0 0
      %2059 = vmatpush1.bf16.msra.mxu0 0
      %2060 = vmatprep.subr.bf16.mxu0 0
      %2061 = vmatpush1.bf16.msra.mxu0 0
      %2062 = vmatprep.subr.bf16.mxu0 0
      %2063 = vmatpush1.bf16.msra.mxu0 0
      %2064 = vmatprep.mubr.bf16.mxu0 0
      %2065 = vmatmul.mubr.bf16.gmra.mrb[0].mxu0 %v654
      %v2066 = vpop.f32.mrb[0].mxu0
      %v2067 = vadd.f32 0.0, %v2066
      %v2068 = vpop.f32.mrb[0].mxu0
      %v2069 = vpop.f32.mrb[0].mxu0
      %v2070 = vpop.f32.mrb[0].mxu0
      %2071 = vdwg.mxu0
      %v2073 = vsel %vm544, %v1921, 0
      %v2076 = vsel %vm544, %v1994, 0
      %2078 = vmatprep.subr.mxu0 0.0
      %2079 = vmatpush1.xpose.msra.mxu0 %v2076
      %2080 = vmatprep.subr.mxu0 0.0
      %2081 = vmatpush1.xpose.msra.mxu0 0.0
      %2082 = vmatprep.subr.mxu0 0.0
      %2083 = vmatpush1.xpose.msra.mxu0 0.0
      %2084 = vmatprep.subr.mxu0 0.0
      %2085 = vmatpush1.xpose.msra.mxu0 0.0
      %2086 = vmatprep.subr.mxu0 0.0
      %2087 = vmatpush1.xpose.msra.mxu0 0.0
      %2088 = vmatprep.subr.mxu0 0.0
      %2089 = vmatpush1.xpose.msra.mxu0 0.0
      %2090 = vmatprep.subr.mxu0 0.0
      %2091 = vmatpush1.xpose.msra.mxu0 0.0
      %2092 = vmatprep.subr.mxu0 0.0
      %2093 = vmatpush1.xpose.msra.mxu0 0.0
      %2094 = vmatprep.subr.mxu0 0.0
      %2095 = vmatpush1.xpose.msra.mxu0 0.0
      %2096 = vmatprep.subr.mxu0 0.0
      %2097 = vmatpush1.xpose.msra.mxu0 0.0
      %2098 = vmatprep.subr.mxu0 0.0
      %2099 = vmatpush1.xpose.msra.mxu0 0.0
      %2100 = vmatprep.subr.mxu0 0.0
      %2101 = vmatpush1.xpose.msra.mxu0 0.0
      %2102 = vmatprep.subr.mxu0 0.0
      %2103 = vmatpush1.xpose.msra.mxu0 0.0
      %2104 = vmatprep.subr.mxu0 0.0
      %2105 = vmatpush1.xpose.msra.mxu0 0.0
      %2106 = vmatprep.subr.mxu0 0.0
      %2107 = vmatpush1.xpose.msra.mxu0 0.0
      %2108 = vmatprep.subr.mxu0 0.0
      %2109 = vmatpush1.xpose.msra.mxu0 0.0
      %2110 = vmatprep.subr.mxu0 0.0
      %2111 = vmatpush1.xpose.msra.mxu0 0.0
      %2112 = vmatprep.subr.mxu0 0.0
      %2113 = vmatpush1.xpose.msra.mxu0 0.0
      %2114 = vmatprep.subr.mxu0 0.0
      %2115 = vmatpush1.xpose.msra.mxu0 0.0
      %2116 = vmatprep.subr.mxu0 0.0
      %2117 = vmatpush1.xpose.msra.mxu0 0.0
      %2118 = vmatprep.subr.mxu0 0.0
      %2119 = vmatpush1.xpose.msra.mxu0 0.0
      %2120 = vmatprep.subr.mxu0 0.0
      %2121 = vmatpush1.xpose.msra.mxu0 0.0
      %2122 = vmatprep.subr.mxu0 0.0
      %2123 = vmatpush1.xpose.msra.mxu0 0.0
      %2124 = vmatprep.subr.mxu0 0.0
      %2125 = vmatpush1.xpose.msra.mxu0 0.0
      %2126 = vmatprep.subr.mxu0 0.0
      %2127 = vmatpush1.xpose.msra.mxu0 0.0
      %2128 = vmatprep.subr.mxu0 0.0
      %2129 = vmatpush1.xpose.msra.mxu0 0.0
      %2130 = vmatprep.subr.mxu0 0.0
      %2131 = vmatpush1.xpose.msra.mxu0 0.0
      %2132 = vmatprep.subr.mxu0 0.0
      %2133 = vmatpush1.xpose.msra.mxu0 0.0
      %2134 = vmatprep.subr.mxu0 0.0
      %2135 = vmatpush1.xpose.msra.mxu0 0.0
      %2136 = vmatprep.subr.mxu0 0.0
      %2137 = vmatpush1.xpose.msra.mxu0 0.0
      %2138 = vmatprep.subr.mxu0 0.0
      %2139 = vmatpush1.xpose.msra.mxu0 0.0
      %2140 = vmatprep.subr.mxu0 0.0
      %2141 = vmatpush1.xpose.msra.mxu0 0.0
      %2142 = vmatprep.mubr.f32.mxu0 0.0
      %2143 = vmatmul.mubr.f32.gmra.mrb[0].mxu0 %v2073
      %v2144 = vpop.f32.mrb[0].mxu0
      %v2145 = vadd.f32 0.0, %v2144
      %v2146 = vpop.f32.mrb[0].mxu0
      %2147 = vdwg.mxu0
      %v2148 = vmul.f32 %v2145, 0.25
      %v2149 = vsel %vm919, %v2148, -inf
      %2150 = vmax.xlane.f32.xlu0 %v2149
      %v2151 = vpop.xlane.xlu0 %2150
      %v2152 = vsub.f32 %v2148, %v2151
      %v2153 = vmul.f32 %v2152, 1.442695
      %v2154 = vpow.pop %v2153
      %v2155 = vsel %vm919, %v2154, 0.0
      %2156 = vadd.xlane.f32.xlu0 %v2155
      %v2157 = vpop.xlane.xlu0 %2156
      %v2158 = vrcp.pop %v2157
      %v2159 = vmul.f32 %v2154, %v2158
      %v2160 = vpack.c.bf16 %v2159, %v2159
      %v2161 = vpack.c.bf16 %v2067, %v2067
      %v2163 = vsel %vm933, %v2160, 0
      %v2166 = vand.u32 %v2161, %v940
      %2168 = vmatprep.subr.bf16.mxu0 0
      %2169 = vmatpush1.bf16.msra.mxu0 %v2166
      %2170 = vmatprep.subr.bf16.mxu0 0
      %2171 = vmatpush1.bf16.msra.mxu0 0
      %2172 = vmatprep.subr.bf16.mxu0 0
      %2173 = vmatpush1.bf16.msra.mxu0 0
      %2174 = vmatprep.subr.bf16.mxu0 0
      %2175 = vmatpush1.bf16.msra.mxu0 0
      %2176 = vmatprep.subr.bf16.mxu0 0
      %2177 = vmatpush1.bf16.msra.mxu0 0
      %2178 = vmatprep.subr.bf16.mxu0 0
      %2179 = vmatpush1.bf16.msra.mxu0 0
      %2180 = vmatprep.subr.bf16.mxu0 0
      %2181 = vmatpush1.bf16.msra.mxu0 0
      %2182 = vmatprep.subr.bf16.mxu0 0
      %2183 = vmatpush1.bf16.msra.mxu0 0
      %2184 = vmatprep.subr.bf16.mxu0 0
      %2185 = vmatpush1.bf16.msra.mxu0 0
      %2186 = vmatprep.subr.bf16.mxu0 0
      %2187 = vmatpush1.bf16.msra.mxu0 0
      %2188 = vmatprep.subr.bf16.mxu0 0
      %2189 = vmatpush1.bf16.msra.mxu0 0
      %2190 = vmatprep.subr.bf16.mxu0 0
      %2191 = vmatpush1.bf16.msra.mxu0 0
      %2192 = vmatprep.subr.bf16.mxu0 0
      %2193 = vmatpush1.bf16.msra.mxu0 0
      %2194 = vmatprep.subr.bf16.mxu0 0
      %2195 = vmatpush1.bf16.msra.mxu0 0
      %2196 = vmatprep.subr.bf16.mxu0 0
      %2197 = vmatpush1.bf16.msra.mxu0 0
      %2198 = vmatprep.subr.bf16.mxu0 0
      %2199 = vmatpush1.bf16.msra.mxu0 0
      %2200 = vmatprep.mubr.bf16.mxu0 0
      %2201 = vmatmul.mubr.bf16.gmra.mrb[0].mxu0 %v2163
      %v2202 = vpop.f32.mrb[0].mxu0
      %v2203 = vadd.f32 0.0, %v2202
      %v2204 = vpop.f32.mrb[0].mxu0
      %v2205 = vpop.f32.mrb[0].mxu0
      %v2206 = vpop.f32.mrb[0].mxu0
      %2207 = vdwg.mxu0
      %v2208 = vpack.c.bf16 %v2203, %v2203
      %s2209 = scalar_lea.vmem %s6, 24
      %v2210 = vld [vmem:[%s2209] sm:$0xf]
      %v2211 = vld [vmem:[%s2209 + $0x4] sm:$0xf]
      %v2214 = vunpack.c.l.b16 %v2210
      %v2215 = vunpack.c.l.b16 %v2211
      %v2216 = vpack.c.b16 %v2215, %v2214
      %v2219 = vsel %vm544, %v2208, 0
      %2221 = vmatprep.subr.bf16.mxu0 0
      %2222 = vmatpush1.bf16.msra.mxu0 %v2216
      %2223 = vmatprep.subr.bf16.mxu0 0
      %2224 = vmatpush1.bf16.msra.mxu0 0
      %2225 = vmatprep.subr.bf16.mxu0 0
      %2226 = vmatpush1.bf16.msra.mxu0 0
      %2227 = vmatprep.subr.bf16.mxu0 0
      %2228 = vmatpush1.bf16.msra.mxu0 0
      %2229 = vmatprep.subr.bf16.mxu0 0
      %2230 = vmatpush1.bf16.msra.mxu0 0
      %2231 = vmatprep.subr.bf16.mxu0 0
      %2232 = vmatpush1.bf16.msra.mxu0 0
      %2233 = vmatprep.subr.bf16.mxu0 0
      %2234 = vmatpush1.bf16.msra.mxu0 0
      %2235 = vmatprep.subr.bf16.mxu0 0
      %2236 = vmatpush1.bf16.msra.mxu0 0
      %2237 = vmatprep.subr.bf16.mxu0 0
      %2238 = vmatpush1.bf16.msra.mxu0 0
      %2239 = vmatprep.subr.bf16.mxu0 0
      %2240 = vmatpush1.bf16.msra.mxu0 0
      %2241 = vmatprep.subr.bf16.mxu0 0
      %2242 = vmatpush1.bf16.msra.mxu0 0
      %2243 = vmatprep.subr.bf16.mxu0 0
      %2244 = vmatpush1.bf16.msra.mxu0 0
      %2245 = vmatprep.subr.bf16.mxu0 0
      %2246 = vmatpush1.bf16.msra.mxu0 0
      %2247 = vmatprep.subr.bf16.mxu0 0
      %2248 = vmatpush1.bf16.msra.mxu0 0
      %2249 = vmatprep.subr.bf16.mxu0 0
      %2250 = vmatpush1.bf16.msra.mxu0 0
      %2251 = vmatprep.subr.bf16.mxu0 0
      %2252 = vmatpush1.bf16.msra.mxu0 0
      %2253 = vmatprep.mubr.bf16.mxu0 0
      %2254 = vmatmul.mubr.bf16.gmra.mrb[0].mxu0 %v2219
      %v2255 = vpop.f32.mrb[0].mxu0
      %v2256 = vadd.f32 0.0, %v2255
      %v2257 = vpop.f32.mrb[0].mxu0
      %v2258 = vpop.f32.mrb[0].mxu0
      %v2259 = vpop.f32.mrb[0].mxu0
      %2260 = vdwg.mxu0
      %v2261 = vadd.f32 %v1852, %v2256
      %v2262 = vadd.f32 %v583, %v2261
      %v2263 = vld [vmem:[%s7] sm:$0x1]
      %v2265 = vlaneseq
      %v2266 = vshrl.u32 %v2265, 7
      %v2267 = vsub.s32 0, %v2266
      %v2268 = vrot.slane %v2263, %v2267
      %v2270 = vadd.f32 %v2262, %v2268
      %v2271 = vld [vmem:[%s8] sm:$0x1]
      %v2272 = vld [vmem:[%s9] sm:$0x1]
      %v2273 = vsel %vm590, %v2270, 0.0
      %2274 = vadd.xlane.f32.xlu0 %v2273
      %v2275 = vpop.xlane.xlu0 %2274
      %v2276 = vmul.f32 %v2275, %v594
      %v2277 = vsub.f32 %v2270, %v2276
      %v2278 = vmul.f32 %v2277, %v2277
      %v2279 = vsel %vm590, %v2278, 0.0
      %2280 = vadd.xlane.f32.xlu0 %v2279
      %v2281 = vpop.xlane.xlu0 %2280
      %v2282 = vmul.f32 %v2281, %v594
      %v2283 = vadd.f32 %v2282, 1e-05
      %v2284 = vrsqrt.pop %v2283
      %v2285 = vmul.f32 %v2277, %v2284
      %v2287 = vlaneseq
      %v2288 = vshrl.u32 %v2287, 7
      %v2289 = vsub.s32 0, %v2288
      %v2290 = vrot.slane %v2271, %v2289
      %v2292 = vmul.f32 %v2285, %v2290
      %v2294 = vlaneseq
      %v2295 = vshrl.u32 %v2294, 7
      %v2296 = vsub.s32 0, %v2295
      %v2297 = vrot.slane %v2272, %v2296
      %v2299 = vadd.f32 %v2292, %v2297
      %v2300 = vpack.c.bf16 %v2299, %v2299
      %v2301 = vld [vmem:[%s10] sm:$0xff]
      %v2302 = vld [vmem:[%s10 + $0x8] sm:$0xff]
      %v2303 = vld [vmem:[%s10 + $0x10] sm:$0xff]
      %v2304 = vld [vmem:[%s10 + $0x18] sm:$0xff]
      %v2305 = vld [vmem:[%s10 + $0x20] sm:$0xff]
      %v2306 = vld [vmem:[%s10 + $0x28] sm:$0xff]
      %v2307 = vld [vmem:[%s10 + $0x30] sm:$0xff]
      %v2308 = vld [vmem:[%s10 + $0x38] sm:$0xff]
      %v2309 = vld [vmem:[%s11] sm:$0x3]
      %v2311 = vlaneseq
      %v2312 = vshrl.u32 %v2311, 7
      %v2313 = vsub.s32 0, %v2312
      %v2314 = vrot.slane %v2309, %v2313
      %v2315 = vlaneseq
      %v2316 = vshrl.u32 %v2315, 7
      %v2317 = vsub.s32 1, %v2316
      %v2318 = vrot.slane %v2309, %v2317
      %v2329 = vunpack.c.l.b16 %v2301
      %v2330 = vunpack.c.h.b16 %v2301
      %v2331 = vunpack.c.l.b16 %v2302
      %v2332 = vunpack.c.h.b16 %v2302
      %v2333 = vunpack.c.l.b16 %v2303
      %v2334 = vunpack.c.h.b16 %v2303
      %v2335 = vunpack.c.l.b16 %v2304
      %v2336 = vunpack.c.h.b16 %v2304
      %v2337 = vunpack.c.l.b16 %v2305
      %v2338 = vunpack.c.h.b16 %v2305
      %v2339 = vunpack.c.l.b16 %v2306
      %v2340 = vunpack.c.h.b16 %v2306
      %v2341 = vunpack.c.l.b16 %v2307
      %v2342 = vunpack.c.h.b16 %v2307
      %v2343 = vunpack.c.l.b16 %v2308
      %v2344 = vunpack.c.h.b16 %v2308
      %v2345 = vpack.c.b16 %v2331, %v2329
      %v2346 = vpack.c.b16 %v2332, %v2330
      %v2347 = vpack.c.b16 %v2335, %v2333
      %v2348 = vpack.c.b16 %v2336, %v2334
      %v2349 = vpack.c.b16 %v2339, %v2337
      %v2350 = vpack.c.b16 %v2340, %v2338
      %v2351 = vpack.c.b16 %v2343, %v2341
      %v2352 = vpack.c.b16 %v2344, %v2342
      %v2362 = vsel %vm652, %v2300, 0
      %2364 = vmatprep.subr.bf16.mxu0 %v2346
      %2365 = vmatpush1.bf16.msra.mxu0 %v2345
      %2366 = vmatprep.subr.bf16.mxu0 %v2348
      %2367 = vmatpush1.bf16.msra.mxu0 %v2347
      %2368 = vmatprep.subr.bf16.mxu0 %v2350
      %2369 = vmatpush1.bf16.msra.mxu0 %v2349
      %2370 = vmatprep.subr.bf16.mxu0 %v2352
      %2371 = vmatpush1.bf16.msra.mxu0 %v2351
      %2372 = vmatprep.subr.bf16.mxu0 0
      %2373 = vmatpush1.bf16.msra.mxu0 0
      %2374 = vmatprep.subr.bf16.mxu0 0
      %2375 = vmatpush1.bf16.msra.mxu0 0
      %2376 = vmatprep.subr.bf16.mxu0 0
      %2377 = vmatpush1.bf16.msra.mxu0 0
      %2378 = vmatprep.subr.bf16.mxu0 0
      %2379 = vmatpush1.bf16.msra.mxu0 0
      %2380 = vmatprep.subr.bf16.mxu0 0
      %2381 = vmatpush1.bf16.msra.mxu0 0
      %2382 = vmatprep.subr.bf16.mxu0 0
      %2383 = vmatpush1.bf16.msra.mxu0 0
      %2384 = vmatprep.subr.bf16.mxu0 0
      %2385 = vmatpush1.bf16.msra.mxu0 0
      %2386 = vmatprep.subr.bf16.mxu0 0
      %2387 = vmatpush1.bf16.msra.mxu0 0
      %2388 = vmatprep.subr.bf16.mxu0 0
      %2389 = vmatpush1.bf16.msra.mxu0 0
      %2390 = vmatprep.subr.bf16.mxu0 0
      %2391 = vmatpush1.bf16.msra.mxu0 0
      %2392 = vmatprep.subr.bf16.mxu0 0
      %2393 = vmatpush1.bf16.msra.mxu0 0
      %2394 = vmatprep.subr.bf16.mxu0 0
      %2395 = vmatpush1.bf16.msra.mxu0 0
      %2396 = vmatprep.mubr.bf16.mxu0 0
      %2397 = vmatmul.mubr.bf16.gmra.mrb[0].mxu0 %v2362
      %v2398 = vpop.f32.mrb[0].mxu0
      %v2399 = vadd.f32 %v2314, %v2398
      %v2400 = vpop.f32.mrb[0].mxu0
      %v2401 = vadd.f32 %v2318, %v2400
      %v2402 = vpop.f32.mrb[0].mxu0
      %v2403 = vpop.f32.mrb[0].mxu0
      %2404 = vdwg.mxu0
      %v2405 = vmul.f32 %v2399, 0.5
      %v2406 = vmul.f32 %v2401, 0.5
      %v2407 = vmul.f32 %v2399, 0.044715
      %v2408 = vmul.f32 %v2401, 0.044715
      %v2409 = vmul.f32 %v2407, %v2399
      %v2410 = vmul.f32 %v2408, %v2401
      %v2411 = vmul.f32 %v2409, %v2399
      %v2412 = vmul.f32 %v2410, %v2401
      %v2413 = vadd.f32 %v2399, %v2411
      %v2414 = vadd.f32 %v2401, %v2412
      %v2415 = vmul.f32 %v2413, 0.7978846
      %v2416 = vmul.f32 %v2414, 0.7978846
      %v2417 = vtanh.pop %v2415
      %v2418 = vtanh.pop %v2416
      %v2419 = vadd.f32 %v2417, 1.0
      %v2420 = vadd.f32 %v2418, 1.0
      %v2421 = vmul.f32 %v2405, %v2419
      %v2422 = vmul.f32 %v2406, %v2420
      %v2423 = vpack.c.bf16 %v2421, %v2421
      %v2424 = vpack.c.bf16 %v2422, %v2422
      %v2425 = vld [vmem:[%s12] sm:$0xf]
      %v2426 = vld [vmem:[%s12 + $0x4] sm:$0xf]
      %v2427 = vld [vmem:[%s12 + $0x8] sm:$0xf]
      %v2428 = vld [vmem:[%s12 + $0xc] sm:$0xf]
      %v2429 = vld [vmem:[%s12 + $0x10] sm:$0xf]
      %v2430 = vld [vmem:[%s12 + $0x14] sm:$0xf]
      %v2431 = vld [vmem:[%s12 + $0x18] sm:$0xf]
      %v2432 = vld [vmem:[%s12 + $0x1c] sm:$0xf]
      %v2433 = vld [vmem:[%s12 + $0x20] sm:$0xf]
      %v2434 = vld [vmem:[%s12 + $0x24] sm:$0xf]
      %v2435 = vld [vmem:[%s12 + $0x28] sm:$0xf]
      %v2436 = vld [vmem:[%s12 + $0x2c] sm:$0xf]
      %v2437 = vld [vmem:[%s12 + $0x30] sm:$0xf]
      %v2438 = vld [vmem:[%s12 + $0x34] sm:$0xf]
      %v2439 = vld [vmem:[%s12 + $0x38] sm:$0xf]
      %v2440 = vld [vmem:[%s12 + $0x3c] sm:$0xf]
      %v2441 = vld [vmem:[%s12 + $0x40] sm:$0xf]
      %v2442 = vld [vmem:[%s12 + $0x44] sm:$0xf]
      %v2443 = vld [vmem:[%s12 + $0x48] sm:$0xf]
      %v2444 = vld [vmem:[%s12 + $0x4c] sm:$0xf]
      %v2445 = vld [vmem:[%s12 + $0x50] sm:$0xf]
      %v2446 = vld [vmem:[%s12 + $0x54] sm:$0xf]
      %v2447 = vld [vmem:[%s12 + $0x58] sm:$0xf]
      %v2448 = vld [vmem:[%s12 + $0x5c] sm:$0xf]
      %v2449 = vld [vmem:[%s12 + $0x60] sm:$0xf]
      %v2450 = vld [vmem:[%s12 + $0x64] sm:$0xf]
      %v2451 = vld [vmem:[%s12 + $0x68] sm:$0xf]
      %v2452 = vld [vmem:[%s12 + $0x6c] sm:$0xf]
      %v2453 = vld [vmem:[%s12 + $0x70] sm:$0xf]
      %v2454 = vld [vmem:[%s12 + $0x74] sm:$0xf]
      %v2455 = vld [vmem:[%s12 + $0x78] sm:$0xf]
      %v2456 = vld [vmem:[%s12 + $0x7c] sm:$0xf]
      %v2489 = vunpack.c.l.b16 %v2425
      %v2490 = vunpack.c.l.b16 %v2426
      %v2491 = vunpack.c.l.b16 %v2427
      %v2492 = vunpack.c.l.b16 %v2428
      %v2493 = vunpack.c.l.b16 %v2429
      %v2494 = vunpack.c.l.b16 %v2430
      %v2495 = vunpack.c.l.b16 %v2431
      %v2496 = vunpack.c.l.b16 %v2432
      %v2497 = vunpack.c.l.b16 %v2433
      %v2498 = vunpack.c.l.b16 %v2434
      %v2499 = vunpack.c.l.b16 %v2435
      %v2500 = vunpack.c.l.b16 %v2436
      %v2501 = vunpack.c.l.b16 %v2437
      %v2502 = vunpack.c.l.b16 %v2438
      %v2503 = vunpack.c.l.b16 %v2439
      %v2504 = vunpack.c.l.b16 %v2440
      %v2505 = vunpack.c.l.b16 %v2441
      %v2506 = vunpack.c.l.b16 %v2442
      %v2507 = vunpack.c.l.b16 %v2443
      %v2508 = vunpack.c.l.b16 %v2444
      %v2509 = vunpack.c.l.b16 %v2445
      %v2510 = vunpack.c.l.b16 %v2446
      %v2511 = vunpack.c.l.b16 %v2447
      %v2512 = vunpack.c.l.b16 %v2448
      %v2513 = vunpack.c.l.b16 %v2449
      %v2514 = vunpack.c.l.b16 %v2450
      %v2515 = vunpack.c.l.b16 %v2451
      %v2516 = vunpack.c.l.b16 %v2452
      %v2517 = vunpack.c.l.b16 %v2453
      %v2518 = vunpack.c.l.b16 %v2454
      %v2519 = vunpack.c.l.b16 %v2455
      %v2520 = vunpack.c.l.b16 %v2456
      %v2521 = vpack.c.b16 %v2490, %v2489
      %v2522 = vpack.c.b16 %v2492, %v2491
      %v2523 = vpack.c.b16 %v2494, %v2493
      %v2524 = vpack.c.b16 %v2496, %v2495
      %v2525 = vpack.c.b16 %v2498, %v2497
      %v2526 = vpack.c.b16 %v2500, %v2499
      %v2527 = vpack.c.b16 %v2502, %v2501
      %v2528 = vpack.c.b16 %v2504, %v2503
      %v2529 = vpack.c.b16 %v2506, %v2505
      %v2530 = vpack.c.b16 %v2508, %v2507
      %v2531 = vpack.c.b16 %v2510, %v2509
      %v2532 = vpack.c.b16 %v2512, %v2511
      %v2533 = vpack.c.b16 %v2514, %v2513
      %v2534 = vpack.c.b16 %v2516, %v2515
      %v2535 = vpack.c.b16 %v2518, %v2517
      %v2536 = vpack.c.b16 %v2520, %v2519
      %2553 = vmatprep.subr.bf16.mxu0 0
      %2554 = vmatpush1.bf16.msra.mxu0 %v2521
      %2555 = vmatprep.subr.bf16.mxu0 0
      %2556 = vmatpush1.bf16.msra.mxu0 %v2522
      %2557 = vmatprep.subr.bf16.mxu0 0
      %2558 = vmatpush1.bf16.msra.mxu0 %v2523
      %2559 = vmatprep.subr.bf16.mxu0 0
      %2560 = vmatpush1.bf16.msra.mxu0 %v2524
      %2561 = vmatprep.subr.bf16.mxu0 0
      %2562 = vmatpush1.bf16.msra.mxu0 %v2525
      %2563 = vmatprep.subr.bf16.mxu0 0
      %2564 = vmatpush1.bf16.msra.mxu0 %v2526
      %2565 = vmatprep.subr.bf16.mxu0 0
      %2566 = vmatpush1.bf16.msra.mxu0 %v2527
      %2567 = vmatprep.subr.bf16.mxu0 0
      %2568 = vmatpush1.bf16.msra.mxu0 %v2528
      %2569 = vmatprep.subr.bf16.mxu0 0
      %2570 = vmatpush1.bf16.msra.mxu0 %v2529
      %2571 = vmatprep.subr.bf16.mxu0 0
      %2572 = vmatpush1.bf16.msra.mxu0 %v2530
      %2573 = vmatprep.subr.bf16.mxu0 0
      %2574 = vmatpush1.bf16.msra.mxu0 %v2531
      %2575 = vmatprep.subr.bf16.mxu0 0
      %2576 = vmatpush1.bf16.msra.mxu0 %v2532
      %2577 = vmatprep.subr.bf16.mxu0 0
      %2578 = vmatpush1.bf16.msra.mxu0 %v2533
      %2579 = vmatprep.subr.bf16.mxu0 0
      %2580 = vmatpush1.bf16.msra.mxu0 %v2534
      %2581 = vmatprep.subr.bf16.mxu0 0
      %2582 = vmatpush1.bf16.msra.mxu0 %v2535
      %2583 = vmatprep.subr.bf16.mxu0 0
      %2584 = vmatpush1.bf16.msra.mxu0 %v2536
      %2585 = vmatprep.mubr.bf16.mxu0 %v2424
      %2586 = vmatmul.mubr.bf16.gmra.mrb[0].mxu0 %v2423
      %v2587 = vpop.f32.mrb[0].mxu0
      %v2588 = vadd.f32 0.0, %v2587
      %v2589 = vpop.f32.mrb[0].mxu0
      %v2590 = vpop.f32.mrb[0].mxu0
      %v2591 = vpop.f32.mrb[0].mxu0
      %2592 = vdwg.mxu0
      %v2593 = vadd.f32 %v2270, %v2588
      %v2594 = vld [vmem:[%s13] sm:$0x1]
      %v2596 = vlaneseq
      %v2597 = vshrl.u32 %v2596, 7
      %v2598 = vsub.s32 0, %v2597
      %v2599 = vrot.slane %v2594, %v2598
      %v2601 = vadd.f32 %v2593, %v2599
      %2602 = vst.msk [vmem:[%s465] sm:$0x1f] %vm590, %v2601
      %p2603 = scmp.lt.s32.totalorder %s25, 1
      %s2604 = scalar_select %p2603, %s25, 1
      %s2605 = smul.addr %s2604, 8
      %s2606 = scalar_lea.vmem %s14, %s2605
      // Predicated region
      $region77: #{t2t_vit_feature_forward.6} parent=75 // pred_check
        %p2607 = pneg %p342
      $region78: #{t2t_vit_feature_forward.6} parent=75 // pred_check_branch
        %2609 = sbr.rel (%p2607) target = $region80
      $region79: #{t2t_vit_feature_forward.6} parent=75 // pred_region
        _
      $region80: #{t2t_vit_feature_forward.6} parent=75 // pred_fallthru
        _
    $region76: #{t2t_vit_feature_forward.6} parent=5 // pred_fallthru
      _
    %p2610 = scmp.le.s32.totalorder 2, %s20
    // Predicated region
    $region81: #{t2t_vit_feature_forward.6} parent=5 // pred_check
      %p2611 = pneg %p2610
    $region82: #{t2t_vit_feature_forward.6} parent=5 // pred_check_branch
      %2613 = sbr.rel (%p2611) target = $region84
    $region83: #{t2t_vit_feature_forward.6} parent=5 // pred_region
      %s2614 = ssub.s32 %s20, 2
      // Predicated region
      $region85: #{t2t_vit_feature_forward.6} parent=83 // pred_check
        %p2615 = pneg %p348
      $region86: #{t2t_vit_feature_forward.6} parent=83 // pred_check_branch
        %2617 = sbr.rel (%p2615) target = $region88
      $region87: #{t2t_vit_feature_forward.6} parent=83 // pred_region
        %p2618 = scmp.lt.s32.totalorder %s26, 1
        %s2619 = scalar_select %p2618, %s26, 1
        %s2620 = smul.addr %s2619, 8
        %s2621 = scalar_lea.vmem %s14, %s2620
      $region88: #{t2t_vit_feature_forward.6} parent=83 // pred_fallthru
        _
    $region84: #{t2t_vit_feature_forward.6} parent=5 // pred_fallthru
      _
  $region6: #{t2t_vit_feature_forward.6} parent=0 // loop_footer
    %s24 = sadd.s32 1, %s20
  $region7: #{t2t_vit_feature_forward.6} parent=0 // loop_footer_branch
    %19 = sbr.rel target = $region3
  $region8: #{t2t_vit_feature_forward.6} parent=0 // loop_exit
    _

// kernel: t2t_vit_feature_forward.7
$region0: #{t2t_vit_feature_forward.7}
  #allocation0 [shape = 'u32[]', space=smem, size = 0x4, offset = 0x4, fixed_abs, tag = 'smem constant byte address 0x4 - core index']
  #allocation1 [shape = 'u32[144,128]{1,0:T(1,128)}', space=vmem, size = 0x12000, scoped, tag = 'internal scratch']
  %s0 = inlined_call_operand.vmem [shape: f32[2,5,64], index: 0, kind: input, shape index: {}]
  %s1 = inlined_call_operand.vmem [shape: f32[1,64], index: 1, kind: input, shape index: {}]
  %s2 = inlined_call_operand.vmem [shape: f32[1,64], index: 2, kind: input, shape index: {}]
  %s3 = inlined_call_operand.vmem [shape: bf16[12,64,16], index: 3, kind: input, shape index: {}]
  %s4 = inlined_call_operand.vmem [shape: bf16[4,16,64], index: 4, kind: input, shape index: {}]
  %s5 = inlined_call_operand.vmem [shape: f32[1,64], index: 5, kind: input, shape index: {}]
  %s6 = inlined_call_operand.vmem [shape: f32[1,64], index: 6, kind: input, shape index: {}]
  %s7 = inlined_call_operand.vmem [shape: f32[1,64], index: 7, kind: input, shape index: {}]
  %s8 = inlined_call_operand.vmem [shape: bf16[64,256], index: 8, kind: input, shape index: {}]
  %s9 = inlined_call_operand.vmem [shape: f32[1,256], index: 9, kind: input, shape index: {}]
  %s10 = inlined_call_operand.vmem [shape: bf16[256,64], index: 10, kind: input, shape index: {}]
  %s11 = inlined_call_operand.vmem [shape: f32[1,64], index: 11, kind: input, shape index: {}]
  %s12 = inlined_call_operand.vmem [shape: f32[1,64], index: 12, kind: input, shape index: {}]
  %s13 = inlined_call_operand.vmem [shape: f32[1,64], index: 13, kind: input, shape index: {}]
  %s14 = inlined_call_operand.vmem [shape: bf16[64,10], index: 14, kind: input, shape index: {}]
  %s15 = inlined_call_operand.vmem [shape: f32[1,10], index: 15, kind: input, shape index: {}]
  %s16 = inlined_call_operand.hbm [shape: f32[2,5,64], index: 16, kind: output, shape index: {0}]
  %s17 = inlined_call_operand.hbm [shape: f32[2,1,10], index: 17, kind: output, shape index: {1}]
  %18 = xla_tuple %s16, %s17
  %s19 = sld [smem:[#allocation0]]
  $region105: #{t2t_vit_feature_forward.7} parent=0
    _
  %s21 = ssub.s32 1, %s19
  %s22 = scalar_select 0, %s21, %s19
  $region1: #{t2t_vit_feature_forward.7} parent=0
    #allocation2 [shape = 'u8[8192]{0}', space=vmem, size = 0x2000, scoped, tag = 'output window, operand 0']
    #allocation3 [shape = 's32[2]{0}', space=sflag, size = 0x8, scoped, tag = 'scoped memory for t2t_vit_feature_forward.7']
    #allocation4 [shape = 'u8[1024]{0}', space=vmem, size = 0x400, scoped, tag = 'output window, operand 1']
    #allocation5 [shape = 's32[2]{0}', space=sflag, size = 0x8, scoped, tag = 'scoped memory for t2t_vit_feature_forward.7']
    %23 = vsyncpa [#allocation3], 0
    %s24 = scalar_lea.sflag [#allocation3], 1
    %25 = vsyncpa %s24, 0
    %26 = vsyncpa [#allocation5], 0
    %s27 = scalar_lea.sflag [#allocation5], 1
    %28 = vsyncpa %s27, 0
    loop: start=0, step=1, limit=4
    $region2: #{t2t_vit_feature_forward.7} parent=1 // loop_pre_header
      _
    $region3: #{t2t_vit_feature_forward.7} parent=1 // loop_header
      %s30 = sphi 0, %s34
      %p31 = scmp.ge.s32.totalorder %s30, 4
      %s40 = sphi 0, %s42
      %s43 = sphi 0, %s40
      %s44 = sphi 0, %s43
      %s60 = sphi 0, %s44
      %s64 = sphi 0, %s64
      %s66 = sphi 0, %s64
      %s67 = sphi 0, %s66
      %s81 = sphi 0, %s67
      %s85 = sphi 0, %s85
      %s87 = sphi 0, %s85
      %s88 = sphi 0, %s87
      %s102 = sphi 0, %s88
      %s106 = sphi 0, %s106
      %s108 = sphi 0, %s106
      %s109 = sphi 0, %s108
      %s123 = sphi 0, %s109
      %s127 = sphi 0, %s127
      %s129 = sphi 0, %s127
      %s130 = sphi 0, %s129
      %s144 = sphi 0, %s130
      %s148 = sphi 0, %s148
      %s150 = sphi 0, %s148
      %s151 = sphi 0, %s150
      %s165 = sphi 0, %s151
      %s169 = sphi 0, %s169
      %s171 = sphi 0, %s169
      %s172 = sphi 0, %s171
      %s186 = sphi 0, %s172
      %s190 = sphi 0, %s190
      %s192 = sphi 0, %s190
      %s193 = sphi 0, %s192
      %s207 = sphi 0, %s193
      %s211 = sphi 0, %s211
      %s213 = sphi 0, %s211
      %s214 = sphi 0, %s213
      %s228 = sphi 0, %s214
      %s232 = sphi 0, %s232
      %s234 = sphi 0, %s232
      %s235 = sphi 0, %s234
      %s249 = sphi 0, %s235
      %s253 = sphi 0, %s253
      %s255 = sphi 0, %s253
      %s256 = sphi 0, %s255
      %s270 = sphi 0, %s256
      %s274 = sphi 0, %s274
      %s276 = sphi 0, %s274
      %s277 = sphi 0, %s276
      %s291 = sphi 0, %s277
      %s295 = sphi 0, %s295
      %s297 = sphi 0, %s295
      %s298 = sphi 0, %s297
      %s312 = sphi 0, %s298
      %s316 = sphi 0, %s316
      %s318 = sphi 0, %s316
      %s319 = sphi 0, %s318
      %s333 = sphi 0, %s319
      %s337 = sphi 0, %s337
      %s339 = sphi 0, %s337
      %s340 = sphi 0, %s339
      %s354 = sphi 0, %s340
      %s358 = sphi 0, %s358
      %s360 = sphi 0, %s358
      %s361 = sphi 0, %s360
      %s375 = sphi 0, %s361
      %s381 = sphi 0, %s383
      %s384 = sphi 0, %s381
      %s385 = sphi 0, %s384
      %s401 = sphi 0, %s385
      %s407 = sphi 0, %s409
      %s410 = sphi 0, %s407
      %s411 = sphi 0, %s410
      %s427 = sphi 0, %s411
    $region4: #{t2t_vit_feature_forward.7} parent=1 // loop_header_branch
      %33 = sbr.rel (%p31) target = $region8
    $region5: #{t2t_vit_feature_forward.7} parent=1 // loop_body
      %s35 = ssub.s32 %s30, 1
      %s36 = ssub.s32 %s30, 2
      %s37 = sadd.s32 %s30, 1
      %s38 = ssub.s32 %s30, %s37
      %p39 = scmp.eq.s32.totalorder %s38, 0
      %s41 = sadd.s32 %s40, 1
      %s42 = scalar_select %p39, %s40, %s41
      %p45 = pneg %p39
      %p46 = scmp.eq.s32.totalorder %s30, 1
      %p47 = por %p45, %p46
      %p48 = scmp.ne.s32.totalorder %s40, %s43
      %p49 = scmp.eq.s32.totalorder %s30, 0
      %p50 = por %p48, %p49
      %p51 = scmp.ne.s32.totalorder %s40, %s43
      %p52 = scmp.eq.s32.totalorder %s35, 1
      %p53 = por %p51, %p52
      %p54 = scmp.ne.s32.totalorder %s43, %s44
      %p55 = scmp.eq.s32.totalorder %s35, 0
      %p56 = por %p54, %p55
      %p57 = scmp.ne.s32.totalorder %s43, %s44
      %p58 = scmp.eq.s32.totalorder %s36, 1
      %p59 = por %p57, %p58
      %p61 = scmp.ne.s32.totalorder %s44, %s60
      %p62 = scmp.eq.s32.totalorder %s36, 0
      %p63 = por %p61, %p62
      %s65 = sadd.s32 %s64, 1
      %p68 = scmp.eq.s32.totalorder %s30, 1
      %p69 = scmp.ne.s32.totalorder %s64, %s66
      %p70 = scmp.eq.s32.totalorder %s30, 0
      %p71 = por %p69, %p70
      %p72 = scmp.ne.s32.totalorder %s64, %s66
      %p73 = scmp.eq.s32.totalorder %s35, 1
      %p74 = por %p72, %p73
      %p75 = scmp.ne.s32.totalorder %s66, %s67
      %p76 = scmp.eq.s32.totalorder %s35, 0
      %p77 = por %p75, %p76
      %p78 = scmp.ne.s32.totalorder %s66, %s67
      %p79 = scmp.eq.s32.totalorder %s36, 1
      %p80 = por %p78, %p79
      %p82 = scmp.ne.s32.totalorder %s67, %s81
      %p83 = scmp.eq.s32.totalorder %s36, 0
      %p84 = por %p82, %p83
      %s86 = sadd.s32 %s85, 1
      %p89 = scmp.eq.s32.totalorder %s30, 1
      %p90 = scmp.ne.s32.totalorder %s85, %s87
      %p91 = scmp.eq.s32.totalorder %s30, 0
      %p92 = por %p90, %p91
      %p93 = scmp.ne.s32.totalorder %s85, %s87
      %p94 = scmp.eq.s32.totalorder %s35, 1
      %p95 = por %p93, %p94
      %p96 = scmp.ne.s32.totalorder %s87, %s88
      %p97 = scmp.eq.s32.totalorder %s35, 0
      %p98 = por %p96, %p97
      %p99 = scmp.ne.s32.totalorder %s87, %s88
      %p100 = scmp.eq.s32.totalorder %s36, 1
      %p101 = por %p99, %p100
      %p103 = scmp.ne.s32.totalorder %s88, %s102
      %p104 = scmp.eq.s32.totalorder %s36, 0
      %p105 = por %p103, %p104
      %s107 = sadd.s32 %s106, 1
      %p110 = scmp.eq.s32.totalorder %s30, 1
      %p111 = scmp.ne.s32.totalorder %s106, %s108
      %p112 = scmp.eq.s32.totalorder %s30, 0
      %p113 = por %p111, %p112
      %p114 = scmp.ne.s32.totalorder %s106, %s108
      %p115 = scmp.eq.s32.totalorder %s35, 1
      %p116 = por %p114, %p115
      %p117 = scmp.ne.s32.totalorder %s108, %s109
      %p118 = scmp.eq.s32.totalorder %s35, 0
      %p119 = por %p117, %p118
      %p120 = scmp.ne.s32.totalorder %s108, %s109
      %p121 = scmp.eq.s32.totalorder %s36, 1
      %p122 = por %p120, %p121
      %p124 = scmp.ne.s32.totalorder %s109, %s123
      %p125 = scmp.eq.s32.totalorder %s36, 0
      %p126 = por %p124, %p125
      %s128 = sadd.s32 %s127, 1
      %p131 = scmp.eq.s32.totalorder %s30, 1
      %p132 = scmp.ne.s32.totalorder %s127, %s129
      %p133 = scmp.eq.s32.totalorder %s30, 0
      %p134 = por %p132, %p133
      %p135 = scmp.ne.s32.totalorder %s127, %s129
      %p136 = scmp.eq.s32.totalorder %s35, 1
      %p137 = por %p135, %p136
      %p138 = scmp.ne.s32.totalorder %s129, %s130
      %p139 = scmp.eq.s32.totalorder %s35, 0
      %p140 = por %p138, %p139
      %p141 = scmp.ne.s32.totalorder %s129, %s130
      %p142 = scmp.eq.s32.totalorder %s36, 1
      %p143 = por %p141, %p142
      %p145 = scmp.ne.s32.totalorder %s130, %s144
      %p146 = scmp.eq.s32.totalorder %s36, 0
      %p147 = por %p145, %p146
      %s149 = sadd.s32 %s148, 1
      %p152 = scmp.eq.s32.totalorder %s30, 1
      %p153 = scmp.ne.s32.totalorder %s148, %s150
      %p154 = scmp.eq.s32.totalorder %s30, 0
      %p155 = por %p153, %p154
      %p156 = scmp.ne.s32.totalorder %s148, %s150
      %p157 = scmp.eq.s32.totalorder %s35, 1
      %p158 = por %p156, %p157
      %p159 = scmp.ne.s32.totalorder %s150, %s151
      %p160 = scmp.eq.s32.totalorder %s35, 0
      %p161 = por %p159, %p160
      %p162 = scmp.ne.s32.totalorder %s150, %s151
      %p163 = scmp.eq.s32.totalorder %s36, 1
      %p164 = por %p162, %p163
      %p166 = scmp.ne.s32.totalorder %s151, %s165
      %p167 = scmp.eq.s32.totalorder %s36, 0
      %p168 = por %p166, %p167
      %s170 = sadd.s32 %s169, 1
      %p173 = scmp.eq.s32.totalorder %s30, 1
      %p174 = scmp.ne.s32.totalorder %s169, %s171
      %p175 = scmp.eq.s32.totalorder %s30, 0
      %p176 = por %p174, %p175
      %p177 = scmp.ne.s32.totalorder %s169, %s171
      %p178 = scmp.eq.s32.totalorder %s35, 1
      %p179 = por %p177, %p178
      %p180 = scmp.ne.s32.totalorder %s171, %s172
      %p181 = scmp.eq.s32.totalorder %s35, 0
      %p182 = por %p180, %p181
      %p183 = scmp.ne.s32.totalorder %s171, %s172
      %p184 = scmp.eq.s32.totalorder %s36, 1
      %p185 = por %p183, %p184
      %p187 = scmp.ne.s32.totalorder %s172, %s186
      %p188 = scmp.eq.s32.totalorder %s36, 0
      %p189 = por %p187, %p188
      %s191 = sadd.s32 %s190, 1
      %p194 = scmp.eq.s32.totalorder %s30, 1
      %p195 = scmp.ne.s32.totalorder %s190, %s192
      %p196 = scmp.eq.s32.totalorder %s30, 0
      %p197 = por %p195, %p196
      %p198 = scmp.ne.s32.totalorder %s190, %s192
      %p199 = scmp.eq.s32.totalorder %s35, 1
      %p200 = por %p198, %p199
      %p201 = scmp.ne.s32.totalorder %s192, %s193
      %p202 = scmp.eq.s32.totalorder %s35, 0
      %p203 = por %p201, %p202
      %p204 = scmp.ne.s32.totalorder %s192, %s193
      %p205 = scmp.eq.s32.totalorder %s36, 1
      %p206 = por %p204, %p205
      %p208 = scmp.ne.s32.totalorder %s193, %s207
      %p209 = scmp.eq.s32.totalorder %s36, 0
      %p210 = por %p208, %p209
      %s212 = sadd.s32 %s211, 1
      %p215 = scmp.eq.s32.totalorder %s30, 1
      %p216 = scmp.ne.s32.totalorder %s211, %s213
      %p217 = scmp.eq.s32.totalorder %s30, 0
      %p218 = por %p216, %p217
      %p219 = scmp.ne.s32.totalorder %s211, %s213
      %p220 = scmp.eq.s32.totalorder %s35, 1
      %p221 = por %p219, %p220
      %p222 = scmp.ne.s32.totalorder %s213, %s214
      %p223 = scmp.eq.s32.totalorder %s35, 0
      %p224 = por %p222, %p223
      %p225 = scmp.ne.s32.totalorder %s213, %s214
      %p226 = scmp.eq.s32.totalorder %s36, 1
      %p227 = por %p225, %p226
      %p229 = scmp.ne.s32.totalorder %s214, %s228
      %p230 = scmp.eq.s32.totalorder %s36, 0
      %p231 = por %p229, %p230
      %s233 = sadd.s32 %s232, 1
      %p236 = scmp.eq.s32.totalorder %s30, 1
      %p237 = scmp.ne.s32.totalorder %s232, %s234
      %p238 = scmp.eq.s32.totalorder %s30, 0
      %p239 = por %p237, %p238
      %p240 = scmp.ne.s32.totalorder %s232, %s234
      %p241 = scmp.eq.s32.totalorder %s35, 1
      %p242 = por %p240, %p241
      %p243 = scmp.ne.s32.totalorder %s234, %s235
      %p244 = scmp.eq.s32.totalorder %s35, 0
      %p245 = por %p243, %p244
      %p246 = scmp.ne.s32.totalorder %s234, %s235
      %p247 = scmp.eq.s32.totalorder %s36, 1
      %p248 = por %p246, %p247
      %p250 = scmp.ne.s32.totalorder %s235, %s249
      %p251 = scmp.eq.s32.totalorder %s36, 0
      %p252 = por %p250, %p251
      %s254 = sadd.s32 %s253, 1
      %p257 = scmp.eq.s32.totalorder %s30, 1
      %p258 = scmp.ne.s32.totalorder %s253, %s255
      %p259 = scmp.eq.s32.totalorder %s30, 0
      %p260 = por %p258, %p259
      %p261 = scmp.ne.s32.totalorder %s253, %s255
      %p262 = scmp.eq.s32.totalorder %s35, 1
      %p263 = por %p261, %p262
      %p264 = scmp.ne.s32.totalorder %s255, %s256
      %p265 = scmp.eq.s32.totalorder %s35, 0
      %p266 = por %p264, %p265
      %p267 = scmp.ne.s32.totalorder %s255, %s256
      %p268 = scmp.eq.s32.totalorder %s36, 1
      %p269 = por %p267, %p268
      %p271 = scmp.ne.s32.totalorder %s256, %s270
      %p272 = scmp.eq.s32.totalorder %s36, 0
      %p273 = por %p271, %p272
      %s275 = sadd.s32 %s274, 1
      %p278 = scmp.eq.s32.totalorder %s30, 1
      %p279 = scmp.ne.s32.totalorder %s274, %s276
      %p280 = scmp.eq.s32.totalorder %s30, 0
      %p281 = por %p279, %p280
      %p282 = scmp.ne.s32.totalorder %s274, %s276
      %p283 = scmp.eq.s32.totalorder %s35, 1
      %p284 = por %p282, %p283
      %p285 = scmp.ne.s32.totalorder %s276, %s277
      %p286 = scmp.eq.s32.totalorder %s35, 0
      %p287 = por %p285, %p286
      %p288 = scmp.ne.s32.totalorder %s276, %s277
      %p289 = scmp.eq.s32.totalorder %s36, 1
      %p290 = por %p288, %p289
      %p292 = scmp.ne.s32.totalorder %s277, %s291
      %p293 = scmp.eq.s32.totalorder %s36, 0
      %p294 = por %p292, %p293
      %s296 = sadd.s32 %s295, 1
      %p299 = scmp.eq.s32.totalorder %s30, 1
      %p300 = scmp.ne.s32.totalorder %s295, %s297
      %p301 = scmp.eq.s32.totalorder %s30, 0
      %p302 = por %p300, %p301
      %p303 = scmp.ne.s32.totalorder %s295, %s297
      %p304 = scmp.eq.s32.totalorder %s35, 1
      %p305 = por %p303, %p304
      %p306 = scmp.ne.s32.totalorder %s297, %s298
      %p307 = scmp.eq.s32.totalorder %s35, 0
      %p308 = por %p306, %p307
      %p309 = scmp.ne.s32.totalorder %s297, %s298
      %p310 = scmp.eq.s32.totalorder %s36, 1
      %p311 = por %p309, %p310
      %p313 = scmp.ne.s32.totalorder %s298, %s312
      %p314 = scmp.eq.s32.totalorder %s36, 0
      %p315 = por %p313, %p314
      %s317 = sadd.s32 %s316, 1
      %p320 = scmp.eq.s32.totalorder %s30, 1
      %p321 = scmp.ne.s32.totalorder %s316, %s318
      %p322 = scmp.eq.s32.totalorder %s30, 0
      %p323 = por %p321, %p322
      %p324 = scmp.ne.s32.totalorder %s316, %s318
      %p325 = scmp.eq.s32.totalorder %s35, 1
      %p326 = por %p324, %p325
      %p327 = scmp.ne.s32.totalorder %s318, %s319
      %p328 = scmp.eq.s32.totalorder %s35, 0
      %p329 = por %p327, %p328
      %p330 = scmp.ne.s32.totalorder %s318, %s319
      %p331 = scmp.eq.s32.totalorder %s36, 1
      %p332 = por %p330, %p331
      %p334 = scmp.ne.s32.totalorder %s319, %s333
      %p335 = scmp.eq.s32.totalorder %s36, 0
      %p336 = por %p334, %p335
      %s338 = sadd.s32 %s337, 1
      %p341 = scmp.eq.s32.totalorder %s30, 1
      %p342 = scmp.ne.s32.totalorder %s337, %s339
      %p343 = scmp.eq.s32.totalorder %s30, 0
      %p344 = por %p342, %p343
      %p345 = scmp.ne.s32.totalorder %s337, %s339
      %p346 = scmp.eq.s32.totalorder %s35, 1
      %p347 = por %p345, %p346
      %p348 = scmp.ne.s32.totalorder %s339, %s340
      %p349 = scmp.eq.s32.totalorder %s35, 0
      %p350 = por %p348, %p349
      %p351 = scmp.ne.s32.totalorder %s339, %s340
      %p352 = scmp.eq.s32.totalorder %s36, 1
      %p353 = por %p351, %p352
      %p355 = scmp.ne.s32.totalorder %s340, %s354
      %p356 = scmp.eq.s32.totalorder %s36, 0
      %p357 = por %p355, %p356
      %s359 = sadd.s32 %s358, 1
      %p362 = scmp.eq.s32.totalorder %s30, 1
      %p363 = scmp.ne.s32.totalorder %s358, %s360
      %p364 = scmp.eq.s32.totalorder %s30, 0
      %p365 = por %p363, %p364
      %p366 = scmp.ne.s32.totalorder %s358, %s360
      %p367 = scmp.eq.s32.totalorder %s35, 1
      %p368 = por %p366, %p367
      %p369 = scmp.ne.s32.totalorder %s360, %s361
      %p370 = scmp.eq.s32.totalorder %s35, 0
      %p371 = por %p369, %p370
      %p372 = scmp.ne.s32.totalorder %s360, %s361
      %p373 = scmp.eq.s32.totalorder %s36, 1
      %p374 = por %p372, %p373
      %p376 = scmp.ne.s32.totalorder %s361, %s375
      %p377 = scmp.eq.s32.totalorder %s36, 0
      %p378 = por %p376, %p377
      %s379 = ssub.s32 %s30, %s37
      %p380 = scmp.eq.s32.totalorder %s379, 0
      %s382 = sadd.s32 %s381, 1
      %s383 = scalar_select %p380, %s381, %s382
      %p386 = pneg %p380
      %p387 = scmp.eq.s32.totalorder %s30, 1
      %p388 = por %p386, %p387
      %p389 = scmp.ne.s32.totalorder %s381, %s384
      %p390 = scmp.eq.s32.totalorder %s30, 0
      %p391 = por %p389, %p390
      %p392 = scmp.ne.s32.totalorder %s381, %s384
      %p393 = scmp.eq.s32.totalorder %s35, 1
      %p394 = por %p392, %p393
      %p395 = scmp.ne.s32.totalorder %s384, %s385
      %p396 = scmp.eq.s32.totalorder %s35, 0
      %p397 = por %p395, %p396
      %p398 = scmp.ne.s32.totalorder %s384, %s385
      %p399 = scmp.eq.s32.totalorder %s36, 1
      %p400 = por %p398, %p399
      %p402 = scmp.ne.s32.totalorder %s385, %s401
      %p403 = scmp.eq.s32.totalorder %s36, 0
      %p404 = por %p402, %p403
      %s405 = ssub.s32 %s30, %s37
      %p406 = scmp.eq.s32.totalorder %s405, 0
      %s408 = sadd.s32 %s407, 1
      %s409 = scalar_select %p406, %s407, %s408
      %p412 = pneg %p406
      %p413 = scmp.eq.s32.totalorder %s30, 1
      %p414 = por %p412, %p413
      %p415 = scmp.ne.s32.totalorder %s407, %s410
      %p416 = scmp.eq.s32.totalorder %s30, 0
      %p417 = por %p415, %p416
      %p418 = scmp.ne.s32.totalorder %s407, %s410
      %p419 = scmp.eq.s32.totalorder %s35, 1
      %p420 = por %p418, %p419
      %p421 = scmp.ne.s32.totalorder %s410, %s411
      %p422 = scmp.eq.s32.totalorder %s35, 0
      %p423 = por %p421, %p422
      %p424 = scmp.ne.s32.totalorder %s410, %s411
      %p425 = scmp.eq.s32.totalorder %s36, 1
      %p426 = por %p424, %p425
      %p428 = scmp.ne.s32.totalorder %s411, %s427
      %p429 = scmp.eq.s32.totalorder %s36, 0
      %p430 = por %p428, %p429
      %p431 = scmp.le.s32.totalorder 1, %s30
      %p432 = scmp.lt.s32.totalorder %s30, 3
      %p433 = pnand %p431, %p432
      %p434 = pneg %p433
      // Predicated region
      $region9: #{t2t_vit_feature_forward.7} parent=5 // pred_check
        _
      $region10: #{t2t_vit_feature_forward.7} parent=5 // pred_check_branch
        %436 = sbr.rel (%p433) target = $region12
      $region11: #{t2t_vit_feature_forward.7} parent=5 // pred_region
        %s437 = ssub.s32 %s30, 1
        // Predicated region
        $region13: #{t2t_vit_feature_forward.7} parent=11 // pred_check
          %p438 = pneg %p77
        $region14: #{t2t_vit_feature_forward.7} parent=11 // pred_check_branch
          %440 = sbr.rel (%p438) target = $region16
        $region15: #{t2t_vit_feature_forward.7} parent=11 // pred_region
          _
        $region16: #{t2t_vit_feature_forward.7} parent=11 // pred_fallthru
          _
        // Predicated region
        $region17: #{t2t_vit_feature_forward.7} parent=11 // pred_check
          %p441 = pneg %p98
        $region18: #{t2t_vit_feature_forward.7} parent=11 // pred_check_branch
          %443 = sbr.rel (%p441) target = $region20
        $region19: #{t2t_vit_feature_forward.7} parent=11 // pred_region
          _
        $region20: #{t2t_vit_feature_forward.7} parent=11 // pred_fallthru
          _
        // Predicated region
        $region21: #{t2t_vit_feature_forward.7} parent=11 // pred_check
          %p444 = pneg %p119
        $region22: #{t2t_vit_feature_forward.7} parent=11 // pred_check_branch
          %446 = sbr.rel (%p444) target = $region24
        $region23: #{t2t_vit_feature_forward.7} parent=11 // pred_region
          _
        $region24: #{t2t_vit_feature_forward.7} parent=11 // pred_fallthru
          _
        // Predicated region
        $region25: #{t2t_vit_feature_forward.7} parent=11 // pred_check
          %p447 = pneg %p140
        $region26: #{t2t_vit_feature_forward.7} parent=11 // pred_check_branch
          %449 = sbr.rel (%p447) target = $region28
        $region27: #{t2t_vit_feature_forward.7} parent=11 // pred_region
          _
        $region28: #{t2t_vit_feature_forward.7} parent=11 // pred_fallthru
          _
        // Predicated region
        $region29: #{t2t_vit_feature_forward.7} parent=11 // pred_check
          %p450 = pneg %p161
        $region30: #{t2t_vit_feature_forward.7} parent=11 // pred_check_branch
          %452 = sbr.rel (%p450) target = $region32
        $region31: #{t2t_vit_feature_forward.7} parent=11 // pred_region
          _
        $region32: #{t2t_vit_feature_forward.7} parent=11 // pred_fallthru
          _
        // Predicated region
        $region33: #{t2t_vit_feature_forward.7} parent=11 // pred_check
          %p453 = pneg %p182
        $region34: #{t2t_vit_feature_forward.7} parent=11 // pred_check_branch
          %455 = sbr.rel (%p453) target = $region36
        $region35: #{t2t_vit_feature_forward.7} parent=11 // pred_region
          _
        $region36: #{t2t_vit_feature_forward.7} parent=11 // pred_fallthru
          _
        // Predicated region
        $region37: #{t2t_vit_feature_forward.7} parent=11 // pred_check
          %p456 = pneg %p203
        $region38: #{t2t_vit_feature_forward.7} parent=11 // pred_check_branch
          %458 = sbr.rel (%p456) target = $region40
        $region39: #{t2t_vit_feature_forward.7} parent=11 // pred_region
          _
        $region40: #{t2t_vit_feature_forward.7} parent=11 // pred_fallthru
          _
        // Predicated region
        $region41: #{t2t_vit_feature_forward.7} parent=11 // pred_check
          %p459 = pneg %p224
        $region42: #{t2t_vit_feature_forward.7} parent=11 // pred_check_branch
          %461 = sbr.rel (%p459) target = $region44
        $region43: #{t2t_vit_feature_forward.7} parent=11 // pred_region
          _
        $region44: #{t2t_vit_feature_forward.7} parent=11 // pred_fallthru
          _
        // Predicated region
        $region45: #{t2t_vit_feature_forward.7} parent=11 // pred_check
          %p462 = pneg %p245
        $region46: #{t2t_vit_feature_forward.7} parent=11 // pred_check_branch
          %464 = sbr.rel (%p462) target = $region48
        $region47: #{t2t_vit_feature_forward.7} parent=11 // pred_region
          _
        $region48: #{t2t_vit_feature_forward.7} parent=11 // pred_fallthru
          _
        // Predicated region
        $region49: #{t2t_vit_feature_forward.7} parent=11 // pred_check
          %p465 = pneg %p266
        $region50: #{t2t_vit_feature_forward.7} parent=11 // pred_check_branch
          %467 = sbr.rel (%p465) target = $region52
        $region51: #{t2t_vit_feature_forward.7} parent=11 // pred_region
          _
        $region52: #{t2t_vit_feature_forward.7} parent=11 // pred_fallthru
          _
        // Predicated region
        $region53: #{t2t_vit_feature_forward.7} parent=11 // pred_check
          %p468 = pneg %p287
        $region54: #{t2t_vit_feature_forward.7} parent=11 // pred_check_branch
          %470 = sbr.rel (%p468) target = $region56
        $region55: #{t2t_vit_feature_forward.7} parent=11 // pred_region
          _
        $region56: #{t2t_vit_feature_forward.7} parent=11 // pred_fallthru
          _
        // Predicated region
        $region57: #{t2t_vit_feature_forward.7} parent=11 // pred_check
          %p471 = pneg %p308
        $region58: #{t2t_vit_feature_forward.7} parent=11 // pred_check_branch
          %473 = sbr.rel (%p471) target = $region60
        $region59: #{t2t_vit_feature_forward.7} parent=11 // pred_region
          _
        $region60: #{t2t_vit_feature_forward.7} parent=11 // pred_fallthru
          _
        // Predicated region
        $region61: #{t2t_vit_feature_forward.7} parent=11 // pred_check
          %p474 = pneg %p329
        $region62: #{t2t_vit_feature_forward.7} parent=11 // pred_check_branch
          %476 = sbr.rel (%p474) target = $region64
        $region63: #{t2t_vit_feature_forward.7} parent=11 // pred_region
          _
        $region64: #{t2t_vit_feature_forward.7} parent=11 // pred_fallthru
          _
        // Predicated region
        $region65: #{t2t_vit_feature_forward.7} parent=11 // pred_check
          %p477 = pneg %p350
        $region66: #{t2t_vit_feature_forward.7} parent=11 // pred_check_branch
          %479 = sbr.rel (%p477) target = $region68
        $region67: #{t2t_vit_feature_forward.7} parent=11 // pred_region
          _
        $region68: #{t2t_vit_feature_forward.7} parent=11 // pred_fallthru
          _
        // Predicated region
        $region69: #{t2t_vit_feature_forward.7} parent=11 // pred_check
          %p480 = pneg %p371
        $region70: #{t2t_vit_feature_forward.7} parent=11 // pred_check_branch
          %482 = sbr.rel (%p480) target = $region72
        $region71: #{t2t_vit_feature_forward.7} parent=11 // pred_region
          _
        $region72: #{t2t_vit_feature_forward.7} parent=11 // pred_fallthru
          _
      $region12: #{t2t_vit_feature_forward.7} parent=5 // pred_fallthru
        _
      %p483 = scmp.lt.s32.totalorder %s30, 2
      // Predicated region
      $region73: #{t2t_vit_feature_forward.7} parent=5 // pred_check
        %p484 = pneg %p483
      $region74: #{t2t_vit_feature_forward.7} parent=5 // pred_check_branch
        %486 = sbr.rel (%p484) target = $region76
      $region75: #{t2t_vit_feature_forward.7} parent=5 // pred_region
        // Predicated region
        $region77: #{t2t_vit_feature_forward.7} parent=75 // pred_check
          %p487 = pneg %p50
        $region78: #{t2t_vit_feature_forward.7} parent=75 // pred_check_branch
          %489 = sbr.rel (%p487) target = $region80
        $region79: #{t2t_vit_feature_forward.7} parent=75 // pred_region
          %p490 = scmp.lt.s32.totalorder %s30, 1
          %s491 = scalar_select %p490, %s30, 1
          %s492 = smul.addr %s491, 8
          %s493 = scalar_lea.vmem %s0, %s492
        $region80: #{t2t_vit_feature_forward.7} parent=75 // pred_fallthru
          _
      $region76: #{t2t_vit_feature_forward.7} parent=5 // pred_fallthru
        _
      %p494 = scmp.le.s32.totalorder 1, %s30
      %p495 = scmp.lt.s32.totalorder %s30, 3
      %p496 = pnand %p494, %p495
      %p497 = pneg %p496
      // Predicated region
      $region81: #{t2t_vit_feature_forward.7} parent=5 // pred_check
        _
      $region82: #{t2t_vit_feature_forward.7} parent=5 // pred_check_branch
        %499 = sbr.rel (%p496) target = $region84
      $region83: #{t2t_vit_feature_forward.7} parent=5 // pred_region
        %s500 = ssub.s32 %s30, 1
        %p501 = scmp.lt.s32.totalorder %s35, 1
        %s502 = scalar_select %p501, %s35, 1
        %s503 = smul.addr %s502, 8
        %s504 = scalar_lea.vmem %s0, %s503
        %p505 = pneg %p56
        %p506 = pneg %p53
        %p507 = pneg %p77
        %p508 = pneg %p74
        %p509 = pneg %p98
        %p510 = pneg %p95
        %p511 = pneg %p119
        %p512 = pneg %p116
        %p513 = pneg %p140
        %p514 = pneg %p137
        %p515 = pneg %p161
        %p516 = pneg %p158
        %p517 = pneg %p182
        %p518 = pneg %p179
        %p519 = pneg %p203
        %p520 = pneg %p200
        %p521 = pneg %p224
        %p522 = pneg %p221
        %p523 = pneg %p245
        %p524 = pneg %p242
        %p525 = pneg %p266
        %p526 = pneg %p263
        %p527 = pneg %p287
        %p528 = pneg %p284
        %p529 = pneg %p308
        %p530 = pneg %p305
        %p531 = pneg %p329
        %p532 = pneg %p326
        %p533 = pneg %p350
        %p534 = pneg %p347
        %p535 = pneg %p371
        %p536 = pneg %p368
        %p537 = pneg %p397
        %p538 = pneg %p394
        %s539 = sand.u32 %s384, 1
        %s540 = scalar_lea.sflag [#allocation3], %s539
        %s541 = sand.u32 %s384, 1
        %s542 = smul.addr %s541, 8
        %s543 = scalar_lea.vmem [#allocation2], %s542
        %p544 = pneg %p423
        %p545 = pneg %p420
        %s546 = sand.u32 %s410, 1
        %s547 = scalar_lea.sflag [#allocation5], %s546
        %s548 = sand.u32 %s410, 1
        %s549 = scalar_lea.vmem [#allocation4], %s548
        %p550 = scmp.lt.s32.totalorder %s35, 1
        %s551 = scalar_select %p550, %s35, 1
        %s552 = smul.addr %s551, 8
        %s553 = scalar_lea.vmem %s0, %s552
        %v555 = vld [vmem:[%s553] sm:$0x1f]
        %v556 = vld [vmem:[%s1] sm:$0x1]
        %v557 = vld [vmem:[%s2] sm:$0x1]
        %vm558 = vcmask 520192
        %v559 = vsel %vm558, %v555, 0.0
        %560 = vadd.xlane.f32.xlu0 %v559
        %v561 = vpop.xlane.xlu0 %560
        %v562 = vrcp.pop 64.0
        %v563 = vmul.f32 %v561, %v562
        %v564 = vsub.f32 %v555, %v563
        %v565 = vmul.f32 %v564, %v564
        %v566 = vsel %vm558, %v565, 0.0
        %567 = vadd.xlane.f32.xlu0 %v566
        %v568 = vpop.xlane.xlu0 %567
        %v569 = vmul.f32 %v568, %v562
        %v570 = vadd.f32 %v569, 1e-05
        %v571 = vrsqrt.pop %v570
        %v572 = vmul.f32 %v564, %v571
        %v574 = vlaneseq
        %v575 = vshrl.u32 %v574, 7
        %v576 = vsub.s32 0, %v575
        %v577 = vrot.slane %v556, %v576
        %v579 = vmul.f32 %v572, %v577
        %v581 = vlaneseq
        %v582 = vshrl.u32 %v581, 7
        %v583 = vsub.s32 0, %v582
        %v584 = vrot.slane %v557, %v583
        %v586 = vadd.f32 %v579, %v584
        %v587 = vpack.c.bf16 %v586, %v586
        %v588 = vld [vmem:[%s3] sm:$0xf]
        %v589 = vld [vmem:[%s3 + $0x4] sm:$0xf]
        %v590 = vld [vmem:[%s3 + $0x8] sm:$0xf]
        %v591 = vld [vmem:[%s3 + $0xc] sm:$0xf]
        %v592 = vld [vmem:[%s3 + $0x10] sm:$0xf]
        %v593 = vld [vmem:[%s3 + $0x14] sm:$0xf]
        %v594 = vld [vmem:[%s3 + $0x18] sm:$0xf]
        %v595 = vld [vmem:[%s3 + $0x1c] sm:$0xf]
        %v604 = vunpack.c.l.b16 %v588
        %v605 = vunpack.c.l.b16 %v589
        %v606 = vunpack.c.l.b16 %v590
        %v607 = vunpack.c.l.b16 %v591
        %v608 = vunpack.c.l.b16 %v592
        %v609 = vunpack.c.l.b16 %v593
        %v610 = vunpack.c.l.b16 %v594
        %v611 = vunpack.c.l.b16 %v595
        %v612 = vpack.c.b16 %v605, %v604
        %v613 = vpack.c.b16 %v607, %v606
        %v614 = vpack.c.b16 %v609, %v608
        %v615 = vpack.c.b16 %v611, %v610
        %vm620 = vcmask 523264
        %v622 = vsel %vm620, %v587, 0
        %624 = vmatprep.subr.bf16.mxu0 0
        %625 = vmatpush1.bf16.msra.mxu0 %v612
        %626 = vmatprep.subr.bf16.mxu0 0
        %627 = vmatpush1.bf16.msra.mxu0 %v613
        %628 = vmatprep.subr.bf16.mxu0 0
        %629 = vmatpush1.bf16.msra.mxu0 %v614
        %630 = vmatprep.subr.bf16.mxu0 0
        %631 = vmatpush1.bf16.msra.mxu0 %v615
        %632 = vmatprep.subr.bf16.mxu0 0
        %633 = vmatpush1.bf16.msra.mxu0 0
        %634 = vmatprep.subr.bf16.mxu0 0
        %635 = vmatpush1.bf16.msra.mxu0 0
        %636 = vmatprep.subr.bf16.mxu0 0
        %637 = vmatpush1.bf16.msra.mxu0 0
        %638 = vmatprep.subr.bf16.mxu0 0
        %639 = vmatpush1.bf16.msra.mxu0 0
        %640 = vmatprep.subr.bf16.mxu0 0
        %641 = vmatpush1.bf16.msra.mxu0 0
        %642 = vmatprep.subr.bf16.mxu0 0
        %643 = vmatpush1.bf16.msra.mxu0 0
        %644 = vmatprep.subr.bf16.mxu0 0
        %645 = vmatpush1.bf16.msra.mxu0 0
        %646 = vmatprep.subr.bf16.mxu0 0
        %647 = vmatpush1.bf16.msra.mxu0 0
        %648 = vmatprep.subr.bf16.mxu0 0
        %649 = vmatpush1.bf16.msra.mxu0 0
        %650 = vmatprep.subr.bf16.mxu0 0
        %651 = vmatpush1.bf16.msra.mxu0 0
        %652 = vmatprep.subr.bf16.mxu0 0
        %653 = vmatpush1.bf16.msra.mxu0 0
        %654 = vmatprep.subr.bf16.mxu0 0
        %655 = vmatpush1.bf16.msra.mxu0 0
        %656 = vmatprep.mubr.bf16.mxu0 0
        %657 = vmatmul.mubr.bf16.gmra.mrb[0].mxu0 %v622
        %v658 = vpop.f32.mrb[0].mxu0
        %v659 = vadd.f32 0.0, %v658
        %v660 = vpop.f32.mrb[0].mxu0
        %v661 = vpop.f32.mrb[0].mxu0
        %v662 = vpop.f32.mrb[0].mxu0
        %663 = vdwg.mxu0
        %s664 = scalar_lea.vmem %s3, 128
        %v665 = vld [vmem:[%s664] sm:$0xf]
        %v666 = vld [vmem:[%s664 + $0x4] sm:$0xf]
        %v667 = vld [vmem:[%s664 + $0x8] sm:$0xf]
        %v668 = vld [vmem:[%s664 + $0xc] sm:$0xf]
        %v669 = vld [vmem:[%s664 + $0x10] sm:$0xf]
        %v670 = vld [vmem:[%s664 + $0x14] sm:$0xf]
        %v671 = vld [vmem:[%s664 + $0x18] sm:$0xf]
        %v672 = vld [vmem:[%s664 + $0x1c] sm:$0xf]
        %v681 = vunpack.c.l.b16 %v665
        %v682 = vunpack.c.l.b16 %v666
        %v683 = vunpack.c.l.b16 %v667
        %v684 = vunpack.c.l.b16 %v668
        %v685 = vunpack.c.l.b16 %v669
        %v686 = vunpack.c.l.b16 %v670
        %v687 = vunpack.c.l.b16 %v671
        %v688 = vunpack.c.l.b16 %v672
        %v689 = vpack.c.b16 %v682, %v681
        %v690 = vpack.c.b16 %v684, %v683
        %v691 = vpack.c.b16 %v686, %v685
        %v692 = vpack.c.b16 %v688, %v687
        %697 = vmatprep.subr.bf16.mxu0 0
        %698 = vmatpush1.bf16.msra.mxu0 %v689
        %699 = vmatprep.subr.bf16.mxu0 0
        %700 = vmatpush1.bf16.msra.mxu0 %v690
        %701 = vmatprep.subr.bf16.mxu0 0
        %702 = vmatpush1.bf16.msra.mxu0 %v691
        %703 = vmatprep.subr.bf16.mxu0 0
        %704 = vmatpush1.bf16.msra.mxu0 %v692
        %705 = vmatprep.subr.bf16.mxu0 0
        %706 = vmatpush1.bf16.msra.mxu0 0
        %707 = vmatprep.subr.bf16.mxu0 0
        %708 = vmatpush1.bf16.msra.mxu0 0
        %709 = vmatprep.subr.bf16.mxu0 0
        %710 = vmatpush1.bf16.msra.mxu0 0
        %711 = vmatprep.subr.bf16.mxu0 0
        %712 = vmatpush1.bf16.msra.mxu0 0
        %713 = vmatprep.subr.bf16.mxu0 0
        %714 = vmatpush1.bf16.msra.mxu0 0
        %715 = vmatprep.subr.bf16.mxu0 0
        %716 = vmatpush1.bf16.msra.mxu0 0
        %717 = vmatprep.subr.bf16.mxu0 0
        %718 = vmatpush1.bf16.msra.mxu0 0
        %719 = vmatprep.subr.bf16.mxu0 0
        %720 = vmatpush1.bf16.msra.mxu0 0
        %721 = vmatprep.subr.bf16.mxu0 0
        %722 = vmatpush1.bf16.msra.mxu0 0
        %723 = vmatprep.subr.bf16.mxu0 0
        %724 = vmatpush1.bf16.msra.mxu0 0
        %725 = vmatprep.subr.bf16.mxu0 0
        %726 = vmatpush1.bf16.msra.mxu0 0
        %727 = vmatprep.subr.bf16.mxu0 0
        %728 = vmatpush1.bf16.msra.mxu0 0
        %729 = vmatprep.mubr.bf16.mxu0 0
        %730 = vmatmul.mubr.bf16.gmra.mrb[0].mxu0 %v622
        %v731 = vpop.f32.mrb[0].mxu0
        %v732 = vadd.f32 0.0, %v731
        %v733 = vpop.f32.mrb[0].mxu0
        %v734 = vpop.f32.mrb[0].mxu0
        %v735 = vpop.f32.mrb[0].mxu0
        %736 = vdwg.mxu0
        %s737 = scalar_lea.vmem %s3, 256
        %v738 = vld [vmem:[%s737] sm:$0xf]
        %v739 = vld [vmem:[%s737 + $0x4] sm:$0xf]
        %v740 = vld [vmem:[%s737 + $0x8] sm:$0xf]
        %v741 = vld [vmem:[%s737 + $0xc] sm:$0xf]
        %v742 = vld [vmem:[%s737 + $0x10] sm:$0xf]
        %v743 = vld [vmem:[%s737 + $0x14] sm:$0xf]
        %v744 = vld [vmem:[%s737 + $0x18] sm:$0xf]
        %v745 = vld [vmem:[%s737 + $0x1c] sm:$0xf]
        %v754 = vunpack.c.l.b16 %v738
        %v755 = vunpack.c.l.b16 %v739
        %v756 = vunpack.c.l.b16 %v740
        %v757 = vunpack.c.l.b16 %v741
        %v758 = vunpack.c.l.b16 %v742
        %v759 = vunpack.c.l.b16 %v743
        %v760 = vunpack.c.l.b16 %v744
        %v761 = vunpack.c.l.b16 %v745
        %v762 = vpack.c.b16 %v755, %v754
        %v763 = vpack.c.b16 %v757, %v756
        %v764 = vpack.c.b16 %v759, %v758
        %v765 = vpack.c.b16 %v761, %v760
        %770 = vmatprep.subr.bf16.mxu0 0
        %771 = vmatpush1.bf16.msra.mxu0 %v762
        %772 = vmatprep.subr.bf16.mxu0 0
        %773 = vmatpush1.bf16.msra.mxu0 %v763
        %774 = vmatprep.subr.bf16.mxu0 0
        %775 = vmatpush1.bf16.msra.mxu0 %v764
        %776 = vmatprep.subr.bf16.mxu0 0
        %777 = vmatpush1.bf16.msra.mxu0 %v765
        %778 = vmatprep.subr.bf16.mxu0 0
        %779 = vmatpush1.bf16.msra.mxu0 0
        %780 = vmatprep.subr.bf16.mxu0 0
        %781 = vmatpush1.bf16.msra.mxu0 0
        %782 = vmatprep.subr.bf16.mxu0 0
        %783 = vmatpush1.bf16.msra.mxu0 0
        %784 = vmatprep.subr.bf16.mxu0 0
        %785 = vmatpush1.bf16.msra.mxu0 0
        %786 = vmatprep.subr.bf16.mxu0 0
        %787 = vmatpush1.bf16.msra.mxu0 0
        %788 = vmatprep.subr.bf16.mxu0 0
        %789 = vmatpush1.bf16.msra.mxu0 0
        %790 = vmatprep.subr.bf16.mxu0 0
        %791 = vmatpush1.bf16.msra.mxu0 0
        %792 = vmatprep.subr.bf16.mxu0 0
        %793 = vmatpush1.bf16.msra.mxu0 0
        %794 = vmatprep.subr.bf16.mxu0 0
        %795 = vmatpush1.bf16.msra.mxu0 0
        %796 = vmatprep.subr.bf16.mxu0 0
        %797 = vmatpush1.bf16.msra.mxu0 0
        %798 = vmatprep.subr.bf16.mxu0 0
        %799 = vmatpush1.bf16.msra.mxu0 0
        %800 = vmatprep.subr.bf16.mxu0 0
        %801 = vmatpush1.bf16.msra.mxu0 0
        %802 = vmatprep.mubr.bf16.mxu0 0
        %803 = vmatmul.mubr.bf16.gmra.mrb[0].mxu0 %v622
        %v804 = vpop.f32.mrb[0].mxu0
        %v805 = vadd.f32 0.0, %v804
        %v806 = vpop.f32.mrb[0].mxu0
        %v807 = vpop.f32.mrb[0].mxu0
        %v808 = vpop.f32.mrb[0].mxu0
        %809 = vdwg.mxu0
        %vm810 = vcmask 130048
        %v812 = vsel %vm810, %v659, 0
        %v815 = vsel %vm810, %v732, 0
        %817 = vmatprep.subr.mxu0 0.0
        %818 = vmatpush1.xpose.msra.mxu0 %v815
        %819 = vmatprep.subr.mxu0 0.0
        %820 = vmatpush1.xpose.msra.mxu0 0.0
        %821 = vmatprep.subr.mxu0 0.0
        %822 = vmatpush1.xpose.msra.mxu0 0.0
        %823 = vmatprep.subr.mxu0 0.0
        %824 = vmatpush1.xpose.msra.mxu0 0.0
        %825 = vmatprep.subr.mxu0 0.0
        %826 = vmatpush1.xpose.msra.mxu0 0.0
        %827 = vmatprep.subr.mxu0 0.0
        %828 = vmatpush1.xpose.msra.mxu0 0.0
        %829 = vmatprep.subr.mxu0 0.0
        %830 = vmatpush1.xpose.msra.mxu0 0.0
        %831 = vmatprep.subr.mxu0 0.0
        %832 = vmatpush1.xpose.msra.mxu0 0.0
        %833 = vmatprep.subr.mxu0 0.0
        %834 = vmatpush1.xpose.msra.mxu0 0.0
        %835 = vmatprep.subr.mxu0 0.0
        %836 = vmatpush1.xpose.msra.mxu0 0.0
        %837 = vmatprep.subr.mxu0 0.0
        %838 = vmatpush1.xpose.msra.mxu0 0.0
        %839 = vmatprep.subr.mxu0 0.0
        %840 = vmatpush1.xpose.msra.mxu0 0.0
        %841 = vmatprep.subr.mxu0 0.0
        %842 = vmatpush1.xpose.msra.mxu0 0.0
        %843 = vmatprep.subr.mxu0 0.0
        %844 = vmatpush1.xpose.msra.mxu0 0.0
        %845 = vmatprep.subr.mxu0 0.0
        %846 = vmatpush1.xpose.msra.mxu0 0.0
        %847 = vmatprep.subr.mxu0 0.0
        %848 = vmatpush1.xpose.msra.mxu0 0.0
        %849 = vmatprep.subr.mxu0 0.0
        %850 = vmatpush1.xpose.msra.mxu0 0.0
        %851 = vmatprep.subr.mxu0 0.0
        %852 = vmatpush1.xpose.msra.mxu0 0.0
        %853 = vmatprep.subr.mxu0 0.0
        %854 = vmatpush1.xpose.msra.mxu0 0.0
        %855 = vmatprep.subr.mxu0 0.0
        %856 = vmatpush1.xpose.msra.mxu0 0.0
        %857 = vmatprep.subr.mxu0 0.0
        %858 = vmatpush1.xpose.msra.mxu0 0.0
        %859 = vmatprep.subr.mxu0 0.0
        %860 = vmatpush1.xpose.msra.mxu0 0.0
        %861 = vmatprep.subr.mxu0 0.0
        %862 = vmatpush1.xpose.msra.mxu0 0.0
        %863 = vmatprep.subr.mxu0 0.0
        %864 = vmatpush1.xpose.msra.mxu0 0.0
        %865 = vmatprep.subr.mxu0 0.0
        %866 = vmatpush1.xpose.msra.mxu0 0.0
        %867 = vmatprep.subr.mxu0 0.0
        %868 = vmatpush1.xpose.msra.mxu0 0.0
        %869 = vmatprep.subr.mxu0 0.0
        %870 = vmatpush1.xpose.msra.mxu0 0.0
        %871 = vmatprep.subr.mxu0 0.0
        %872 = vmatpush1.xpose.msra.mxu0 0.0
        %873 = vmatprep.subr.mxu0 0.0
        %874 = vmatpush1.xpose.msra.mxu0 0.0
        %875 = vmatprep.subr.mxu0 0.0
        %876 = vmatpush1.xpose.msra.mxu0 0.0
        %877 = vmatprep.subr.mxu0 0.0
        %878 = vmatpush1.xpose.msra.mxu0 0.0
        %879 = vmatprep.subr.mxu0 0.0
        %880 = vmatpush1.xpose.msra.mxu0 0.0
        %881 = vmatprep.mubr.f32.mxu0 0.0
        %882 = vmatmul.mubr.f32.gmra.mrb[0].mxu0 %v812
        %v883 = vpop.f32.mrb[0].mxu0
        %v884 = vadd.f32 0.0, %v883
        %v885 = vpop.f32.mrb[0].mxu0
        %886 = vdwg.mxu0
        %v887 = vmul.f32 %v884, 0.25
        %vm888 = vcmask 36864
        %v889 = vsel %vm888, %v887, -inf
        %890 = vmax.xlane.f32.xlu0 %v889
        %v891 = vpop.xlane.xlu0 %890
        %v892 = vsub.f32 %v887, %v891
        %v893 = vmul.f32 %v892, 1.442695
        %v894 = vpow.pop %v893
        %v895 = vsel %vm888, %v894, 0.0
        %896 = vadd.xlane.f32.xlu0 %v895
        %v897 = vpop.xlane.xlu0 %896
        %v898 = vrcp.pop %v897
        %v899 = vmul.f32 %v894, %v898
        %v900 = vpack.c.bf16 %v899, %v899
        %v901 = vpack.c.bf16 %v805, %v805
        %vm902 = vcmask 39936
        %v904 = vsel %vm902, %v900, 0
        %vm906 = vcmask 1041408
        %vm907 = vcmask 1042432
        %v908 = vsel %vm906, 4294967295, 65535
        %v909 = vsel %vm907, %v908, 0
        %v911 = vand.u32 %v901, %v909
        %913 = vmatprep.subr.bf16.mxu0 0
        %914 = vmatpush1.bf16.msra.mxu0 %v911
        %915 = vmatprep.subr.bf16.mxu0 0
        %916 = vmatpush1.bf16.msra.mxu0 0
        %917 = vmatprep.subr.bf16.mxu0 0
        %918 = vmatpush1.bf16.msra.mxu0 0
        %919 = vmatprep.subr.bf16.mxu0 0
        %920 = vmatpush1.bf16.msra.mxu0 0
        %921 = vmatprep.subr.bf16.mxu0 0
        %922 = vmatpush1.bf16.msra.mxu0 0
        %923 = vmatprep.subr.bf16.mxu0 0
        %924 = vmatpush1.bf16.msra.mxu0 0
        %925 = vmatprep.subr.bf16.mxu0 0
        %926 = vmatpush1.bf16.msra.mxu0 0
        %927 = vmatprep.subr.bf16.mxu0 0
        %928 = vmatpush1.bf16.msra.mxu0 0
        %929 = vmatprep.subr.bf16.mxu0 0
        %930 = vmatpush1.bf16.msra.mxu0 0
        %931 = vmatprep.subr.bf16.mxu0 0
        %932 = vmatpush1.bf16.msra.mxu0 0
        %933 = vmatprep.subr.bf16.mxu0 0
        %934 = vmatpush1.bf16.msra.mxu0 0
        %935 = vmatprep.subr.bf16.mxu0 0
        %936 = vmatpush1.bf16.msra.mxu0 0
        %937 = vmatprep.subr.bf16.mxu0 0
        %938 = vmatpush1.bf16.msra.mxu0 0
        %939 = vmatprep.subr.bf16.mxu0 0
        %940 = vmatpush1.bf16.msra.mxu0 0
        %941 = vmatprep.subr.bf16.mxu0 0
        %942 = vmatpush1.bf16.msra.mxu0 0
        %943 = vmatprep.subr.bf16.mxu0 0
        %944 = vmatpush1.bf16.msra.mxu0 0
        %945 = vmatprep.mubr.bf16.mxu0 0
        %946 = vmatmul.mubr.bf16.gmra.mrb[0].mxu0 %v904
        %v947 = vpop.f32.mrb[0].mxu0
        %v948 = vadd.f32 0.0, %v947
        %v949 = vpop.f32.mrb[0].mxu0
        %v950 = vpop.f32.mrb[0].mxu0
        %v951 = vpop.f32.mrb[0].mxu0
        %952 = vdwg.mxu0
        %v953 = vpack.c.bf16 %v948, %v948
        %v954 = vld [vmem:[%s4] sm:$0xf]
        %v955 = vld [vmem:[%s4 + $0x4] sm:$0xf]
        %s956 = scalar_lea.vmem %s3, 32
        %v957 = vld [vmem:[%s956] sm:$0xf]
        %v958 = vld [vmem:[%s956 + $0x4] sm:$0xf]
        %v959 = vld [vmem:[%s956 + $0x8] sm:$0xf]
        %v960 = vld [vmem:[%s956 + $0xc] sm:$0xf]
        %v961 = vld [vmem:[%s956 + $0x10] sm:$0xf]
        %v962 = vld [vmem:[%s956 + $0x14] sm:$0xf]
        %v963 = vld [vmem:[%s956 + $0x18] sm:$0xf]
        %v964 = vld [vmem:[%s956 + $0x1c] sm:$0xf]
        %v973 = vunpack.c.l.b16 %v957
        %v974 = vunpack.c.l.b16 %v958
        %v975 = vunpack.c.l.b16 %v959
        %v976 = vunpack.c.l.b16 %v960
        %v977 = vunpack.c.l.b16 %v961
        %v978 = vunpack.c.l.b16 %v962
        %v979 = vunpack.c.l.b16 %v963
        %v980 = vunpack.c.l.b16 %v964
        %v981 = vpack.c.b16 %v974, %v973
        %v982 = vpack.c.b16 %v976, %v975
        %v983 = vpack.c.b16 %v978, %v977
        %v984 = vpack.c.b16 %v980, %v979
        %989 = vmatprep.subr.bf16.mxu0 0
        %990 = vmatpush1.bf16.msra.mxu0 %v981
        %991 = vmatprep.subr.bf16.mxu0 0
        %992 = vmatpush1.bf16.msra.mxu0 %v982
        %993 = vmatprep.subr.bf16.mxu0 0
        %994 = vmatpush1.bf16.msra.mxu0 %v983
        %995 = vmatprep.subr.bf16.mxu0 0
        %996 = vmatpush1.bf16.msra.mxu0 %v984
        %997 = vmatprep.subr.bf16.mxu0 0
        %998 = vmatpush1.bf16.msra.mxu0 0
        %999 = vmatprep.subr.bf16.mxu0 0
        %1000 = vmatpush1.bf16.msra.mxu0 0
        %1001 = vmatprep.subr.bf16.mxu0 0
        %1002 = vmatpush1.bf16.msra.mxu0 0
        %1003 = vmatprep.subr.bf16.mxu0 0
        %1004 = vmatpush1.bf16.msra.mxu0 0
        %1005 = vmatprep.subr.bf16.mxu0 0
        %1006 = vmatpush1.bf16.msra.mxu0 0
        %1007 = vmatprep.subr.bf16.mxu0 0
        %1008 = vmatpush1.bf16.msra.mxu0 0
        %1009 = vmatprep.subr.bf16.mxu0 0
        %1010 = vmatpush1.bf16.msra.mxu0 0
        %1011 = vmatprep.subr.bf16.mxu0 0
        %1012 = vmatpush1.bf16.msra.mxu0 0
        %1013 = vmatprep.subr.bf16.mxu0 0
        %1014 = vmatpush1.bf16.msra.mxu0 0
        %1015 = vmatprep.subr.bf16.mxu0 0
        %1016 = vmatpush1.bf16.msra.mxu0 0
        %1017 = vmatprep.subr.bf16.mxu0 0
        %1018 = vmatpush1.bf16.msra.mxu0 0
        %1019 = vmatprep.subr.bf16.mxu0 0
        %1020 = vmatpush1.bf16.msra.mxu0 0
        %1021 = vmatprep.mubr.bf16.mxu0 0
        %1022 = vmatmul.mubr.bf16.gmra.mrb[0].mxu0 %v622
        %v1023 = vpop.f32.mrb[0].mxu0
        %v1024 = vadd.f32 0.0, %v1023
        %v1025 = vpop.f32.mrb[0].mxu0
        %v1026 = vpop.f32.mrb[0].mxu0
        %v1027 = vpop.f32.mrb[0].mxu0
        %1028 = vdwg.mxu0
        %s1029 = scalar_lea.vmem %s3, 160
        %v1030 = vld [vmem:[%s1029] sm:$0xf]
        %v1031 = vld [vmem:[%s1029 + $0x4] sm:$0xf]
        %v1032 = vld [vmem:[%s1029 + $0x8] sm:$0xf]
        %v1033 = vld [vmem:[%s1029 + $0xc] sm:$0xf]
        %v1034 = vld [vmem:[%s1029 + $0x10] sm:$0xf]
        %v1035 = vld [vmem:[%s1029 + $0x14] sm:$0xf]
        %v1036 = vld [vmem:[%s1029 + $0x18] sm:$0xf]
        %v1037 = vld [vmem:[%s1029 + $0x1c] sm:$0xf]
        %v1046 = vunpack.c.l.b16 %v1030
        %v1047 = vunpack.c.l.b16 %v1031
        %v1048 = vunpack.c.l.b16 %v1032
        %v1049 = vunpack.c.l.b16 %v1033
        %v1050 = vunpack.c.l.b16 %v1034
        %v1051 = vunpack.c.l.b16 %v1035
        %v1052 = vunpack.c.l.b16 %v1036
        %v1053 = vunpack.c.l.b16 %v1037
        %v1054 = vpack.c.b16 %v1047, %v1046
        %v1055 = vpack.c.b16 %v1049, %v1048
        %v1056 = vpack.c.b16 %v1051, %v1050
        %v1057 = vpack.c.b16 %v1053, %v1052
        %1062 = vmatprep.subr.bf16.mxu0 0
        %1063 = vmatpush1.bf16.msra.mxu0 %v1054
        %1064 = vmatprep.subr.bf16.mxu0 0
        %1065 = vmatpush1.bf16.msra.mxu0 %v1055
        %1066 = vmatprep.subr.bf16.mxu0 0
        %1067 = vmatpush1.bf16.msra.mxu0 %v1056
        %1068 = vmatprep.subr.bf16.mxu0 0
        %1069 = vmatpush1.bf16.msra.mxu0 %v1057
        %1070 = vmatprep.subr.bf16.mxu0 0
        %1071 = vmatpush1.bf16.msra.mxu0 0
        %1072 = vmatprep.subr.bf16.mxu0 0
        %1073 = vmatpush1.bf16.msra.mxu0 0
        %1074 = vmatprep.subr.bf16.mxu0 0
        %1075 = vmatpush1.bf16.msra.mxu0 0
        %1076 = vmatprep.subr.bf16.mxu0 0
        %1077 = vmatpush1.bf16.msra.mxu0 0
        %1078 = vmatprep.subr.bf16.mxu0 0
        %1079 = vmatpush1.bf16.msra.mxu0 0
        %1080 = vmatprep.subr.bf16.mxu0 0
        %1081 = vmatpush1.bf16.msra.mxu0 0
        %1082 = vmatprep.subr.bf16.mxu0 0
        %1083 = vmatpush1.bf16.msra.mxu0 0
        %1084 = vmatprep.subr.bf16.mxu0 0
        %1085 = vmatpush1.bf16.msra.mxu0 0
        %1086 = vmatprep.subr.bf16.mxu0 0
        %1087 = vmatpush1.bf16.msra.mxu0 0
        %1088 = vmatprep.subr.bf16.mxu0 0
        %1089 = vmatpush1.bf16.msra.mxu0 0
        %1090 = vmatprep.subr.bf16.mxu0 0
        %1091 = vmatpush1.bf16.msra.mxu0 0
        %1092 = vmatprep.subr.bf16.mxu0 0
        %1093 = vmatpush1.bf16.msra.mxu0 0
        %1094 = vmatprep.mubr.bf16.mxu0 0
        %1095 = vmatmul.mubr.bf16.gmra.mrb[0].mxu0 %v622
        %v1096 = vpop.f32.mrb[0].mxu0
        %v1097 = vadd.f32 0.0, %v1096
        %v1098 = vpop.f32.mrb[0].mxu0
        %v1099 = vpop.f32.mrb[0].mxu0
        %v1100 = vpop.f32.mrb[0].mxu0
        %1101 = vdwg.mxu0
        %s1102 = scalar_lea.vmem %s3, 288
        %v1103 = vld [vmem:[%s1102] sm:$0xf]
        %v1104 = vld [vmem:[%s1102 + $0x4] sm:$0xf]
        %v1105 = vld [vmem:[%s1102 + $0x8] sm:$0xf]
        %v1106 = vld [vmem:[%s1102 + $0xc] sm:$0xf]
        %v1107 = vld [vmem:[%s1102 + $0x10] sm:$0xf]
        %v1108 = vld [vmem:[%s1102 + $0x14] sm:$0xf]
        %v1109 = vld [vmem:[%s1102 + $0x18] sm:$0xf]
        %v1110 = vld [vmem:[%s1102 + $0x1c] sm:$0xf]
        %v1119 = vunpack.c.l.b16 %v1103
        %v1120 = vunpack.c.l.b16 %v1104
        %v1121 = vunpack.c.l.b16 %v1105
        %v1122 = vunpack.c.l.b16 %v1106
        %v1123 = vunpack.c.l.b16 %v1107
        %v1124 = vunpack.c.l.b16 %v1108
        %v1125 = vunpack.c.l.b16 %v1109
        %v1126 = vunpack.c.l.b16 %v1110
        %v1127 = vpack.c.b16 %v1120, %v1119
        %v1128 = vpack.c.b16 %v1122, %v1121
        %v1129 = vpack.c.b16 %v1124, %v1123
        %v1130 = vpack.c.b16 %v1126, %v1125
        %1135 = vmatprep.subr.bf16.mxu0 0
        %1136 = vmatpush1.bf16.msra.mxu0 %v1127
        %1137 = vmatprep.subr.bf16.mxu0 0
        %1138 = vmatpush1.bf16.msra.mxu0 %v1128
        %1139 = vmatprep.subr.bf16.mxu0 0
        %1140 = vmatpush1.bf16.msra.mxu0 %v1129
        %1141 = vmatprep.subr.bf16.mxu0 0
        %1142 = vmatpush1.bf16.msra.mxu0 %v1130
        %1143 = vmatprep.subr.bf16.mxu0 0
        %1144 = vmatpush1.bf16.msra.mxu0 0
        %1145 = vmatprep.subr.bf16.mxu0 0
        %1146 = vmatpush1.bf16.msra.mxu0 0
        %1147 = vmatprep.subr.bf16.mxu0 0
        %1148 = vmatpush1.bf16.msra.mxu0 0
        %1149 = vmatprep.subr.bf16.mxu0 0
        %1150 = vmatpush1.bf16.msra.mxu0 0
        %1151 = vmatprep.subr.bf16.mxu0 0
        %1152 = vmatpush1.bf16.msra.mxu0 0
        %1153 = vmatprep.subr.bf16.mxu0 0
        %1154 = vmatpush1.bf16.msra.mxu0 0
        %1155 = vmatprep.subr.bf16.mxu0 0
        %1156 = vmatpush1.bf16.msra.mxu0 0
        %1157 = vmatprep.subr.bf16.mxu0 0
        %1158 = vmatpush1.bf16.msra.mxu0 0
        %1159 = vmatprep.subr.bf16.mxu0 0
        %1160 = vmatpush1.bf16.msra.mxu0 0
        %1161 = vmatprep.subr.bf16.mxu0 0
        %1162 = vmatpush1.bf16.msra.mxu0 0
        %1163 = vmatprep.subr.bf16.mxu0 0
        %1164 = vmatpush1.bf16.msra.mxu0 0
        %1165 = vmatprep.subr.bf16.mxu0 0
        %1166 = vmatpush1.bf16.msra.mxu0 0
        %1167 = vmatprep.mubr.bf16.mxu0 0
        %1168 = vmatmul.mubr.bf16.gmra.mrb[0].mxu0 %v622
        %v1169 = vpop.f32.mrb[0].mxu0
        %v1170 = vadd.f32 0.0, %v1169
        %v1171 = vpop.f32.mrb[0].mxu0
        %v1172 = vpop.f32.mrb[0].mxu0
        %v1173 = vpop.f32.mrb[0].mxu0
        %1174 = vdwg.mxu0
        %v1176 = vsel %vm810, %v1024, 0
        %v1179 = vsel %vm810, %v1097, 0
        %1181 = vmatprep.subr.mxu0 0.0
        %1182 = vmatpush1.xpose.msra.mxu0 %v1179
        %1183 = vmatprep.subr.mxu0 0.0
        %1184 = vmatpush1.xpose.msra.mxu0 0.0
        %1185 = vmatprep.subr.mxu0 0.0
        %1186 = vmatpush1.xpose.msra.mxu0 0.0
        %1187 = vmatprep.subr.mxu0 0.0
        %1188 = vmatpush1.xpose.msra.mxu0 0.0
        %1189 = vmatprep.subr.mxu0 0.0
        %1190 = vmatpush1.xpose.msra.mxu0 0.0
        %1191 = vmatprep.subr.mxu0 0.0
        %1192 = vmatpush1.xpose.msra.mxu0 0.0
        %1193 = vmatprep.subr.mxu0 0.0
        %1194 = vmatpush1.xpose.msra.mxu0 0.0
        %1195 = vmatprep.subr.mxu0 0.0
        %1196 = vmatpush1.xpose.msra.mxu0 0.0
        %1197 = vmatprep.subr.mxu0 0.0
        %1198 = vmatpush1.xpose.msra.mxu0 0.0
        %1199 = vmatprep.subr.mxu0 0.0
        %1200 = vmatpush1.xpose.msra.mxu0 0.0
        %1201 = vmatprep.subr.mxu0 0.0
        %1202 = vmatpush1.xpose.msra.mxu0 0.0
        %1203 = vmatprep.subr.mxu0 0.0
        %1204 = vmatpush1.xpose.msra.mxu0 0.0
        %1205 = vmatprep.subr.mxu0 0.0
        %1206 = vmatpush1.xpose.msra.mxu0 0.0
        %1207 = vmatprep.subr.mxu0 0.0
        %1208 = vmatpush1.xpose.msra.mxu0 0.0
        %1209 = vmatprep.subr.mxu0 0.0
        %1210 = vmatpush1.xpose.msra.mxu0 0.0
        %1211 = vmatprep.subr.mxu0 0.0
        %1212 = vmatpush1.xpose.msra.mxu0 0.0
        %1213 = vmatprep.subr.mxu0 0.0
        %1214 = vmatpush1.xpose.msra.mxu0 0.0
        %1215 = vmatprep.subr.mxu0 0.0
        %1216 = vmatpush1.xpose.msra.mxu0 0.0
        %1217 = vmatprep.subr.mxu0 0.0
        %1218 = vmatpush1.xpose.msra.mxu0 0.0
        %1219 = vmatprep.subr.mxu0 0.0
        %1220 = vmatpush1.xpose.msra.mxu0 0.0
        %1221 = vmatprep.subr.mxu0 0.0
        %1222 = vmatpush1.xpose.msra.mxu0 0.0
        %1223 = vmatprep.subr.mxu0 0.0
        %1224 = vmatpush1.xpose.msra.mxu0 0.0
        %1225 = vmatprep.subr.mxu0 0.0
        %1226 = vmatpush1.xpose.msra.mxu0 0.0
        %1227 = vmatprep.subr.mxu0 0.0
        %1228 = vmatpush1.xpose.msra.mxu0 0.0
        %1229 = vmatprep.subr.mxu0 0.0
        %1230 = vmatpush1.xpose.msra.mxu0 0.0
        %1231 = vmatprep.subr.mxu0 0.0
        %1232 = vmatpush1.xpose.msra.mxu0 0.0
        %1233 = vmatprep.subr.mxu0 0.0
        %1234 = vmatpush1.xpose.msra.mxu0 0.0
        %1235 = vmatprep.subr.mxu0 0.0
        %1236 = vmatpush1.xpose.msra.mxu0 0.0
        %1237 = vmatprep.subr.mxu0 0.0
        %1238 = vmatpush1.xpose.msra.mxu0 0.0
        %1239 = vmatprep.subr.mxu0 0.0
        %1240 = vmatpush1.xpose.msra.mxu0 0.0
        %1241 = vmatprep.subr.mxu0 0.0
        %1242 = vmatpush1.xpose.msra.mxu0 0.0
        %1243 = vmatprep.subr.mxu0 0.0
        %1244 = vmatpush1.xpose.msra.mxu0 0.0
        %1245 = vmatprep.mubr.f32.mxu0 0.0
        %1246 = vmatmul.mubr.f32.gmra.mrb[0].mxu0 %v1176
        %v1247 = vpop.f32.mrb[0].mxu0
        %v1248 = vadd.f32 0.0, %v1247
        %v1249 = vpop.f32.mrb[0].mxu0
        %1250 = vdwg.mxu0
        %v1251 = vmul.f32 %v1248, 0.25
        %v1252 = vsel %vm888, %v1251, -inf
        %1253 = vmax.xlane.f32.xlu0 %v1252
        %v1254 = vpop.xlane.xlu0 %1253
        %v1255 = vsub.f32 %v1251, %v1254
        %v1256 = vmul.f32 %v1255, 1.442695
        %v1257 = vpow.pop %v1256
        %v1258 = vsel %vm888, %v1257, 0.0
        %1259 = vadd.xlane.f32.xlu0 %v1258
        %v1260 = vpop.xlane.xlu0 %1259
        %v1261 = vrcp.pop %v1260
        %v1262 = vmul.f32 %v1257, %v1261
        %v1263 = vpack.c.bf16 %v1262, %v1262
        %v1264 = vpack.c.bf16 %v1170, %v1170
        %v1266 = vsel %vm902, %v1263, 0
        %v1269 = vand.u32 %v1264, %v909
        %1271 = vmatprep.subr.bf16.mxu0 0
        %1272 = vmatpush1.bf16.msra.mxu0 %v1269
        %1273 = vmatprep.subr.bf16.mxu0 0
        %1274 = vmatpush1.bf16.msra.mxu0 0
        %1275 = vmatprep.subr.bf16.mxu0 0
        %1276 = vmatpush1.bf16.msra.mxu0 0
        %1277 = vmatprep.subr.bf16.mxu0 0
        %1278 = vmatpush1.bf16.msra.mxu0 0
        %1279 = vmatprep.subr.bf16.mxu0 0
        %1280 = vmatpush1.bf16.msra.mxu0 0
        %1281 = vmatprep.subr.bf16.mxu0 0
        %1282 = vmatpush1.bf16.msra.mxu0 0
        %1283 = vmatprep.subr.bf16.mxu0 0
        %1284 = vmatpush1.bf16.msra.mxu0 0
        %1285 = vmatprep.subr.bf16.mxu0 0
        %1286 = vmatpush1.bf16.msra.mxu0 0
        %1287 = vmatprep.subr.bf16.mxu0 0
        %1288 = vmatpush1.bf16.msra.mxu0 0
        %1289 = vmatprep.subr.bf16.mxu0 0
        %1290 = vmatpush1.bf16.msra.mxu0 0
        %1291 = vmatprep.subr.bf16.mxu0 0
        %1292 = vmatpush1.bf16.msra.mxu0 0
        %1293 = vmatprep.subr.bf16.mxu0 0
        %1294 = vmatpush1.bf16.msra.mxu0 0
        %1295 = vmatprep.subr.bf16.mxu0 0
        %1296 = vmatpush1.bf16.msra.mxu0 0
        %1297 = vmatprep.subr.bf16.mxu0 0
        %1298 = vmatpush1.bf16.msra.mxu0 0
        %1299 = vmatprep.subr.bf16.mxu0 0
        %1300 = vmatpush1.bf16.msra.mxu0 0
        %1301 = vmatprep.subr.bf16.mxu0 0
        %1302 = vmatpush1.bf16.msra.mxu0 0
        %1303 = vmatprep.mubr.bf16.mxu0 0
        %1304 = vmatmul.mubr.bf16.gmra.mrb[0].mxu0 %v1266
        %v1305 = vpop.f32.mrb[0].mxu0
        %v1306 = vadd.f32 0.0, %v1305
        %v1307 = vpop.f32.mrb[0].mxu0
        %v1308 = vpop.f32.mrb[0].mxu0
        %v1309 = vpop.f32.mrb[0].mxu0
        %1310 = vdwg.mxu0
        %v1311 = vpack.c.bf16 %v1306, %v1306
        %s1312 = scalar_lea.vmem %s4, 8
        %v1313 = vld [vmem:[%s1312] sm:$0xf]
        %v1314 = vld [vmem:[%s1312 + $0x4] sm:$0xf]
        %v1317 = vunpack.c.l.b16 %v1313
        %v1318 = vunpack.c.l.b16 %v1314
        %v1319 = vpack.c.b16 %v1318, %v1317
        %v1322 = vsel %vm810, %v1311, 0
        %1324 = vmatprep.subr.bf16.mxu0 0
        %1325 = vmatpush1.bf16.msra.mxu0 %v1319
        %1326 = vmatprep.subr.bf16.mxu0 0
        %1327 = vmatpush1.bf16.msra.mxu0 0
        %1328 = vmatprep.subr.bf16.mxu0 0
        %1329 = vmatpush1.bf16.msra.mxu0 0
        %1330 = vmatprep.subr.bf16.mxu0 0
        %1331 = vmatpush1.bf16.msra.mxu0 0
        %1332 = vmatprep.subr.bf16.mxu0 0
        %1333 = vmatpush1.bf16.msra.mxu0 0
        %1334 = vmatprep.subr.bf16.mxu0 0
        %1335 = vmatpush1.bf16.msra.mxu0 0
        %1336 = vmatprep.subr.bf16.mxu0 0
        %1337 = vmatpush1.bf16.msra.mxu0 0
        %1338 = vmatprep.subr.bf16.mxu0 0
        %1339 = vmatpush1.bf16.msra.mxu0 0
        %1340 = vmatprep.subr.bf16.mxu0 0
        %1341 = vmatpush1.bf16.msra.mxu0 0
        %1342 = vmatprep.subr.bf16.mxu0 0
        %1343 = vmatpush1.bf16.msra.mxu0 0
        %1344 = vmatprep.subr.bf16.mxu0 0
        %1345 = vmatpush1.bf16.msra.mxu0 0
        %1346 = vmatprep.subr.bf16.mxu0 0
        %1347 = vmatpush1.bf16.msra.mxu0 0
        %1348 = vmatprep.subr.bf16.mxu0 0
        %1349 = vmatpush1.bf16.msra.mxu0 0
        %1350 = vmatprep.subr.bf16.mxu0 0
        %1351 = vmatpush1.bf16.msra.mxu0 0
        %1352 = vmatprep.subr.bf16.mxu0 0
        %1353 = vmatpush1.bf16.msra.mxu0 0
        %1354 = vmatprep.subr.bf16.mxu0 0
        %1355 = vmatpush1.bf16.msra.mxu0 0
        %1356 = vmatprep.mubr.bf16.mxu0 0
        %1357 = vmatmul.mubr.bf16.gmra.mrb[0].mxu0 %v1322
        %v1358 = vpop.f32.mrb[0].mxu0
        %v1359 = vadd.f32 0.0, %v1358
        %v1360 = vpop.f32.mrb[0].mxu0
        %v1361 = vpop.f32.mrb[0].mxu0
        %v1362 = vpop.f32.mrb[0].mxu0
        %1363 = vdwg.mxu0
        %v1366 = vunpack.c.l.b16 %v954
        %v1367 = vunpack.c.l.b16 %v955
        %v1368 = vpack.c.b16 %v1367, %v1366
        %v1371 = vsel %vm810, %v953, 0
        %1373 = vmatprep.subr.bf16.mxu0 0
        %1374 = vmatpush1.bf16.msra.mxu0 %v1368
        %1375 = vmatprep.subr.bf16.mxu0 0
        %1376 = vmatpush1.bf16.msra.mxu0 0
        %1377 = vmatprep.subr.bf16.mxu0 0
        %1378 = vmatpush1.bf16.msra.mxu0 0
        %1379 = vmatprep.subr.bf16.mxu0 0
        %1380 = vmatpush1.bf16.msra.mxu0 0
        %1381 = vmatprep.subr.bf16.mxu0 0
        %1382 = vmatpush1.bf16.msra.mxu0 0
        %1383 = vmatprep.subr.bf16.mxu0 0
        %1384 = vmatpush1.bf16.msra.mxu0 0
        %1385 = vmatprep.subr.bf16.mxu0 0
        %1386 = vmatpush1.bf16.msra.mxu0 0
        %1387 = vmatprep.subr.bf16.mxu0 0
        %1388 = vmatpush1.bf16.msra.mxu0 0
        %1389 = vmatprep.subr.bf16.mxu0 0
        %1390 = vmatpush1.bf16.msra.mxu0 0
        %1391 = vmatprep.subr.bf16.mxu0 0
        %1392 = vmatpush1.bf16.msra.mxu0 0
        %1393 = vmatprep.subr.bf16.mxu0 0
        %1394 = vmatpush1.bf16.msra.mxu0 0
        %1395 = vmatprep.subr.bf16.mxu0 0
        %1396 = vmatpush1.bf16.msra.mxu0 0
        %1397 = vmatprep.subr.bf16.mxu0 0
        %1398 = vmatpush1.bf16.msra.mxu0 0
        %1399 = vmatprep.subr.bf16.mxu0 0
        %1400 = vmatpush1.bf16.msra.mxu0 0
        %1401 = vmatprep.subr.bf16.mxu0 0
        %1402 = vmatpush1.bf16.msra.mxu0 0
        %1403 = vmatprep.subr.bf16.mxu0 0
        %1404 = vmatpush1.bf16.msra.mxu0 0
        %1405 = vmatprep.mubr.bf16.mxu0 0
        %1406 = vmatmul.mubr.bf16.gmra.mrb[0].mxu0 %v1371
        %v1407 = vpop.f32.mrb[0].mxu0
        %v1408 = vadd.f32 %v1359, %v1407
        %v1409 = vpop.f32.mrb[0].mxu0
        %v1410 = vpop.f32.mrb[0].mxu0
        %v1411 = vpop.f32.mrb[0].mxu0
        %1412 = vdwg.mxu0
        %s1413 = scalar_lea.vmem %s3, 64
        %v1414 = vld [vmem:[%s1413] sm:$0xf]
        %v1415 = vld [vmem:[%s1413 + $0x4] sm:$0xf]
        %v1416 = vld [vmem:[%s1413 + $0x8] sm:$0xf]
        %v1417 = vld [vmem:[%s1413 + $0xc] sm:$0xf]
        %v1418 = vld [vmem:[%s1413 + $0x10] sm:$0xf]
        %v1419 = vld [vmem:[%s1413 + $0x14] sm:$0xf]
        %v1420 = vld [vmem:[%s1413 + $0x18] sm:$0xf]
        %v1421 = vld [vmem:[%s1413 + $0x1c] sm:$0xf]
        %v1430 = vunpack.c.l.b16 %v1414
        %v1431 = vunpack.c.l.b16 %v1415
        %v1432 = vunpack.c.l.b16 %v1416
        %v1433 = vunpack.c.l.b16 %v1417
        %v1434 = vunpack.c.l.b16 %v1418
        %v1435 = vunpack.c.l.b16 %v1419
        %v1436 = vunpack.c.l.b16 %v1420
        %v1437 = vunpack.c.l.b16 %v1421
        %v1438 = vpack.c.b16 %v1431, %v1430
        %v1439 = vpack.c.b16 %v1433, %v1432
        %v1440 = vpack.c.b16 %v1435, %v1434
        %v1441 = vpack.c.b16 %v1437, %v1436
        %1446 = vmatprep.subr.bf16.mxu0 0
        %1447 = vmatpush1.bf16.msra.mxu0 %v1438
        %1448 = vmatprep.subr.bf16.mxu0 0
        %1449 = vmatpush1.bf16.msra.mxu0 %v1439
        %1450 = vmatprep.subr.bf16.mxu0 0
        %1451 = vmatpush1.bf16.msra.mxu0 %v1440
        %1452 = vmatprep.subr.bf16.mxu0 0
        %1453 = vmatpush1.bf16.msra.mxu0 %v1441
        %1454 = vmatprep.subr.bf16.mxu0 0
        %1455 = vmatpush1.bf16.msra.mxu0 0
        %1456 = vmatprep.subr.bf16.mxu0 0
        %1457 = vmatpush1.bf16.msra.mxu0 0
        %1458 = vmatprep.subr.bf16.mxu0 0
        %1459 = vmatpush1.bf16.msra.mxu0 0
        %1460 = vmatprep.subr.bf16.mxu0 0
        %1461 = vmatpush1.bf16.msra.mxu0 0
        %1462 = vmatprep.subr.bf16.mxu0 0
        %1463 = vmatpush1.bf16.msra.mxu0 0
        %1464 = vmatprep.subr.bf16.mxu0 0
        %1465 = vmatpush1.bf16.msra.mxu0 0
        %1466 = vmatprep.subr.bf16.mxu0 0
        %1467 = vmatpush1.bf16.msra.mxu0 0
        %1468 = vmatprep.subr.bf16.mxu0 0
        %1469 = vmatpush1.bf16.msra.mxu0 0
        %1470 = vmatprep.subr.bf16.mxu0 0
        %1471 = vmatpush1.bf16.msra.mxu0 0
        %1472 = vmatprep.subr.bf16.mxu0 0
        %1473 = vmatpush1.bf16.msra.mxu0 0
        %1474 = vmatprep.subr.bf16.mxu0 0
        %1475 = vmatpush1.bf16.msra.mxu0 0
        %1476 = vmatprep.subr.bf16.mxu0 0
        %1477 = vmatpush1.bf16.msra.mxu0 0
        %1478 = vmatprep.mubr.bf16.mxu0 0
        %1479 = vmatmul.mubr.bf16.gmra.mrb[0].mxu0 %v622
        %v1480 = vpop.f32.mrb[0].mxu0
        %v1481 = vadd.f32 0.0, %v1480
        %v1482 = vpop.f32.mrb[0].mxu0
        %v1483 = vpop.f32.mrb[0].mxu0
        %v1484 = vpop.f32.mrb[0].mxu0
        %1485 = vdwg.mxu0
        %s1486 = scalar_lea.vmem %s3, 192
        %v1487 = vld [vmem:[%s1486] sm:$0xf]
        %v1488 = vld [vmem:[%s1486 + $0x4] sm:$0xf]
        %v1489 = vld [vmem:[%s1486 + $0x8] sm:$0xf]
        %v1490 = vld [vmem:[%s1486 + $0xc] sm:$0xf]
        %v1491 = vld [vmem:[%s1486 + $0x10] sm:$0xf]
        %v1492 = vld [vmem:[%s1486 + $0x14] sm:$0xf]
        %v1493 = vld [vmem:[%s1486 + $0x18] sm:$0xf]
        %v1494 = vld [vmem:[%s1486 + $0x1c] sm:$0xf]
        %v1503 = vunpack.c.l.b16 %v1487
        %v1504 = vunpack.c.l.b16 %v1488
        %v1505 = vunpack.c.l.b16 %v1489
        %v1506 = vunpack.c.l.b16 %v1490
        %v1507 = vunpack.c.l.b16 %v1491
        %v1508 = vunpack.c.l.b16 %v1492
        %v1509 = vunpack.c.l.b16 %v1493
        %v1510 = vunpack.c.l.b16 %v1494
        %v1511 = vpack.c.b16 %v1504, %v1503
        %v1512 = vpack.c.b16 %v1506, %v1505
        %v1513 = vpack.c.b16 %v1508, %v1507
        %v1514 = vpack.c.b16 %v1510, %v1509
        %1519 = vmatprep.subr.bf16.mxu0 0
        %1520 = vmatpush1.bf16.msra.mxu0 %v1511
        %1521 = vmatprep.subr.bf16.mxu0 0
        %1522 = vmatpush1.bf16.msra.mxu0 %v1512
        %1523 = vmatprep.subr.bf16.mxu0 0
        %1524 = vmatpush1.bf16.msra.mxu0 %v1513
        %1525 = vmatprep.subr.bf16.mxu0 0
        %1526 = vmatpush1.bf16.msra.mxu0 %v1514
        %1527 = vmatprep.subr.bf16.mxu0 0
        %1528 = vmatpush1.bf16.msra.mxu0 0
        %1529 = vmatprep.subr.bf16.mxu0 0
        %1530 = vmatpush1.bf16.msra.mxu0 0
        %1531 = vmatprep.subr.bf16.mxu0 0
        %1532 = vmatpush1.bf16.msra.mxu0 0
        %1533 = vmatprep.subr.bf16.mxu0 0
        %1534 = vmatpush1.bf16.msra.mxu0 0
        %1535 = vmatprep.subr.bf16.mxu0 0
        %1536 = vmatpush1.bf16.msra.mxu0 0
        %1537 = vmatprep.subr.bf16.mxu0 0
        %1538 = vmatpush1.bf16.msra.mxu0 0
        %1539 = vmatprep.subr.bf16.mxu0 0
        %1540 = vmatpush1.bf16.msra.mxu0 0
        %1541 = vmatprep.subr.bf16.mxu0 0
        %1542 = vmatpush1.bf16.msra.mxu0 0
        %1543 = vmatprep.subr.bf16.mxu0 0
        %1544 = vmatpush1.bf16.msra.mxu0 0
        %1545 = vmatprep.subr.bf16.mxu0 0
        %1546 = vmatpush1.bf16.msra.mxu0 0
        %1547 = vmatprep.subr.bf16.mxu0 0
        %1548 = vmatpush1.bf16.msra.mxu0 0
        %1549 = vmatprep.subr.bf16.mxu0 0
        %1550 = vmatpush1.bf16.msra.mxu0 0
        %1551 = vmatprep.mubr.bf16.mxu0 0
        %1552 = vmatmul.mubr.bf16.gmra.mrb[0].mxu0 %v622
        %v1553 = vpop.f32.mrb[0].mxu0
        %v1554 = vadd.f32 0.0, %v1553
        %v1555 = vpop.f32.mrb[0].mxu0
        %v1556 = vpop.f32.mrb[0].mxu0
        %v1557 = vpop.f32.mrb[0].mxu0
        %1558 = vdwg.mxu0
        %s1559 = scalar_lea.vmem %s3, 320
        %v1560 = vld [vmem:[%s1559] sm:$0xf]
        %v1561 = vld [vmem:[%s1559 + $0x4] sm:$0xf]
        %v1562 = vld [vmem:[%s1559 + $0x8] sm:$0xf]
        %v1563 = vld [vmem:[%s1559 + $0xc] sm:$0xf]
        %v1564 = vld [vmem:[%s1559 + $0x10] sm:$0xf]
        %v1565 = vld [vmem:[%s1559 + $0x14] sm:$0xf]
        %v1566 = vld [vmem:[%s1559 + $0x18] sm:$0xf]
        %v1567 = vld [vmem:[%s1559 + $0x1c] sm:$0xf]
        %v1576 = vunpack.c.l.b16 %v1560
        %v1577 = vunpack.c.l.b16 %v1561
        %v1578 = vunpack.c.l.b16 %v1562
        %v1579 = vunpack.c.l.b16 %v1563
        %v1580 = vunpack.c.l.b16 %v1564
        %v1581 = vunpack.c.l.b16 %v1565
        %v1582 = vunpack.c.l.b16 %v1566
        %v1583 = vunpack.c.l.b16 %v1567
        %v1584 = vpack.c.b16 %v1577, %v1576
        %v1585 = vpack.c.b16 %v1579, %v1578
        %v1586 = vpack.c.b16 %v1581, %v1580
        %v1587 = vpack.c.b16 %v1583, %v1582
        %1592 = vmatprep.subr.bf16.mxu0 0
        %1593 = vmatpush1.bf16.msra.mxu0 %v1584
        %1594 = vmatprep.subr.bf16.mxu0 0
        %1595 = vmatpush1.bf16.msra.mxu0 %v1585
        %1596 = vmatprep.subr.bf16.mxu0 0
        %1597 = vmatpush1.bf16.msra.mxu0 %v1586
        %1598 = vmatprep.subr.bf16.mxu0 0
        %1599 = vmatpush1.bf16.msra.mxu0 %v1587
        %1600 = vmatprep.subr.bf16.mxu0 0
        %1601 = vmatpush1.bf16.msra.mxu0 0
        %1602 = vmatprep.subr.bf16.mxu0 0
        %1603 = vmatpush1.bf16.msra.mxu0 0
        %1604 = vmatprep.subr.bf16.mxu0 0
        %1605 = vmatpush1.bf16.msra.mxu0 0
        %1606 = vmatprep.subr.bf16.mxu0 0
        %1607 = vmatpush1.bf16.msra.mxu0 0
        %1608 = vmatprep.subr.bf16.mxu0 0
        %1609 = vmatpush1.bf16.msra.mxu0 0
        %1610 = vmatprep.subr.bf16.mxu0 0
        %1611 = vmatpush1.bf16.msra.mxu0 0
        %1612 = vmatprep.subr.bf16.mxu0 0
        %1613 = vmatpush1.bf16.msra.mxu0 0
        %1614 = vmatprep.subr.bf16.mxu0 0
        %1615 = vmatpush1.bf16.msra.mxu0 0
        %1616 = vmatprep.subr.bf16.mxu0 0
        %1617 = vmatpush1.bf16.msra.mxu0 0
        %1618 = vmatprep.subr.bf16.mxu0 0
        %1619 = vmatpush1.bf16.msra.mxu0 0
        %1620 = vmatprep.subr.bf16.mxu0 0
        %1621 = vmatpush1.bf16.msra.mxu0 0
        %1622 = vmatprep.subr.bf16.mxu0 0
        %1623 = vmatpush1.bf16.msra.mxu0 0
        %1624 = vmatprep.mubr.bf16.mxu0 0
        %1625 = vmatmul.mubr.bf16.gmra.mrb[0].mxu0 %v622
        %v1626 = vpop.f32.mrb[0].mxu0
        %v1627 = vadd.f32 0.0, %v1626
        %v1628 = vpop.f32.mrb[0].mxu0
        %v1629 = vpop.f32.mrb[0].mxu0
        %v1630 = vpop.f32.mrb[0].mxu0
        %1631 = vdwg.mxu0
        %v1633 = vsel %vm810, %v1481, 0
        %v1636 = vsel %vm810, %v1554, 0
        %1638 = vmatprep.subr.mxu0 0.0
        %1639 = vmatpush1.xpose.msra.mxu0 %v1636
        %1640 = vmatprep.subr.mxu0 0.0
        %1641 = vmatpush1.xpose.msra.mxu0 0.0
        %1642 = vmatprep.subr.mxu0 0.0
        %1643 = vmatpush1.xpose.msra.mxu0 0.0
        %1644 = vmatprep.subr.mxu0 0.0
        %1645 = vmatpush1.xpose.msra.mxu0 0.0
        %1646 = vmatprep.subr.mxu0 0.0
        %1647 = vmatpush1.xpose.msra.mxu0 0.0
        %1648 = vmatprep.subr.mxu0 0.0
        %1649 = vmatpush1.xpose.msra.mxu0 0.0
        %1650 = vmatprep.subr.mxu0 0.0
        %1651 = vmatpush1.xpose.msra.mxu0 0.0
        %1652 = vmatprep.subr.mxu0 0.0
        %1653 = vmatpush1.xpose.msra.mxu0 0.0
        %1654 = vmatprep.subr.mxu0 0.0
        %1655 = vmatpush1.xpose.msra.mxu0 0.0
        %1656 = vmatprep.subr.mxu0 0.0
        %1657 = vmatpush1.xpose.msra.mxu0 0.0
        %1658 = vmatprep.subr.mxu0 0.0
        %1659 = vmatpush1.xpose.msra.mxu0 0.0
        %1660 = vmatprep.subr.mxu0 0.0
        %1661 = vmatpush1.xpose.msra.mxu0 0.0
        %1662 = vmatprep.subr.mxu0 0.0
        %1663 = vmatpush1.xpose.msra.mxu0 0.0
        %1664 = vmatprep.subr.mxu0 0.0
        %1665 = vmatpush1.xpose.msra.mxu0 0.0
        %1666 = vmatprep.subr.mxu0 0.0
        %1667 = vmatpush1.xpose.msra.mxu0 0.0
        %1668 = vmatprep.subr.mxu0 0.0
        %1669 = vmatpush1.xpose.msra.mxu0 0.0
        %1670 = vmatprep.subr.mxu0 0.0
        %1671 = vmatpush1.xpose.msra.mxu0 0.0
        %1672 = vmatprep.subr.mxu0 0.0
        %1673 = vmatpush1.xpose.msra.mxu0 0.0
        %1674 = vmatprep.subr.mxu0 0.0
        %1675 = vmatpush1.xpose.msra.mxu0 0.0
        %1676 = vmatprep.subr.mxu0 0.0
        %1677 = vmatpush1.xpose.msra.mxu0 0.0
        %1678 = vmatprep.subr.mxu0 0.0
        %1679 = vmatpush1.xpose.msra.mxu0 0.0
        %1680 = vmatprep.subr.mxu0 0.0
        %1681 = vmatpush1.xpose.msra.mxu0 0.0
        %1682 = vmatprep.subr.mxu0 0.0
        %1683 = vmatpush1.xpose.msra.mxu0 0.0
        %1684 = vmatprep.subr.mxu0 0.0
        %1685 = vmatpush1.xpose.msra.mxu0 0.0
        %1686 = vmatprep.subr.mxu0 0.0
        %1687 = vmatpush1.xpose.msra.mxu0 0.0
        %1688 = vmatprep.subr.mxu0 0.0
        %1689 = vmatpush1.xpose.msra.mxu0 0.0
        %1690 = vmatprep.subr.mxu0 0.0
        %1691 = vmatpush1.xpose.msra.mxu0 0.0
        %1692 = vmatprep.subr.mxu0 0.0
        %1693 = vmatpush1.xpose.msra.mxu0 0.0
        %1694 = vmatprep.subr.mxu0 0.0
        %1695 = vmatpush1.xpose.msra.mxu0 0.0
        %1696 = vmatprep.subr.mxu0 0.0
        %1697 = vmatpush1.xpose.msra.mxu0 0.0
        %1698 = vmatprep.subr.mxu0 0.0
        %1699 = vmatpush1.xpose.msra.mxu0 0.0
        %1700 = vmatprep.subr.mxu0 0.0
        %1701 = vmatpush1.xpose.msra.mxu0 0.0
        %1702 = vmatprep.mubr.f32.mxu0 0.0
        %1703 = vmatmul.mubr.f32.gmra.mrb[0].mxu0 %v1633
        %v1704 = vpop.f32.mrb[0].mxu0
        %v1705 = vadd.f32 0.0, %v1704
        %v1706 = vpop.f32.mrb[0].mxu0
        %1707 = vdwg.mxu0
        %v1708 = vmul.f32 %v1705, 0.25
        %v1709 = vsel %vm888, %v1708, -inf
        %1710 = vmax.xlane.f32.xlu0 %v1709
        %v1711 = vpop.xlane.xlu0 %1710
        %v1712 = vsub.f32 %v1708, %v1711
        %v1713 = vmul.f32 %v1712, 1.442695
        %v1714 = vpow.pop %v1713
        %v1715 = vsel %vm888, %v1714, 0.0
        %1716 = vadd.xlane.f32.xlu0 %v1715
        %v1717 = vpop.xlane.xlu0 %1716
        %v1718 = vrcp.pop %v1717
        %v1719 = vmul.f32 %v1714, %v1718
        %v1720 = vpack.c.bf16 %v1719, %v1719
        %v1721 = vpack.c.bf16 %v1627, %v1627
        %v1723 = vsel %vm902, %v1720, 0
        %v1726 = vand.u32 %v1721, %v909
        %1728 = vmatprep.subr.bf16.mxu0 0
        %1729 = vmatpush1.bf16.msra.mxu0 %v1726
        %1730 = vmatprep.subr.bf16.mxu0 0
        %1731 = vmatpush1.bf16.msra.mxu0 0
        %1732 = vmatprep.subr.bf16.mxu0 0
        %1733 = vmatpush1.bf16.msra.mxu0 0
        %1734 = vmatprep.subr.bf16.mxu0 0
        %1735 = vmatpush1.bf16.msra.mxu0 0
        %1736 = vmatprep.subr.bf16.mxu0 0
        %1737 = vmatpush1.bf16.msra.mxu0 0
        %1738 = vmatprep.subr.bf16.mxu0 0
        %1739 = vmatpush1.bf16.msra.mxu0 0
        %1740 = vmatprep.subr.bf16.mxu0 0
        %1741 = vmatpush1.bf16.msra.mxu0 0
        %1742 = vmatprep.subr.bf16.mxu0 0
        %1743 = vmatpush1.bf16.msra.mxu0 0
        %1744 = vmatprep.subr.bf16.mxu0 0
        %1745 = vmatpush1.bf16.msra.mxu0 0
        %1746 = vmatprep.subr.bf16.mxu0 0
        %1747 = vmatpush1.bf16.msra.mxu0 0
        %1748 = vmatprep.subr.bf16.mxu0 0
        %1749 = vmatpush1.bf16.msra.mxu0 0
        %1750 = vmatprep.subr.bf16.mxu0 0
        %1751 = vmatpush1.bf16.msra.mxu0 0
        %1752 = vmatprep.subr.bf16.mxu0 0
        %1753 = vmatpush1.bf16.msra.mxu0 0
        %1754 = vmatprep.subr.bf16.mxu0 0
        %1755 = vmatpush1.bf16.msra.mxu0 0
        %1756 = vmatprep.subr.bf16.mxu0 0
        %1757 = vmatpush1.bf16.msra.mxu0 0
        %1758 = vmatprep.subr.bf16.mxu0 0
        %1759 = vmatpush1.bf16.msra.mxu0 0
        %1760 = vmatprep.mubr.bf16.mxu0 0
        %1761 = vmatmul.mubr.bf16.gmra.mrb[0].mxu0 %v1723
        %v1762 = vpop.f32.mrb[0].mxu0
        %v1763 = vadd.f32 0.0, %v1762
        %v1764 = vpop.f32.mrb[0].mxu0
        %v1765 = vpop.f32.mrb[0].mxu0
        %v1766 = vpop.f32.mrb[0].mxu0
        %1767 = vdwg.mxu0
        %v1768 = vpack.c.bf16 %v1763, %v1763
        %s1769 = scalar_lea.vmem %s4, 16
        %v1770 = vld [vmem:[%s1769] sm:$0xf]
        %v1771 = vld [vmem:[%s1769 + $0x4] sm:$0xf]
        %v1774 = vunpack.c.l.b16 %v1770
        %v1775 = vunpack.c.l.b16 %v1771
        %v1776 = vpack.c.b16 %v1775, %v1774
        %v1779 = vsel %vm810, %v1768, 0
        %1781 = vmatprep.subr.bf16.mxu0 0
        %1782 = vmatpush1.bf16.msra.mxu0 %v1776
        %1783 = vmatprep.subr.bf16.mxu0 0
        %1784 = vmatpush1.bf16.msra.mxu0 0
        %1785 = vmatprep.subr.bf16.mxu0 0
        %1786 = vmatpush1.bf16.msra.mxu0 0
        %1787 = vmatprep.subr.bf16.mxu0 0
        %1788 = vmatpush1.bf16.msra.mxu0 0
        %1789 = vmatprep.subr.bf16.mxu0 0
        %1790 = vmatpush1.bf16.msra.mxu0 0
        %1791 = vmatprep.subr.bf16.mxu0 0
        %1792 = vmatpush1.bf16.msra.mxu0 0
        %1793 = vmatprep.subr.bf16.mxu0 0
        %1794 = vmatpush1.bf16.msra.mxu0 0
        %1795 = vmatprep.subr.bf16.mxu0 0
        %1796 = vmatpush1.bf16.msra.mxu0 0
        %1797 = vmatprep.subr.bf16.mxu0 0
        %1798 = vmatpush1.bf16.msra.mxu0 0
        %1799 = vmatprep.subr.bf16.mxu0 0
        %1800 = vmatpush1.bf16.msra.mxu0 0
        %1801 = vmatprep.subr.bf16.mxu0 0
        %1802 = vmatpush1.bf16.msra.mxu0 0
        %1803 = vmatprep.subr.bf16.mxu0 0
        %1804 = vmatpush1.bf16.msra.mxu0 0
        %1805 = vmatprep.subr.bf16.mxu0 0
        %1806 = vmatpush1.bf16.msra.mxu0 0
        %1807 = vmatprep.subr.bf16.mxu0 0
        %1808 = vmatpush1.bf16.msra.mxu0 0
        %1809 = vmatprep.subr.bf16.mxu0 0
        %1810 = vmatpush1.bf16.msra.mxu0 0
        %1811 = vmatprep.subr.bf16.mxu0 0
        %1812 = vmatpush1.bf16.msra.mxu0 0
        %1813 = vmatprep.mubr.bf16.mxu0 0
        %1814 = vmatmul.mubr.bf16.gmra.mrb[0].mxu0 %v1779
        %v1815 = vpop.f32.mrb[0].mxu0
        %v1816 = vadd.f32 0.0, %v1815
        %v1817 = vpop.f32.mrb[0].mxu0
        %v1818 = vpop.f32.mrb[0].mxu0
        %v1819 = vpop.f32.mrb[0].mxu0
        %1820 = vdwg.mxu0
        %v1821 = vadd.f32 %v1408, %v1816
        %s1822 = scalar_lea.vmem %s3, 96
        %v1823 = vld [vmem:[%s1822] sm:$0xf]
        %v1824 = vld [vmem:[%s1822 + $0x4] sm:$0xf]
        %v1825 = vld [vmem:[%s1822 + $0x8] sm:$0xf]
        %v1826 = vld [vmem:[%s1822 + $0xc] sm:$0xf]
        %v1827 = vld [vmem:[%s1822 + $0x10] sm:$0xf]
        %v1828 = vld [vmem:[%s1822 + $0x14] sm:$0xf]
        %v1829 = vld [vmem:[%s1822 + $0x18] sm:$0xf]
        %v1830 = vld [vmem:[%s1822 + $0x1c] sm:$0xf]
        %v1839 = vunpack.c.l.b16 %v1823
        %v1840 = vunpack.c.l.b16 %v1824
        %v1841 = vunpack.c.l.b16 %v1825
        %v1842 = vunpack.c.l.b16 %v1826
        %v1843 = vunpack.c.l.b16 %v1827
        %v1844 = vunpack.c.l.b16 %v1828
        %v1845 = vunpack.c.l.b16 %v1829
        %v1846 = vunpack.c.l.b16 %v1830
        %v1847 = vpack.c.b16 %v1840, %v1839
        %v1848 = vpack.c.b16 %v1842, %v1841
        %v1849 = vpack.c.b16 %v1844, %v1843
        %v1850 = vpack.c.b16 %v1846, %v1845
        %1855 = vmatprep.subr.bf16.mxu0 0
        %1856 = vmatpush1.bf16.msra.mxu0 %v1847
        %1857 = vmatprep.subr.bf16.mxu0 0
        %1858 = vmatpush1.bf16.msra.mxu0 %v1848
        %1859 = vmatprep.subr.bf16.mxu0 0
        %1860 = vmatpush1.bf16.msra.mxu0 %v1849
        %1861 = vmatprep.subr.bf16.mxu0 0
        %1862 = vmatpush1.bf16.msra.mxu0 %v1850
        %1863 = vmatprep.subr.bf16.mxu0 0
        %1864 = vmatpush1.bf16.msra.mxu0 0
        %1865 = vmatprep.subr.bf16.mxu0 0
        %1866 = vmatpush1.bf16.msra.mxu0 0
        %1867 = vmatprep.subr.bf16.mxu0 0
        %1868 = vmatpush1.bf16.msra.mxu0 0
        %1869 = vmatprep.subr.bf16.mxu0 0
        %1870 = vmatpush1.bf16.msra.mxu0 0
        %1871 = vmatprep.subr.bf16.mxu0 0
        %1872 = vmatpush1.bf16.msra.mxu0 0
        %1873 = vmatprep.subr.bf16.mxu0 0
        %1874 = vmatpush1.bf16.msra.mxu0 0
        %1875 = vmatprep.subr.bf16.mxu0 0
        %1876 = vmatpush1.bf16.msra.mxu0 0
        %1877 = vmatprep.subr.bf16.mxu0 0
        %1878 = vmatpush1.bf16.msra.mxu0 0
        %1879 = vmatprep.subr.bf16.mxu0 0
        %1880 = vmatpush1.bf16.msra.mxu0 0
        %1881 = vmatprep.subr.bf16.mxu0 0
        %1882 = vmatpush1.bf16.msra.mxu0 0
        %1883 = vmatprep.subr.bf16.mxu0 0
        %1884 = vmatpush1.bf16.msra.mxu0 0
        %1885 = vmatprep.subr.bf16.mxu0 0
        %1886 = vmatpush1.bf16.msra.mxu0 0
        %1887 = vmatprep.mubr.bf16.mxu0 0
        %1888 = vmatmul.mubr.bf16.gmra.mrb[0].mxu0 %v622
        %v1889 = vpop.f32.mrb[0].mxu0
        %v1890 = vadd.f32 0.0, %v1889
        %v1891 = vpop.f32.mrb[0].mxu0
        %v1892 = vpop.f32.mrb[0].mxu0
        %v1893 = vpop.f32.mrb[0].mxu0
        %1894 = vdwg.mxu0
        %s1895 = scalar_lea.vmem %s3, 224
        %v1896 = vld [vmem:[%s1895] sm:$0xf]
        %v1897 = vld [vmem:[%s1895 + $0x4] sm:$0xf]
        %v1898 = vld [vmem:[%s1895 + $0x8] sm:$0xf]
        %v1899 = vld [vmem:[%s1895 + $0xc] sm:$0xf]
        %v1900 = vld [vmem:[%s1895 + $0x10] sm:$0xf]
        %v1901 = vld [vmem:[%s1895 + $0x14] sm:$0xf]
        %v1902 = vld [vmem:[%s1895 + $0x18] sm:$0xf]
        %v1903 = vld [vmem:[%s1895 + $0x1c] sm:$0xf]
        %v1912 = vunpack.c.l.b16 %v1896
        %v1913 = vunpack.c.l.b16 %v1897
        %v1914 = vunpack.c.l.b16 %v1898
        %v1915 = vunpack.c.l.b16 %v1899
        %v1916 = vunpack.c.l.b16 %v1900
        %v1917 = vunpack.c.l.b16 %v1901
        %v1918 = vunpack.c.l.b16 %v1902
        %v1919 = vunpack.c.l.b16 %v1903
        %v1920 = vpack.c.b16 %v1913, %v1912
        %v1921 = vpack.c.b16 %v1915, %v1914
        %v1922 = vpack.c.b16 %v1917, %v1916
        %v1923 = vpack.c.b16 %v1919, %v1918
        %1928 = vmatprep.subr.bf16.mxu0 0
        %1929 = vmatpush1.bf16.msra.mxu0 %v1920
        %1930 = vmatprep.subr.bf16.mxu0 0
        %1931 = vmatpush1.bf16.msra.mxu0 %v1921
        %1932 = vmatprep.subr.bf16.mxu0 0
        %1933 = vmatpush1.bf16.msra.mxu0 %v1922
        %1934 = vmatprep.subr.bf16.mxu0 0
        %1935 = vmatpush1.bf16.msra.mxu0 %v1923
        %1936 = vmatprep.subr.bf16.mxu0 0
        %1937 = vmatpush1.bf16.msra.mxu0 0
        %1938 = vmatprep.subr.bf16.mxu0 0
        %1939 = vmatpush1.bf16.msra.mxu0 0
        %1940 = vmatprep.subr.bf16.mxu0 0
        %1941 = vmatpush1.bf16.msra.mxu0 0
        %1942 = vmatprep.subr.bf16.mxu0 0
        %1943 = vmatpush1.bf16.msra.mxu0 0
        %1944 = vmatprep.subr.bf16.mxu0 0
        %1945 = vmatpush1.bf16.msra.mxu0 0
        %1946 = vmatprep.subr.bf16.mxu0 0
        %1947 = vmatpush1.bf16.msra.mxu0 0
        %1948 = vmatprep.subr.bf16.mxu0 0
        %1949 = vmatpush1.bf16.msra.mxu0 0
        %1950 = vmatprep.subr.bf16.mxu0 0
        %1951 = vmatpush1.bf16.msra.mxu0 0
        %1952 = vmatprep.subr.bf16.mxu0 0
        %1953 = vmatpush1.bf16.msra.mxu0 0
        %1954 = vmatprep.subr.bf16.mxu0 0
        %1955 = vmatpush1.bf16.msra.mxu0 0
        %1956 = vmatprep.subr.bf16.mxu0 0
        %1957 = vmatpush1.bf16.msra.mxu0 0
        %1958 = vmatprep.subr.bf16.mxu0 0
        %1959 = vmatpush1.bf16.msra.mxu0 0
        %1960 = vmatprep.mubr.bf16.mxu0 0
        %1961 = vmatmul.mubr.bf16.gmra.mrb[0].mxu0 %v622
        %v1962 = vpop.f32.mrb[0].mxu0
        %v1963 = vadd.f32 0.0, %v1962
        %v1964 = vpop.f32.mrb[0].mxu0
        %v1965 = vpop.f32.mrb[0].mxu0
        %v1966 = vpop.f32.mrb[0].mxu0
        %1967 = vdwg.mxu0
        %s1968 = scalar_lea.vmem %s3, 352
        %v1969 = vld [vmem:[%s1968] sm:$0xf]
        %v1970 = vld [vmem:[%s1968 + $0x4] sm:$0xf]
        %v1971 = vld [vmem:[%s1968 + $0x8] sm:$0xf]
        %v1972 = vld [vmem:[%s1968 + $0xc] sm:$0xf]
        %v1973 = vld [vmem:[%s1968 + $0x10] sm:$0xf]
        %v1974 = vld [vmem:[%s1968 + $0x14] sm:$0xf]
        %v1975 = vld [vmem:[%s1968 + $0x18] sm:$0xf]
        %v1976 = vld [vmem:[%s1968 + $0x1c] sm:$0xf]
        %v1985 = vunpack.c.l.b16 %v1969
        %v1986 = vunpack.c.l.b16 %v1970
        %v1987 = vunpack.c.l.b16 %v1971
        %v1988 = vunpack.c.l.b16 %v1972
        %v1989 = vunpack.c.l.b16 %v1973
        %v1990 = vunpack.c.l.b16 %v1974
        %v1991 = vunpack.c.l.b16 %v1975
        %v1992 = vunpack.c.l.b16 %v1976
        %v1993 = vpack.c.b16 %v1986, %v1985
        %v1994 = vpack.c.b16 %v1988, %v1987
        %v1995 = vpack.c.b16 %v1990, %v1989
        %v1996 = vpack.c.b16 %v1992, %v1991
        %2001 = vmatprep.subr.bf16.mxu0 0
        %2002 = vmatpush1.bf16.msra.mxu0 %v1993
        %2003 = vmatprep.subr.bf16.mxu0 0
        %2004 = vmatpush1.bf16.msra.mxu0 %v1994
        %2005 = vmatprep.subr.bf16.mxu0 0
        %2006 = vmatpush1.bf16.msra.mxu0 %v1995
        %2007 = vmatprep.subr.bf16.mxu0 0
        %2008 = vmatpush1.bf16.msra.mxu0 %v1996
        %2009 = vmatprep.subr.bf16.mxu0 0
        %2010 = vmatpush1.bf16.msra.mxu0 0
        %2011 = vmatprep.subr.bf16.mxu0 0
        %2012 = vmatpush1.bf16.msra.mxu0 0
        %2013 = vmatprep.subr.bf16.mxu0 0
        %2014 = vmatpush1.bf16.msra.mxu0 0
        %2015 = vmatprep.subr.bf16.mxu0 0
        %2016 = vmatpush1.bf16.msra.mxu0 0
        %2017 = vmatprep.subr.bf16.mxu0 0
        %2018 = vmatpush1.bf16.msra.mxu0 0
        %2019 = vmatprep.subr.bf16.mxu0 0
        %2020 = vmatpush1.bf16.msra.mxu0 0
        %2021 = vmatprep.subr.bf16.mxu0 0
        %2022 = vmatpush1.bf16.msra.mxu0 0
        %2023 = vmatprep.subr.bf16.mxu0 0
        %2024 = vmatpush1.bf16.msra.mxu0 0
        %2025 = vmatprep.subr.bf16.mxu0 0
        %2026 = vmatpush1.bf16.msra.mxu0 0
        %2027 = vmatprep.subr.bf16.mxu0 0
        %2028 = vmatpush1.bf16.msra.mxu0 0
        %2029 = vmatprep.subr.bf16.mxu0 0
        %2030 = vmatpush1.bf16.msra.mxu0 0
        %2031 = vmatprep.subr.bf16.mxu0 0
        %2032 = vmatpush1.bf16.msra.mxu0 0
        %2033 = vmatprep.mubr.bf16.mxu0 0
        %2034 = vmatmul.mubr.bf16.gmra.mrb[0].mxu0 %v622
        %v2035 = vpop.f32.mrb[0].mxu0
        %v2036 = vadd.f32 0.0, %v2035
        %v2037 = vpop.f32.mrb[0].mxu0
        %v2038 = vpop.f32.mrb[0].mxu0
        %v2039 = vpop.f32.mrb[0].mxu0
        %2040 = vdwg.mxu0
        %v2042 = vsel %vm810, %v1890, 0
        %v2045 = vsel %vm810, %v1963, 0
        %2047 = vmatprep.subr.mxu0 0.0
        %2048 = vmatpush1.xpose.msra.mxu0 %v2045
        %2049 = vmatprep.subr.mxu0 0.0
        %2050 = vmatpush1.xpose.msra.mxu0 0.0
        %2051 = vmatprep.subr.mxu0 0.0
        %2052 = vmatpush1.xpose.msra.mxu0 0.0
        %2053 = vmatprep.subr.mxu0 0.0
        %2054 = vmatpush1.xpose.msra.mxu0 0.0
        %2055 = vmatprep.subr.mxu0 0.0
        %2056 = vmatpush1.xpose.msra.mxu0 0.0
        %2057 = vmatprep.subr.mxu0 0.0
        %2058 = vmatpush1.xpose.msra.mxu0 0.0
        %2059 = vmatprep.subr.mxu0 0.0
        %2060 = vmatpush1.xpose.msra.mxu0 0.0
        %2061 = vmatprep.subr.mxu0 0.0
        %2062 = vmatpush1.xpose.msra.mxu0 0.0
        %2063 = vmatprep.subr.mxu0 0.0
        %2064 = vmatpush1.xpose.msra.mxu0 0.0
        %2065 = vmatprep.subr.mxu0 0.0
        %2066 = vmatpush1.xpose.msra.mxu0 0.0
        %2067 = vmatprep.subr.mxu0 0.0
        %2068 = vmatpush1.xpose.msra.mxu0 0.0
        %2069 = vmatprep.subr.mxu0 0.0
        %2070 = vmatpush1.xpose.msra.mxu0 0.0
        %2071 = vmatprep.subr.mxu0 0.0
        %2072 = vmatpush1.xpose.msra.mxu0 0.0
        %2073 = vmatprep.subr.mxu0 0.0
        %2074 = vmatpush1.xpose.msra.mxu0 0.0
        %2075 = vmatprep.subr.mxu0 0.0
        %2076 = vmatpush1.xpose.msra.mxu0 0.0
        %2077 = vmatprep.subr.mxu0 0.0
        %2078 = vmatpush1.xpose.msra.mxu0 0.0
        %2079 = vmatprep.subr.mxu0 0.0
        %2080 = vmatpush1.xpose.msra.mxu0 0.0
        %2081 = vmatprep.subr.mxu0 0.0
        %2082 = vmatpush1.xpose.msra.mxu0 0.0
        %2083 = vmatprep.subr.mxu0 0.0
        %2084 = vmatpush1.xpose.msra.mxu0 0.0
        %2085 = vmatprep.subr.mxu0 0.0
        %2086 = vmatpush1.xpose.msra.mxu0 0.0
        %2087 = vmatprep.subr.mxu0 0.0
        %2088 = vmatpush1.xpose.msra.mxu0 0.0
        %2089 = vmatprep.subr.mxu0 0.0
        %2090 = vmatpush1.xpose.msra.mxu0 0.0
        %2091 = vmatprep.subr.mxu0 0.0
        %2092 = vmatpush1.xpose.msra.mxu0 0.0
        %2093 = vmatprep.subr.mxu0 0.0
        %2094 = vmatpush1.xpose.msra.mxu0 0.0
        %2095 = vmatprep.subr.mxu0 0.0
        %2096 = vmatpush1.xpose.msra.mxu0 0.0
        %2097 = vmatprep.subr.mxu0 0.0
        %2098 = vmatpush1.xpose.msra.mxu0 0.0
        %2099 = vmatprep.subr.mxu0 0.0
        %2100 = vmatpush1.xpose.msra.mxu0 0.0
        %2101 = vmatprep.subr.mxu0 0.0
        %2102 = vmatpush1.xpose.msra.mxu0 0.0
        %2103 = vmatprep.subr.mxu0 0.0
        %2104 = vmatpush1.xpose.msra.mxu0 0.0
        %2105 = vmatprep.subr.mxu0 0.0
        %2106 = vmatpush1.xpose.msra.mxu0 0.0
        %2107 = vmatprep.subr.mxu0 0.0
        %2108 = vmatpush1.xpose.msra.mxu0 0.0
        %2109 = vmatprep.subr.mxu0 0.0
        %2110 = vmatpush1.xpose.msra.mxu0 0.0
        %2111 = vmatprep.mubr.f32.mxu0 0.0
        %2112 = vmatmul.mubr.f32.gmra.mrb[0].mxu0 %v2042
        %v2113 = vpop.f32.mrb[0].mxu0
        %v2114 = vadd.f32 0.0, %v2113
        %v2115 = vpop.f32.mrb[0].mxu0
        %2116 = vdwg.mxu0
        %v2117 = vmul.f32 %v2114, 0.25
        %v2118 = vsel %vm888, %v2117, -inf
        %2119 = vmax.xlane.f32.xlu0 %v2118
        %v2120 = vpop.xlane.xlu0 %2119
        %v2121 = vsub.f32 %v2117, %v2120
        %v2122 = vmul.f32 %v2121, 1.442695
        %v2123 = vpow.pop %v2122
        %v2124 = vsel %vm888, %v2123, 0.0
        %2125 = vadd.xlane.f32.xlu0 %v2124
        %v2126 = vpop.xlane.xlu0 %2125
        %v2127 = vrcp.pop %v2126
        %v2128 = vmul.f32 %v2123, %v2127
        %v2129 = vpack.c.bf16 %v2128, %v2128
        %v2130 = vpack.c.bf16 %v2036, %v2036
        %v2132 = vsel %vm902, %v2129, 0
        %v2135 = vand.u32 %v2130, %v909
        %2137 = vmatprep.subr.bf16.mxu0 0
        %2138 = vmatpush1.bf16.msra.mxu0 %v2135
        %2139 = vmatprep.subr.bf16.mxu0 0
        %2140 = vmatpush1.bf16.msra.mxu0 0
        %2141 = vmatprep.subr.bf16.mxu0 0
        %2142 = vmatpush1.bf16.msra.mxu0 0
        %2143 = vmatprep.subr.bf16.mxu0 0
        %2144 = vmatpush1.bf16.msra.mxu0 0
        %2145 = vmatprep.subr.bf16.mxu0 0
        %2146 = vmatpush1.bf16.msra.mxu0 0
        %2147 = vmatprep.subr.bf16.mxu0 0
        %2148 = vmatpush1.bf16.msra.mxu0 0
        %2149 = vmatprep.subr.bf16.mxu0 0
        %2150 = vmatpush1.bf16.msra.mxu0 0
        %2151 = vmatprep.subr.bf16.mxu0 0
        %2152 = vmatpush1.bf16.msra.mxu0 0
        %2153 = vmatprep.subr.bf16.mxu0 0
        %2154 = vmatpush1.bf16.msra.mxu0 0
        %2155 = vmatprep.subr.bf16.mxu0 0
        %2156 = vmatpush1.bf16.msra.mxu0 0
        %2157 = vmatprep.subr.bf16.mxu0 0
        %2158 = vmatpush1.bf16.msra.mxu0 0
        %2159 = vmatprep.subr.bf16.mxu0 0
        %2160 = vmatpush1.bf16.msra.mxu0 0
        %2161 = vmatprep.subr.bf16.mxu0 0
        %2162 = vmatpush1.bf16.msra.mxu0 0
        %2163 = vmatprep.subr.bf16.mxu0 0
        %2164 = vmatpush1.bf16.msra.mxu0 0
        %2165 = vmatprep.subr.bf16.mxu0 0
        %2166 = vmatpush1.bf16.msra.mxu0 0
        %2167 = vmatprep.subr.bf16.mxu0 0
        %2168 = vmatpush1.bf16.msra.mxu0 0
        %2169 = vmatprep.mubr.bf16.mxu0 0
        %2170 = vmatmul.mubr.bf16.gmra.mrb[0].mxu0 %v2132
        %v2171 = vpop.f32.mrb[0].mxu0
        %v2172 = vadd.f32 0.0, %v2171
        %v2173 = vpop.f32.mrb[0].mxu0
        %v2174 = vpop.f32.mrb[0].mxu0
        %v2175 = vpop.f32.mrb[0].mxu0
        %2176 = vdwg.mxu0
        %v2177 = vpack.c.bf16 %v2172, %v2172
        %s2178 = scalar_lea.vmem %s4, 24
        %v2179 = vld [vmem:[%s2178] sm:$0xf]
        %v2180 = vld [vmem:[%s2178 + $0x4] sm:$0xf]
        %v2183 = vunpack.c.l.b16 %v2179
        %v2184 = vunpack.c.l.b16 %v2180
        %v2185 = vpack.c.b16 %v2184, %v2183
        %v2188 = vsel %vm810, %v2177, 0
        %2190 = vmatprep.subr.bf16.mxu0 0
        %2191 = vmatpush1.bf16.msra.mxu0 %v2185
        %2192 = vmatprep.subr.bf16.mxu0 0
        %2193 = vmatpush1.bf16.msra.mxu0 0
        %2194 = vmatprep.subr.bf16.mxu0 0
        %2195 = vmatpush1.bf16.msra.mxu0 0
        %2196 = vmatprep.subr.bf16.mxu0 0
        %2197 = vmatpush1.bf16.msra.mxu0 0
        %2198 = vmatprep.subr.bf16.mxu0 0
        %2199 = vmatpush1.bf16.msra.mxu0 0
        %2200 = vmatprep.subr.bf16.mxu0 0
        %2201 = vmatpush1.bf16.msra.mxu0 0
        %2202 = vmatprep.subr.bf16.mxu0 0
        %2203 = vmatpush1.bf16.msra.mxu0 0
        %2204 = vmatprep.subr.bf16.mxu0 0
        %2205 = vmatpush1.bf16.msra.mxu0 0
        %2206 = vmatprep.subr.bf16.mxu0 0
        %2207 = vmatpush1.bf16.msra.mxu0 0
        %2208 = vmatprep.subr.bf16.mxu0 0
        %2209 = vmatpush1.bf16.msra.mxu0 0
        %2210 = vmatprep.subr.bf16.mxu0 0
        %2211 = vmatpush1.bf16.msra.mxu0 0
        %2212 = vmatprep.subr.bf16.mxu0 0
        %2213 = vmatpush1.bf16.msra.mxu0 0
        %2214 = vmatprep.subr.bf16.mxu0 0
        %2215 = vmatpush1.bf16.msra.mxu0 0
        %2216 = vmatprep.subr.bf16.mxu0 0
        %2217 = vmatpush1.bf16.msra.mxu0 0
        %2218 = vmatprep.subr.bf16.mxu0 0
        %2219 = vmatpush1.bf16.msra.mxu0 0
        %2220 = vmatprep.subr.bf16.mxu0 0
        %2221 = vmatpush1.bf16.msra.mxu0 0
        %2222 = vmatprep.mubr.bf16.mxu0 0
        %2223 = vmatmul.mubr.bf16.gmra.mrb[0].mxu0 %v2188
        %v2224 = vpop.f32.mrb[0].mxu0
        %v2225 = vadd.f32 0.0, %v2224
        %v2226 = vpop.f32.mrb[0].mxu0
        %v2227 = vpop.f32.mrb[0].mxu0
        %v2228 = vpop.f32.mrb[0].mxu0
        %2229 = vdwg.mxu0
        %v2230 = vadd.f32 %v1821, %v2225
        %v2231 = vadd.f32 %v555, %v2230
        %v2232 = vld [vmem:[%s5] sm:$0x1]
        %v2234 = vlaneseq
        %v2235 = vshrl.u32 %v2234, 7
        %v2236 = vsub.s32 0, %v2235
        %v2237 = vrot.slane %v2232, %v2236
        %v2239 = vadd.f32 %v2231, %v2237
        %v2240 = vld [vmem:[%s6] sm:$0x1]
        %v2241 = vld [vmem:[%s7] sm:$0x1]
        %v2242 = vsel %vm558, %v2239, 0.0
        %2243 = vadd.xlane.f32.xlu0 %v2242
        %v2244 = vpop.xlane.xlu0 %2243
        %v2245 = vmul.f32 %v2244, %v562
        %v2246 = vsub.f32 %v2239, %v2245
        %v2247 = vmul.f32 %v2246, %v2246
        %v2248 = vsel %vm558, %v2247, 0.0
        %2249 = vadd.xlane.f32.xlu0 %v2248
        %v2250 = vpop.xlane.xlu0 %2249
        %v2251 = vmul.f32 %v2250, %v562
        %v2252 = vadd.f32 %v2251, 1e-05
        %v2253 = vrsqrt.pop %v2252
        %v2254 = vmul.f32 %v2246, %v2253
        %v2256 = vlaneseq
        %v2257 = vshrl.u32 %v2256, 7
        %v2258 = vsub.s32 0, %v2257
        %v2259 = vrot.slane %v2240, %v2258
        %v2261 = vmul.f32 %v2254, %v2259
        %v2263 = vlaneseq
        %v2264 = vshrl.u32 %v2263, 7
        %v2265 = vsub.s32 0, %v2264
        %v2266 = vrot.slane %v2241, %v2265
        %v2268 = vadd.f32 %v2261, %v2266
        %v2269 = vpack.c.bf16 %v2268, %v2268
        %v2270 = vld [vmem:[%s8] sm:$0xff]
        %v2271 = vld [vmem:[%s8 + $0x8] sm:$0xff]
        %v2272 = vld [vmem:[%s8 + $0x10] sm:$0xff]
        %v2273 = vld [vmem:[%s8 + $0x18] sm:$0xff]
        %v2274 = vld [vmem:[%s8 + $0x20] sm:$0xff]
        %v2275 = vld [vmem:[%s8 + $0x28] sm:$0xff]
        %v2276 = vld [vmem:[%s8 + $0x30] sm:$0xff]
        %v2277 = vld [vmem:[%s8 + $0x38] sm:$0xff]
        %v2278 = vld [vmem:[%s9] sm:$0x3]
        %v2280 = vlaneseq
        %v2281 = vshrl.u32 %v2280, 7
        %v2282 = vsub.s32 0, %v2281
        %v2283 = vrot.slane %v2278, %v2282
        %v2284 = vlaneseq
        %v2285 = vshrl.u32 %v2284, 7
        %v2286 = vsub.s32 1, %v2285
        %v2287 = vrot.slane %v2278, %v2286
        %v2298 = vunpack.c.l.b16 %v2270
        %v2299 = vunpack.c.h.b16 %v2270
        %v2300 = vunpack.c.l.b16 %v2271
        %v2301 = vunpack.c.h.b16 %v2271
        %v2302 = vunpack.c.l.b16 %v2272
        %v2303 = vunpack.c.h.b16 %v2272
        %v2304 = vunpack.c.l.b16 %v2273
        %v2305 = vunpack.c.h.b16 %v2273
        %v2306 = vunpack.c.l.b16 %v2274
        %v2307 = vunpack.c.h.b16 %v2274
        %v2308 = vunpack.c.l.b16 %v2275
        %v2309 = vunpack.c.h.b16 %v2275
        %v2310 = vunpack.c.l.b16 %v2276
        %v2311 = vunpack.c.h.b16 %v2276
        %v2312 = vunpack.c.l.b16 %v2277
        %v2313 = vunpack.c.h.b16 %v2277
        %v2314 = vpack.c.b16 %v2300, %v2298
        %v2315 = vpack.c.b16 %v2301, %v2299
        %v2316 = vpack.c.b16 %v2304, %v2302
        %v2317 = vpack.c.b16 %v2305, %v2303
        %v2318 = vpack.c.b16 %v2308, %v2306
        %v2319 = vpack.c.b16 %v2309, %v2307
        %v2320 = vpack.c.b16 %v2312, %v2310
        %v2321 = vpack.c.b16 %v2313, %v2311
        %v2331 = vsel %vm620, %v2269, 0
        %2333 = vmatprep.subr.bf16.mxu0 %v2315
        %2334 = vmatpush1.bf16.msra.mxu0 %v2314
        %2335 = vmatprep.subr.bf16.mxu0 %v2317
        %2336 = vmatpush1.bf16.msra.mxu0 %v2316
        %2337 = vmatprep.subr.bf16.mxu0 %v2319
        %2338 = vmatpush1.bf16.msra.mxu0 %v2318
        %2339 = vmatprep.subr.bf16.mxu0 %v2321
        %2340 = vmatpush1.bf16.msra.mxu0 %v2320
        %2341 = vmatprep.subr.bf16.mxu0 0
        %2342 = vmatpush1.bf16.msra.mxu0 0
        %2343 = vmatprep.subr.bf16.mxu0 0
        %2344 = vmatpush1.bf16.msra.mxu0 0
        %2345 = vmatprep.subr.bf16.mxu0 0
        %2346 = vmatpush1.bf16.msra.mxu0 0
        %2347 = vmatprep.subr.bf16.mxu0 0
        %2348 = vmatpush1.bf16.msra.mxu0 0
        %2349 = vmatprep.subr.bf16.mxu0 0
        %2350 = vmatpush1.bf16.msra.mxu0 0
        %2351 = vmatprep.subr.bf16.mxu0 0
        %2352 = vmatpush1.bf16.msra.mxu0 0
        %2353 = vmatprep.subr.bf16.mxu0 0
        %2354 = vmatpush1.bf16.msra.mxu0 0
        %2355 = vmatprep.subr.bf16.mxu0 0
        %2356 = vmatpush1.bf16.msra.mxu0 0
        %2357 = vmatprep.subr.bf16.mxu0 0
        %2358 = vmatpush1.bf16.msra.mxu0 0
        %2359 = vmatprep.subr.bf16.mxu0 0
        %2360 = vmatpush1.bf16.msra.mxu0 0
        %2361 = vmatprep.subr.bf16.mxu0 0
        %2362 = vmatpush1.bf16.msra.mxu0 0
        %2363 = vmatprep.subr.bf16.mxu0 0
        %2364 = vmatpush1.bf16.msra.mxu0 0
        %2365 = vmatprep.mubr.bf16.mxu0 0
        %2366 = vmatmul.mubr.bf16.gmra.mrb[0].mxu0 %v2331
        %v2367 = vpop.f32.mrb[0].mxu0
        %v2368 = vadd.f32 %v2283, %v2367
        %v2369 = vpop.f32.mrb[0].mxu0
        %v2370 = vadd.f32 %v2287, %v2369
        %v2371 = vpop.f32.mrb[0].mxu0
        %v2372 = vpop.f32.mrb[0].mxu0
        %2373 = vdwg.mxu0
        %v2374 = vmul.f32 %v2368, 0.5
        %v2375 = vmul.f32 %v2370, 0.5
        %v2376 = vmul.f32 %v2368, 0.044715
        %v2377 = vmul.f32 %v2370, 0.044715
        %v2378 = vmul.f32 %v2376, %v2368
        %v2379 = vmul.f32 %v2377, %v2370
        %v2380 = vmul.f32 %v2378, %v2368
        %v2381 = vmul.f32 %v2379, %v2370
        %v2382 = vadd.f32 %v2368, %v2380
        %v2383 = vadd.f32 %v2370, %v2381
        %v2384 = vmul.f32 %v2382, 0.7978846
        %v2385 = vmul.f32 %v2383, 0.7978846
        %v2386 = vtanh.pop %v2384
        %v2387 = vtanh.pop %v2385
        %v2388 = vadd.f32 %v2386, 1.0
        %v2389 = vadd.f32 %v2387, 1.0
        %v2390 = vmul.f32 %v2374, %v2388
        %v2391 = vmul.f32 %v2375, %v2389
        %v2392 = vpack.c.bf16 %v2390, %v2390
        %v2393 = vpack.c.bf16 %v2391, %v2391
        %v2394 = vld [vmem:[%s10] sm:$0xf]
        %v2395 = vld [vmem:[%s10 + $0x4] sm:$0xf]
        %v2396 = vld [vmem:[%s10 + $0x8] sm:$0xf]
        %v2397 = vld [vmem:[%s10 + $0xc] sm:$0xf]
        %v2398 = vld [vmem:[%s10 + $0x10] sm:$0xf]
        %v2399 = vld [vmem:[%s10 + $0x14] sm:$0xf]
        %v2400 = vld [vmem:[%s10 + $0x18] sm:$0xf]
        %v2401 = vld [vmem:[%s10 + $0x1c] sm:$0xf]
        %v2402 = vld [vmem:[%s10 + $0x20] sm:$0xf]
        %v2403 = vld [vmem:[%s10 + $0x24] sm:$0xf]
        %v2404 = vld [vmem:[%s10 + $0x28] sm:$0xf]
        %v2405 = vld [vmem:[%s10 + $0x2c] sm:$0xf]
        %v2406 = vld [vmem:[%s10 + $0x30] sm:$0xf]
        %v2407 = vld [vmem:[%s10 + $0x34] sm:$0xf]
        %v2408 = vld [vmem:[%s10 + $0x38] sm:$0xf]
        %v2409 = vld [vmem:[%s10 + $0x3c] sm:$0xf]
        %v2410 = vld [vmem:[%s10 + $0x40] sm:$0xf]
        %v2411 = vld [vmem:[%s10 + $0x44] sm:$0xf]
        %v2412 = vld [vmem:[%s10 + $0x48] sm:$0xf]
        %v2413 = vld [vmem:[%s10 + $0x4c] sm:$0xf]
        %v2414 = vld [vmem:[%s10 + $0x50] sm:$0xf]
        %v2415 = vld [vmem:[%s10 + $0x54] sm:$0xf]
        %v2416 = vld [vmem:[%s10 + $0x58] sm:$0xf]
        %v2417 = vld [vmem:[%s10 + $0x5c] sm:$0xf]
        %v2418 = vld [vmem:[%s10 + $0x60] sm:$0xf]
        %v2419 = vld [vmem:[%s10 + $0x64] sm:$0xf]
        %v2420 = vld [vmem:[%s10 + $0x68] sm:$0xf]
        %v2421 = vld [vmem:[%s10 + $0x6c] sm:$0xf]
        %v2422 = vld [vmem:[%s10 + $0x70] sm:$0xf]
        %v2423 = vld [vmem:[%s10 + $0x74] sm:$0xf]
        %v2424 = vld [vmem:[%s10 + $0x78] sm:$0xf]
        %v2425 = vld [vmem:[%s10 + $0x7c] sm:$0xf]
        %v2458 = vunpack.c.l.b16 %v2394
        %v2459 = vunpack.c.l.b16 %v2395
        %v2460 = vunpack.c.l.b16 %v2396
        %v2461 = vunpack.c.l.b16 %v2397
        %v2462 = vunpack.c.l.b16 %v2398
        %v2463 = vunpack.c.l.b16 %v2399
        %v2464 = vunpack.c.l.b16 %v2400
        %v2465 = vunpack.c.l.b16 %v2401
        %v2466 = vunpack.c.l.b16 %v2402
        %v2467 = vunpack.c.l.b16 %v2403
        %v2468 = vunpack.c.l.b16 %v2404
        %v2469 = vunpack.c.l.b16 %v2405
        %v2470 = vunpack.c.l.b16 %v2406
        %v2471 = vunpack.c.l.b16 %v2407
        %v2472 = vunpack.c.l.b16 %v2408
        %v2473 = vunpack.c.l.b16 %v2409
        %v2474 = vunpack.c.l.b16 %v2410
        %v2475 = vunpack.c.l.b16 %v2411
        %v2476 = vunpack.c.l.b16 %v2412
        %v2477 = vunpack.c.l.b16 %v2413
        %v2478 = vunpack.c.l.b16 %v2414
        %v2479 = vunpack.c.l.b16 %v2415
        %v2480 = vunpack.c.l.b16 %v2416
        %v2481 = vunpack.c.l.b16 %v2417
        %v2482 = vunpack.c.l.b16 %v2418
        %v2483 = vunpack.c.l.b16 %v2419
        %v2484 = vunpack.c.l.b16 %v2420
        %v2485 = vunpack.c.l.b16 %v2421
        %v2486 = vunpack.c.l.b16 %v2422
        %v2487 = vunpack.c.l.b16 %v2423
        %v2488 = vunpack.c.l.b16 %v2424
        %v2489 = vunpack.c.l.b16 %v2425
        %v2490 = vpack.c.b16 %v2459, %v2458
        %v2491 = vpack.c.b16 %v2461, %v2460
        %v2492 = vpack.c.b16 %v2463, %v2462
        %v2493 = vpack.c.b16 %v2465, %v2464
        %v2494 = vpack.c.b16 %v2467, %v2466
        %v2495 = vpack.c.b16 %v2469, %v2468
        %v2496 = vpack.c.b16 %v2471, %v2470
        %v2497 = vpack.c.b16 %v2473, %v2472
        %v2498 = vpack.c.b16 %v2475, %v2474
        %v2499 = vpack.c.b16 %v2477, %v2476
        %v2500 = vpack.c.b16 %v2479, %v2478
        %v2501 = vpack.c.b16 %v2481, %v2480
        %v2502 = vpack.c.b16 %v2483, %v2482
        %v2503 = vpack.c.b16 %v2485, %v2484
        %v2504 = vpack.c.b16 %v2487, %v2486
        %v2505 = vpack.c.b16 %v2489, %v2488
        %2522 = vmatprep.subr.bf16.mxu0 0
        %2523 = vmatpush1.bf16.msra.mxu0 %v2490
        %2524 = vmatprep.subr.bf16.mxu0 0
        %2525 = vmatpush1.bf16.msra.mxu0 %v2491
        %2526 = vmatprep.subr.bf16.mxu0 0
        %2527 = vmatpush1.bf16.msra.mxu0 %v2492
        %2528 = vmatprep.subr.bf16.mxu0 0
        %2529 = vmatpush1.bf16.msra.mxu0 %v2493
        %2530 = vmatprep.subr.bf16.mxu0 0
        %2531 = vmatpush1.bf16.msra.mxu0 %v2494
        %2532 = vmatprep.subr.bf16.mxu0 0
        %2533 = vmatpush1.bf16.msra.mxu0 %v2495
        %2534 = vmatprep.subr.bf16.mxu0 0
        %2535 = vmatpush1.bf16.msra.mxu0 %v2496
        %2536 = vmatprep.subr.bf16.mxu0 0
        %2537 = vmatpush1.bf16.msra.mxu0 %v2497
        %2538 = vmatprep.subr.bf16.mxu0 0
        %2539 = vmatpush1.bf16.msra.mxu0 %v2498
        %2540 = vmatprep.subr.bf16.mxu0 0
        %2541 = vmatpush1.bf16.msra.mxu0 %v2499
        %2542 = vmatprep.subr.bf16.mxu0 0
        %2543 = vmatpush1.bf16.msra.mxu0 %v2500
        %2544 = vmatprep.subr.bf16.mxu0 0
        %2545 = vmatpush1.bf16.msra.mxu0 %v2501
        %2546 = vmatprep.subr.bf16.mxu0 0
        %2547 = vmatpush1.bf16.msra.mxu0 %v2502
        %2548 = vmatprep.subr.bf16.mxu0 0
        %2549 = vmatpush1.bf16.msra.mxu0 %v2503
        %2550 = vmatprep.subr.bf16.mxu0 0
        %2551 = vmatpush1.bf16.msra.mxu0 %v2504
        %2552 = vmatprep.subr.bf16.mxu0 0
        %2553 = vmatpush1.bf16.msra.mxu0 %v2505
        %2554 = vmatprep.mubr.bf16.mxu0 %v2393
        %2555 = vmatmul.mubr.bf16.gmra.mrb[0].mxu0 %v2392
        %v2556 = vpop.f32.mrb[0].mxu0
        %v2557 = vadd.f32 0.0, %v2556
        %v2558 = vpop.f32.mrb[0].mxu0
        %v2559 = vpop.f32.mrb[0].mxu0
        %v2560 = vpop.f32.mrb[0].mxu0
        %2561 = vdwg.mxu0
        %v2562 = vadd.f32 %v2239, %v2557
        %v2563 = vld [vmem:[%s11] sm:$0x1]
        %v2565 = vlaneseq
        %v2566 = vshrl.u32 %v2565, 7
        %v2567 = vsub.s32 0, %v2566
        %v2568 = vrot.slane %v2563, %v2567
        %v2570 = vadd.f32 %v2562, %v2568
        %2571 = vst.msk [vmem:[%s543] sm:$0x1f] %vm558, %v2570
        %v2572 = vld [vmem:[%s12] sm:$0x1]
        %v2573 = vld [vmem:[%s13] sm:$0x1]
        %vm2574 = vcmask 516096
        %v2575 = vsel %vm2574, %v2570, 0.0
        %2576 = vadd.xlane.f32.xlu0 %v2575
        %v2577 = vpop.xlane.xlu0 %2576
        %v2578 = vmul.f32 %v2577, %v562
        %v2579 = vsub.f32 %v2570, %v2578
        %v2580 = vmul.f32 %v2579, %v2579
        %v2581 = vsel %vm2574, %v2580, 0.0
        %2582 = vadd.xlane.f32.xlu0 %v2581
        %v2583 = vpop.xlane.xlu0 %2582
        %v2584 = vmul.f32 %v2583, %v562
        %v2585 = vadd.f32 %v2584, 1e-05
        %v2586 = vrsqrt.pop %v2585
        %v2587 = vmul.f32 %v2579, %v2586
        %v2588 = vmul.f32 %v2587, %v2572
        %v2589 = vadd.f32 %v2588, %v2573
        %v2590 = vpack.c.bf16 %v2589, %v2589
        %v2591 = vld [vmem:[%s14] sm:$0xf]
        %v2592 = vld [vmem:[%s14 + $0x4] sm:$0xf]
        %v2593 = vld [vmem:[%s14 + $0x8] sm:$0xf]
        %v2594 = vld [vmem:[%s14 + $0xc] sm:$0xf]
        %v2595 = vld [vmem:[%s14 + $0x10] sm:$0xf]
        %v2596 = vld [vmem:[%s14 + $0x14] sm:$0xf]
        %v2597 = vld [vmem:[%s14 + $0x18] sm:$0xf]
        %v2598 = vld [vmem:[%s14 + $0x1c] sm:$0xf]
        %v2599 = vld [vmem:[%s15] sm:$0x1]
        %v2608 = vunpack.c.l.b16 %v2591
        %v2609 = vunpack.c.l.b16 %v2592
        %v2610 = vunpack.c.l.b16 %v2593
        %v2611 = vunpack.c.l.b16 %v2594
        %v2612 = vunpack.c.l.b16 %v2595
        %v2613 = vunpack.c.l.b16 %v2596
        %v2614 = vunpack.c.l.b16 %v2597
        %v2615 = vunpack.c.l.b16 %v2598
        %v2616 = vpack.c.b16 %v2609, %v2608
        %v2617 = vpack.c.b16 %v2611, %v2610
        %v2618 = vpack.c.b16 %v2613, %v2612
        %v2619 = vpack.c.b16 %v2615, %v2614
        %v2625 = vsel %vm620, %v2590, 0
        %2627 = vmatprep.subr.bf16.mxu0 0
        %2628 = vmatpush1.bf16.msra.mxu0 %v2616
        %2629 = vmatprep.subr.bf16.mxu0 0
        %2630 = vmatpush1.bf16.msra.mxu0 %v2617
        %2631 = vmatprep.subr.bf16.mxu0 0
        %2632 = vmatpush1.bf16.msra.mxu0 %v2618
        %2633 = vmatprep.subr.bf16.mxu0 0
        %2634 = vmatpush1.bf16.msra.mxu0 %v2619
        %2635 = vmatprep.subr.bf16.mxu0 0
        %2636 = vmatpush1.bf16.msra.mxu0 0
        %2637 = vmatprep.subr.bf16.mxu0 0
        %2638 = vmatpush1.bf16.msra.mxu0 0
        %2639 = vmatprep.subr.bf16.mxu0 0
        %2640 = vmatpush1.bf16.msra.mxu0 0
        %2641 = vmatprep.subr.bf16.mxu0 0
        %2642 = vmatpush1.bf16.msra.mxu0 0
        %2643 = vmatprep.subr.bf16.mxu0 0
        %2644 = vmatpush1.bf16.msra.mxu0 0
        %2645 = vmatprep.subr.bf16.mxu0 0
        %2646 = vmatpush1.bf16.msra.mxu0 0
        %2647 = vmatprep.subr.bf16.mxu0 0
        %2648 = vmatpush1.bf16.msra.mxu0 0
        %2649 = vmatprep.subr.bf16.mxu0 0
        %2650 = vmatpush1.bf16.msra.mxu0 0
        %2651 = vmatprep.subr.bf16.mxu0 0
        %2652 = vmatpush1.bf16.msra.mxu0 0
        %2653 = vmatprep.subr.bf16.mxu0 0
        %2654 = vmatpush1.bf16.msra.mxu0 0
        %2655 = vmatprep.subr.bf16.mxu0 0
        %2656 = vmatpush1.bf16.msra.mxu0 0
        %2657 = vmatprep.subr.bf16.mxu0 0
        %2658 = vmatpush1.bf16.msra.mxu0 0
        %2659 = vmatprep.mubr.bf16.mxu0 0
        %2660 = vmatmul.mubr.bf16.gmra.mrb[0].mxu0 %v2625
        %v2661 = vpop.f32.mrb[0].mxu0
        %v2662 = vadd.f32 %v2599, %v2661
        %v2663 = vpop.f32.mrb[0].mxu0
        %v2664 = vpop.f32.mrb[0].mxu0
        %v2665 = vpop.f32.mrb[0].mxu0
        %2666 = vdwg.mxu0
        %vm2667 = vcmask 73728
        %2668 = vst.msk [vmem:[%s549] sm:$0x1] %vm2667, %v2662
        %s2669 = sand.u32 %s384, 1
        %s2670 = scalar_lea.sflag [#allocation3], %s2669
        %s2671 = sand.u32 %s384, 1
        %s2672 = smul.addr %s2671, 8
        %s2673 = scalar_lea.vmem [#allocation2], %s2672
        %s2674 = sand.u32 %s410, 1
        %s2675 = scalar_lea.sflag [#allocation5], %s2674
        %s2676 = sand.u32 %s410, 1
        %s2677 = scalar_lea.vmem [#allocation4], %s2676
        // Predicated region
        $region85: #{t2t_vit_feature_forward.7} parent=83 // pred_check
          %p2678 = pneg %p394
        $region86: #{t2t_vit_feature_forward.7} parent=83 // pred_check_branch
          %2680 = sbr.rel (%p2678) target = $region88
        $region87: #{t2t_vit_feature_forward.7} parent=83 // pred_region
          %s2682 = ssub.s32 128, 128
          %2683 = vsyncadd %s2670, %s2682
          %s2684 = smul.addr %s35, 128
          %s2685 = scalar_lea.hbm %s16, %s2684
          %s2687 = sshll.u32 %s2673, 4
          %s2688 = int_to_ptr.vmem [resolvable:$true] %s2687
          %2690 = dma.vmem_to_hbm [thread:$0]  %s2688, 128, %s2685, %s2670
        $region88: #{t2t_vit_feature_forward.7} parent=83 // pred_fallthru
          _
        // Predicated region
        $region89: #{t2t_vit_feature_forward.7} parent=83 // pred_check
          %p2691 = pneg %p420
        $region90: #{t2t_vit_feature_forward.7} parent=83 // pred_check_branch
          %2693 = sbr.rel (%p2691) target = $region92
        $region91: #{t2t_vit_feature_forward.7} parent=83 // pred_region
          %s2695 = ssub.s32 16, 16
          %2696 = vsyncadd %s2675, %s2695
          %s2697 = smul.addr %s35, 16
          %s2698 = scalar_lea.hbm %s17, %s2697
          %s2700 = sshll.u32 %s2677, 4
          %s2701 = int_to_ptr.vmem [resolvable:$true] %s2700
          %2703 = dma.vmem_to_hbm [thread:$0]  %s2701, 16, %s2698, %s2675
        $region92: #{t2t_vit_feature_forward.7} parent=83 // pred_fallthru
          _
      $region84: #{t2t_vit_feature_forward.7} parent=5 // pred_fallthru
        _
      %p2704 = scmp.le.s32.totalorder 2, %s30
      // Predicated region
      $region93: #{t2t_vit_feature_forward.7} parent=5 // pred_check
        %p2705 = pneg %p2704
      $region94: #{t2t_vit_feature_forward.7} parent=5 // pred_check_branch
        %2707 = sbr.rel (%p2705) target = $region96
      $region95: #{t2t_vit_feature_forward.7} parent=5 // pred_region
        %s2708 = ssub.s32 %s30, 2
        // Predicated region
        $region97: #{t2t_vit_feature_forward.7} parent=95 // pred_check
          %p2709 = pneg %p400
        $region98: #{t2t_vit_feature_forward.7} parent=95 // pred_check_branch
          %2711 = sbr.rel (%p2709) target = $region100
        $region99: #{t2t_vit_feature_forward.7} parent=95 // pred_region
          %s2712 = sand.u32 %s385, 1
          %s2713 = scalar_lea.sflag [#allocation3], %s2712
          %s2714 = sand.u32 %s385, 1
          %s2715 = smul.addr %s2714, 8
          %s2716 = scalar_lea.vmem [#allocation2], %s2715
          %2717 = dma.done %s2713, 128
        $region100: #{t2t_vit_feature_forward.7} parent=95 // pred_fallthru
          _
        // Predicated region
        $region101: #{t2t_vit_feature_forward.7} parent=95 // pred_check
          %p2718 = pneg %p426
        $region102: #{t2t_vit_feature_forward.7} parent=95 // pred_check_branch
          %2720 = sbr.rel (%p2718) target = $region104
        $region103: #{t2t_vit_feature_forward.7} parent=95 // pred_region
          %s2721 = sand.u32 %s411, 1
          %s2722 = scalar_lea.sflag [#allocation5], %s2721
          %s2723 = sand.u32 %s411, 1
          %s2724 = scalar_lea.vmem [#allocation4], %s2723
          %2725 = dma.done %s2722, 16
        $region104: #{t2t_vit_feature_forward.7} parent=95 // pred_fallthru
          _
      $region96: #{t2t_vit_feature_forward.7} parent=5 // pred_fallthru
        _
    $region6: #{t2t_vit_feature_forward.7} parent=1 // loop_footer
      %s34 = sadd.s32 1, %s30
    $region7: #{t2t_vit_feature_forward.7} parent=1 // loop_footer_branch
      %29 = sbr.rel target = $region3
    $region8: #{t2t_vit_feature_forward.7} parent=1 // loop_exit
      _
    %2726 = vsyncpa [#allocation3], 1
    %s2727 = scalar_lea.sflag [#allocation3], 1
    %2728 = vsyncpa %s2727, 1
    %2729 = vsyncpa [#allocation5], 1
    %s2730 = scalar_lea.sflag [#allocation5], 1
    %2731 = vsyncpa %s2730, 1

</llo_original>
